<compile_context>
chip_gen: v6e
topology: v6e:2x2x1
jax: 0.10.0
libtpu: 0.0.40
codegen_flags: <defaults>
</compile_context>

<pallas_src>
import jax
import jax.numpy as jnp
from jax.experimental import pallas as pl
from jax.experimental.pallas import tpu as pltpu  # noqa: F401  (TPU backend)

CPAD = 128  # conv output channels padded to one full lane register (lane-dense)


# ----------------------------- Pallas kernels ------------------------------

def _conv_relu_pool_kernel(p_ref, w_ref, b_ref, o_ref):
    """Fused 3x3 conv (im2col matmul) + bias + ReLU + MaxPool2d(2).

    p_ref: (4, M, K) bf16 -- 9-tap patches; leading axis = the four positions of
                             each 2x2 pooling window, rows ordered (b, i, j).
    w_ref: (K, N)    bf16 -- taps-major conv weights, N padded to 128 lanes.
    b_ref: (1, N)    f32
    o_ref: (M, N)    bf16 -- pooled NHWC activations (lane-dense, N = 128).
    """
    w = w_ref[...]
    b = b_ref[...]

    def partner(idx):
        acc = jnp.dot(p_ref[idx], w, preferred_element_type=jnp.float32)
        return jnp.maximum(acc + b, 0.0)

    pooled = jnp.maximum(jnp.maximum(partner(0), partner(1)),
                         jnp.maximum(partner(2), partner(3)))
    o_ref[...] = pooled.astype(o_ref.dtype)


def _mlp_kernel(x_ref, w3_ref, b3_ref, w4_ref, b4_ref, o_ref):
    """Fused Linear(1568,128) + ReLU + Linear(128,10); hidden stays in VMEM."""
    h = jnp.dot(x_ref[...], w3_ref[...], preferred_element_type=jnp.float32)
    h = jnp.maximum(h + b3_ref[...], 0.0).astype(jnp.bfloat16)
    o = jnp.dot(h, w4_ref[...], preferred_element_type=jnp.float32)
    o_ref[...] = (o + b4_ref[...]).astype(o_ref.dtype)


# ------------------------------ Layer wrappers ------------------------------

def conv_relu_pool(x, w_mat, b_vec):
    """x: (B, H, W, Cin) bf16 (H, W even) -> (B, H//2, W//2, CPAD) bf16."""
    B, H, W, Cin = x.shape
    K = 9 * Cin
    N = w_mat.shape[1]
    H2, W2 = H // 2, W // 2
    M = B * H2 * W2

    xp = jnp.pad(x, ((0, 0), (1, 1), (1, 1), (0, 0)))
    # 9 shifted views concatenated along the channel axis (NHWC: no transpose
    # back to NCHW needed anywhere).
    taps = jnp.concatenate(
        [xp[:, ki:ki + H, kj:kj + W, :] for ki in range(3) for kj in range(3)],
        axis=-1)                                                 # (B, H, W, K)
    # Regroup rows so the four 2x2-pool partners form the leading axis; the
    # kernel then fuses the pool into the conv epilogue and never writes the
    # pre-pool activation to HBM.
    p4 = (taps.reshape(B, H2, 2, W2, 2, K)
              .transpose(2, 4, 0, 1, 3, 5)                       # (u, v, b, i, j, k)
              .reshape(4, M, K))

    out = pl.pallas_call(
        _conv_relu_pool_kernel,
        out_shape=jax.ShapeDtypeStruct((M, N), jnp.bfloat16),
        in_specs=[
            pl.BlockSpec((4, M, K), lambda: (0, 0, 0)),
            pl.BlockSpec((K, N), lambda: (0, 0)),
            pl.BlockSpec((1, N), lambda: (0, 0)),
        ],
        out_specs=pl.BlockSpec((M, N), lambda: (0, 0)),
    )(p4, w_mat, b_vec.reshape(1, N))
    return out.reshape(B, H2, W2, N)


def mlp(x, w3, b3, w4, b4):
    """x: (B, F) bf16; w3: (F, 128) bf16; w4: (128, 10) bf16 -> (B, 10) f32."""
    B, F = x.shape
    Hd = w3.shape[1]
    O = w4.shape[1]
    return pl.pallas_call(
        _mlp_kernel,
        out_shape=jax.ShapeDtypeStruct((B, O), jnp.float32),
        in_specs=[
            pl.BlockSpec((B, F), lambda: (0, 0)),
            pl.BlockSpec((F, Hd), lambda: (0, 0)),
            pl.BlockSpec((1, Hd), lambda: (0, 0)),
            pl.BlockSpec((Hd, O), lambda: (0, 0)),
            pl.BlockSpec((1, O), lambda: (0, 0)),
        ],
        out_specs=pl.BlockSpec((B, O), lambda: (0, 0)),
    )(x, w3, b3.reshape(1, Hd), w4, b4.reshape(1, O))


def simple_cnn_forward(x, params):
    B = x.shape[0]
    # NCHW -> NHWC is a pure (free) reshape because Cin == 1; stay channels-last.
    x = x.reshape(B, 28, 28, 1).astype(jnp.bfloat16)
    x = conv_relu_pool(x, params["w1m"], params["b1p"])   # (B, 14, 14, 128), ch 0..15 live
    x = conv_relu_pool(x, params["w2m"], params["b2p"])   # (B, 7, 7, 128),  ch 0..31 live
    # Drop the channel padding and flatten in (h, w, c) order; the PyTorch
    # (c, h, w) flatten permutation is already folded into w3m at init time.
    x = x[:, :, :, :32].reshape(B, 32 * 7 * 7)
    return mlp(x, params["w3m"], params["b3"], params["w4m"], params["b4"])


# ------------------------------ Parameters ----------------------------------

def pack_params(w1, b1, w2, b2, w3, b3, w4, b4):
    """Convert PyTorch-layout params into the kernel layouts (init-time only).

    w1: (16, 1, 3, 3)   w2: (32, 16, 3, 3)
    w3: (128, 1568) with input features ordered (c, h, w)   w4: (10, 128)
    """
    # Conv weights -> taps-major (ki, kj, cin, cout) matmul matrices; input and
    # output channels zero-padded to the 128-lane conv activation layout.
    w1m = jnp.transpose(w1, (2, 3, 1, 0))                        # (3, 3, 1, 16)
    w1m = jnp.pad(w1m, ((0, 0), (0, 0), (0, 0), (0, CPAD - 16)))
    w1m = w1m.reshape(9 * 1, CPAD)
    b1p = jnp.pad(b1, (0, CPAD - 16))

    w2m = jnp.transpose(w2, (2, 3, 1, 0))                        # (3, 3, 16, 32)
    w2m = jnp.pad(w2m, ((0, 0), (0, 0), (0, CPAD - 16), (0, CPAD - 32)))
    w2m = w2m.reshape(9 * CPAD, CPAD)
    b2p = jnp.pad(b2, (0, CPAD - 32))

    # FC1: fold the NCHW flatten permutation (c, h, w) -> (h, w, c) into the weight.
    w3m = w3.reshape(128, 32, 7, 7).transpose(2, 3, 1, 0).reshape(32 * 7 * 7, 128)
    w4m = w4.T                                                    # (128, 10)

    bf = jnp.bfloat16
    return {
        "w1m": w1m.astype(bf), "b1p": b1p.astype(jnp.float32),
        "w2m": w2m.astype(bf), "b2p": b2p.astype(jnp.float32),
        "w3m": w3m.astype(bf), "b3": b3.astype(jnp.float32),
        "w4m": w4m.astype(bf), "b4": b4.astype(jnp.float32),
    }


def init_params(key):
    k1, k2, k3, k4 = jax.random.split(key, 4)
    # Deterministic synthetic init, PyTorch-shaped, then repacked once.
    w1 = 0.1 * jax.random.normal(k1, (16, 1, 3, 3), jnp.float32)
    b1 = jnp.zeros((16,), jnp.float32)
    w2 = 0.1 * jax.random.normal(k2, (32, 16, 3, 3), jnp.float32)
    b2 = jnp.zeros((32,), jnp.float32)
    w3 = 0.05 * jax.random.normal(k3, (128, 32 * 7 * 7), jnp.float32)
    b3 = jnp.zeros((128,), jnp.float32)
    w4 = 0.05 * jax.random.normal(k4, (10, 128), jnp.float32)
    b4 = jnp.zeros((10,), jnp.float32)
    return pack_params(w1, b1, w2, b2, w3, b3, w4, b4)


if __name__ == "__main__":
    key = jax.random.PRNGKey(0)
    k_x, k_p = jax.random.split(key)
    # Input must be 28x28 so that 32*7*7 matches the first Linear layer.
    x = jax.random.normal(k_x, (2, 1, 28, 28), jnp.float32)
    params = init_params(k_p)

    out = jax.jit(simple_cnn_forward)(x, params)
    out = jax.block_until_ready(out)
    assert out.shape == (2, 10), out.shape
    print("KERNEL_OK")
</pallas_src>

<mosaic_0001>
module attributes {stable_mosaic.version = 11 : i64} {
  func.func @_conv_relu_pool_kernel(%arg0: memref<4x392x9xbf16, #tpu.memory_space<vmem>>, %arg1: memref<9x128xbf16, #tpu.memory_space<vmem>>, %arg2: memref<1x128xf32, #tpu.memory_space<vmem>>, %arg3: memref<392x128xbf16, #tpu.memory_space<vmem>>) attributes {dimension_semantics = [], scalar_prefetch = 0 : i64, scratch_operands = 0 : i64, tpu.core_type = #tpu.core_type<tc>} {
    %c0 = arith.constant 0 : index
    %c0_0 = arith.constant 0 : index
    %0 = vector.load %arg1[%c0, %c0_0] : memref<9x128xbf16, #tpu.memory_space<vmem>>, vector<9x128xbf16>
    %c0_1 = arith.constant 0 : index
    %c0_2 = arith.constant 0 : index
    %1 = vector.load %arg2[%c0_1, %c0_2] : memref<1x128xf32, #tpu.memory_space<vmem>>, vector<1x128xf32>
    %c0_3 = arith.constant 0 : index
    %c0_4 = arith.constant 0 : index
    %c0_5 = arith.constant 0 : index
    %2 = vector.load %arg0[%c0_3, %c0_4, %c0_5] : memref<4x392x9xbf16, #tpu.memory_space<vmem>>, vector<1x392x9xbf16>
    %3 = vector.shape_cast %2 : vector<1x392x9xbf16> to vector<392x9xbf16>
    %cst = arith.constant dense<0.000000e+00> : vector<392x128xf32>
    %4 = tpu.matmul %3, %0, %cst {dimension_numbers = #tpu.dot_dimension_numbers<[1], [0], [0], [1], [0, 0, 1, 1], [], []>} : vector<392x9xbf16>, vector<9x128xbf16>, vector<392x128xf32> -> vector<392x128xf32>
    %5 = vector.broadcast %1 : vector<1x128xf32> to vector<392x128xf32>
    %6 = arith.addf %4, %5 : vector<392x128xf32>
    %cst_6 = arith.constant 0.000000e+00 : f32
    %7 = vector.broadcast %cst_6 : f32 to vector<392x128xf32>
    %8 = arith.maximumf %6, %7 : vector<392x128xf32>
    %c1 = arith.constant 1 : index
    %c0_7 = arith.constant 0 : index
    %c0_8 = arith.constant 0 : index
    %9 = vector.load %arg0[%c1, %c0_7, %c0_8] : memref<4x392x9xbf16, #tpu.memory_space<vmem>>, vector<1x392x9xbf16>
    %10 = vector.shape_cast %9 : vector<1x392x9xbf16> to vector<392x9xbf16>
    %cst_9 = arith.constant dense<0.000000e+00> : vector<392x128xf32>
    %11 = tpu.matmul %10, %0, %cst_9 {dimension_numbers = #tpu.dot_dimension_numbers<[1], [0], [0], [1], [0, 0, 1, 1], [], []>} : vector<392x9xbf16>, vector<9x128xbf16>, vector<392x128xf32> -> vector<392x128xf32>
    %12 = vector.broadcast %1 : vector<1x128xf32> to vector<392x128xf32>
    %13 = arith.addf %11, %12 : vector<392x128xf32>
    %cst_10 = arith.constant 0.000000e+00 : f32
    %14 = vector.broadcast %cst_10 : f32 to vector<392x128xf32>
    %15 = arith.maximumf %13, %14 : vector<392x128xf32>
    %16 = arith.maximumf %8, %15 : vector<392x128xf32>
    %c2 = arith.constant 2 : index
    %c0_11 = arith.constant 0 : index
    %c0_12 = arith.constant 0 : index
    %17 = vector.load %arg0[%c2, %c0_11, %c0_12] : memref<4x392x9xbf16, #tpu.memory_space<vmem>>, vector<1x392x9xbf16>
    %18 = vector.shape_cast %17 : vector<1x392x9xbf16> to vector<392x9xbf16>
    %cst_13 = arith.constant dense<0.000000e+00> : vector<392x128xf32>
    %19 = tpu.matmul %18, %0, %cst_13 {dimension_numbers = #tpu.dot_dimension_numbers<[1], [0], [0], [1], [0, 0, 1, 1], [], []>} : vector<392x9xbf16>, vector<9x128xbf16>, vector<392x128xf32> -> vector<392x128xf32>
    %20 = vector.broadcast %1 : vector<1x128xf32> to vector<392x128xf32>
    %21 = arith.addf %19, %20 : vector<392x128xf32>
    %cst_14 = arith.constant 0.000000e+00 : f32
    %22 = vector.broadcast %cst_14 : f32 to vector<392x128xf32>
    %23 = arith.maximumf %21, %22 : vector<392x128xf32>
    %c3 = arith.constant 3 : index
    %c0_15 = arith.constant 0 : index
    %c0_16 = arith.constant 0 : index
    %24 = vector.load %arg0[%c3, %c0_15, %c0_16] : memref<4x392x9xbf16, #tpu.memory_space<vmem>>, vector<1x392x9xbf16>
    %25 = vector.shape_cast %24 : vector<1x392x9xbf16> to vector<392x9xbf16>
    %cst_17 = arith.constant dense<0.000000e+00> : vector<392x128xf32>
    %26 = tpu.matmul %25, %0, %cst_17 {dimension_numbers = #tpu.dot_dimension_numbers<[1], [0], [0], [1], [0, 0, 1, 1], [], []>} : vector<392x9xbf16>, vector<9x128xbf16>, vector<392x128xf32> -> vector<392x128xf32>
    %27 = vector.broadcast %1 : vector<1x128xf32> to vector<392x128xf32>
    %28 = arith.addf %26, %27 : vector<392x128xf32>
    %cst_18 = arith.constant 0.000000e+00 : f32
    %29 = vector.broadcast %cst_18 : f32 to vector<392x128xf32>
    %30 = arith.maximumf %28, %29 : vector<392x128xf32>
    %31 = arith.maximumf %23, %30 : vector<392x128xf32>
    %32 = arith.maximumf %16, %31 : vector<392x128xf32>
    %33 = arith.truncf %32 : vector<392x128xf32> to vector<392x128xbf16>
    %c0_19 = arith.constant 0 : index
    %c0_20 = arith.constant 0 : index
    %34 = vector.load %arg3[%c0_19, %c0_20] : memref<392x128xbf16, #tpu.memory_space<vmem>>, vector<392x128xbf16>
    tpu.vector_store %arg3[%c0_19, %c0_20], %33 {strides = array<i32>} : memref<392x128xbf16, #tpu.memory_space<vmem>>, vector<392x128xbf16>,
    return
  }
}

module attributes {stable_mosaic.version = 11 : i64} {
  func.func @_conv_relu_pool_kernel(%arg0: memref<4x98x1152xbf16, #tpu.memory_space<vmem>>, %arg1: memref<1152x128xbf16, #tpu.memory_space<vmem>>, %arg2: memref<1x128xf32, #tpu.memory_space<vmem>>, %arg3: memref<98x128xbf16, #tpu.memory_space<vmem>>) attributes {dimension_semantics = [], scalar_prefetch = 0 : i64, scratch_operands = 0 : i64, tpu.core_type = #tpu.core_type<tc>} {
    %c0 = arith.constant 0 : index
    %c0_0 = arith.constant 0 : index
    %0 = vector.load %arg1[%c0, %c0_0] : memref<1152x128xbf16, #tpu.memory_space<vmem>>, vector<1152x128xbf16>
    %c0_1 = arith.constant 0 : index
    %c0_2 = arith.constant 0 : index
    %1 = vector.load %arg2[%c0_1, %c0_2] : memref<1x128xf32, #tpu.memory_space<vmem>>, vector<1x128xf32>
    %c0_3 = arith.constant 0 : index
    %c0_4 = arith.constant 0 : index
    %c0_5 = arith.constant 0 : index
    %2 = vector.load %arg0[%c0_3, %c0_4, %c0_5] : memref<4x98x1152xbf16, #tpu.memory_space<vmem>>, vector<1x98x1152xbf16>
    %3 = vector.shape_cast %2 : vector<1x98x1152xbf16> to vector<98x1152xbf16>
    %cst = arith.constant dense<0.000000e+00> : vector<98x128xf32>
    %4 = tpu.matmul %3, %0, %cst {dimension_numbers = #tpu.dot_dimension_numbers<[1], [0], [0], [1], [0, 0, 1, 1], [], []>} : vector<98x1152xbf16>, vector<1152x128xbf16>, vector<98x128xf32> -> vector<98x128xf32>
    %5 = vector.broadcast %1 : vector<1x128xf32> to vector<98x128xf32>
    %6 = arith.addf %4, %5 : vector<98x128xf32>
    %cst_6 = arith.constant 0.000000e+00 : f32
    %7 = vector.broadcast %cst_6 : f32 to vector<98x128xf32>
    %8 = arith.maximumf %6, %7 : vector<98x128xf32>
    %c1 = arith.constant 1 : index
    %c0_7 = arith.constant 0 : index
    %c0_8 = arith.constant 0 : index
    %9 = vector.load %arg0[%c1, %c0_7, %c0_8] : memref<4x98x1152xbf16, #tpu.memory_space<vmem>>, vector<1x98x1152xbf16>
    %10 = vector.shape_cast %9 : vector<1x98x1152xbf16> to vector<98x1152xbf16>
    %cst_9 = arith.constant dense<0.000000e+00> : vector<98x128xf32>
    %11 = tpu.matmul %10, %0, %cst_9 {dimension_numbers = #tpu.dot_dimension_numbers<[1], [0], [0], [1], [0, 0, 1, 1], [], []>} : vector<98x1152xbf16>, vector<1152x128xbf16>, vector<98x128xf32> -> vector<98x128xf32>
    %12 = vector.broadcast %1 : vector<1x128xf32> to vector<98x128xf32>
    %13 = arith.addf %11, %12 : vector<98x128xf32>
    %cst_10 = arith.constant 0.000000e+00 : f32
    %14 = vector.broadcast %cst_10 : f32 to vector<98x128xf32>
    %15 = arith.maximumf %13, %14 : vector<98x128xf32>
    %16 = arith.maximumf %8, %15 : vector<98x128xf32>
    %c2 = arith.constant 2 : index
    %c0_11 = arith.constant 0 : index
    %c0_12 = arith.constant 0 : index
    %17 = vector.load %arg0[%c2, %c0_11, %c0_12] : memref<4x98x1152xbf16, #tpu.memory_space<vmem>>, vector<1x98x1152xbf16>
    %18 = vector.shape_cast %17 : vector<1x98x1152xbf16> to vector<98x1152xbf16>
    %cst_13 = arith.constant dense<0.000000e+00> : vector<98x128xf32>
    %19 = tpu.matmul %18, %0, %cst_13 {dimension_numbers = #tpu.dot_dimension_numbers<[1], [0], [0], [1], [0, 0, 1, 1], [], []>} : vector<98x1152xbf16>, vector<1152x128xbf16>, vector<98x128xf32> -> vector<98x128xf32>
    %20 = vector.broadcast %1 : vector<1x128xf32> to vector<98x128xf32>
    %21 = arith.addf %19, %20 : vector<98x128xf32>
    %cst_14 = arith.constant 0.000000e+00 : f32
    %22 = vector.broadcast %cst_14 : f32 to vector<98x128xf32>
    %23 = arith.maximumf %21, %22 : vector<98x128xf32>
    %c3 = arith.constant 3 : index
    %c0_15 = arith.constant 0 : index
    %c0_16 = arith.constant 0 : index
    %24 = vector.load %arg0[%c3, %c0_15, %c0_16] : memref<4x98x1152xbf16, #tpu.memory_space<vmem>>, vector<1x98x1152xbf16>
    %25 = vector.shape_cast %24 : vector<1x98x1152xbf16> to vector<98x1152xbf16>
    %cst_17 = arith.constant dense<0.000000e+00> : vector<98x128xf32>
    %26 = tpu.matmul %25, %0, %cst_17 {dimension_numbers = #tpu.dot_dimension_numbers<[1], [0], [0], [1], [0, 0, 1, 1], [], []>} : vector<98x1152xbf16>, vector<1152x128xbf16>, vector<98x128xf32> -> vector<98x128xf32>
    %27 = vector.broadcast %1 : vector<1x128xf32> to vector<98x128xf32>
    %28 = arith.addf %26, %27 : vector<98x128xf32>
    %cst_18 = arith.constant 0.000000e+00 : f32
    %29 = vector.broadcast %cst_18 : f32 to vector<98x128xf32>
    %30 = arith.maximumf %28, %29 : vector<98x128xf32>
    %31 = arith.maximumf %23, %30 : vector<98x128xf32>
    %32 = arith.maximumf %16, %31 : vector<98x128xf32>
    %33 = arith.truncf %32 : vector<98x128xf32> to vector<98x128xbf16>
    %c0_19 = arith.constant 0 : index
    %c0_20 = arith.constant 0 : index
    %34 = vector.load %arg3[%c0_19, %c0_20] : memref<98x128xbf16, #tpu.memory_space<vmem>>, vector<98x128xbf16>
    tpu.vector_store %arg3[%c0_19, %c0_20], %33 {strides = array<i32>} : memref<98x128xbf16, #tpu.memory_space<vmem>>, vector<98x128xbf16>,
    return
  }
}

module attributes {stable_mosaic.version = 11 : i64} {
  func.func @_mlp_kernel(%arg0: memref<2x1568xbf16, #tpu.memory_space<vmem>>, %arg1: memref<1568x128xbf16, #tpu.memory_space<vmem>>, %arg2: memref<1x128xf32, #tpu.memory_space<vmem>>, %arg3: memref<128x10xbf16, #tpu.memory_space<vmem>>, %arg4: memref<1x10xf32, #tpu.memory_space<vmem>>, %arg5: memref<2x10xf32, #tpu.memory_space<vmem>>) attributes {dimension_semantics = [], scalar_prefetch = 0 : i64, scratch_operands = 0 : i64, tpu.core_type = #tpu.core_type<tc>} {
    %c0 = arith.constant 0 : index
    %c0_0 = arith.constant 0 : index
    %0 = vector.load %arg0[%c0, %c0_0] : memref<2x1568xbf16, #tpu.memory_space<vmem>>, vector<2x1568xbf16>
    %c0_1 = arith.constant 0 : index
    %c0_2 = arith.constant 0 : index
    %1 = vector.load %arg1[%c0_1, %c0_2] : memref<1568x128xbf16, #tpu.memory_space<vmem>>, vector<1568x128xbf16>
    %cst = arith.constant dense<0.000000e+00> : vector<2x128xf32>
    %2 = tpu.matmul %0, %1, %cst {dimension_numbers = #tpu.dot_dimension_numbers<[1], [0], [0], [1], [0, 0, 1, 1], [], []>} : vector<2x1568xbf16>, vector<1568x128xbf16>, vector<2x128xf32> -> vector<2x128xf32>
    %c0_3 = arith.constant 0 : index
    %c0_4 = arith.constant 0 : index
    %3 = vector.load %arg2[%c0_3, %c0_4] : memref<1x128xf32, #tpu.memory_space<vmem>>, vector<1x128xf32>
    %4 = vector.broadcast %3 : vector<1x128xf32> to vector<2x128xf32>
    %5 = arith.addf %2, %4 : vector<2x128xf32>
    %cst_5 = arith.constant 0.000000e+00 : f32
    %6 = vector.broadcast %cst_5 : f32 to vector<2x128xf32>
    %7 = arith.maximumf %5, %6 : vector<2x128xf32>
    %8 = arith.truncf %7 : vector<2x128xf32> to vector<2x128xbf16>
    %c0_6 = arith.constant 0 : index
    %c0_7 = arith.constant 0 : index
    %9 = vector.load %arg3[%c0_6, %c0_7] : memref<128x10xbf16, #tpu.memory_space<vmem>>, vector<128x10xbf16>
    %cst_8 = arith.constant dense<0.000000e+00> : vector<2x10xf32>
    %10 = tpu.matmul %8, %9, %cst_8 {dimension_numbers = #tpu.dot_dimension_numbers<[1], [0], [0], [1], [0, 0, 1, 1], [], []>} : vector<2x128xbf16>, vector<128x10xbf16>, vector<2x10xf32> -> vector<2x10xf32>
    %c0_9 = arith.constant 0 : index
    %c0_10 = arith.constant 0 : index
    %11 = vector.load %arg4[%c0_9, %c0_10] : memref<1x10xf32, #tpu.memory_space<vmem>>, vector<1x10xf32>
    %12 = vector.broadcast %11 : vector<1x10xf32> to vector<2x10xf32>
    %13 = arith.addf %10, %12 : vector<2x10xf32>
    %c0_11 = arith.constant 0 : index
    %c0_12 = arith.constant 0 : index
    %14 = vector.load %arg5[%c0_11, %c0_12] : memref<2x10xf32, #tpu.memory_space<vmem>>, vector<2x10xf32>
    tpu.vector_store %arg5[%c0_11, %c0_12], %13 {strides = array<i32>} : memref<2x10xf32, #tpu.memory_space<vmem>>, vector<2x10xf32>,
    return
  }
}

</mosaic_0001>

<llo_original>
// kernel: simple_cnn_forward.3
$region0: #{simple_cnn_forward.3}
  #allocation0 [shape = 'u32[]', space=smem, size = 0x4, offset = 0x4, fixed_abs, tag = 'smem constant byte address 0x4 - core index']
  #allocation1 [shape = 'u32[144,128]{1,0:T(1,128)}', space=vmem, size = 0x12000, scoped, tag = 'internal scratch']
  %s0 = inlined_call_operand.vmem [shape: bf16[4,392,9], index: 0, kind: input, shape index: {}]
  %s1 = inlined_call_operand.vmem [shape: bf16[9,128], index: 1, kind: input, shape index: {}]
  %s2 = inlined_call_operand.vmem [shape: f32[1,128], index: 2, kind: input, shape index: {}]
  %s3 = inlined_call_operand.vmem [shape: bf16[392,128], index: 3, kind: output, shape index: {}]
  %s4 = sld [smem:[#allocation0]]
  $region22: #{simple_cnn_forward.3} parent=0
    _
  %s6 = ssub.s32 1, %s4
  %s7 = scalar_select 0, %s6, %s4
  // Predicated region
  $region2: #{simple_cnn_forward.3} parent=0 // pred_check
    _
  $region3: #{simple_cnn_forward.3} parent=0 // pred_check_branch
    %9 = sbr.rel (0) target = $region5
  $region4: #{simple_cnn_forward.3} parent=0 // pred_region
    _
  $region5: #{simple_cnn_forward.3} parent=0 // pred_fallthru
    _
  // Predicated region
  $region6: #{simple_cnn_forward.3} parent=0 // pred_check
    _
  $region7: #{simple_cnn_forward.3} parent=0 // pred_check_branch
    %11 = sbr.rel (0) target = $region9
  $region8: #{simple_cnn_forward.3} parent=0 // pred_region
    _
  $region9: #{simple_cnn_forward.3} parent=0 // pred_fallthru
    _
  // Predicated region
  $region10: #{simple_cnn_forward.3} parent=0 // pred_check
    _
  $region11: #{simple_cnn_forward.3} parent=0 // pred_check_branch
    %13 = sbr.rel (0) target = $region13
  $region12: #{simple_cnn_forward.3} parent=0 // pred_region
    _
  $region13: #{simple_cnn_forward.3} parent=0 // pred_fallthru
    _
  %v15 = vld [vmem:[%s1] sm:$0xf]
  %v16 = vld [vmem:[%s1 + $0x4] sm:$0x1]
  %v17 = vld [vmem:[%s2] sm:$0x1]
  %v18 = vld [vmem:[%s0] sm:$0xf]
  %v19 = vld [vmem:[%s0 + $0x4] sm:$0xf]
  %v20 = vld [vmem:[%s0 + $0x8] sm:$0xf]
  %v21 = vld [vmem:[%s0 + $0xc] sm:$0xf]
  %v22 = vld [vmem:[%s0 + $0x10] sm:$0xf]
  %v23 = vld [vmem:[%s0 + $0x14] sm:$0xf]
  %v24 = vld [vmem:[%s0 + $0x18] sm:$0xf]
  %v25 = vld [vmem:[%s0 + $0x1c] sm:$0xf]
  %v26 = vld [vmem:[%s0 + $0x20] sm:$0xf]
  %v27 = vld [vmem:[%s0 + $0x24] sm:$0xf]
  %v28 = vld [vmem:[%s0 + $0x28] sm:$0xf]
  %v29 = vld [vmem:[%s0 + $0x2c] sm:$0xf]
  %v30 = vld [vmem:[%s0 + $0x30] sm:$0xf]
  %v31 = vld [vmem:[%s0 + $0x34] sm:$0xf]
  %v32 = vld [vmem:[%s0 + $0x38] sm:$0xf]
  %v33 = vld [vmem:[%s0 + $0x3c] sm:$0xf]
  %v34 = vld [vmem:[%s0 + $0x40] sm:$0xf]
  %v35 = vld [vmem:[%s0 + $0x44] sm:$0xf]
  %v36 = vld [vmem:[%s0 + $0x48] sm:$0xf]
  %v37 = vld [vmem:[%s0 + $0x4c] sm:$0xf]
  %v38 = vld [vmem:[%s0 + $0x50] sm:$0xf]
  %v39 = vld [vmem:[%s0 + $0x54] sm:$0xf]
  %v40 = vld [vmem:[%s0 + $0x58] sm:$0xf]
  %v41 = vld [vmem:[%s0 + $0x5c] sm:$0xf]
  %v42 = vld [vmem:[%s0 + $0x60] sm:$0xf]
  %v43 = vld [vmem:[%s0 + $0x64] sm:$0xf]
  %v44 = vld [vmem:[%s0 + $0x68] sm:$0xf]
  %v45 = vld [vmem:[%s0 + $0x6c] sm:$0xf]
  %v46 = vld [vmem:[%s0 + $0x70] sm:$0xf]
  %v47 = vld [vmem:[%s0 + $0x74] sm:$0xf]
  %v48 = vld [vmem:[%s0 + $0x78] sm:$0xf]
  %v49 = vld [vmem:[%s0 + $0x7c] sm:$0xf]
  %v50 = vld [vmem:[%s0 + $0x80] sm:$0xf]
  %v51 = vld [vmem:[%s0 + $0x84] sm:$0xf]
  %v52 = vld [vmem:[%s0 + $0x88] sm:$0xf]
  %v53 = vld [vmem:[%s0 + $0x8c] sm:$0xf]
  %v54 = vld [vmem:[%s0 + $0x90] sm:$0xf]
  %v55 = vld [vmem:[%s0 + $0x94] sm:$0xf]
  %v56 = vld [vmem:[%s0 + $0x98] sm:$0xf]
  %v57 = vld [vmem:[%s0 + $0x9c] sm:$0xf]
  %v58 = vld [vmem:[%s0 + $0xa0] sm:$0xf]
  %v59 = vld [vmem:[%s0 + $0xa4] sm:$0xf]
  %v60 = vld [vmem:[%s0 + $0xa8] sm:$0xf]
  %v61 = vld [vmem:[%s0 + $0xac] sm:$0xf]
  %v62 = vld [vmem:[%s0 + $0xb0] sm:$0xf]
  %v63 = vld [vmem:[%s0 + $0xb4] sm:$0xf]
  %v64 = vld [vmem:[%s0 + $0xb8] sm:$0xf]
  %v65 = vld [vmem:[%s0 + $0xbc] sm:$0xf]
  %v66 = vld [vmem:[%s0 + $0xc0] sm:$0xf]
  %v68 = vlaneseq
  %v69 = vshrl.u32 %v68, 7
  %v70 = vsub.s32 0, %v69
  %v71 = vrot.slane %v17, %v70
  %v122 = vunpack.c.l.b16 %v18
  %v123 = vunpack.c.l.b16 %v19
  %v124 = vunpack.c.l.b16 %v20
  %v125 = vunpack.c.l.b16 %v21
  %v126 = vunpack.c.l.b16 %v22
  %v127 = vunpack.c.l.b16 %v23
  %v128 = vunpack.c.l.b16 %v24
  %v129 = vunpack.c.l.b16 %v25
  %v130 = vunpack.c.l.b16 %v26
  %v131 = vunpack.c.l.b16 %v27
  %v132 = vunpack.c.l.b16 %v28
  %v133 = vunpack.c.l.b16 %v29
  %v134 = vunpack.c.l.b16 %v30
  %v135 = vunpack.c.l.b16 %v31
  %v136 = vunpack.c.l.b16 %v32
  %v137 = vunpack.c.l.b16 %v33
  %v138 = vunpack.c.l.b16 %v34
  %v139 = vunpack.c.l.b16 %v35
  %v140 = vunpack.c.l.b16 %v36
  %v141 = vunpack.c.l.b16 %v37
  %v142 = vunpack.c.l.b16 %v38
  %v143 = vunpack.c.l.b16 %v39
  %v144 = vunpack.c.l.b16 %v40
  %v145 = vunpack.c.l.b16 %v41
  %v146 = vunpack.c.l.b16 %v42
  %v147 = vunpack.c.l.b16 %v43
  %v148 = vunpack.c.l.b16 %v44
  %v149 = vunpack.c.l.b16 %v45
  %v150 = vunpack.c.l.b16 %v46
  %v151 = vunpack.c.l.b16 %v47
  %v152 = vunpack.c.l.b16 %v48
  %v153 = vunpack.c.l.b16 %v49
  %v154 = vunpack.c.l.b16 %v50
  %v155 = vunpack.c.l.b16 %v51
  %v156 = vunpack.c.l.b16 %v52
  %v157 = vunpack.c.l.b16 %v53
  %v158 = vunpack.c.l.b16 %v54
  %v159 = vunpack.c.l.b16 %v55
  %v160 = vunpack.c.l.b16 %v56
  %v161 = vunpack.c.l.b16 %v57
  %v162 = vunpack.c.l.b16 %v58
  %v163 = vunpack.c.l.b16 %v59
  %v164 = vunpack.c.l.b16 %v60
  %v165 = vunpack.c.l.b16 %v61
  %v166 = vunpack.c.l.b16 %v62
  %v167 = vunpack.c.l.b16 %v63
  %v168 = vunpack.c.l.b16 %v64
  %v169 = vunpack.c.l.b16 %v65
  %v170 = vunpack.c.l.b16 %v66
  %v171 = vpack.c.b16 %v123, %v122
  %v172 = vpack.c.b16 %v125, %v124
  %v173 = vpack.c.b16 %v127, %v126
  %v174 = vpack.c.b16 %v129, %v128
  %v175 = vpack.c.b16 %v131, %v130
  %v176 = vpack.c.b16 %v133, %v132
  %v177 = vpack.c.b16 %v135, %v134
  %v178 = vpack.c.b16 %v137, %v136
  %v179 = vpack.c.b16 %v139, %v138
  %v180 = vpack.c.b16 %v141, %v140
  %v181 = vpack.c.b16 %v143, %v142
  %v182 = vpack.c.b16 %v145, %v144
  %v183 = vpack.c.b16 %v147, %v146
  %v184 = vpack.c.b16 %v149, %v148
  %v185 = vpack.c.b16 %v151, %v150
  %v186 = vpack.c.b16 %v153, %v152
  %v187 = vpack.c.b16 %v155, %v154
  %v188 = vpack.c.b16 %v157, %v156
  %v189 = vpack.c.b16 %v159, %v158
  %v190 = vpack.c.b16 %v161, %v160
  %v191 = vpack.c.b16 %v163, %v162
  %v192 = vpack.c.b16 %v165, %v164
  %v193 = vpack.c.b16 %v167, %v166
  %v194 = vpack.c.b16 %v169, %v168
  %v195 = vpack.c.b16 %v170, %v170
  %v198 = vunpack.c.l.b16 %v15
  %v199 = vunpack.c.l.b16 %v16
  %v200 = vpack.c.b16 %v199, %v198
  %vm201 = vcmask 72704
  %v203 = vsel %vm201, %v171, 0
  %v206 = vsel %vm201, %v172, 0
  %v209 = vsel %vm201, %v173, 0
  %v212 = vsel %vm201, %v174, 0
  %v215 = vsel %vm201, %v175, 0
  %v218 = vsel %vm201, %v176, 0
  %v221 = vsel %vm201, %v177, 0
  %v224 = vsel %vm201, %v178, 0
  %v227 = vsel %vm201, %v179, 0
  %v230 = vsel %vm201, %v180, 0
  %v233 = vsel %vm201, %v181, 0
  %v236 = vsel %vm201, %v182, 0
  %v239 = vsel %vm201, %v183, 0
  %v242 = vsel %vm201, %v184, 0
  %v245 = vsel %vm201, %v185, 0
  %v248 = vsel %vm201, %v186, 0
  %v251 = vsel %vm201, %v187, 0
  %v254 = vsel %vm201, %v188, 0
  %v257 = vsel %vm201, %v189, 0
  %v260 = vsel %vm201, %v190, 0
  %v263 = vsel %vm201, %v191, 0
  %v266 = vsel %vm201, %v192, 0
  %v269 = vsel %vm201, %v193, 0
  %v272 = vsel %vm201, %v194, 0
  %v275 = vsel %vm201, %v195, 0
  %vm277 = vcmask 1043456
  %vm278 = vcmask 1044480
  %v279 = vsel %vm277, 4294967295, 65535
  %v280 = vsel %vm278, %v279, 0
  %v282 = vand.u32 %v200, %v280
  %284 = vmatprep.subr.bf16.mxu0 0
  %285 = vmatpush1.bf16.msra.mxu0 0
  %286 = vmatprep.subr.bf16.mxu0 0
  %287 = vmatpush1.bf16.msra.mxu0 0
  %288 = vmatprep.subr.bf16.mxu0 0
  %289 = vmatpush1.bf16.msra.mxu0 0
  %290 = vmatprep.subr.bf16.mxu0 0
  %291 = vmatpush1.bf16.msra.mxu0 0
  %292 = vmatprep.subr.bf16.mxu0 0
  %293 = vmatpush1.bf16.msra.mxu0 0
  %294 = vmatprep.subr.bf16.mxu0 0
  %295 = vmatpush1.bf16.msra.mxu0 0
  %296 = vmatprep.subr.bf16.mxu0 0
  %297 = vmatpush1.bf16.msra.mxu0 0
  %298 = vmatprep.subr.bf16.mxu0 0
  %299 = vmatpush1.bf16.msra.mxu0 %v282
  %300 = vmatprep.subr.bf16.mxu0 0
  %301 = vmatpush2.bf16.msra.mxu0 0
  %302 = vmatprep.subr.bf16.mxu0 0
  %303 = vmatpush2.bf16.msra.mxu0 0
  %304 = vmatprep.subr.bf16.mxu0 0
  %305 = vmatpush2.bf16.msra.mxu0 0
  %306 = vmatprep.subr.bf16.mxu0 0
  %307 = vmatpush2.bf16.msra.mxu0 0
  %308 = vmatprep.subr.bf16.mxu0 0
  %309 = vmatpush2.bf16.msra.mxu0 0
  %310 = vmatprep.subr.bf16.mxu0 0
  %311 = vmatpush2.bf16.msra.mxu0 0
  %312 = vmatprep.subr.bf16.mxu0 0
  %313 = vmatpush2.bf16.msra.mxu0 0
  %314 = vmatprep.subr.bf16.mxu0 0
  %315 = vmatpush2.bf16.msra.mxu0 0
  %316 = vmatprep.mubr.bf16.mxu0 0
  %317 = vmatmul.mubr.bf16.gmra.mxu0 %v203
  %v318 = vpop.f32.mrf.mxu0
  %v319 = vadd.f32 %v71, %v318
  %v320 = vpop.f32.mrf.mxu0
  %v321 = vpop.f32.mrf.mxu0
  %v322 = vadd.f32 %v71, %v321
  %v323 = vpop.f32.mrf.mxu0
  %324 = vmatprep.mubr.bf16.mxu0 0
  %325 = vmatmul.mubr.bf16.gmra.mxu0 %v206
  %v326 = vpop.f32.mrf.mxu0
  %v327 = vadd.f32 %v71, %v326
  %v328 = vpop.f32.mrf.mxu0
  %v329 = vpop.f32.mrf.mxu0
  %v330 = vadd.f32 %v71, %v329
  %v331 = vpop.f32.mrf.mxu0
  %332 = vmatprep.mubr.bf16.mxu0 0
  %333 = vmatmul.mubr.bf16.gmra.mxu0 %v209
  %v334 = vpop.f32.mrf.mxu0
  %v335 = vadd.f32 %v71, %v334
  %v336 = vpop.f32.mrf.mxu0
  %v337 = vpop.f32.mrf.mxu0
  %v338 = vadd.f32 %v71, %v337
  %v339 = vpop.f32.mrf.mxu0
  %340 = vmatprep.mubr.bf16.mxu0 0
  %341 = vmatmul.mubr.bf16.gmra.mxu0 %v212
  %v342 = vpop.f32.mrf.mxu0
  %v343 = vadd.f32 %v71, %v342
  %v344 = vpop.f32.mrf.mxu0
  %v345 = vpop.f32.mrf.mxu0
  %v346 = vadd.f32 %v71, %v345
  %v347 = vpop.f32.mrf.mxu0
  %348 = vmatprep.mubr.bf16.mxu0 0
  %349 = vmatmul.mubr.bf16.gmra.mxu0 %v215
  %v350 = vpop.f32.mrf.mxu0
  %v351 = vadd.f32 %v71, %v350
  %v352 = vpop.f32.mrf.mxu0
  %v353 = vpop.f32.mrf.mxu0
  %v354 = vadd.f32 %v71, %v353
  %v355 = vpop.f32.mrf.mxu0
  %356 = vmatprep.mubr.bf16.mxu0 0
  %357 = vmatmul.mubr.bf16.gmra.mxu0 %v218
  %v358 = vpop.f32.mrf.mxu0
  %v359 = vadd.f32 %v71, %v358
  %v360 = vpop.f32.mrf.mxu0
  %v361 = vpop.f32.mrf.mxu0
  %v362 = vadd.f32 %v71, %v361
  %v363 = vpop.f32.mrf.mxu0
  %364 = vmatprep.mubr.bf16.mxu0 0
  %365 = vmatmul.mubr.bf16.gmra.mxu0 %v221
  %v366 = vpop.f32.mrf.mxu0
  %v367 = vadd.f32 %v71, %v366
  %v368 = vpop.f32.mrf.mxu0
  %v369 = vpop.f32.mrf.mxu0
  %v370 = vadd.f32 %v71, %v369
  %v371 = vpop.f32.mrf.mxu0
  %372 = vmatprep.mubr.bf16.mxu0 0
  %373 = vmatmul.mubr.bf16.gmra.mxu0 %v224
  %v374 = vpop.f32.mrf.mxu0
  %v375 = vadd.f32 %v71, %v374
  %v376 = vpop.f32.mrf.mxu0
  %v377 = vpop.f32.mrf.mxu0
  %v378 = vadd.f32 %v71, %v377
  %v379 = vpop.f32.mrf.mxu0
  %380 = vmatprep.mubr.bf16.mxu0 0
  %381 = vmatmul.mubr.bf16.gmra.mxu0 %v227
  %v382 = vpop.f32.mrf.mxu0
  %v383 = vadd.f32 %v71, %v382
  %v384 = vpop.f32.mrf.mxu0
  %v385 = vpop.f32.mrf.mxu0
  %v386 = vadd.f32 %v71, %v385
  %v387 = vpop.f32.mrf.mxu0
  %388 = vmatprep.mubr.bf16.mxu0 0
  %389 = vmatmul.mubr.bf16.gmra.mxu0 %v230
  %v390 = vpop.f32.mrf.mxu0
  %v391 = vadd.f32 %v71, %v390
  %v392 = vpop.f32.mrf.mxu0
  %v393 = vpop.f32.mrf.mxu0
  %v394 = vadd.f32 %v71, %v393
  %v395 = vpop.f32.mrf.mxu0
  %396 = vmatprep.mubr.bf16.mxu0 0
  %397 = vmatmul.mubr.bf16.gmra.mxu0 %v233
  %v398 = vpop.f32.mrf.mxu0
  %v399 = vadd.f32 %v71, %v398
  %v400 = vpop.f32.mrf.mxu0
  %v401 = vpop.f32.mrf.mxu0
  %v402 = vadd.f32 %v71, %v401
  %v403 = vpop.f32.mrf.mxu0
  %404 = vmatprep.mubr.bf16.mxu0 0
  %405 = vmatmul.mubr.bf16.gmra.mxu0 %v236
  %v406 = vpop.f32.mrf.mxu0
  %v407 = vadd.f32 %v71, %v406
  %v408 = vpop.f32.mrf.mxu0
  %v409 = vpop.f32.mrf.mxu0
  %v410 = vadd.f32 %v71, %v409
  %v411 = vpop.f32.mrf.mxu0
  %412 = vmatprep.mubr.bf16.mxu0 0
  %413 = vmatmul.mubr.bf16.gmra.mxu0 %v239
  %v414 = vpop.f32.mrf.mxu0
  %v415 = vadd.f32 %v71, %v414
  %v416 = vpop.f32.mrf.mxu0
  %v417 = vpop.f32.mrf.mxu0
  %v418 = vadd.f32 %v71, %v417
  %v419 = vpop.f32.mrf.mxu0
  %420 = vmatprep.mubr.bf16.mxu0 0
  %421 = vmatmul.mubr.bf16.gmra.mxu0 %v242
  %v422 = vpop.f32.mrf.mxu0
  %v423 = vadd.f32 %v71, %v422
  %v424 = vpop.f32.mrf.mxu0
  %v425 = vpop.f32.mrf.mxu0
  %v426 = vadd.f32 %v71, %v425
  %v427 = vpop.f32.mrf.mxu0
  %428 = vmatprep.mubr.bf16.mxu0 0
  %429 = vmatmul.mubr.bf16.gmra.mxu0 %v245
  %v430 = vpop.f32.mrf.mxu0
  %v431 = vadd.f32 %v71, %v430
  %v432 = vpop.f32.mrf.mxu0
  %v433 = vpop.f32.mrf.mxu0
  %v434 = vadd.f32 %v71, %v433
  %v435 = vpop.f32.mrf.mxu0
  %436 = vmatprep.mubr.bf16.mxu0 0
  %437 = vmatmul.mubr.bf16.gmra.mxu0 %v248
  %v438 = vpop.f32.mrf.mxu0
  %v439 = vadd.f32 %v71, %v438
  %v440 = vpop.f32.mrf.mxu0
  %v441 = vpop.f32.mrf.mxu0
  %v442 = vadd.f32 %v71, %v441
  %v443 = vpop.f32.mrf.mxu0
  %444 = vmatprep.mubr.bf16.mxu0 0
  %445 = vmatmul.mubr.bf16.gmra.mxu0 %v251
  %v446 = vpop.f32.mrf.mxu0
  %v447 = vadd.f32 %v71, %v446
  %v448 = vpop.f32.mrf.mxu0
  %v449 = vpop.f32.mrf.mxu0
  %v450 = vadd.f32 %v71, %v449
  %v451 = vpop.f32.mrf.mxu0
  %452 = vmatprep.mubr.bf16.mxu0 0
  %453 = vmatmul.mubr.bf16.gmra.mxu0 %v254
  %v454 = vpop.f32.mrf.mxu0
  %v455 = vadd.f32 %v71, %v454
  %v456 = vpop.f32.mrf.mxu0
  %v457 = vpop.f32.mrf.mxu0
  %v458 = vadd.f32 %v71, %v457
  %v459 = vpop.f32.mrf.mxu0
  %460 = vmatprep.mubr.bf16.mxu0 0
  %461 = vmatmul.mubr.bf16.gmra.mxu0 %v257
  %v462 = vpop.f32.mrf.mxu0
  %v463 = vadd.f32 %v71, %v462
  %v464 = vpop.f32.mrf.mxu0
  %v465 = vpop.f32.mrf.mxu0
  %v466 = vadd.f32 %v71, %v465
  %v467 = vpop.f32.mrf.mxu0
  %468 = vmatprep.mubr.bf16.mxu0 0
  %469 = vmatmul.mubr.bf16.gmra.mxu0 %v260
  %v470 = vpop.f32.mrf.mxu0
  %v471 = vadd.f32 %v71, %v470
  %v472 = vpop.f32.mrf.mxu0
  %v473 = vpop.f32.mrf.mxu0
  %v474 = vadd.f32 %v71, %v473
  %v475 = vpop.f32.mrf.mxu0
  %476 = vmatprep.mubr.bf16.mxu0 0
  %477 = vmatmul.mubr.bf16.gmra.mxu0 %v263
  %v478 = vpop.f32.mrf.mxu0
  %v479 = vadd.f32 %v71, %v478
  %v480 = vpop.f32.mrf.mxu0
  %v481 = vpop.f32.mrf.mxu0
  %v482 = vadd.f32 %v71, %v481
  %v483 = vpop.f32.mrf.mxu0
  %484 = vmatprep.mubr.bf16.mxu0 0
  %485 = vmatmul.mubr.bf16.gmra.mxu0 %v266
  %v486 = vpop.f32.mrf.mxu0
  %v487 = vadd.f32 %v71, %v486
  %v488 = vpop.f32.mrf.mxu0
  %v489 = vpop.f32.mrf.mxu0
  %v490 = vadd.f32 %v71, %v489
  %v491 = vpop.f32.mrf.mxu0
  %492 = vmatprep.mubr.bf16.mxu0 0
  %493 = vmatmul.mubr.bf16.gmra.mxu0 %v269
  %v494 = vpop.f32.mrf.mxu0
  %v495 = vadd.f32 %v71, %v494
  %v496 = vpop.f32.mrf.mxu0
  %v497 = vpop.f32.mrf.mxu0
  %v498 = vadd.f32 %v71, %v497
  %v499 = vpop.f32.mrf.mxu0
  %500 = vmatprep.mubr.bf16.mxu0 0
  %501 = vmatmul.mubr.bf16.gmra.mxu0 %v272
  %v502 = vpop.f32.mrf.mxu0
  %v503 = vadd.f32 %v71, %v502
  %v504 = vpop.f32.mrf.mxu0
  %v505 = vpop.f32.mrf.mxu0
  %v506 = vadd.f32 %v71, %v505
  %v507 = vpop.f32.mrf.mxu0
  %508 = vmatprep.mubr.bf16.mxu0 0
  %509 = vmatmul.mubr.bf16.gmra.mxu0 %v275
  %v510 = vpop.f32.mrf.mxu0
  %v511 = vadd.f32 %v71, %v510
  %v512 = vpop.f32.mrf.mxu0
  %v513 = vpop.f32.mrf.mxu0
  %v514 = vpop.f32.mrf.mxu0
  %515 = vdwg.mxu0
  %v516 = vmax.f32 %v319, 0.0
  %v517 = vmax.f32 %v322, 0.0
  %v518 = vmax.f32 %v327, 0.0
  %v519 = vmax.f32 %v330, 0.0
  %v520 = vmax.f32 %v335, 0.0
  %v521 = vmax.f32 %v338, 0.0
  %v522 = vmax.f32 %v343, 0.0
  %v523 = vmax.f32 %v346, 0.0
  %v524 = vmax.f32 %v351, 0.0
  %v525 = vmax.f32 %v354, 0.0
  %v526 = vmax.f32 %v359, 0.0
  %v527 = vmax.f32 %v362, 0.0
  %v528 = vmax.f32 %v367, 0.0
  %v529 = vmax.f32 %v370, 0.0
  %v530 = vmax.f32 %v375, 0.0
  %v531 = vmax.f32 %v378, 0.0
  %v532 = vmax.f32 %v383, 0.0
  %v533 = vmax.f32 %v386, 0.0
  %v534 = vmax.f32 %v391, 0.0
  %v535 = vmax.f32 %v394, 0.0
  %v536 = vmax.f32 %v399, 0.0
  %v537 = vmax.f32 %v402, 0.0
  %v538 = vmax.f32 %v407, 0.0
  %v539 = vmax.f32 %v410, 0.0
  %v540 = vmax.f32 %v415, 0.0
  %v541 = vmax.f32 %v418, 0.0
  %v542 = vmax.f32 %v423, 0.0
  %v543 = vmax.f32 %v426, 0.0
  %v544 = vmax.f32 %v431, 0.0
  %v545 = vmax.f32 %v434, 0.0
  %v546 = vmax.f32 %v439, 0.0
  %v547 = vmax.f32 %v442, 0.0
  %v548 = vmax.f32 %v447, 0.0
  %v549 = vmax.f32 %v450, 0.0
  %v550 = vmax.f32 %v455, 0.0
  %v551 = vmax.f32 %v458, 0.0
  %v552 = vmax.f32 %v463, 0.0
  %v553 = vmax.f32 %v466, 0.0
  %v554 = vmax.f32 %v471, 0.0
  %v555 = vmax.f32 %v474, 0.0
  %v556 = vmax.f32 %v479, 0.0
  %v557 = vmax.f32 %v482, 0.0
  %v558 = vmax.f32 %v487, 0.0
  %v559 = vmax.f32 %v490, 0.0
  %v560 = vmax.f32 %v495, 0.0
  %v561 = vmax.f32 %v498, 0.0
  %v562 = vmax.f32 %v503, 0.0
  %v563 = vmax.f32 %v506, 0.0
  %v564 = vmax.f32 %v511, 0.0
  %s565 = scalar_lea.vmem %s0, 196
  %v566 = vld [vmem:[%s565] sm:$0xf]
  %v567 = vld [vmem:[%s565 + $0x4] sm:$0xf]
  %v568 = vld [vmem:[%s565 + $0x8] sm:$0xf]
  %v569 = vld [vmem:[%s565 + $0xc] sm:$0xf]
  %v570 = vld [vmem:[%s565 + $0x10] sm:$0xf]
  %v571 = vld [vmem:[%s565 + $0x14] sm:$0xf]
  %v572 = vld [vmem:[%s565 + $0x18] sm:$0xf]
  %v573 = vld [vmem:[%s565 + $0x1c] sm:$0xf]
  %v574 = vld [vmem:[%s565 + $0x20] sm:$0xf]
  %v575 = vld [vmem:[%s565 + $0x24] sm:$0xf]
  %v576 = vld [vmem:[%s565 + $0x28] sm:$0xf]
  %v577 = vld [vmem:[%s565 + $0x2c] sm:$0xf]
  %v578 = vld [vmem:[%s565 + $0x30] sm:$0xf]
  %v579 = vld [vmem:[%s565 + $0x34] sm:$0xf]
  %v580 = vld [vmem:[%s565 + $0x38] sm:$0xf]
  %v581 = vld [vmem:[%s565 + $0x3c] sm:$0xf]
  %v582 = vld [vmem:[%s565 + $0x40] sm:$0xf]
  %v583 = vld [vmem:[%s565 + $0x44] sm:$0xf]
  %v584 = vld [vmem:[%s565 + $0x48] sm:$0xf]
  %v585 = vld [vmem:[%s565 + $0x4c] sm:$0xf]
  %v586 = vld [vmem:[%s565 + $0x50] sm:$0xf]
  %v587 = vld [vmem:[%s565 + $0x54] sm:$0xf]
  %v588 = vld [vmem:[%s565 + $0x58] sm:$0xf]
  %v589 = vld [vmem:[%s565 + $0x5c] sm:$0xf]
  %v590 = vld [vmem:[%s565 + $0x60] sm:$0xf]
  %v591 = vld [vmem:[%s565 + $0x64] sm:$0xf]
  %v592 = vld [vmem:[%s565 + $0x68] sm:$0xf]
  %v593 = vld [vmem:[%s565 + $0x6c] sm:$0xf]
  %v594 = vld [vmem:[%s565 + $0x70] sm:$0xf]
  %v595 = vld [vmem:[%s565 + $0x74] sm:$0xf]
  %v596 = vld [vmem:[%s565 + $0x78] sm:$0xf]
  %v597 = vld [vmem:[%s565 + $0x7c] sm:$0xf]
  %v598 = vld [vmem:[%s565 + $0x80] sm:$0xf]
  %v599 = vld [vmem:[%s565 + $0x84] sm:$0xf]
  %v600 = vld [vmem:[%s565 + $0x88] sm:$0xf]
  %v601 = vld [vmem:[%s565 + $0x8c] sm:$0xf]
  %v602 = vld [vmem:[%s565 + $0x90] sm:$0xf]
  %v603 = vld [vmem:[%s565 + $0x94] sm:$0xf]
  %v604 = vld [vmem:[%s565 + $0x98] sm:$0xf]
  %v605 = vld [vmem:[%s565 + $0x9c] sm:$0xf]
  %v606 = vld [vmem:[%s565 + $0xa0] sm:$0xf]
  %v607 = vld [vmem:[%s565 + $0xa4] sm:$0xf]
  %v608 = vld [vmem:[%s565 + $0xa8] sm:$0xf]
  %v609 = vld [vmem:[%s565 + $0xac] sm:$0xf]
  %v610 = vld [vmem:[%s565 + $0xb0] sm:$0xf]
  %v611 = vld [vmem:[%s565 + $0xb4] sm:$0xf]
  %v612 = vld [vmem:[%s565 + $0xb8] sm:$0xf]
  %v613 = vld [vmem:[%s565 + $0xbc] sm:$0xf]
  %v614 = vld [vmem:[%s565 + $0xc0] sm:$0xf]
  %v664 = vunpack.c.l.b16 %v566
  %v665 = vunpack.c.l.b16 %v567
  %v666 = vunpack.c.l.b16 %v568
  %v667 = vunpack.c.l.b16 %v569
  %v668 = vunpack.c.l.b16 %v570
  %v669 = vunpack.c.l.b16 %v571
  %v670 = vunpack.c.l.b16 %v572
  %v671 = vunpack.c.l.b16 %v573
  %v672 = vunpack.c.l.b16 %v574
  %v673 = vunpack.c.l.b16 %v575
  %v674 = vunpack.c.l.b16 %v576
  %v675 = vunpack.c.l.b16 %v577
  %v676 = vunpack.c.l.b16 %v578
  %v677 = vunpack.c.l.b16 %v579
  %v678 = vunpack.c.l.b16 %v580
  %v679 = vunpack.c.l.b16 %v581
  %v680 = vunpack.c.l.b16 %v582
  %v681 = vunpack.c.l.b16 %v583
  %v682 = vunpack.c.l.b16 %v584
  %v683 = vunpack.c.l.b16 %v585
  %v684 = vunpack.c.l.b16 %v586
  %v685 = vunpack.c.l.b16 %v587
  %v686 = vunpack.c.l.b16 %v588
  %v687 = vunpack.c.l.b16 %v589
  %v688 = vunpack.c.l.b16 %v590
  %v689 = vunpack.c.l.b16 %v591
  %v690 = vunpack.c.l.b16 %v592
  %v691 = vunpack.c.l.b16 %v593
  %v692 = vunpack.c.l.b16 %v594
  %v693 = vunpack.c.l.b16 %v595
  %v694 = vunpack.c.l.b16 %v596
  %v695 = vunpack.c.l.b16 %v597
  %v696 = vunpack.c.l.b16 %v598
  %v697 = vunpack.c.l.b16 %v599
  %v698 = vunpack.c.l.b16 %v600
  %v699 = vunpack.c.l.b16 %v601
  %v700 = vunpack.c.l.b16 %v602
  %v701 = vunpack.c.l.b16 %v603
  %v702 = vunpack.c.l.b16 %v604
  %v703 = vunpack.c.l.b16 %v605
  %v704 = vunpack.c.l.b16 %v606
  %v705 = vunpack.c.l.b16 %v607
  %v706 = vunpack.c.l.b16 %v608
  %v707 = vunpack.c.l.b16 %v609
  %v708 = vunpack.c.l.b16 %v610
  %v709 = vunpack.c.l.b16 %v611
  %v710 = vunpack.c.l.b16 %v612
  %v711 = vunpack.c.l.b16 %v613
  %v712 = vunpack.c.l.b16 %v614
  %v713 = vpack.c.b16 %v665, %v664
  %v714 = vpack.c.b16 %v667, %v666
  %v715 = vpack.c.b16 %v669, %v668
  %v716 = vpack.c.b16 %v671, %v670
  %v717 = vpack.c.b16 %v673, %v672
  %v718 = vpack.c.b16 %v675, %v674
  %v719 = vpack.c.b16 %v677, %v676
  %v720 = vpack.c.b16 %v679, %v678
  %v721 = vpack.c.b16 %v681, %v680
  %v722 = vpack.c.b16 %v683, %v682
  %v723 = vpack.c.b16 %v685, %v684
  %v724 = vpack.c.b16 %v687, %v686
  %v725 = vpack.c.b16 %v689, %v688
  %v726 = vpack.c.b16 %v691, %v690
  %v727 = vpack.c.b16 %v693, %v692
  %v728 = vpack.c.b16 %v695, %v694
  %v729 = vpack.c.b16 %v697, %v696
  %v730 = vpack.c.b16 %v699, %v698
  %v731 = vpack.c.b16 %v701, %v700
  %v732 = vpack.c.b16 %v703, %v702
  %v733 = vpack.c.b16 %v705, %v704
  %v734 = vpack.c.b16 %v707, %v706
  %v735 = vpack.c.b16 %v709, %v708
  %v736 = vpack.c.b16 %v711, %v710
  %v737 = vpack.c.b16 %v712, %v712
  %v739 = vsel %vm201, %v713, 0
  %v742 = vsel %vm201, %v714, 0
  %v745 = vsel %vm201, %v715, 0
  %v748 = vsel %vm201, %v716, 0
  %v751 = vsel %vm201, %v717, 0
  %v754 = vsel %vm201, %v718, 0
  %v757 = vsel %vm201, %v719, 0
  %v760 = vsel %vm201, %v720, 0
  %v763 = vsel %vm201, %v721, 0
  %v766 = vsel %vm201, %v722, 0
  %v769 = vsel %vm201, %v723, 0
  %v772 = vsel %vm201, %v724, 0
  %v775 = vsel %vm201, %v725, 0
  %v778 = vsel %vm201, %v726, 0
  %v781 = vsel %vm201, %v727, 0
  %v784 = vsel %vm201, %v728, 0
  %v787 = vsel %vm201, %v729, 0
  %v790 = vsel %vm201, %v730, 0
  %v793 = vsel %vm201, %v731, 0
  %v796 = vsel %vm201, %v732, 0
  %v799 = vsel %vm201, %v733, 0
  %v802 = vsel %vm201, %v734, 0
  %v805 = vsel %vm201, %v735, 0
  %v808 = vsel %vm201, %v736, 0
  %v811 = vsel %vm201, %v737, 0
  %813 = vmatprep.subr.bf16.mxu0 0
  %814 = vmatpush1.bf16.msra.mxu0 0
  %815 = vmatprep.subr.bf16.mxu0 0
  %816 = vmatpush1.bf16.msra.mxu0 0
  %817 = vmatprep.subr.bf16.mxu0 0
  %818 = vmatpush1.bf16.msra.mxu0 0
  %819 = vmatprep.subr.bf16.mxu0 0
  %820 = vmatpush1.bf16.msra.mxu0 0
  %821 = vmatprep.subr.bf16.mxu0 0
  %822 = vmatpush1.bf16.msra.mxu0 0
  %823 = vmatprep.subr.bf16.mxu0 0
  %824 = vmatpush1.bf16.msra.mxu0 0
  %825 = vmatprep.subr.bf16.mxu0 0
  %826 = vmatpush1.bf16.msra.mxu0 0
  %827 = vmatprep.subr.bf16.mxu0 0
  %828 = vmatpush1.bf16.msra.mxu0 %v282
  %829 = vmatprep.subr.bf16.mxu0 0
  %830 = vmatpush2.bf16.msra.mxu0 0
  %831 = vmatprep.subr.bf16.mxu0 0
  %832 = vmatpush2.bf16.msra.mxu0 0
  %833 = vmatprep.subr.bf16.mxu0 0
  %834 = vmatpush2.bf16.msra.mxu0 0
  %835 = vmatprep.subr.bf16.mxu0 0
  %836 = vmatpush2.bf16.msra.mxu0 0
  %837 = vmatprep.subr.bf16.mxu0 0
  %838 = vmatpush2.bf16.msra.mxu0 0
  %839 = vmatprep.subr.bf16.mxu0 0
  %840 = vmatpush2.bf16.msra.mxu0 0
  %841 = vmatprep.subr.bf16.mxu0 0
  %842 = vmatpush2.bf16.msra.mxu0 0
  %843 = vmatprep.subr.bf16.mxu0 0
  %844 = vmatpush2.bf16.msra.mxu0 0
  %845 = vmatprep.mubr.bf16.mxu0 0
  %846 = vmatmul.mubr.bf16.gmra.mxu0 %v739
  %v847 = vpop.f32.mrf.mxu0
  %v848 = vadd.f32 %v71, %v847
  %v849 = vpop.f32.mrf.mxu0
  %v850 = vpop.f32.mrf.mxu0
  %v851 = vadd.f32 %v71, %v850
  %v852 = vpop.f32.mrf.mxu0
  %853 = vmatprep.mubr.bf16.mxu0 0
  %854 = vmatmul.mubr.bf16.gmra.mxu0 %v742
  %v855 = vpop.f32.mrf.mxu0
  %v856 = vadd.f32 %v71, %v855
  %v857 = vpop.f32.mrf.mxu0
  %v858 = vpop.f32.mrf.mxu0
  %v859 = vadd.f32 %v71, %v858
  %v860 = vpop.f32.mrf.mxu0
  %861 = vmatprep.mubr.bf16.mxu0 0
  %862 = vmatmul.mubr.bf16.gmra.mxu0 %v745
  %v863 = vpop.f32.mrf.mxu0
  %v864 = vadd.f32 %v71, %v863
  %v865 = vpop.f32.mrf.mxu0
  %v866 = vpop.f32.mrf.mxu0
  %v867 = vadd.f32 %v71, %v866
  %v868 = vpop.f32.mrf.mxu0
  %869 = vmatprep.mubr.bf16.mxu0 0
  %870 = vmatmul.mubr.bf16.gmra.mxu0 %v748
  %v871 = vpop.f32.mrf.mxu0
  %v872 = vadd.f32 %v71, %v871
  %v873 = vpop.f32.mrf.mxu0
  %v874 = vpop.f32.mrf.mxu0
  %v875 = vadd.f32 %v71, %v874
  %v876 = vpop.f32.mrf.mxu0
  %877 = vmatprep.mubr.bf16.mxu0 0
  %878 = vmatmul.mubr.bf16.gmra.mxu0 %v751
  %v879 = vpop.f32.mrf.mxu0
  %v880 = vadd.f32 %v71, %v879
  %v881 = vpop.f32.mrf.mxu0
  %v882 = vpop.f32.mrf.mxu0
  %v883 = vadd.f32 %v71, %v882
  %v884 = vpop.f32.mrf.mxu0
  %885 = vmatprep.mubr.bf16.mxu0 0
  %886 = vmatmul.mubr.bf16.gmra.mxu0 %v754
  %v887 = vpop.f32.mrf.mxu0
  %v888 = vadd.f32 %v71, %v887
  %v889 = vpop.f32.mrf.mxu0
  %v890 = vpop.f32.mrf.mxu0
  %v891 = vadd.f32 %v71, %v890
  %v892 = vpop.f32.mrf.mxu0
  %893 = vmatprep.mubr.bf16.mxu0 0
  %894 = vmatmul.mubr.bf16.gmra.mxu0 %v757
  %v895 = vpop.f32.mrf.mxu0
  %v896 = vadd.f32 %v71, %v895
  %v897 = vpop.f32.mrf.mxu0
  %v898 = vpop.f32.mrf.mxu0
  %v899 = vadd.f32 %v71, %v898
  %v900 = vpop.f32.mrf.mxu0
  %901 = vmatprep.mubr.bf16.mxu0 0
  %902 = vmatmul.mubr.bf16.gmra.mxu0 %v760
  %v903 = vpop.f32.mrf.mxu0
  %v904 = vadd.f32 %v71, %v903
  %v905 = vpop.f32.mrf.mxu0
  %v906 = vpop.f32.mrf.mxu0
  %v907 = vadd.f32 %v71, %v906
  %v908 = vpop.f32.mrf.mxu0
  %909 = vmatprep.mubr.bf16.mxu0 0
  %910 = vmatmul.mubr.bf16.gmra.mxu0 %v763
  %v911 = vpop.f32.mrf.mxu0
  %v912 = vadd.f32 %v71, %v911
  %v913 = vpop.f32.mrf.mxu0
  %v914 = vpop.f32.mrf.mxu0
  %v915 = vadd.f32 %v71, %v914
  %v916 = vpop.f32.mrf.mxu0
  %917 = vmatprep.mubr.bf16.mxu0 0
  %918 = vmatmul.mubr.bf16.gmra.mxu0 %v766
  %v919 = vpop.f32.mrf.mxu0
  %v920 = vadd.f32 %v71, %v919
  %v921 = vpop.f32.mrf.mxu0
  %v922 = vpop.f32.mrf.mxu0
  %v923 = vadd.f32 %v71, %v922
  %v924 = vpop.f32.mrf.mxu0
  %925 = vmatprep.mubr.bf16.mxu0 0
  %926 = vmatmul.mubr.bf16.gmra.mxu0 %v769
  %v927 = vpop.f32.mrf.mxu0
  %v928 = vadd.f32 %v71, %v927
  %v929 = vpop.f32.mrf.mxu0
  %v930 = vpop.f32.mrf.mxu0
  %v931 = vadd.f32 %v71, %v930
  %v932 = vpop.f32.mrf.mxu0
  %933 = vmatprep.mubr.bf16.mxu0 0
  %934 = vmatmul.mubr.bf16.gmra.mxu0 %v772
  %v935 = vpop.f32.mrf.mxu0
  %v936 = vadd.f32 %v71, %v935
  %v937 = vpop.f32.mrf.mxu0
  %v938 = vpop.f32.mrf.mxu0
  %v939 = vadd.f32 %v71, %v938
  %v940 = vpop.f32.mrf.mxu0
  %941 = vmatprep.mubr.bf16.mxu0 0
  %942 = vmatmul.mubr.bf16.gmra.mxu0 %v775
  %v943 = vpop.f32.mrf.mxu0
  %v944 = vadd.f32 %v71, %v943
  %v945 = vpop.f32.mrf.mxu0
  %v946 = vpop.f32.mrf.mxu0
  %v947 = vadd.f32 %v71, %v946
  %v948 = vpop.f32.mrf.mxu0
  %949 = vmatprep.mubr.bf16.mxu0 0
  %950 = vmatmul.mubr.bf16.gmra.mxu0 %v778
  %v951 = vpop.f32.mrf.mxu0
  %v952 = vadd.f32 %v71, %v951
  %v953 = vpop.f32.mrf.mxu0
  %v954 = vpop.f32.mrf.mxu0
  %v955 = vadd.f32 %v71, %v954
  %v956 = vpop.f32.mrf.mxu0
  %957 = vmatprep.mubr.bf16.mxu0 0
  %958 = vmatmul.mubr.bf16.gmra.mxu0 %v781
  %v959 = vpop.f32.mrf.mxu0
  %v960 = vadd.f32 %v71, %v959
  %v961 = vpop.f32.mrf.mxu0
  %v962 = vpop.f32.mrf.mxu0
  %v963 = vadd.f32 %v71, %v962
  %v964 = vpop.f32.mrf.mxu0
  %965 = vmatprep.mubr.bf16.mxu0 0
  %966 = vmatmul.mubr.bf16.gmra.mxu0 %v784
  %v967 = vpop.f32.mrf.mxu0
  %v968 = vadd.f32 %v71, %v967
  %v969 = vpop.f32.mrf.mxu0
  %v970 = vpop.f32.mrf.mxu0
  %v971 = vadd.f32 %v71, %v970
  %v972 = vpop.f32.mrf.mxu0
  %973 = vmatprep.mubr.bf16.mxu0 0
  %974 = vmatmul.mubr.bf16.gmra.mxu0 %v787
  %v975 = vpop.f32.mrf.mxu0
  %v976 = vadd.f32 %v71, %v975
  %v977 = vpop.f32.mrf.mxu0
  %v978 = vpop.f32.mrf.mxu0
  %v979 = vadd.f32 %v71, %v978
  %v980 = vpop.f32.mrf.mxu0
  %981 = vmatprep.mubr.bf16.mxu0 0
  %982 = vmatmul.mubr.bf16.gmra.mxu0 %v790
  %v983 = vpop.f32.mrf.mxu0
  %v984 = vadd.f32 %v71, %v983
  %v985 = vpop.f32.mrf.mxu0
  %v986 = vpop.f32.mrf.mxu0
  %v987 = vadd.f32 %v71, %v986
  %v988 = vpop.f32.mrf.mxu0
  %989 = vmatprep.mubr.bf16.mxu0 0
  %990 = vmatmul.mubr.bf16.gmra.mxu0 %v793
  %v991 = vpop.f32.mrf.mxu0
  %v992 = vadd.f32 %v71, %v991
  %v993 = vpop.f32.mrf.mxu0
  %v994 = vpop.f32.mrf.mxu0
  %v995 = vadd.f32 %v71, %v994
  %v996 = vpop.f32.mrf.mxu0
  %997 = vmatprep.mubr.bf16.mxu0 0
  %998 = vmatmul.mubr.bf16.gmra.mxu0 %v796
  %v999 = vpop.f32.mrf.mxu0
  %v1000 = vadd.f32 %v71, %v999
  %v1001 = vpop.f32.mrf.mxu0
  %v1002 = vpop.f32.mrf.mxu0
  %v1003 = vadd.f32 %v71, %v1002
  %v1004 = vpop.f32.mrf.mxu0
  %1005 = vmatprep.mubr.bf16.mxu0 0
  %1006 = vmatmul.mubr.bf16.gmra.mxu0 %v799
  %v1007 = vpop.f32.mrf.mxu0
  %v1008 = vadd.f32 %v71, %v1007
  %v1009 = vpop.f32.mrf.mxu0
  %v1010 = vpop.f32.mrf.mxu0
  %v1011 = vadd.f32 %v71, %v1010
  %v1012 = vpop.f32.mrf.mxu0
  %1013 = vmatprep.mubr.bf16.mxu0 0
  %1014 = vmatmul.mubr.bf16.gmra.mxu0 %v802
  %v1015 = vpop.f32.mrf.mxu0
  %v1016 = vadd.f32 %v71, %v1015
  %v1017 = vpop.f32.mrf.mxu0
  %v1018 = vpop.f32.mrf.mxu0
  %v1019 = vadd.f32 %v71, %v1018
  %v1020 = vpop.f32.mrf.mxu0
  %1021 = vmatprep.mubr.bf16.mxu0 0
  %1022 = vmatmul.mubr.bf16.gmra.mxu0 %v805
  %v1023 = vpop.f32.mrf.mxu0
  %v1024 = vadd.f32 %v71, %v1023
  %v1025 = vpop.f32.mrf.mxu0
  %v1026 = vpop.f32.mrf.mxu0
  %v1027 = vadd.f32 %v71, %v1026
  %v1028 = vpop.f32.mrf.mxu0
  %1029 = vmatprep.mubr.bf16.mxu0 0
  %1030 = vmatmul.mubr.bf16.gmra.mxu0 %v808
  %v1031 = vpop.f32.mrf.mxu0
  %v1032 = vadd.f32 %v71, %v1031
  %v1033 = vpop.f32.mrf.mxu0
  %v1034 = vpop.f32.mrf.mxu0
  %v1035 = vadd.f32 %v71, %v1034
  %v1036 = vpop.f32.mrf.mxu0
  %1037 = vmatprep.mubr.bf16.mxu0 0
  %1038 = vmatmul.mubr.bf16.gmra.mxu0 %v811
  %v1039 = vpop.f32.mrf.mxu0
  %v1040 = vadd.f32 %v71, %v1039
  %v1041 = vpop.f32.mrf.mxu0
  %v1042 = vpop.f32.mrf.mxu0
  %v1043 = vpop.f32.mrf.mxu0
  %1044 = vdwg.mxu0
  %v1045 = vmax.f32 %v848, 0.0
  %v1046 = vmax.f32 %v851, 0.0
  %v1047 = vmax.f32 %v856, 0.0
  %v1048 = vmax.f32 %v859, 0.0
  %v1049 = vmax.f32 %v864, 0.0
  %v1050 = vmax.f32 %v867, 0.0
  %v1051 = vmax.f32 %v872, 0.0
  %v1052 = vmax.f32 %v875, 0.0
  %v1053 = vmax.f32 %v880, 0.0
  %v1054 = vmax.f32 %v883, 0.0
  %v1055 = vmax.f32 %v888, 0.0
  %v1056 = vmax.f32 %v891, 0.0
  %v1057 = vmax.f32 %v896, 0.0
  %v1058 = vmax.f32 %v899, 0.0
  %v1059 = vmax.f32 %v904, 0.0
  %v1060 = vmax.f32 %v907, 0.0
  %v1061 = vmax.f32 %v912, 0.0
  %v1062 = vmax.f32 %v915, 0.0
  %v1063 = vmax.f32 %v920, 0.0
  %v1064 = vmax.f32 %v923, 0.0
  %v1065 = vmax.f32 %v928, 0.0
  %v1066 = vmax.f32 %v931, 0.0
  %v1067 = vmax.f32 %v936, 0.0
  %v1068 = vmax.f32 %v939, 0.0
  %v1069 = vmax.f32 %v944, 0.0
  %v1070 = vmax.f32 %v947, 0.0
  %v1071 = vmax.f32 %v952, 0.0
  %v1072 = vmax.f32 %v955, 0.0
  %v1073 = vmax.f32 %v960, 0.0
  %v1074 = vmax.f32 %v963, 0.0
  %v1075 = vmax.f32 %v968, 0.0
  %v1076 = vmax.f32 %v971, 0.0
  %v1077 = vmax.f32 %v976, 0.0
  %v1078 = vmax.f32 %v979, 0.0
  %v1079 = vmax.f32 %v984, 0.0
  %v1080 = vmax.f32 %v987, 0.0
  %v1081 = vmax.f32 %v992, 0.0
  %v1082 = vmax.f32 %v995, 0.0
  %v1083 = vmax.f32 %v1000, 0.0
  %v1084 = vmax.f32 %v1003, 0.0
  %v1085 = vmax.f32 %v1008, 0.0
  %v1086 = vmax.f32 %v1011, 0.0
  %v1087 = vmax.f32 %v1016, 0.0
  %v1088 = vmax.f32 %v1019, 0.0
  %v1089 = vmax.f32 %v1024, 0.0
  %v1090 = vmax.f32 %v1027, 0.0
  %v1091 = vmax.f32 %v1032, 0.0
  %v1092 = vmax.f32 %v1035, 0.0
  %v1093 = vmax.f32 %v1040, 0.0
  %v1094 = vmax.f32 %v516, %v1045
  %v1095 = vmax.f32 %v517, %v1046
  %v1096 = vmax.f32 %v518, %v1047
  %v1097 = vmax.f32 %v519, %v1048
  %v1098 = vmax.f32 %v520, %v1049
  %v1099 = vmax.f32 %v521, %v1050
  %v1100 = vmax.f32 %v522, %v1051
  %v1101 = vmax.f32 %v523, %v1052
  %v1102 = vmax.f32 %v524, %v1053
  %v1103 = vmax.f32 %v525, %v1054
  %v1104 = vmax.f32 %v526, %v1055
  %v1105 = vmax.f32 %v527, %v1056
  %v1106 = vmax.f32 %v528, %v1057
  %v1107 = vmax.f32 %v529, %v1058
  %v1108 = vmax.f32 %v530, %v1059
  %v1109 = vmax.f32 %v531, %v1060
  %v1110 = vmax.f32 %v532, %v1061
  %v1111 = vmax.f32 %v533, %v1062
  %v1112 = vmax.f32 %v534, %v1063
  %v1113 = vmax.f32 %v535, %v1064
  %v1114 = vmax.f32 %v536, %v1065
  %v1115 = vmax.f32 %v537, %v1066
  %v1116 = vmax.f32 %v538, %v1067
  %v1117 = vmax.f32 %v539, %v1068
  %v1118 = vmax.f32 %v540, %v1069
  %v1119 = vmax.f32 %v541, %v1070
  %v1120 = vmax.f32 %v542, %v1071
  %v1121 = vmax.f32 %v543, %v1072
  %v1122 = vmax.f32 %v544, %v1073
  %v1123 = vmax.f32 %v545, %v1074
  %v1124 = vmax.f32 %v546, %v1075
  %v1125 = vmax.f32 %v547, %v1076
  %v1126 = vmax.f32 %v548, %v1077
  %v1127 = vmax.f32 %v549, %v1078
  %v1128 = vmax.f32 %v550, %v1079
  %v1129 = vmax.f32 %v551, %v1080
  %v1130 = vmax.f32 %v552, %v1081
  %v1131 = vmax.f32 %v553, %v1082
  %v1132 = vmax.f32 %v554, %v1083
  %v1133 = vmax.f32 %v555, %v1084
  %v1134 = vmax.f32 %v556, %v1085
  %v1135 = vmax.f32 %v557, %v1086
  %v1136 = vmax.f32 %v558, %v1087
  %v1137 = vmax.f32 %v559, %v1088
  %v1138 = vmax.f32 %v560, %v1089
  %v1139 = vmax.f32 %v561, %v1090
  %v1140 = vmax.f32 %v562, %v1091
  %v1141 = vmax.f32 %v563, %v1092
  %v1142 = vmax.f32 %v564, %v1093
  %s1143 = scalar_lea.vmem %s0, 392
  %v1144 = vld [vmem:[%s1143] sm:$0xf]
  %v1145 = vld [vmem:[%s1143 + $0x4] sm:$0xf]
  %v1146 = vld [vmem:[%s1143 + $0x8] sm:$0xf]
  %v1147 = vld [vmem:[%s1143 + $0xc] sm:$0xf]
  %v1148 = vld [vmem:[%s1143 + $0x10] sm:$0xf]
  %v1149 = vld [vmem:[%s1143 + $0x14] sm:$0xf]
  %v1150 = vld [vmem:[%s1143 + $0x18] sm:$0xf]
  %v1151 = vld [vmem:[%s1143 + $0x1c] sm:$0xf]
  %v1152 = vld [vmem:[%s1143 + $0x20] sm:$0xf]
  %v1153 = vld [vmem:[%s1143 + $0x24] sm:$0xf]
  %v1154 = vld [vmem:[%s1143 + $0x28] sm:$0xf]
  %v1155 = vld [vmem:[%s1143 + $0x2c] sm:$0xf]
  %v1156 = vld [vmem:[%s1143 + $0x30] sm:$0xf]
  %v1157 = vld [vmem:[%s1143 + $0x34] sm:$0xf]
  %v1158 = vld [vmem:[%s1143 + $0x38] sm:$0xf]
  %v1159 = vld [vmem:[%s1143 + $0x3c] sm:$0xf]
  %v1160 = vld [vmem:[%s1143 + $0x40] sm:$0xf]
  %v1161 = vld [vmem:[%s1143 + $0x44] sm:$0xf]
  %v1162 = vld [vmem:[%s1143 + $0x48] sm:$0xf]
  %v1163 = vld [vmem:[%s1143 + $0x4c] sm:$0xf]
  %v1164 = vld [vmem:[%s1143 + $0x50] sm:$0xf]
  %v1165 = vld [vmem:[%s1143 + $0x54] sm:$0xf]
  %v1166 = vld [vmem:[%s1143 + $0x58] sm:$0xf]
  %v1167 = vld [vmem:[%s1143 + $0x5c] sm:$0xf]
  %v1168 = vld [vmem:[%s1143 + $0x60] sm:$0xf]
  %v1169 = vld [vmem:[%s1143 + $0x64] sm:$0xf]
  %v1170 = vld [vmem:[%s1143 + $0x68] sm:$0xf]
  %v1171 = vld [vmem:[%s1143 + $0x6c] sm:$0xf]
  %v1172 = vld [vmem:[%s1143 + $0x70] sm:$0xf]
  %v1173 = vld [vmem:[%s1143 + $0x74] sm:$0xf]
  %v1174 = vld [vmem:[%s1143 + $0x78] sm:$0xf]
  %v1175 = vld [vmem:[%s1143 + $0x7c] sm:$0xf]
  %v1176 = vld [vmem:[%s1143 + $0x80] sm:$0xf]
  %v1177 = vld [vmem:[%s1143 + $0x84] sm:$0xf]
  %v1178 = vld [vmem:[%s1143 + $0x88] sm:$0xf]
  %v1179 = vld [vmem:[%s1143 + $0x8c] sm:$0xf]
  %v1180 = vld [vmem:[%s1143 + $0x90] sm:$0xf]
  %v1181 = vld [vmem:[%s1143 + $0x94] sm:$0xf]
  %v1182 = vld [vmem:[%s1143 + $0x98] sm:$0xf]
  %v1183 = vld [vmem:[%s1143 + $0x9c] sm:$0xf]
  %v1184 = vld [vmem:[%s1143 + $0xa0] sm:$0xf]
  %v1185 = vld [vmem:[%s1143 + $0xa4] sm:$0xf]
  %v1186 = vld [vmem:[%s1143 + $0xa8] sm:$0xf]
  %v1187 = vld [vmem:[%s1143 + $0xac] sm:$0xf]
  %v1188 = vld [vmem:[%s1143 + $0xb0] sm:$0xf]
  %v1189 = vld [vmem:[%s1143 + $0xb4] sm:$0xf]
  %v1190 = vld [vmem:[%s1143 + $0xb8] sm:$0xf]
  %v1191 = vld [vmem:[%s1143 + $0xbc] sm:$0xf]
  %v1192 = vld [vmem:[%s1143 + $0xc0] sm:$0xf]
  %v1242 = vunpack.c.l.b16 %v1144
  %v1243 = vunpack.c.l.b16 %v1145
  %v1244 = vunpack.c.l.b16 %v1146
  %v1245 = vunpack.c.l.b16 %v1147
  %v1246 = vunpack.c.l.b16 %v1148
  %v1247 = vunpack.c.l.b16 %v1149
  %v1248 = vunpack.c.l.b16 %v1150
  %v1249 = vunpack.c.l.b16 %v1151
  %v1250 = vunpack.c.l.b16 %v1152
  %v1251 = vunpack.c.l.b16 %v1153
  %v1252 = vunpack.c.l.b16 %v1154
  %v1253 = vunpack.c.l.b16 %v1155
  %v1254 = vunpack.c.l.b16 %v1156
  %v1255 = vunpack.c.l.b16 %v1157
  %v1256 = vunpack.c.l.b16 %v1158
  %v1257 = vunpack.c.l.b16 %v1159
  %v1258 = vunpack.c.l.b16 %v1160
  %v1259 = vunpack.c.l.b16 %v1161
  %v1260 = vunpack.c.l.b16 %v1162
  %v1261 = vunpack.c.l.b16 %v1163
  %v1262 = vunpack.c.l.b16 %v1164
  %v1263 = vunpack.c.l.b16 %v1165
  %v1264 = vunpack.c.l.b16 %v1166
  %v1265 = vunpack.c.l.b16 %v1167
  %v1266 = vunpack.c.l.b16 %v1168
  %v1267 = vunpack.c.l.b16 %v1169
  %v1268 = vunpack.c.l.b16 %v1170
  %v1269 = vunpack.c.l.b16 %v1171
  %v1270 = vunpack.c.l.b16 %v1172
  %v1271 = vunpack.c.l.b16 %v1173
  %v1272 = vunpack.c.l.b16 %v1174
  %v1273 = vunpack.c.l.b16 %v1175
  %v1274 = vunpack.c.l.b16 %v1176
  %v1275 = vunpack.c.l.b16 %v1177
  %v1276 = vunpack.c.l.b16 %v1178
  %v1277 = vunpack.c.l.b16 %v1179
  %v1278 = vunpack.c.l.b16 %v1180
  %v1279 = vunpack.c.l.b16 %v1181
  %v1280 = vunpack.c.l.b16 %v1182
  %v1281 = vunpack.c.l.b16 %v1183
  %v1282 = vunpack.c.l.b16 %v1184
  %v1283 = vunpack.c.l.b16 %v1185
  %v1284 = vunpack.c.l.b16 %v1186
  %v1285 = vunpack.c.l.b16 %v1187
  %v1286 = vunpack.c.l.b16 %v1188
  %v1287 = vunpack.c.l.b16 %v1189
  %v1288 = vunpack.c.l.b16 %v1190
  %v1289 = vunpack.c.l.b16 %v1191
  %v1290 = vunpack.c.l.b16 %v1192
  %v1291 = vpack.c.b16 %v1243, %v1242
  %v1292 = vpack.c.b16 %v1245, %v1244
  %v1293 = vpack.c.b16 %v1247, %v1246
  %v1294 = vpack.c.b16 %v1249, %v1248
  %v1295 = vpack.c.b16 %v1251, %v1250
  %v1296 = vpack.c.b16 %v1253, %v1252
  %v1297 = vpack.c.b16 %v1255, %v1254
  %v1298 = vpack.c.b16 %v1257, %v1256
  %v1299 = vpack.c.b16 %v1259, %v1258
  %v1300 = vpack.c.b16 %v1261, %v1260
  %v1301 = vpack.c.b16 %v1263, %v1262
  %v1302 = vpack.c.b16 %v1265, %v1264
  %v1303 = vpack.c.b16 %v1267, %v1266
  %v1304 = vpack.c.b16 %v1269, %v1268
  %v1305 = vpack.c.b16 %v1271, %v1270
  %v1306 = vpack.c.b16 %v1273, %v1272
  %v1307 = vpack.c.b16 %v1275, %v1274
  %v1308 = vpack.c.b16 %v1277, %v1276
  %v1309 = vpack.c.b16 %v1279, %v1278
  %v1310 = vpack.c.b16 %v1281, %v1280
  %v1311 = vpack.c.b16 %v1283, %v1282
  %v1312 = vpack.c.b16 %v1285, %v1284
  %v1313 = vpack.c.b16 %v1287, %v1286
  %v1314 = vpack.c.b16 %v1289, %v1288
  %v1315 = vpack.c.b16 %v1290, %v1290
  %v1317 = vsel %vm201, %v1291, 0
  %v1320 = vsel %vm201, %v1292, 0
  %v1323 = vsel %vm201, %v1293, 0
  %v1326 = vsel %vm201, %v1294, 0
  %v1329 = vsel %vm201, %v1295, 0
  %v1332 = vsel %vm201, %v1296, 0
  %v1335 = vsel %vm201, %v1297, 0
  %v1338 = vsel %vm201, %v1298, 0
  %v1341 = vsel %vm201, %v1299, 0
  %v1344 = vsel %vm201, %v1300, 0
  %v1347 = vsel %vm201, %v1301, 0
  %v1350 = vsel %vm201, %v1302, 0
  %v1353 = vsel %vm201, %v1303, 0
  %v1356 = vsel %vm201, %v1304, 0
  %v1359 = vsel %vm201, %v1305, 0
  %v1362 = vsel %vm201, %v1306, 0
  %v1365 = vsel %vm201, %v1307, 0
  %v1368 = vsel %vm201, %v1308, 0
  %v1371 = vsel %vm201, %v1309, 0
  %v1374 = vsel %vm201, %v1310, 0
  %v1377 = vsel %vm201, %v1311, 0
  %v1380 = vsel %vm201, %v1312, 0
  %v1383 = vsel %vm201, %v1313, 0
  %v1386 = vsel %vm201, %v1314, 0
  %v1389 = vsel %vm201, %v1315, 0
  %1391 = vmatprep.subr.bf16.mxu0 0
  %1392 = vmatpush1.bf16.msra.mxu0 0
  %1393 = vmatprep.subr.bf16.mxu0 0
  %1394 = vmatpush1.bf16.msra.mxu0 0
  %1395 = vmatprep.subr.bf16.mxu0 0
  %1396 = vmatpush1.bf16.msra.mxu0 0
  %1397 = vmatprep.subr.bf16.mxu0 0
  %1398 = vmatpush1.bf16.msra.mxu0 0
  %1399 = vmatprep.subr.bf16.mxu0 0
  %1400 = vmatpush1.bf16.msra.mxu0 0
  %1401 = vmatprep.subr.bf16.mxu0 0
  %1402 = vmatpush1.bf16.msra.mxu0 0
  %1403 = vmatprep.subr.bf16.mxu0 0
  %1404 = vmatpush1.bf16.msra.mxu0 0
  %1405 = vmatprep.subr.bf16.mxu0 0
  %1406 = vmatpush1.bf16.msra.mxu0 %v282
  %1407 = vmatprep.subr.bf16.mxu0 0
  %1408 = vmatpush2.bf16.msra.mxu0 0
  %1409 = vmatprep.subr.bf16.mxu0 0
  %1410 = vmatpush2.bf16.msra.mxu0 0
  %1411 = vmatprep.subr.bf16.mxu0 0
  %1412 = vmatpush2.bf16.msra.mxu0 0
  %1413 = vmatprep.subr.bf16.mxu0 0
  %1414 = vmatpush2.bf16.msra.mxu0 0
  %1415 = vmatprep.subr.bf16.mxu0 0
  %1416 = vmatpush2.bf16.msra.mxu0 0
  %1417 = vmatprep.subr.bf16.mxu0 0
  %1418 = vmatpush2.bf16.msra.mxu0 0
  %1419 = vmatprep.subr.bf16.mxu0 0
  %1420 = vmatpush2.bf16.msra.mxu0 0
  %1421 = vmatprep.subr.bf16.mxu0 0
  %1422 = vmatpush2.bf16.msra.mxu0 0
  %1423 = vmatprep.mubr.bf16.mxu0 0
  %1424 = vmatmul.mubr.bf16.gmra.mxu0 %v1317
  %v1425 = vpop.f32.mrf.mxu0
  %v1426 = vadd.f32 %v71, %v1425
  %v1427 = vpop.f32.mrf.mxu0
  %v1428 = vpop.f32.mrf.mxu0
  %v1429 = vadd.f32 %v71, %v1428
  %v1430 = vpop.f32.mrf.mxu0
  %1431 = vmatprep.mubr.bf16.mxu0 0
  %1432 = vmatmul.mubr.bf16.gmra.mxu0 %v1320
  %v1433 = vpop.f32.mrf.mxu0
  %v1434 = vadd.f32 %v71, %v1433
  %v1435 = vpop.f32.mrf.mxu0
  %v1436 = vpop.f32.mrf.mxu0
  %v1437 = vadd.f32 %v71, %v1436
  %v1438 = vpop.f32.mrf.mxu0
  %1439 = vmatprep.mubr.bf16.mxu0 0
  %1440 = vmatmul.mubr.bf16.gmra.mxu0 %v1323
  %v1441 = vpop.f32.mrf.mxu0
  %v1442 = vadd.f32 %v71, %v1441
  %v1443 = vpop.f32.mrf.mxu0
  %v1444 = vpop.f32.mrf.mxu0
  %v1445 = vadd.f32 %v71, %v1444
  %v1446 = vpop.f32.mrf.mxu0
  %1447 = vmatprep.mubr.bf16.mxu0 0
  %1448 = vmatmul.mubr.bf16.gmra.mxu0 %v1326
  %v1449 = vpop.f32.mrf.mxu0
  %v1450 = vadd.f32 %v71, %v1449
  %v1451 = vpop.f32.mrf.mxu0
  %v1452 = vpop.f32.mrf.mxu0
  %v1453 = vadd.f32 %v71, %v1452
  %v1454 = vpop.f32.mrf.mxu0
  %1455 = vmatprep.mubr.bf16.mxu0 0
  %1456 = vmatmul.mubr.bf16.gmra.mxu0 %v1329
  %v1457 = vpop.f32.mrf.mxu0
  %v1458 = vadd.f32 %v71, %v1457
  %v1459 = vpop.f32.mrf.mxu0
  %v1460 = vpop.f32.mrf.mxu0
  %v1461 = vadd.f32 %v71, %v1460
  %v1462 = vpop.f32.mrf.mxu0
  %1463 = vmatprep.mubr.bf16.mxu0 0
  %1464 = vmatmul.mubr.bf16.gmra.mxu0 %v1332
  %v1465 = vpop.f32.mrf.mxu0
  %v1466 = vadd.f32 %v71, %v1465
  %v1467 = vpop.f32.mrf.mxu0
  %v1468 = vpop.f32.mrf.mxu0
  %v1469 = vadd.f32 %v71, %v1468
  %v1470 = vpop.f32.mrf.mxu0
  %1471 = vmatprep.mubr.bf16.mxu0 0
  %1472 = vmatmul.mubr.bf16.gmra.mxu0 %v1335
  %v1473 = vpop.f32.mrf.mxu0
  %v1474 = vadd.f32 %v71, %v1473
  %v1475 = vpop.f32.mrf.mxu0
  %v1476 = vpop.f32.mrf.mxu0
  %v1477 = vadd.f32 %v71, %v1476
  %v1478 = vpop.f32.mrf.mxu0
  %1479 = vmatprep.mubr.bf16.mxu0 0
  %1480 = vmatmul.mubr.bf16.gmra.mxu0 %v1338
  %v1481 = vpop.f32.mrf.mxu0
  %v1482 = vadd.f32 %v71, %v1481
  %v1483 = vpop.f32.mrf.mxu0
  %v1484 = vpop.f32.mrf.mxu0
  %v1485 = vadd.f32 %v71, %v1484
  %v1486 = vpop.f32.mrf.mxu0
  %1487 = vmatprep.mubr.bf16.mxu0 0
  %1488 = vmatmul.mubr.bf16.gmra.mxu0 %v1341
  %v1489 = vpop.f32.mrf.mxu0
  %v1490 = vadd.f32 %v71, %v1489
  %v1491 = vpop.f32.mrf.mxu0
  %v1492 = vpop.f32.mrf.mxu0
  %v1493 = vadd.f32 %v71, %v1492
  %v1494 = vpop.f32.mrf.mxu0
  %1495 = vmatprep.mubr.bf16.mxu0 0
  %1496 = vmatmul.mubr.bf16.gmra.mxu0 %v1344
  %v1497 = vpop.f32.mrf.mxu0
  %v1498 = vadd.f32 %v71, %v1497
  %v1499 = vpop.f32.mrf.mxu0
  %v1500 = vpop.f32.mrf.mxu0
  %v1501 = vadd.f32 %v71, %v1500
  %v1502 = vpop.f32.mrf.mxu0
  %1503 = vmatprep.mubr.bf16.mxu0 0
  %1504 = vmatmul.mubr.bf16.gmra.mxu0 %v1347
  %v1505 = vpop.f32.mrf.mxu0
  %v1506 = vadd.f32 %v71, %v1505
  %v1507 = vpop.f32.mrf.mxu0
  %v1508 = vpop.f32.mrf.mxu0
  %v1509 = vadd.f32 %v71, %v1508
  %v1510 = vpop.f32.mrf.mxu0
  %1511 = vmatprep.mubr.bf16.mxu0 0
  %1512 = vmatmul.mubr.bf16.gmra.mxu0 %v1350
  %v1513 = vpop.f32.mrf.mxu0
  %v1514 = vadd.f32 %v71, %v1513
  %v1515 = vpop.f32.mrf.mxu0
  %v1516 = vpop.f32.mrf.mxu0
  %v1517 = vadd.f32 %v71, %v1516
  %v1518 = vpop.f32.mrf.mxu0
  %1519 = vmatprep.mubr.bf16.mxu0 0
  %1520 = vmatmul.mubr.bf16.gmra.mxu0 %v1353
  %v1521 = vpop.f32.mrf.mxu0
  %v1522 = vadd.f32 %v71, %v1521
  %v1523 = vpop.f32.mrf.mxu0
  %v1524 = vpop.f32.mrf.mxu0
  %v1525 = vadd.f32 %v71, %v1524
  %v1526 = vpop.f32.mrf.mxu0
  %1527 = vmatprep.mubr.bf16.mxu0 0
  %1528 = vmatmul.mubr.bf16.gmra.mxu0 %v1356
  %v1529 = vpop.f32.mrf.mxu0
  %v1530 = vadd.f32 %v71, %v1529
  %v1531 = vpop.f32.mrf.mxu0
  %v1532 = vpop.f32.mrf.mxu0
  %v1533 = vadd.f32 %v71, %v1532
  %v1534 = vpop.f32.mrf.mxu0
  %1535 = vmatprep.mubr.bf16.mxu0 0
  %1536 = vmatmul.mubr.bf16.gmra.mxu0 %v1359
  %v1537 = vpop.f32.mrf.mxu0
  %v1538 = vadd.f32 %v71, %v1537
  %v1539 = vpop.f32.mrf.mxu0
  %v1540 = vpop.f32.mrf.mxu0
  %v1541 = vadd.f32 %v71, %v1540
  %v1542 = vpop.f32.mrf.mxu0
  %1543 = vmatprep.mubr.bf16.mxu0 0
  %1544 = vmatmul.mubr.bf16.gmra.mxu0 %v1362
  %v1545 = vpop.f32.mrf.mxu0
  %v1546 = vadd.f32 %v71, %v1545
  %v1547 = vpop.f32.mrf.mxu0
  %v1548 = vpop.f32.mrf.mxu0
  %v1549 = vadd.f32 %v71, %v1548
  %v1550 = vpop.f32.mrf.mxu0
  %1551 = vmatprep.mubr.bf16.mxu0 0
  %1552 = vmatmul.mubr.bf16.gmra.mxu0 %v1365
  %v1553 = vpop.f32.mrf.mxu0
  %v1554 = vadd.f32 %v71, %v1553
  %v1555 = vpop.f32.mrf.mxu0
  %v1556 = vpop.f32.mrf.mxu0
  %v1557 = vadd.f32 %v71, %v1556
  %v1558 = vpop.f32.mrf.mxu0
  %1559 = vmatprep.mubr.bf16.mxu0 0
  %1560 = vmatmul.mubr.bf16.gmra.mxu0 %v1368
  %v1561 = vpop.f32.mrf.mxu0
  %v1562 = vadd.f32 %v71, %v1561
  %v1563 = vpop.f32.mrf.mxu0
  %v1564 = vpop.f32.mrf.mxu0
  %v1565 = vadd.f32 %v71, %v1564
  %v1566 = vpop.f32.mrf.mxu0
  %1567 = vmatprep.mubr.bf16.mxu0 0
  %1568 = vmatmul.mubr.bf16.gmra.mxu0 %v1371
  %v1569 = vpop.f32.mrf.mxu0
  %v1570 = vadd.f32 %v71, %v1569
  %v1571 = vpop.f32.mrf.mxu0
  %v1572 = vpop.f32.mrf.mxu0
  %v1573 = vadd.f32 %v71, %v1572
  %v1574 = vpop.f32.mrf.mxu0
  %1575 = vmatprep.mubr.bf16.mxu0 0
  %1576 = vmatmul.mubr.bf16.gmra.mxu0 %v1374
  %v1577 = vpop.f32.mrf.mxu0
  %v1578 = vadd.f32 %v71, %v1577
  %v1579 = vpop.f32.mrf.mxu0
  %v1580 = vpop.f32.mrf.mxu0
  %v1581 = vadd.f32 %v71, %v1580
  %v1582 = vpop.f32.mrf.mxu0
  %1583 = vmatprep.mubr.bf16.mxu0 0
  %1584 = vmatmul.mubr.bf16.gmra.mxu0 %v1377
  %v1585 = vpop.f32.mrf.mxu0
  %v1586 = vadd.f32 %v71, %v1585
  %v1587 = vpop.f32.mrf.mxu0
  %v1588 = vpop.f32.mrf.mxu0
  %v1589 = vadd.f32 %v71, %v1588
  %v1590 = vpop.f32.mrf.mxu0
  %1591 = vmatprep.mubr.bf16.mxu0 0
  %1592 = vmatmul.mubr.bf16.gmra.mxu0 %v1380
  %v1593 = vpop.f32.mrf.mxu0
  %v1594 = vadd.f32 %v71, %v1593
  %v1595 = vpop.f32.mrf.mxu0
  %v1596 = vpop.f32.mrf.mxu0
  %v1597 = vadd.f32 %v71, %v1596
  %v1598 = vpop.f32.mrf.mxu0
  %1599 = vmatprep.mubr.bf16.mxu0 0
  %1600 = vmatmul.mubr.bf16.gmra.mxu0 %v1383
  %v1601 = vpop.f32.mrf.mxu0
  %v1602 = vadd.f32 %v71, %v1601
  %v1603 = vpop.f32.mrf.mxu0
  %v1604 = vpop.f32.mrf.mxu0
  %v1605 = vadd.f32 %v71, %v1604
  %v1606 = vpop.f32.mrf.mxu0
  %1607 = vmatprep.mubr.bf16.mxu0 0
  %1608 = vmatmul.mubr.bf16.gmra.mxu0 %v1386
  %v1609 = vpop.f32.mrf.mxu0
  %v1610 = vadd.f32 %v71, %v1609
  %v1611 = vpop.f32.mrf.mxu0
  %v1612 = vpop.f32.mrf.mxu0
  %v1613 = vadd.f32 %v71, %v1612
  %v1614 = vpop.f32.mrf.mxu0
  %1615 = vmatprep.mubr.bf16.mxu0 0
  %1616 = vmatmul.mubr.bf16.gmra.mxu0 %v1389
  %v1617 = vpop.f32.mrf.mxu0
  %v1618 = vadd.f32 %v71, %v1617
  %v1619 = vpop.f32.mrf.mxu0
  %v1620 = vpop.f32.mrf.mxu0
  %v1621 = vpop.f32.mrf.mxu0
  %1622 = vdwg.mxu0
  %v1623 = vmax.f32 %v1426, 0.0
  %v1624 = vmax.f32 %v1429, 0.0
  %v1625 = vmax.f32 %v1434, 0.0
  %v1626 = vmax.f32 %v1437, 0.0
  %v1627 = vmax.f32 %v1442, 0.0
  %v1628 = vmax.f32 %v1445, 0.0
  %v1629 = vmax.f32 %v1450, 0.0
  %v1630 = vmax.f32 %v1453, 0.0
  %v1631 = vmax.f32 %v1458, 0.0
  %v1632 = vmax.f32 %v1461, 0.0
  %v1633 = vmax.f32 %v1466, 0.0
  %v1634 = vmax.f32 %v1469, 0.0
  %v1635 = vmax.f32 %v1474, 0.0
  %v1636 = vmax.f32 %v1477, 0.0
  %v1637 = vmax.f32 %v1482, 0.0
  %v1638 = vmax.f32 %v1485, 0.0
  %v1639 = vmax.f32 %v1490, 0.0
  %v1640 = vmax.f32 %v1493, 0.0
  %v1641 = vmax.f32 %v1498, 0.0
  %v1642 = vmax.f32 %v1501, 0.0
  %v1643 = vmax.f32 %v1506, 0.0
  %v1644 = vmax.f32 %v1509, 0.0
  %v1645 = vmax.f32 %v1514, 0.0
  %v1646 = vmax.f32 %v1517, 0.0
  %v1647 = vmax.f32 %v1522, 0.0
  %v1648 = vmax.f32 %v1525, 0.0
  %v1649 = vmax.f32 %v1530, 0.0
  %v1650 = vmax.f32 %v1533, 0.0
  %v1651 = vmax.f32 %v1538, 0.0
  %v1652 = vmax.f32 %v1541, 0.0
  %v1653 = vmax.f32 %v1546, 0.0
  %v1654 = vmax.f32 %v1549, 0.0
  %v1655 = vmax.f32 %v1554, 0.0
  %v1656 = vmax.f32 %v1557, 0.0
  %v1657 = vmax.f32 %v1562, 0.0
  %v1658 = vmax.f32 %v1565, 0.0
  %v1659 = vmax.f32 %v1570, 0.0
  %v1660 = vmax.f32 %v1573, 0.0
  %v1661 = vmax.f32 %v1578, 0.0
  %v1662 = vmax.f32 %v1581, 0.0
  %v1663 = vmax.f32 %v1586, 0.0
  %v1664 = vmax.f32 %v1589, 0.0
  %v1665 = vmax.f32 %v1594, 0.0
  %v1666 = vmax.f32 %v1597, 0.0
  %v1667 = vmax.f32 %v1602, 0.0
  %v1668 = vmax.f32 %v1605, 0.0
  %v1669 = vmax.f32 %v1610, 0.0
  %v1670 = vmax.f32 %v1613, 0.0
  %v1671 = vmax.f32 %v1618, 0.0
  %s1672 = scalar_lea.vmem %s0, 588
  %v1673 = vld [vmem:[%s1672] sm:$0xf]
  %v1674 = vld [vmem:[%s1672 + $0x4] sm:$0xf]
  %v1675 = vld [vmem:[%s1672 + $0x8] sm:$0xf]
  %v1676 = vld [vmem:[%s1672 + $0xc] sm:$0xf]
  %v1677 = vld [vmem:[%s1672 + $0x10] sm:$0xf]
  %v1678 = vld [vmem:[%s1672 + $0x14] sm:$0xf]
  %v1679 = vld [vmem:[%s1672 + $0x18] sm:$0xf]
  %v1680 = vld [vmem:[%s1672 + $0x1c] sm:$0xf]
  %v1681 = vld [vmem:[%s1672 + $0x20] sm:$0xf]
  %v1682 = vld [vmem:[%s1672 + $0x24] sm:$0xf]
  %v1683 = vld [vmem:[%s1672 + $0x28] sm:$0xf]
  %v1684 = vld [vmem:[%s1672 + $0x2c] sm:$0xf]
  %v1685 = vld [vmem:[%s1672 + $0x30] sm:$0xf]
  %v1686 = vld [vmem:[%s1672 + $0x34] sm:$0xf]
  %v1687 = vld [vmem:[%s1672 + $0x38] sm:$0xf]
  %v1688 = vld [vmem:[%s1672 + $0x3c] sm:$0xf]
  %v1689 = vld [vmem:[%s1672 + $0x40] sm:$0xf]
  %v1690 = vld [vmem:[%s1672 + $0x44] sm:$0xf]
  %v1691 = vld [vmem:[%s1672 + $0x48] sm:$0xf]
  %v1692 = vld [vmem:[%s1672 + $0x4c] sm:$0xf]
  %v1693 = vld [vmem:[%s1672 + $0x50] sm:$0xf]
  %v1694 = vld [vmem:[%s1672 + $0x54] sm:$0xf]
  %v1695 = vld [vmem:[%s1672 + $0x58] sm:$0xf]
  %v1696 = vld [vmem:[%s1672 + $0x5c] sm:$0xf]
  %v1697 = vld [vmem:[%s1672 + $0x60] sm:$0xf]
  %v1698 = vld [vmem:[%s1672 + $0x64] sm:$0xf]
  %v1699 = vld [vmem:[%s1672 + $0x68] sm:$0xf]
  %v1700 = vld [vmem:[%s1672 + $0x6c] sm:$0xf]
  %v1701 = vld [vmem:[%s1672 + $0x70] sm:$0xf]
  %v1702 = vld [vmem:[%s1672 + $0x74] sm:$0xf]
  %v1703 = vld [vmem:[%s1672 + $0x78] sm:$0xf]
  %v1704 = vld [vmem:[%s1672 + $0x7c] sm:$0xf]
  %v1705 = vld [vmem:[%s1672 + $0x80] sm:$0xf]
  %v1706 = vld [vmem:[%s1672 + $0x84] sm:$0xf]
  %v1707 = vld [vmem:[%s1672 + $0x88] sm:$0xf]
  %v1708 = vld [vmem:[%s1672 + $0x8c] sm:$0xf]
  %v1709 = vld [vmem:[%s1672 + $0x90] sm:$0xf]
  %v1710 = vld [vmem:[%s1672 + $0x94] sm:$0xf]
  %v1711 = vld [vmem:[%s1672 + $0x98] sm:$0xf]
  %v1712 = vld [vmem:[%s1672 + $0x9c] sm:$0xf]
  %v1713 = vld [vmem:[%s1672 + $0xa0] sm:$0xf]
  %v1714 = vld [vmem:[%s1672 + $0xa4] sm:$0xf]
  %v1715 = vld [vmem:[%s1672 + $0xa8] sm:$0xf]
  %v1716 = vld [vmem:[%s1672 + $0xac] sm:$0xf]
  %v1717 = vld [vmem:[%s1672 + $0xb0] sm:$0xf]
  %v1718 = vld [vmem:[%s1672 + $0xb4] sm:$0xf]
  %v1719 = vld [vmem:[%s1672 + $0xb8] sm:$0xf]
  %v1720 = vld [vmem:[%s1672 + $0xbc] sm:$0xf]
  %v1721 = vld [vmem:[%s1672 + $0xc0] sm:$0xf]
  %v1771 = vunpack.c.l.b16 %v1673
  %v1772 = vunpack.c.l.b16 %v1674
  %v1773 = vunpack.c.l.b16 %v1675
  %v1774 = vunpack.c.l.b16 %v1676
  %v1775 = vunpack.c.l.b16 %v1677
  %v1776 = vunpack.c.l.b16 %v1678
  %v1777 = vunpack.c.l.b16 %v1679
  %v1778 = vunpack.c.l.b16 %v1680
  %v1779 = vunpack.c.l.b16 %v1681
  %v1780 = vunpack.c.l.b16 %v1682
  %v1781 = vunpack.c.l.b16 %v1683
  %v1782 = vunpack.c.l.b16 %v1684
  %v1783 = vunpack.c.l.b16 %v1685
  %v1784 = vunpack.c.l.b16 %v1686
  %v1785 = vunpack.c.l.b16 %v1687
  %v1786 = vunpack.c.l.b16 %v1688
  %v1787 = vunpack.c.l.b16 %v1689
  %v1788 = vunpack.c.l.b16 %v1690
  %v1789 = vunpack.c.l.b16 %v1691
  %v1790 = vunpack.c.l.b16 %v1692
  %v1791 = vunpack.c.l.b16 %v1693
  %v1792 = vunpack.c.l.b16 %v1694
  %v1793 = vunpack.c.l.b16 %v1695
  %v1794 = vunpack.c.l.b16 %v1696
  %v1795 = vunpack.c.l.b16 %v1697
  %v1796 = vunpack.c.l.b16 %v1698
  %v1797 = vunpack.c.l.b16 %v1699
  %v1798 = vunpack.c.l.b16 %v1700
  %v1799 = vunpack.c.l.b16 %v1701
  %v1800 = vunpack.c.l.b16 %v1702
  %v1801 = vunpack.c.l.b16 %v1703
  %v1802 = vunpack.c.l.b16 %v1704
  %v1803 = vunpack.c.l.b16 %v1705
  %v1804 = vunpack.c.l.b16 %v1706
  %v1805 = vunpack.c.l.b16 %v1707
  %v1806 = vunpack.c.l.b16 %v1708
  %v1807 = vunpack.c.l.b16 %v1709
  %v1808 = vunpack.c.l.b16 %v1710
  %v1809 = vunpack.c.l.b16 %v1711
  %v1810 = vunpack.c.l.b16 %v1712
  %v1811 = vunpack.c.l.b16 %v1713
  %v1812 = vunpack.c.l.b16 %v1714
  %v1813 = vunpack.c.l.b16 %v1715
  %v1814 = vunpack.c.l.b16 %v1716
  %v1815 = vunpack.c.l.b16 %v1717
  %v1816 = vunpack.c.l.b16 %v1718
  %v1817 = vunpack.c.l.b16 %v1719
  %v1818 = vunpack.c.l.b16 %v1720
  %v1819 = vunpack.c.l.b16 %v1721
  %v1820 = vpack.c.b16 %v1772, %v1771
  %v1821 = vpack.c.b16 %v1774, %v1773
  %v1822 = vpack.c.b16 %v1776, %v1775
  %v1823 = vpack.c.b16 %v1778, %v1777
  %v1824 = vpack.c.b16 %v1780, %v1779
  %v1825 = vpack.c.b16 %v1782, %v1781
  %v1826 = vpack.c.b16 %v1784, %v1783
  %v1827 = vpack.c.b16 %v1786, %v1785
  %v1828 = vpack.c.b16 %v1788, %v1787
  %v1829 = vpack.c.b16 %v1790, %v1789
  %v1830 = vpack.c.b16 %v1792, %v1791
  %v1831 = vpack.c.b16 %v1794, %v1793
  %v1832 = vpack.c.b16 %v1796, %v1795
  %v1833 = vpack.c.b16 %v1798, %v1797
  %v1834 = vpack.c.b16 %v1800, %v1799
  %v1835 = vpack.c.b16 %v1802, %v1801
  %v1836 = vpack.c.b16 %v1804, %v1803
  %v1837 = vpack.c.b16 %v1806, %v1805
  %v1838 = vpack.c.b16 %v1808, %v1807
  %v1839 = vpack.c.b16 %v1810, %v1809
  %v1840 = vpack.c.b16 %v1812, %v1811
  %v1841 = vpack.c.b16 %v1814, %v1813
  %v1842 = vpack.c.b16 %v1816, %v1815
  %v1843 = vpack.c.b16 %v1818, %v1817
  %v1844 = vpack.c.b16 %v1819, %v1819
  %v1846 = vsel %vm201, %v1820, 0
  %v1849 = vsel %vm201, %v1821, 0
  %v1852 = vsel %vm201, %v1822, 0
  %v1855 = vsel %vm201, %v1823, 0
  %v1858 = vsel %vm201, %v1824, 0
  %v1861 = vsel %vm201, %v1825, 0
  %v1864 = vsel %vm201, %v1826, 0
  %v1867 = vsel %vm201, %v1827, 0
  %v1870 = vsel %vm201, %v1828, 0
  %v1873 = vsel %vm201, %v1829, 0
  %v1876 = vsel %vm201, %v1830, 0
  %v1879 = vsel %vm201, %v1831, 0
  %v1882 = vsel %vm201, %v1832, 0
  %v1885 = vsel %vm201, %v1833, 0
  %v1888 = vsel %vm201, %v1834, 0
  %v1891 = vsel %vm201, %v1835, 0
  %v1894 = vsel %vm201, %v1836, 0
  %v1897 = vsel %vm201, %v1837, 0
  %v1900 = vsel %vm201, %v1838, 0
  %v1903 = vsel %vm201, %v1839, 0
  %v1906 = vsel %vm201, %v1840, 0
  %v1909 = vsel %vm201, %v1841, 0
  %v1912 = vsel %vm201, %v1842, 0
  %v1915 = vsel %vm201, %v1843, 0
  %v1918 = vsel %vm201, %v1844, 0
  %1920 = vmatprep.subr.bf16.mxu0 0
  %1921 = vmatpush1.bf16.msra.mxu0 0
  %1922 = vmatprep.subr.bf16.mxu0 0
  %1923 = vmatpush1.bf16.msra.mxu0 0
  %1924 = vmatprep.subr.bf16.mxu0 0
  %1925 = vmatpush1.bf16.msra.mxu0 0
  %1926 = vmatprep.subr.bf16.mxu0 0
  %1927 = vmatpush1.bf16.msra.mxu0 0
  %1928 = vmatprep.subr.bf16.mxu0 0
  %1929 = vmatpush1.bf16.msra.mxu0 0
  %1930 = vmatprep.subr.bf16.mxu0 0
  %1931 = vmatpush1.bf16.msra.mxu0 0
  %1932 = vmatprep.subr.bf16.mxu0 0
  %1933 = vmatpush1.bf16.msra.mxu0 0
  %1934 = vmatprep.subr.bf16.mxu0 0
  %1935 = vmatpush1.bf16.msra.mxu0 %v282
  %1936 = vmatprep.subr.bf16.mxu0 0
  %1937 = vmatpush2.bf16.msra.mxu0 0
  %1938 = vmatprep.subr.bf16.mxu0 0
  %1939 = vmatpush2.bf16.msra.mxu0 0
  %1940 = vmatprep.subr.bf16.mxu0 0
  %1941 = vmatpush2.bf16.msra.mxu0 0
  %1942 = vmatprep.subr.bf16.mxu0 0
  %1943 = vmatpush2.bf16.msra.mxu0 0
  %1944 = vmatprep.subr.bf16.mxu0 0
  %1945 = vmatpush2.bf16.msra.mxu0 0
  %1946 = vmatprep.subr.bf16.mxu0 0
  %1947 = vmatpush2.bf16.msra.mxu0 0
  %1948 = vmatprep.subr.bf16.mxu0 0
  %1949 = vmatpush2.bf16.msra.mxu0 0
  %1950 = vmatprep.subr.bf16.mxu0 0
  %1951 = vmatpush2.bf16.msra.mxu0 0
  %1952 = vmatprep.mubr.bf16.mxu0 0
  %1953 = vmatmul.mubr.bf16.gmra.mxu0 %v1846
  %v1954 = vpop.f32.mrf.mxu0
  %v1955 = vadd.f32 %v71, %v1954
  %v1956 = vpop.f32.mrf.mxu0
  %v1957 = vpop.f32.mrf.mxu0
  %v1958 = vadd.f32 %v71, %v1957
  %v1959 = vpop.f32.mrf.mxu0
  %1960 = vmatprep.mubr.bf16.mxu0 0
  %1961 = vmatmul.mubr.bf16.gmra.mxu0 %v1849
  %v1962 = vpop.f32.mrf.mxu0
  %v1963 = vadd.f32 %v71, %v1962
  %v1964 = vpop.f32.mrf.mxu0
  %v1965 = vpop.f32.mrf.mxu0
  %v1966 = vadd.f32 %v71, %v1965
  %v1967 = vpop.f32.mrf.mxu0
  %1968 = vmatprep.mubr.bf16.mxu0 0
  %1969 = vmatmul.mubr.bf16.gmra.mxu0 %v1852
  %v1970 = vpop.f32.mrf.mxu0
  %v1971 = vadd.f32 %v71, %v1970
  %v1972 = vpop.f32.mrf.mxu0
  %v1973 = vpop.f32.mrf.mxu0
  %v1974 = vadd.f32 %v71, %v1973
  %v1975 = vpop.f32.mrf.mxu0
  %1976 = vmatprep.mubr.bf16.mxu0 0
  %1977 = vmatmul.mubr.bf16.gmra.mxu0 %v1855
  %v1978 = vpop.f32.mrf.mxu0
  %v1979 = vadd.f32 %v71, %v1978
  %v1980 = vpop.f32.mrf.mxu0
  %v1981 = vpop.f32.mrf.mxu0
  %v1982 = vadd.f32 %v71, %v1981
  %v1983 = vpop.f32.mrf.mxu0
  %1984 = vmatprep.mubr.bf16.mxu0 0
  %1985 = vmatmul.mubr.bf16.gmra.mxu0 %v1858
  %v1986 = vpop.f32.mrf.mxu0
  %v1987 = vadd.f32 %v71, %v1986
  %v1988 = vpop.f32.mrf.mxu0
  %v1989 = vpop.f32.mrf.mxu0
  %v1990 = vadd.f32 %v71, %v1989
  %v1991 = vpop.f32.mrf.mxu0
  %1992 = vmatprep.mubr.bf16.mxu0 0
  %1993 = vmatmul.mubr.bf16.gmra.mxu0 %v1861
  %v1994 = vpop.f32.mrf.mxu0
  %v1995 = vadd.f32 %v71, %v1994
  %v1996 = vpop.f32.mrf.mxu0
  %v1997 = vpop.f32.mrf.mxu0
  %v1998 = vadd.f32 %v71, %v1997
  %v1999 = vpop.f32.mrf.mxu0
  %2000 = vmatprep.mubr.bf16.mxu0 0
  %2001 = vmatmul.mubr.bf16.gmra.mxu0 %v1864
  %v2002 = vpop.f32.mrf.mxu0
  %v2003 = vadd.f32 %v71, %v2002
  %v2004 = vpop.f32.mrf.mxu0
  %v2005 = vpop.f32.mrf.mxu0
  %v2006 = vadd.f32 %v71, %v2005
  %v2007 = vpop.f32.mrf.mxu0
  %2008 = vmatprep.mubr.bf16.mxu0 0
  %2009 = vmatmul.mubr.bf16.gmra.mxu0 %v1867
  %v2010 = vpop.f32.mrf.mxu0
  %v2011 = vadd.f32 %v71, %v2010
  %v2012 = vpop.f32.mrf.mxu0
  %v2013 = vpop.f32.mrf.mxu0
  %v2014 = vadd.f32 %v71, %v2013
  %v2015 = vpop.f32.mrf.mxu0
  %2016 = vmatprep.mubr.bf16.mxu0 0
  %2017 = vmatmul.mubr.bf16.gmra.mxu0 %v1870
  %v2018 = vpop.f32.mrf.mxu0
  %v2019 = vadd.f32 %v71, %v2018
  %v2020 = vpop.f32.mrf.mxu0
  %v2021 = vpop.f32.mrf.mxu0
  %v2022 = vadd.f32 %v71, %v2021
  %v2023 = vpop.f32.mrf.mxu0
  %2024 = vmatprep.mubr.bf16.mxu0 0
  %2025 = vmatmul.mubr.bf16.gmra.mxu0 %v1873
  %v2026 = vpop.f32.mrf.mxu0
  %v2027 = vadd.f32 %v71, %v2026
  %v2028 = vpop.f32.mrf.mxu0
  %v2029 = vpop.f32.mrf.mxu0
  %v2030 = vadd.f32 %v71, %v2029
  %v2031 = vpop.f32.mrf.mxu0
  %2032 = vmatprep.mubr.bf16.mxu0 0
  %2033 = vmatmul.mubr.bf16.gmra.mxu0 %v1876
  %v2034 = vpop.f32.mrf.mxu0
  %v2035 = vadd.f32 %v71, %v2034
  %v2036 = vpop.f32.mrf.mxu0
  %v2037 = vpop.f32.mrf.mxu0
  %v2038 = vadd.f32 %v71, %v2037
  %v2039 = vpop.f32.mrf.mxu0
  %2040 = vmatprep.mubr.bf16.mxu0 0
  %2041 = vmatmul.mubr.bf16.gmra.mxu0 %v1879
  %v2042 = vpop.f32.mrf.mxu0
  %v2043 = vadd.f32 %v71, %v2042
  %v2044 = vpop.f32.mrf.mxu0
  %v2045 = vpop.f32.mrf.mxu0
  %v2046 = vadd.f32 %v71, %v2045
  %v2047 = vpop.f32.mrf.mxu0
  %2048 = vmatprep.mubr.bf16.mxu0 0
  %2049 = vmatmul.mubr.bf16.gmra.mxu0 %v1882
  %v2050 = vpop.f32.mrf.mxu0
  %v2051 = vadd.f32 %v71, %v2050
  %v2052 = vpop.f32.mrf.mxu0
  %v2053 = vpop.f32.mrf.mxu0
  %v2054 = vadd.f32 %v71, %v2053
  %v2055 = vpop.f32.mrf.mxu0
  %2056 = vmatprep.mubr.bf16.mxu0 0
  %2057 = vmatmul.mubr.bf16.gmra.mxu0 %v1885
  %v2058 = vpop.f32.mrf.mxu0
  %v2059 = vadd.f32 %v71, %v2058
  %v2060 = vpop.f32.mrf.mxu0
  %v2061 = vpop.f32.mrf.mxu0
  %v2062 = vadd.f32 %v71, %v2061
  %v2063 = vpop.f32.mrf.mxu0
  %2064 = vmatprep.mubr.bf16.mxu0 0
  %2065 = vmatmul.mubr.bf16.gmra.mxu0 %v1888
  %v2066 = vpop.f32.mrf.mxu0
  %v2067 = vadd.f32 %v71, %v2066
  %v2068 = vpop.f32.mrf.mxu0
  %v2069 = vpop.f32.mrf.mxu0
  %v2070 = vadd.f32 %v71, %v2069
  %v2071 = vpop.f32.mrf.mxu0
  %2072 = vmatprep.mubr.bf16.mxu0 0
  %2073 = vmatmul.mubr.bf16.gmra.mxu0 %v1891
  %v2074 = vpop.f32.mrf.mxu0
  %v2075 = vadd.f32 %v71, %v2074
  %v2076 = vpop.f32.mrf.mxu0
  %v2077 = vpop.f32.mrf.mxu0
  %v2078 = vadd.f32 %v71, %v2077
  %v2079 = vpop.f32.mrf.mxu0
  %2080 = vmatprep.mubr.bf16.mxu0 0
  %2081 = vmatmul.mubr.bf16.gmra.mxu0 %v1894
  %v2082 = vpop.f32.mrf.mxu0
  %v2083 = vadd.f32 %v71, %v2082
  %v2084 = vpop.f32.mrf.mxu0
  %v2085 = vpop.f32.mrf.mxu0
  %v2086 = vadd.f32 %v71, %v2085
  %v2087 = vpop.f32.mrf.mxu0
  %2088 = vmatprep.mubr.bf16.mxu0 0
  %2089 = vmatmul.mubr.bf16.gmra.mxu0 %v1897
  %v2090 = vpop.f32.mrf.mxu0
  %v2091 = vadd.f32 %v71, %v2090
  %v2092 = vpop.f32.mrf.mxu0
  %v2093 = vpop.f32.mrf.mxu0
  %v2094 = vadd.f32 %v71, %v2093
  %v2095 = vpop.f32.mrf.mxu0
  %2096 = vmatprep.mubr.bf16.mxu0 0
  %2097 = vmatmul.mubr.bf16.gmra.mxu0 %v1900
  %v2098 = vpop.f32.mrf.mxu0
  %v2099 = vadd.f32 %v71, %v2098
  %v2100 = vpop.f32.mrf.mxu0
  %v2101 = vpop.f32.mrf.mxu0
  %v2102 = vadd.f32 %v71, %v2101
  %v2103 = vpop.f32.mrf.mxu0
  %2104 = vmatprep.mubr.bf16.mxu0 0
  %2105 = vmatmul.mubr.bf16.gmra.mxu0 %v1903
  %v2106 = vpop.f32.mrf.mxu0
  %v2107 = vadd.f32 %v71, %v2106
  %v2108 = vpop.f32.mrf.mxu0
  %v2109 = vpop.f32.mrf.mxu0
  %v2110 = vadd.f32 %v71, %v2109
  %v2111 = vpop.f32.mrf.mxu0
  %2112 = vmatprep.mubr.bf16.mxu0 0
  %2113 = vmatmul.mubr.bf16.gmra.mxu0 %v1906
  %v2114 = vpop.f32.mrf.mxu0
  %v2115 = vadd.f32 %v71, %v2114
  %v2116 = vpop.f32.mrf.mxu0
  %v2117 = vpop.f32.mrf.mxu0
  %v2118 = vadd.f32 %v71, %v2117
  %v2119 = vpop.f32.mrf.mxu0
  %2120 = vmatprep.mubr.bf16.mxu0 0
  %2121 = vmatmul.mubr.bf16.gmra.mxu0 %v1909
  %v2122 = vpop.f32.mrf.mxu0
  %v2123 = vadd.f32 %v71, %v2122
  %v2124 = vpop.f32.mrf.mxu0
  %v2125 = vpop.f32.mrf.mxu0
  %v2126 = vadd.f32 %v71, %v2125
  %v2127 = vpop.f32.mrf.mxu0
  %2128 = vmatprep.mubr.bf16.mxu0 0
  %2129 = vmatmul.mubr.bf16.gmra.mxu0 %v1912
  %v2130 = vpop.f32.mrf.mxu0
  %v2131 = vadd.f32 %v71, %v2130
  %v2132 = vpop.f32.mrf.mxu0
  %v2133 = vpop.f32.mrf.mxu0
  %v2134 = vadd.f32 %v71, %v2133
  %v2135 = vpop.f32.mrf.mxu0
  %2136 = vmatprep.mubr.bf16.mxu0 0
  %2137 = vmatmul.mubr.bf16.gmra.mxu0 %v1915
  %v2138 = vpop.f32.mrf.mxu0
  %v2139 = vadd.f32 %v71, %v2138
  %v2140 = vpop.f32.mrf.mxu0
  %v2141 = vpop.f32.mrf.mxu0
  %v2142 = vadd.f32 %v71, %v2141
  %v2143 = vpop.f32.mrf.mxu0
  %2144 = vmatprep.mubr.bf16.mxu0 0
  %2145 = vmatmul.mubr.bf16.gmra.mxu0 %v1918
  %v2146 = vpop.f32.mrf.mxu0
  %v2147 = vadd.f32 %v71, %v2146
  %v2148 = vpop.f32.mrf.mxu0
  %v2149 = vpop.f32.mrf.mxu0
  %v2150 = vpop.f32.mrf.mxu0
  %2151 = vdwg.mxu0
  %v2152 = vmax.f32 %v1955, 0.0
  %v2153 = vmax.f32 %v1958, 0.0
  %v2154 = vmax.f32 %v1963, 0.0
  %v2155 = vmax.f32 %v1966, 0.0
  %v2156 = vmax.f32 %v1971, 0.0
  %v2157 = vmax.f32 %v1974, 0.0
  %v2158 = vmax.f32 %v1979, 0.0
  %v2159 = vmax.f32 %v1982, 0.0
  %v2160 = vmax.f32 %v1987, 0.0
  %v2161 = vmax.f32 %v1990, 0.0
  %v2162 = vmax.f32 %v1995, 0.0
  %v2163 = vmax.f32 %v1998, 0.0
  %v2164 = vmax.f32 %v2003, 0.0
  %v2165 = vmax.f32 %v2006, 0.0
  %v2166 = vmax.f32 %v2011, 0.0
  %v2167 = vmax.f32 %v2014, 0.0
  %v2168 = vmax.f32 %v2019, 0.0
  %v2169 = vmax.f32 %v2022, 0.0
  %v2170 = vmax.f32 %v2027, 0.0
  %v2171 = vmax.f32 %v2030, 0.0
  %v2172 = vmax.f32 %v2035, 0.0
  %v2173 = vmax.f32 %v2038, 0.0
  %v2174 = vmax.f32 %v2043, 0.0
  %v2175 = vmax.f32 %v2046, 0.0
  %v2176 = vmax.f32 %v2051, 0.0
  %v2177 = vmax.f32 %v2054, 0.0
  %v2178 = vmax.f32 %v2059, 0.0
  %v2179 = vmax.f32 %v2062, 0.0
  %v2180 = vmax.f32 %v2067, 0.0
  %v2181 = vmax.f32 %v2070, 0.0
  %v2182 = vmax.f32 %v2075, 0.0
  %v2183 = vmax.f32 %v2078, 0.0
  %v2184 = vmax.f32 %v2083, 0.0
  %v2185 = vmax.f32 %v2086, 0.0
  %v2186 = vmax.f32 %v2091, 0.0
  %v2187 = vmax.f32 %v2094, 0.0
  %v2188 = vmax.f32 %v2099, 0.0
  %v2189 = vmax.f32 %v2102, 0.0
  %v2190 = vmax.f32 %v2107, 0.0
  %v2191 = vmax.f32 %v2110, 0.0
  %v2192 = vmax.f32 %v2115, 0.0
  %v2193 = vmax.f32 %v2118, 0.0
  %v2194 = vmax.f32 %v2123, 0.0
  %v2195 = vmax.f32 %v2126, 0.0
  %v2196 = vmax.f32 %v2131, 0.0
  %v2197 = vmax.f32 %v2134, 0.0
  %v2198 = vmax.f32 %v2139, 0.0
  %v2199 = vmax.f32 %v2142, 0.0
  %v2200 = vmax.f32 %v2147, 0.0
  %v2201 = vmax.f32 %v1623, %v2152
  %v2202 = vmax.f32 %v1624, %v2153
  %v2203 = vmax.f32 %v1625, %v2154
  %v2204 = vmax.f32 %v1626, %v2155
  %v2205 = vmax.f32 %v1627, %v2156
  %v2206 = vmax.f32 %v1628, %v2157
  %v2207 = vmax.f32 %v1629, %v2158
  %v2208 = vmax.f32 %v1630, %v2159
  %v2209 = vmax.f32 %v1631, %v2160
  %v2210 = vmax.f32 %v1632, %v2161
  %v2211 = vmax.f32 %v1633, %v2162
  %v2212 = vmax.f32 %v1634, %v2163
  %v2213 = vmax.f32 %v1635, %v2164
  %v2214 = vmax.f32 %v1636, %v2165
  %v2215 = vmax.f32 %v1637, %v2166
  %v2216 = vmax.f32 %v1638, %v2167
  %v2217 = vmax.f32 %v1639, %v2168
  %v2218 = vmax.f32 %v1640, %v2169
  %v2219 = vmax.f32 %v1641, %v2170
  %v2220 = vmax.f32 %v1642, %v2171
  %v2221 = vmax.f32 %v1643, %v2172
  %v2222 = vmax.f32 %v1644, %v2173
  %v2223 = vmax.f32 %v1645, %v2174
  %v2224 = vmax.f32 %v1646, %v2175
  %v2225 = vmax.f32 %v1647, %v2176
  %v2226 = vmax.f32 %v1648, %v2177
  %v2227 = vmax.f32 %v1649, %v2178
  %v2228 = vmax.f32 %v1650, %v2179
  %v2229 = vmax.f32 %v1651, %v2180
  %v2230 = vmax.f32 %v1652, %v2181
  %v2231 = vmax.f32 %v1653, %v2182
  %v2232 = vmax.f32 %v1654, %v2183
  %v2233 = vmax.f32 %v1655, %v2184
  %v2234 = vmax.f32 %v1656, %v2185
  %v2235 = vmax.f32 %v1657, %v2186
  %v2236 = vmax.f32 %v1658, %v2187
  %v2237 = vmax.f32 %v1659, %v2188
  %v2238 = vmax.f32 %v1660, %v2189
  %v2239 = vmax.f32 %v1661, %v2190
  %v2240 = vmax.f32 %v1662, %v2191
  %v2241 = vmax.f32 %v1663, %v2192
  %v2242 = vmax.f32 %v1664, %v2193
  %v2243 = vmax.f32 %v1665, %v2194
  %v2244 = vmax.f32 %v1666, %v2195
  %v2245 = vmax.f32 %v1667, %v2196
  %v2246 = vmax.f32 %v1668, %v2197
  %v2247 = vmax.f32 %v1669, %v2198
  %v2248 = vmax.f32 %v1670, %v2199
  %v2249 = vmax.f32 %v1671, %v2200
  %v2250 = vmax.f32 %v1094, %v2201
  %v2251 = vmax.f32 %v1095, %v2202
  %v2252 = vmax.f32 %v1096, %v2203
  %v2253 = vmax.f32 %v1097, %v2204
  %v2254 = vmax.f32 %v1098, %v2205
  %v2255 = vmax.f32 %v1099, %v2206
  %v2256 = vmax.f32 %v1100, %v2207
  %v2257 = vmax.f32 %v1101, %v2208
  %v2258 = vmax.f32 %v1102, %v2209
  %v2259 = vmax.f32 %v1103, %v2210
  %v2260 = vmax.f32 %v1104, %v2211
  %v2261 = vmax.f32 %v1105, %v2212
  %v2262 = vmax.f32 %v1106, %v2213
  %v2263 = vmax.f32 %v1107, %v2214
  %v2264 = vmax.f32 %v1108, %v2215
  %v2265 = vmax.f32 %v1109, %v2216
  %v2266 = vmax.f32 %v1110, %v2217
  %v2267 = vmax.f32 %v1111, %v2218
  %v2268 = vmax.f32 %v1112, %v2219
  %v2269 = vmax.f32 %v1113, %v2220
  %v2270 = vmax.f32 %v1114, %v2221
  %v2271 = vmax.f32 %v1115, %v2222
  %v2272 = vmax.f32 %v1116, %v2223
  %v2273 = vmax.f32 %v1117, %v2224
  %v2274 = vmax.f32 %v1118, %v2225
  %v2275 = vmax.f32 %v1119, %v2226
  %v2276 = vmax.f32 %v1120, %v2227
  %v2277 = vmax.f32 %v1121, %v2228
  %v2278 = vmax.f32 %v1122, %v2229
  %v2279 = vmax.f32 %v1123, %v2230
  %v2280 = vmax.f32 %v1124, %v2231
  %v2281 = vmax.f32 %v1125, %v2232
  %v2282 = vmax.f32 %v1126, %v2233
  %v2283 = vmax.f32 %v1127, %v2234
  %v2284 = vmax.f32 %v1128, %v2235
  %v2285 = vmax.f32 %v1129, %v2236
  %v2286 = vmax.f32 %v1130, %v2237
  %v2287 = vmax.f32 %v1131, %v2238
  %v2288 = vmax.f32 %v1132, %v2239
  %v2289 = vmax.f32 %v1133, %v2240
  %v2290 = vmax.f32 %v1134, %v2241
  %v2291 = vmax.f32 %v1135, %v2242
  %v2292 = vmax.f32 %v1136, %v2243
  %v2293 = vmax.f32 %v1137, %v2244
  %v2294 = vmax.f32 %v1138, %v2245
  %v2295 = vmax.f32 %v1139, %v2246
  %v2296 = vmax.f32 %v1140, %v2247
  %v2297 = vmax.f32 %v1141, %v2248
  %v2298 = vmax.f32 %v1142, %v2249
  %v2299 = vpack.c.bf16 %v2251, %v2250
  %v2300 = vpack.c.bf16 %v2253, %v2252
  %v2301 = vpack.c.bf16 %v2255, %v2254
  %v2302 = vpack.c.bf16 %v2257, %v2256
  %v2303 = vpack.c.bf16 %v2259, %v2258
  %v2304 = vpack.c.bf16 %v2261, %v2260
  %v2305 = vpack.c.bf16 %v2263, %v2262
  %v2306 = vpack.c.bf16 %v2265, %v2264
  %v2307 = vpack.c.bf16 %v2267, %v2266
  %v2308 = vpack.c.bf16 %v2269, %v2268
  %v2309 = vpack.c.bf16 %v2271, %v2270
  %v2310 = vpack.c.bf16 %v2273, %v2272
  %v2311 = vpack.c.bf16 %v2275, %v2274
  %v2312 = vpack.c.bf16 %v2277, %v2276
  %v2313 = vpack.c.bf16 %v2279, %v2278
  %v2314 = vpack.c.bf16 %v2281, %v2280
  %v2315 = vpack.c.bf16 %v2283, %v2282
  %v2316 = vpack.c.bf16 %v2285, %v2284
  %v2317 = vpack.c.bf16 %v2287, %v2286
  %v2318 = vpack.c.bf16 %v2289, %v2288
  %v2319 = vpack.c.bf16 %v2291, %v2290
  %v2320 = vpack.c.bf16 %v2293, %v2292
  %v2321 = vpack.c.bf16 %v2295, %v2294
  %v2322 = vpack.c.bf16 %v2297, %v2296
  %v2323 = vpack.c.bf16 %v2298, %v2298
  %v2349 = vunpack.c.l.b16 %v2299
  %v2350 = vunpack.c.h.b16 %v2299
  %v2351 = vunpack.c.l.b16 %v2300
  %v2352 = vunpack.c.h.b16 %v2300
  %v2353 = vunpack.c.l.b16 %v2301
  %v2354 = vunpack.c.h.b16 %v2301
  %v2355 = vunpack.c.l.b16 %v2302
  %v2356 = vunpack.c.h.b16 %v2302
  %v2357 = vunpack.c.l.b16 %v2303
  %v2358 = vunpack.c.h.b16 %v2303
  %v2359 = vunpack.c.l.b16 %v2304
  %v2360 = vunpack.c.h.b16 %v2304
  %v2361 = vunpack.c.l.b16 %v2305
  %v2362 = vunpack.c.h.b16 %v2305
  %v2363 = vunpack.c.l.b16 %v2306
  %v2364 = vunpack.c.h.b16 %v2306
  %v2365 = vunpack.c.l.b16 %v2307
  %v2366 = vunpack.c.h.b16 %v2307
  %v2367 = vunpack.c.l.b16 %v2308
  %v2368 = vunpack.c.h.b16 %v2308
  %v2369 = vunpack.c.l.b16 %v2309
  %v2370 = vunpack.c.h.b16 %v2309
  %v2371 = vunpack.c.l.b16 %v2310
  %v2372 = vunpack.c.h.b16 %v2310
  %v2373 = vunpack.c.l.b16 %v2311
  %v2374 = vunpack.c.h.b16 %v2311
  %v2375 = vunpack.c.l.b16 %v2312
  %v2376 = vunpack.c.h.b16 %v2312
  %v2377 = vunpack.c.l.b16 %v2313
  %v2378 = vunpack.c.h.b16 %v2313
  %v2379 = vunpack.c.l.b16 %v2314
  %v2380 = vunpack.c.h.b16 %v2314
  %v2381 = vunpack.c.l.b16 %v2315
  %v2382 = vunpack.c.h.b16 %v2315
  %v2383 = vunpack.c.l.b16 %v2316
  %v2384 = vunpack.c.h.b16 %v2316
  %v2385 = vunpack.c.l.b16 %v2317
  %v2386 = vunpack.c.h.b16 %v2317
  %v2387 = vunpack.c.l.b16 %v2318
  %v2388 = vunpack.c.h.b16 %v2318
  %v2389 = vunpack.c.l.b16 %v2319
  %v2390 = vunpack.c.h.b16 %v2319
  %v2391 = vunpack.c.l.b16 %v2320
  %v2392 = vunpack.c.h.b16 %v2320
  %v2393 = vunpack.c.l.b16 %v2321
  %v2394 = vunpack.c.h.b16 %v2321
  %v2395 = vunpack.c.l.b16 %v2322
  %v2396 = vunpack.c.h.b16 %v2322
  %v2397 = vunpack.c.l.b16 %v2323
  %v2398 = vpack.c.b16 %v2349, %v2349
  %v2399 = vpack.c.b16 %v2350, %v2350
  %v2400 = vpack.c.b16 %v2351, %v2351
  %v2401 = vpack.c.b16 %v2352, %v2352
  %v2402 = vpack.c.b16 %v2353, %v2353
  %v2403 = vpack.c.b16 %v2354, %v2354
  %v2404 = vpack.c.b16 %v2355, %v2355
  %v2405 = vpack.c.b16 %v2356, %v2356
  %v2406 = vpack.c.b16 %v2357, %v2357
  %v2407 = vpack.c.b16 %v2358, %v2358
  %v2408 = vpack.c.b16 %v2359, %v2359
  %v2409 = vpack.c.b16 %v2360, %v2360
  %v2410 = vpack.c.b16 %v2361, %v2361
  %v2411 = vpack.c.b16 %v2362, %v2362
  %v2412 = vpack.c.b16 %v2363, %v2363
  %v2413 = vpack.c.b16 %v2364, %v2364
  %v2414 = vpack.c.b16 %v2365, %v2365
  %v2415 = vpack.c.b16 %v2366, %v2366
  %v2416 = vpack.c.b16 %v2367, %v2367
  %v2417 = vpack.c.b16 %v2368, %v2368
  %v2418 = vpack.c.b16 %v2369, %v2369
  %v2419 = vpack.c.b16 %v2370, %v2370
  %v2420 = vpack.c.b16 %v2371, %v2371
  %v2421 = vpack.c.b16 %v2372, %v2372
  %v2422 = vpack.c.b16 %v2373, %v2373
  %v2423 = vpack.c.b16 %v2374, %v2374
  %v2424 = vpack.c.b16 %v2375, %v2375
  %v2425 = vpack.c.b16 %v2376, %v2376
  %v2426 = vpack.c.b16 %v2377, %v2377
  %v2427 = vpack.c.b16 %v2378, %v2378
  %v2428 = vpack.c.b16 %v2379, %v2379
  %v2429 = vpack.c.b16 %v2380, %v2380
  %v2430 = vpack.c.b16 %v2381, %v2381
  %v2431 = vpack.c.b16 %v2382, %v2382
  %v2432 = vpack.c.b16 %v2383, %v2383
  %v2433 = vpack.c.b16 %v2384, %v2384
  %v2434 = vpack.c.b16 %v2385, %v2385
  %v2435 = vpack.c.b16 %v2386, %v2386
  %v2436 = vpack.c.b16 %v2387, %v2387
  %v2437 = vpack.c.b16 %v2388, %v2388
  %v2438 = vpack.c.b16 %v2389, %v2389
  %v2439 = vpack.c.b16 %v2390, %v2390
  %v2440 = vpack.c.b16 %v2391, %v2391
  %v2441 = vpack.c.b16 %v2392, %v2392
  %v2442 = vpack.c.b16 %v2393, %v2393
  %v2443 = vpack.c.b16 %v2394, %v2394
  %v2444 = vpack.c.b16 %v2395, %v2395
  %v2445 = vpack.c.b16 %v2396, %v2396
  %v2446 = vpack.c.b16 %v2397, %v2397
  %2496 = vst [vmem:[%s3] sm:$0xf] %v2398
  %2497 = vst [vmem:[%s3 + $0x4] sm:$0xf] %v2399
  %2498 = vst [vmem:[%s3 + $0x8] sm:$0xf] %v2400
  %2499 = vst [vmem:[%s3 + $0xc] sm:$0xf] %v2401
  %2500 = vst [vmem:[%s3 + $0x10] sm:$0xf] %v2402
  %2501 = vst [vmem:[%s3 + $0x14] sm:$0xf] %v2403
  %2502 = vst [vmem:[%s3 + $0x18] sm:$0xf] %v2404
  %2503 = vst [vmem:[%s3 + $0x1c] sm:$0xf] %v2405
  %2504 = vst [vmem:[%s3 + $0x20] sm:$0xf] %v2406
  %2505 = vst [vmem:[%s3 + $0x24] sm:$0xf] %v2407
  %2506 = vst [vmem:[%s3 + $0x28] sm:$0xf] %v2408
  %2507 = vst [vmem:[%s3 + $0x2c] sm:$0xf] %v2409
  %2508 = vst [vmem:[%s3 + $0x30] sm:$0xf] %v2410
  %2509 = vst [vmem:[%s3 + $0x34] sm:$0xf] %v2411
  %2510 = vst [vmem:[%s3 + $0x38] sm:$0xf] %v2412
  %2511 = vst [vmem:[%s3 + $0x3c] sm:$0xf] %v2413
  %2512 = vst [vmem:[%s3 + $0x40] sm:$0xf] %v2414
  %2513 = vst [vmem:[%s3 + $0x44] sm:$0xf] %v2415
  %2514 = vst [vmem:[%s3 + $0x48] sm:$0xf] %v2416
  %2515 = vst [vmem:[%s3 + $0x4c] sm:$0xf] %v2417
  %2516 = vst [vmem:[%s3 + $0x50] sm:$0xf] %v2418
  %2517 = vst [vmem:[%s3 + $0x54] sm:$0xf] %v2419
  %2518 = vst [vmem:[%s3 + $0x58] sm:$0xf] %v2420
  %2519 = vst [vmem:[%s3 + $0x5c] sm:$0xf] %v2421
  %2520 = vst [vmem:[%s3 + $0x60] sm:$0xf] %v2422
  %2521 = vst [vmem:[%s3 + $0x64] sm:$0xf] %v2423
  %2522 = vst [vmem:[%s3 + $0x68] sm:$0xf] %v2424
  %2523 = vst [vmem:[%s3 + $0x6c] sm:$0xf] %v2425
  %2524 = vst [vmem:[%s3 + $0x70] sm:$0xf] %v2426
  %2525 = vst [vmem:[%s3 + $0x74] sm:$0xf] %v2427
  %2526 = vst [vmem:[%s3 + $0x78] sm:$0xf] %v2428
  %2527 = vst [vmem:[%s3 + $0x7c] sm:$0xf] %v2429
  %2528 = vst [vmem:[%s3 + $0x80] sm:$0xf] %v2430
  %2529 = vst [vmem:[%s3 + $0x84] sm:$0xf] %v2431
  %2530 = vst [vmem:[%s3 + $0x88] sm:$0xf] %v2432
  %2531 = vst [vmem:[%s3 + $0x8c] sm:$0xf] %v2433
  %2532 = vst [vmem:[%s3 + $0x90] sm:$0xf] %v2434
  %2533 = vst [vmem:[%s3 + $0x94] sm:$0xf] %v2435
  %2534 = vst [vmem:[%s3 + $0x98] sm:$0xf] %v2436
  %2535 = vst [vmem:[%s3 + $0x9c] sm:$0xf] %v2437
  %2536 = vst [vmem:[%s3 + $0xa0] sm:$0xf] %v2438
  %2537 = vst [vmem:[%s3 + $0xa4] sm:$0xf] %v2439
  %2538 = vst [vmem:[%s3 + $0xa8] sm:$0xf] %v2440
  %2539 = vst [vmem:[%s3 + $0xac] sm:$0xf] %v2441
  %2540 = vst [vmem:[%s3 + $0xb0] sm:$0xf] %v2442
  %2541 = vst [vmem:[%s3 + $0xb4] sm:$0xf] %v2443
  %2542 = vst [vmem:[%s3 + $0xb8] sm:$0xf] %v2444
  %2543 = vst [vmem:[%s3 + $0xbc] sm:$0xf] %v2445
  %2544 = vst [vmem:[%s3 + $0xc0] sm:$0xf] %v2446
  // Predicated region
  $region14: #{simple_cnn_forward.3} parent=0 // pred_check
    _
  $region15: #{simple_cnn_forward.3} parent=0 // pred_check_branch
    %2546 = sbr.rel (0) target = $region17
  $region16: #{simple_cnn_forward.3} parent=0 // pred_region
    _
  $region17: #{simple_cnn_forward.3} parent=0 // pred_fallthru
    _
  // Predicated region
  $region18: #{simple_cnn_forward.3} parent=0 // pred_check
    _
  $region19: #{simple_cnn_forward.3} parent=0 // pred_check_branch
    %2548 = sbr.rel (0) target = $region21
  $region20: #{simple_cnn_forward.3} parent=0 // pred_region
    _
  $region21: #{simple_cnn_forward.3} parent=0 // pred_fallthru
    _

// kernel: simple_cnn_forward.5
$region0: #{simple_cnn_forward.5}
  #allocation0 [shape = 'u32[]', space=smem, size = 0x4, offset = 0x4, fixed_abs, tag = 'smem constant byte address 0x4 - core index']
  #allocation1 [shape = 'u32[144,128]{1,0:T(1,128)}', space=vmem, size = 0x12000, scoped, tag = 'internal scratch']
  %s0 = inlined_call_operand.vmem [shape: bf16[2,1568], index: 0, kind: input, shape index: {}]
  %s1 = inlined_call_operand.vmem [shape: bf16[1568,128], index: 1, kind: input, shape index: {}]
  %s2 = inlined_call_operand.vmem [shape: f32[1,128], index: 2, kind: input, shape index: {}]
  %s3 = inlined_call_operand.vmem [shape: bf16[128,10], index: 3, kind: input, shape index: {}]
  %s4 = inlined_call_operand.vmem [shape: f32[1,10], index: 4, kind: input, shape index: {}]
  %s5 = inlined_call_operand.hbm [shape: f32[2,10], index: 5, kind: output, shape index: {}]
  %s6 = sld [smem:[#allocation0]]
  $region30: #{simple_cnn_forward.5} parent=0
    _
  %s8 = ssub.s32 1, %s6
  %s9 = scalar_select 0, %s8, %s6
  $region1: #{simple_cnn_forward.5} parent=0
    #allocation2 [shape = 'u8[1024]{0}', space=vmem, size = 0x400, scoped, tag = 'output window, operand 0, single buffered']
    #allocation3 [shape = 's32[1]{0}', space=sflag, size = 0x4, scoped, tag = 'scoped memory for simple_cnn_forward.5']
    %10 = vsyncpa [#allocation3], 0
    // Predicated region
    $region2: #{simple_cnn_forward.5} parent=1 // pred_check
      _
    $region3: #{simple_cnn_forward.5} parent=1 // pred_check_branch
      %12 = sbr.rel (0) target = $region5
    $region4: #{simple_cnn_forward.5} parent=1 // pred_region
      _
    $region5: #{simple_cnn_forward.5} parent=1 // pred_fallthru
      _
    // Predicated region
    $region6: #{simple_cnn_forward.5} parent=1 // pred_check
      _
    $region7: #{simple_cnn_forward.5} parent=1 // pred_check_branch
      %14 = sbr.rel (0) target = $region9
    $region8: #{simple_cnn_forward.5} parent=1 // pred_region
      _
    $region9: #{simple_cnn_forward.5} parent=1 // pred_fallthru
      _
    // Predicated region
    $region10: #{simple_cnn_forward.5} parent=1 // pred_check
      _
    $region11: #{simple_cnn_forward.5} parent=1 // pred_check_branch
      %16 = sbr.rel (0) target = $region13
    $region12: #{simple_cnn_forward.5} parent=1 // pred_region
      _
    $region13: #{simple_cnn_forward.5} parent=1 // pred_fallthru
      _
    // Predicated region
    $region14: #{simple_cnn_forward.5} parent=1 // pred_check
      _
    $region15: #{simple_cnn_forward.5} parent=1 // pred_check_branch
      %18 = sbr.rel (0) target = $region17
    $region16: #{simple_cnn_forward.5} parent=1 // pred_region
      _
    $region17: #{simple_cnn_forward.5} parent=1 // pred_fallthru
      _
    // Predicated region
    $region18: #{simple_cnn_forward.5} parent=1 // pred_check
      _
    $region19: #{simple_cnn_forward.5} parent=1 // pred_check_branch
      %20 = sbr.rel (0) target = $region21
    $region20: #{simple_cnn_forward.5} parent=1 // pred_region
      _
    $region21: #{simple_cnn_forward.5} parent=1 // pred_fallthru
      _
    %v22 = vld [vmem:[%s0] sm:$0xff]
    %v23 = vld [vmem:[%s0 + $0x8] sm:$0x1f]
    %v24 = vld [vmem:[%s1] sm:$0xf]
    %v25 = vld [vmem:[%s1 + $0x4] sm:$0xf]
    %v26 = vld [vmem:[%s1 + $0x8] sm:$0xf]
    %v27 = vld [vmem:[%s1 + $0xc] sm:$0xf]
    %v28 = vld [vmem:[%s1 + $0x10] sm:$0xf]
    %v29 = vld [vmem:[%s1 + $0x14] sm:$0xf]
    %v30 = vld [vmem:[%s1 + $0x18] sm:$0xf]
    %v31 = vld [vmem:[%s1 + $0x1c] sm:$0xf]
    %v32 = vld [vmem:[%s1 + $0x20] sm:$0xf]
    %v33 = vld [vmem:[%s1 + $0x24] sm:$0xf]
    %v34 = vld [vmem:[%s1 + $0x28] sm:$0xf]
    %v35 = vld [vmem:[%s1 + $0x2c] sm:$0xf]
    %v36 = vld [vmem:[%s1 + $0x30] sm:$0xf]
    %v37 = vld [vmem:[%s1 + $0x34] sm:$0xf]
    %v38 = vld [vmem:[%s1 + $0x38] sm:$0xf]
    %v39 = vld [vmem:[%s1 + $0x3c] sm:$0xf]
    %v40 = vld [vmem:[%s1 + $0x40] sm:$0xf]
    %v41 = vld [vmem:[%s1 + $0x44] sm:$0xf]
    %v42 = vld [vmem:[%s1 + $0x48] sm:$0xf]
    %v43 = vld [vmem:[%s1 + $0x4c] sm:$0xf]
    %v44 = vld [vmem:[%s1 + $0x50] sm:$0xf]
    %v45 = vld [vmem:[%s1 + $0x54] sm:$0xf]
    %v46 = vld [vmem:[%s1 + $0x58] sm:$0xf]
    %v47 = vld [vmem:[%s1 + $0x5c] sm:$0xf]
    %v48 = vld [vmem:[%s1 + $0x60] sm:$0xf]
    %v49 = vld [vmem:[%s1 + $0x64] sm:$0xf]
    %v50 = vld [vmem:[%s1 + $0x68] sm:$0xf]
    %v51 = vld [vmem:[%s1 + $0x6c] sm:$0xf]
    %v52 = vld [vmem:[%s1 + $0x70] sm:$0xf]
    %v53 = vld [vmem:[%s1 + $0x74] sm:$0xf]
    %v54 = vld [vmem:[%s1 + $0x78] sm:$0xf]
    %v55 = vld [vmem:[%s1 + $0x7c] sm:$0xf]
    %v56 = vld [vmem:[%s1 + $0x80] sm:$0xf]
    %v57 = vld [vmem:[%s1 + $0x84] sm:$0xf]
    %v58 = vld [vmem:[%s1 + $0x88] sm:$0xf]
    %v59 = vld [vmem:[%s1 + $0x8c] sm:$0xf]
    %v60 = vld [vmem:[%s1 + $0x90] sm:$0xf]
    %v61 = vld [vmem:[%s1 + $0x94] sm:$0xf]
    %v62 = vld [vmem:[%s1 + $0x98] sm:$0xf]
    %v63 = vld [vmem:[%s1 + $0x9c] sm:$0xf]
    %v64 = vld [vmem:[%s1 + $0xa0] sm:$0xf]
    %v65 = vld [vmem:[%s1 + $0xa4] sm:$0xf]
    %v66 = vld [vmem:[%s1 + $0xa8] sm:$0xf]
    %v67 = vld [vmem:[%s1 + $0xac] sm:$0xf]
    %v68 = vld [vmem:[%s1 + $0xb0] sm:$0xf]
    %v69 = vld [vmem:[%s1 + $0xb4] sm:$0xf]
    %v70 = vld [vmem:[%s1 + $0xb8] sm:$0xf]
    %v71 = vld [vmem:[%s1 + $0xbc] sm:$0xf]
    %v72 = vld [vmem:[%s1 + $0xc0] sm:$0xf]
    %v73 = vld [vmem:[%s1 + $0xc4] sm:$0xf]
    %v74 = vld [vmem:[%s1 + $0xc8] sm:$0xf]
    %v75 = vld [vmem:[%s1 + $0xcc] sm:$0xf]
    %v76 = vld [vmem:[%s1 + $0xd0] sm:$0xf]
    %v77 = vld [vmem:[%s1 + $0xd4] sm:$0xf]
    %v78 = vld [vmem:[%s1 + $0xd8] sm:$0xf]
    %v79 = vld [vmem:[%s1 + $0xdc] sm:$0xf]
    %v80 = vld [vmem:[%s1 + $0xe0] sm:$0xf]
    %v81 = vld [vmem:[%s1 + $0xe4] sm:$0xf]
    %v82 = vld [vmem:[%s1 + $0xe8] sm:$0xf]
    %v83 = vld [vmem:[%s1 + $0xec] sm:$0xf]
    %v84 = vld [vmem:[%s1 + $0xf0] sm:$0xf]
    %v85 = vld [vmem:[%s1 + $0xf4] sm:$0xf]
    %v86 = vld [vmem:[%s1 + $0xf8] sm:$0xf]
    %v87 = vld [vmem:[%s1 + $0xfc] sm:$0xf]
    %v88 = vld [vmem:[%s1 + $0x100] sm:$0xf]
    %v89 = vld [vmem:[%s1 + $0x104] sm:$0xf]
    %v90 = vld [vmem:[%s1 + $0x108] sm:$0xf]
    %v91 = vld [vmem:[%s1 + $0x10c] sm:$0xf]
    %v92 = vld [vmem:[%s1 + $0x110] sm:$0xf]
    %v93 = vld [vmem:[%s1 + $0x114] sm:$0xf]
    %v94 = vld [vmem:[%s1 + $0x118] sm:$0xf]
    %v95 = vld [vmem:[%s1 + $0x11c] sm:$0xf]
    %v96 = vld [vmem:[%s1 + $0x120] sm:$0xf]
    %v97 = vld [vmem:[%s1 + $0x124] sm:$0xf]
    %v98 = vld [vmem:[%s1 + $0x128] sm:$0xf]
    %v99 = vld [vmem:[%s1 + $0x12c] sm:$0xf]
    %v100 = vld [vmem:[%s1 + $0x130] sm:$0xf]
    %v101 = vld [vmem:[%s1 + $0x134] sm:$0xf]
    %v102 = vld [vmem:[%s1 + $0x138] sm:$0xf]
    %v103 = vld [vmem:[%s1 + $0x13c] sm:$0xf]
    %v104 = vld [vmem:[%s1 + $0x140] sm:$0xf]
    %v105 = vld [vmem:[%s1 + $0x144] sm:$0xf]
    %v106 = vld [vmem:[%s1 + $0x148] sm:$0xf]
    %v107 = vld [vmem:[%s1 + $0x14c] sm:$0xf]
    %v108 = vld [vmem:[%s1 + $0x150] sm:$0xf]
    %v109 = vld [vmem:[%s1 + $0x154] sm:$0xf]
    %v110 = vld [vmem:[%s1 + $0x158] sm:$0xf]
    %v111 = vld [vmem:[%s1 + $0x15c] sm:$0xf]
    %v112 = vld [vmem:[%s1 + $0x160] sm:$0xf]
    %v113 = vld [vmem:[%s1 + $0x164] sm:$0xf]
    %v114 = vld [vmem:[%s1 + $0x168] sm:$0xf]
    %v115 = vld [vmem:[%s1 + $0x16c] sm:$0xf]
    %v116 = vld [vmem:[%s1 + $0x170] sm:$0xf]
    %v117 = vld [vmem:[%s1 + $0x174] sm:$0xf]
    %v118 = vld [vmem:[%s1 + $0x178] sm:$0xf]
    %v119 = vld [vmem:[%s1 + $0x17c] sm:$0xf]
    %v120 = vld [vmem:[%s1 + $0x180] sm:$0xf]
    %v121 = vld [vmem:[%s1 + $0x184] sm:$0xf]
    %v122 = vld [vmem:[%s1 + $0x188] sm:$0xf]
    %v123 = vld [vmem:[%s1 + $0x18c] sm:$0xf]
    %v124 = vld [vmem:[%s1 + $0x190] sm:$0xf]
    %v125 = vld [vmem:[%s1 + $0x194] sm:$0xf]
    %v126 = vld [vmem:[%s1 + $0x198] sm:$0xf]
    %v127 = vld [vmem:[%s1 + $0x19c] sm:$0xf]
    %v128 = vld [vmem:[%s1 + $0x1a0] sm:$0xf]
    %v129 = vld [vmem:[%s1 + $0x1a4] sm:$0xf]
    %v130 = vld [vmem:[%s1 + $0x1a8] sm:$0xf]
    %v131 = vld [vmem:[%s1 + $0x1ac] sm:$0xf]
    %v132 = vld [vmem:[%s1 + $0x1b0] sm:$0xf]
    %v133 = vld [vmem:[%s1 + $0x1b4] sm:$0xf]
    %v134 = vld [vmem:[%s1 + $0x1b8] sm:$0xf]
    %v135 = vld [vmem:[%s1 + $0x1bc] sm:$0xf]
    %v136 = vld [vmem:[%s1 + $0x1c0] sm:$0xf]
    %v137 = vld [vmem:[%s1 + $0x1c4] sm:$0xf]
    %v138 = vld [vmem:[%s1 + $0x1c8] sm:$0xf]
    %v139 = vld [vmem:[%s1 + $0x1cc] sm:$0xf]
    %v140 = vld [vmem:[%s1 + $0x1d0] sm:$0xf]
    %v141 = vld [vmem:[%s1 + $0x1d4] sm:$0xf]
    %v142 = vld [vmem:[%s1 + $0x1d8] sm:$0xf]
    %v143 = vld [vmem:[%s1 + $0x1dc] sm:$0xf]
    %v144 = vld [vmem:[%s1 + $0x1e0] sm:$0xf]
    %v145 = vld [vmem:[%s1 + $0x1e4] sm:$0xf]
    %v146 = vld [vmem:[%s1 + $0x1e8] sm:$0xf]
    %v147 = vld [vmem:[%s1 + $0x1ec] sm:$0xf]
    %v148 = vld [vmem:[%s1 + $0x1f0] sm:$0xf]
    %v149 = vld [vmem:[%s1 + $0x1f4] sm:$0xf]
    %v150 = vld [vmem:[%s1 + $0x1f8] sm:$0xf]
    %v151 = vld [vmem:[%s1 + $0x1fc] sm:$0xf]
    %v152 = vld [vmem:[%s1 + $0x200] sm:$0xf]
    %v153 = vld [vmem:[%s1 + $0x204] sm:$0xf]
    %v154 = vld [vmem:[%s1 + $0x208] sm:$0xf]
    %v155 = vld [vmem:[%s1 + $0x20c] sm:$0xf]
    %v156 = vld [vmem:[%s1 + $0x210] sm:$0xf]
    %v157 = vld [vmem:[%s1 + $0x214] sm:$0xf]
    %v158 = vld [vmem:[%s1 + $0x218] sm:$0xf]
    %v159 = vld [vmem:[%s1 + $0x21c] sm:$0xf]
    %v160 = vld [vmem:[%s1 + $0x220] sm:$0xf]
    %v161 = vld [vmem:[%s1 + $0x224] sm:$0xf]
    %v162 = vld [vmem:[%s1 + $0x228] sm:$0xf]
    %v163 = vld [vmem:[%s1 + $0x22c] sm:$0xf]
    %v164 = vld [vmem:[%s1 + $0x230] sm:$0xf]
    %v165 = vld [vmem:[%s1 + $0x234] sm:$0xf]
    %v166 = vld [vmem:[%s1 + $0x238] sm:$0xf]
    %v167 = vld [vmem:[%s1 + $0x23c] sm:$0xf]
    %v168 = vld [vmem:[%s1 + $0x240] sm:$0xf]
    %v169 = vld [vmem:[%s1 + $0x244] sm:$0xf]
    %v170 = vld [vmem:[%s1 + $0x248] sm:$0xf]
    %v171 = vld [vmem:[%s1 + $0x24c] sm:$0xf]
    %v172 = vld [vmem:[%s1 + $0x250] sm:$0xf]
    %v173 = vld [vmem:[%s1 + $0x254] sm:$0xf]
    %v174 = vld [vmem:[%s1 + $0x258] sm:$0xf]
    %v175 = vld [vmem:[%s1 + $0x25c] sm:$0xf]
    %v176 = vld [vmem:[%s1 + $0x260] sm:$0xf]
    %v177 = vld [vmem:[%s1 + $0x264] sm:$0xf]
    %v178 = vld [vmem:[%s1 + $0x268] sm:$0xf]
    %v179 = vld [vmem:[%s1 + $0x26c] sm:$0xf]
    %v180 = vld [vmem:[%s1 + $0x270] sm:$0xf]
    %v181 = vld [vmem:[%s1 + $0x274] sm:$0xf]
    %v182 = vld [vmem:[%s1 + $0x278] sm:$0xf]
    %v183 = vld [vmem:[%s1 + $0x27c] sm:$0xf]
    %v184 = vld [vmem:[%s1 + $0x280] sm:$0xf]
    %v185 = vld [vmem:[%s1 + $0x284] sm:$0xf]
    %v186 = vld [vmem:[%s1 + $0x288] sm:$0xf]
    %v187 = vld [vmem:[%s1 + $0x28c] sm:$0xf]
    %v188 = vld [vmem:[%s1 + $0x290] sm:$0xf]
    %v189 = vld [vmem:[%s1 + $0x294] sm:$0xf]
    %v190 = vld [vmem:[%s1 + $0x298] sm:$0xf]
    %v191 = vld [vmem:[%s1 + $0x29c] sm:$0xf]
    %v192 = vld [vmem:[%s1 + $0x2a0] sm:$0xf]
    %v193 = vld [vmem:[%s1 + $0x2a4] sm:$0xf]
    %v194 = vld [vmem:[%s1 + $0x2a8] sm:$0xf]
    %v195 = vld [vmem:[%s1 + $0x2ac] sm:$0xf]
    %v196 = vld [vmem:[%s1 + $0x2b0] sm:$0xf]
    %v197 = vld [vmem:[%s1 + $0x2b4] sm:$0xf]
    %v198 = vld [vmem:[%s1 + $0x2b8] sm:$0xf]
    %v199 = vld [vmem:[%s1 + $0x2bc] sm:$0xf]
    %v200 = vld [vmem:[%s1 + $0x2c0] sm:$0xf]
    %v201 = vld [vmem:[%s1 + $0x2c4] sm:$0xf]
    %v202 = vld [vmem:[%s1 + $0x2c8] sm:$0xf]
    %v203 = vld [vmem:[%s1 + $0x2cc] sm:$0xf]
    %v204 = vld [vmem:[%s1 + $0x2d0] sm:$0xf]
    %v205 = vld [vmem:[%s1 + $0x2d4] sm:$0xf]
    %v206 = vld [vmem:[%s1 + $0x2d8] sm:$0xf]
    %v207 = vld [vmem:[%s1 + $0x2dc] sm:$0xf]
    %v208 = vld [vmem:[%s1 + $0x2e0] sm:$0xf]
    %v209 = vld [vmem:[%s1 + $0x2e4] sm:$0xf]
    %v210 = vld [vmem:[%s1 + $0x2e8] sm:$0xf]
    %v211 = vld [vmem:[%s1 + $0x2ec] sm:$0xf]
    %v212 = vld [vmem:[%s1 + $0x2f0] sm:$0xf]
    %v213 = vld [vmem:[%s1 + $0x2f4] sm:$0xf]
    %v214 = vld [vmem:[%s1 + $0x2f8] sm:$0xf]
    %v215 = vld [vmem:[%s1 + $0x2fc] sm:$0xf]
    %v216 = vld [vmem:[%s1 + $0x300] sm:$0xf]
    %v217 = vld [vmem:[%s1 + $0x304] sm:$0xf]
    %v218 = vld [vmem:[%s1 + $0x308] sm:$0xf]
    %v219 = vld [vmem:[%s1 + $0x30c] sm:$0xf]
    %v220 = vld [vmem:[%s2] sm:$0x1]
    %v222 = vlaneseq
    %v223 = vshrl.u32 %v222, 7
    %v224 = vsub.s32 0, %v223
    %v225 = vrot.slane %v220, %v224
    %v229 = vcombine.high %v22, %v22
    %v231 = vunpack.c.l.s4 1966171168
    %v232 = vunpack.c.0.s8 %v231
    %v233 = vlaneseq
    %v234 = vshrl.u32 %v233, 7
    %v235 = vsub.s32 %v232, %v234
    %v236 = vrot.slane %v22, %v235
    %v238 = vunpack.c.l.s4 1966171168
    %v239 = vunpack.c.0.s8 %v238
    %v240 = vlaneseq
    %v241 = vshrl.u32 %v240, 7
    %v242 = vsub.s32 %v239, %v241
    %v243 = vrot.slane %v229, %v242
    %v244 = vcombine.high %v236, %v236
    %v245 = vcombine.high %v243, %v243
    %v247 = vunpack.c.l.s4 1966171168
    %v248 = vunpack.c.0.s8 %v247
    %v249 = vlaneseq
    %v250 = vshrl.u32 %v249, 7
    %v251 = vsub.s32 %v248, %v250
    %v252 = vrot.slane %v236, %v251
    %v254 = vunpack.c.l.s4 1966171168
    %v255 = vunpack.c.0.s8 %v254
    %v256 = vlaneseq
    %v257 = vshrl.u32 %v256, 7
    %v258 = vsub.s32 %v255, %v257
    %v259 = vrot.slane %v243, %v258
    %v261 = vunpack.c.l.s4 1966171168
    %v262 = vunpack.c.0.s8 %v261
    %v263 = vlaneseq
    %v264 = vshrl.u32 %v263, 7
    %v265 = vsub.s32 %v262, %v264
    %v266 = vrot.slane %v244, %v265
    %v268 = vunpack.c.l.s4 1966171168
    %v269 = vunpack.c.0.s8 %v268
    %v270 = vlaneseq
    %v271 = vshrl.u32 %v270, 7
    %v272 = vsub.s32 %v269, %v271
    %v273 = vrot.slane %v245, %v272
    %v274 = vcombine.high %v252, %v252
    %v275 = vcombine.high %v259, %v259
    %v276 = vcombine.high %v266, %v266
    %v277 = vcombine.high %v273, %v273
    %v278 = vcombine.high %v23, %v23
    %v280 = vunpack.c.l.s4 1966171168
    %v281 = vunpack.c.0.s8 %v280
    %v282 = vlaneseq
    %v283 = vshrl.u32 %v282, 7
    %v284 = vsub.s32 %v281, %v283
    %v285 = vrot.slane %v23, %v284
    %v287 = vunpack.c.l.s4 1966171168
    %v288 = vunpack.c.0.s8 %v287
    %v289 = vlaneseq
    %v290 = vshrl.u32 %v289, 7
    %v291 = vsub.s32 %v288, %v290
    %v292 = vrot.slane %v278, %v291
    %v293 = vcombine.high %v285, %v285
    %v295 = vunpack.c.l.s4 1966171168
    %v296 = vunpack.c.0.s8 %v295
    %v297 = vlaneseq
    %v298 = vshrl.u32 %v297, 7
    %v299 = vsub.s32 %v296, %v298
    %v300 = vrot.slane %v285, %v299
    %v302 = vunpack.c.l.s4 1966171168
    %v303 = vunpack.c.0.s8 %v302
    %v304 = vlaneseq
    %v305 = vshrl.u32 %v304, 7
    %v306 = vsub.s32 %v303, %v305
    %v307 = vrot.slane %v292, %v306
    %v309 = vunpack.c.l.s4 1966171168
    %v310 = vunpack.c.0.s8 %v309
    %v311 = vlaneseq
    %v312 = vshrl.u32 %v311, 7
    %v313 = vsub.s32 %v310, %v312
    %v314 = vrot.slane %v293, %v313
    %v315 = vcombine.high %v300, %v300
    %v316 = vcombine.high %v314, %v314
    %v525 = vunpack.c.l.b16 %v24
    %v526 = vunpack.c.l.b16 %v25
    %v527 = vunpack.c.l.b16 %v26
    %v528 = vunpack.c.l.b16 %v27
    %v529 = vunpack.c.l.b16 %v28
    %v530 = vunpack.c.l.b16 %v29
    %v531 = vunpack.c.l.b16 %v30
    %v532 = vunpack.c.l.b16 %v31
    %v533 = vunpack.c.l.b16 %v32
    %v534 = vunpack.c.l.b16 %v33
    %v535 = vunpack.c.l.b16 %v34
    %v536 = vunpack.c.l.b16 %v35
    %v537 = vunpack.c.l.b16 %v36
    %v538 = vunpack.c.l.b16 %v37
    %v539 = vunpack.c.l.b16 %v38
    %v540 = vunpack.c.l.b16 %v39
    %v541 = vunpack.c.l.b16 %v40
    %v542 = vunpack.c.l.b16 %v41
    %v543 = vunpack.c.l.b16 %v42
    %v544 = vunpack.c.l.b16 %v43
    %v545 = vunpack.c.l.b16 %v44
    %v546 = vunpack.c.l.b16 %v45
    %v547 = vunpack.c.l.b16 %v46
    %v548 = vunpack.c.l.b16 %v47
    %v549 = vunpack.c.l.b16 %v48
    %v550 = vunpack.c.l.b16 %v49
    %v551 = vunpack.c.l.b16 %v50
    %v552 = vunpack.c.l.b16 %v51
    %v553 = vunpack.c.l.b16 %v52
    %v554 = vunpack.c.l.b16 %v53
    %v555 = vunpack.c.l.b16 %v54
    %v556 = vunpack.c.l.b16 %v55
    %v557 = vunpack.c.l.b16 %v56
    %v558 = vunpack.c.l.b16 %v57
    %v559 = vunpack.c.l.b16 %v58
    %v560 = vunpack.c.l.b16 %v59
    %v561 = vunpack.c.l.b16 %v60
    %v562 = vunpack.c.l.b16 %v61
    %v563 = vunpack.c.l.b16 %v62
    %v564 = vunpack.c.l.b16 %v63
    %v565 = vunpack.c.l.b16 %v64
    %v566 = vunpack.c.l.b16 %v65
    %v567 = vunpack.c.l.b16 %v66
    %v568 = vunpack.c.l.b16 %v67
    %v569 = vunpack.c.l.b16 %v68
    %v570 = vunpack.c.l.b16 %v69
    %v571 = vunpack.c.l.b16 %v70
    %v572 = vunpack.c.l.b16 %v71
    %v573 = vunpack.c.l.b16 %v72
    %v574 = vunpack.c.l.b16 %v73
    %v575 = vunpack.c.l.b16 %v74
    %v576 = vunpack.c.l.b16 %v75
    %v577 = vunpack.c.l.b16 %v76
    %v578 = vunpack.c.l.b16 %v77
    %v579 = vunpack.c.l.b16 %v78
    %v580 = vunpack.c.l.b16 %v79
    %v581 = vunpack.c.l.b16 %v80
    %v582 = vunpack.c.l.b16 %v81
    %v583 = vunpack.c.l.b16 %v82
    %v584 = vunpack.c.l.b16 %v83
    %v585 = vunpack.c.l.b16 %v84
    %v586 = vunpack.c.l.b16 %v85
    %v587 = vunpack.c.l.b16 %v86
    %v588 = vunpack.c.l.b16 %v87
    %v589 = vunpack.c.l.b16 %v88
    %v590 = vunpack.c.l.b16 %v89
    %v591 = vunpack.c.l.b16 %v90
    %v592 = vunpack.c.l.b16 %v91
    %v593 = vunpack.c.l.b16 %v92
    %v594 = vunpack.c.l.b16 %v93
    %v595 = vunpack.c.l.b16 %v94
    %v596 = vunpack.c.l.b16 %v95
    %v597 = vunpack.c.l.b16 %v96
    %v598 = vunpack.c.l.b16 %v97
    %v599 = vunpack.c.l.b16 %v98
    %v600 = vunpack.c.l.b16 %v99
    %v601 = vunpack.c.l.b16 %v100
    %v602 = vunpack.c.l.b16 %v101
    %v603 = vunpack.c.l.b16 %v102
    %v604 = vunpack.c.l.b16 %v103
    %v605 = vunpack.c.l.b16 %v104
    %v606 = vunpack.c.l.b16 %v105
    %v607 = vunpack.c.l.b16 %v106
    %v608 = vunpack.c.l.b16 %v107
    %v609 = vunpack.c.l.b16 %v108
    %v610 = vunpack.c.l.b16 %v109
    %v611 = vunpack.c.l.b16 %v110
    %v612 = vunpack.c.l.b16 %v111
    %v613 = vunpack.c.l.b16 %v112
    %v614 = vunpack.c.l.b16 %v113
    %v615 = vunpack.c.l.b16 %v114
    %v616 = vunpack.c.l.b16 %v115
    %v617 = vunpack.c.l.b16 %v116
    %v618 = vunpack.c.l.b16 %v117
    %v619 = vunpack.c.l.b16 %v118
    %v620 = vunpack.c.l.b16 %v119
    %v621 = vunpack.c.l.b16 %v120
    %v622 = vunpack.c.l.b16 %v121
    %v623 = vunpack.c.l.b16 %v122
    %v624 = vunpack.c.l.b16 %v123
    %v625 = vunpack.c.l.b16 %v124
    %v626 = vunpack.c.l.b16 %v125
    %v627 = vunpack.c.l.b16 %v126
    %v628 = vunpack.c.l.b16 %v127
    %v629 = vunpack.c.l.b16 %v128
    %v630 = vunpack.c.l.b16 %v129
    %v631 = vunpack.c.l.b16 %v130
    %v632 = vunpack.c.l.b16 %v131
    %v633 = vunpack.c.l.b16 %v132
    %v634 = vunpack.c.l.b16 %v133
    %v635 = vunpack.c.l.b16 %v134
    %v636 = vunpack.c.l.b16 %v135
    %v637 = vunpack.c.l.b16 %v136
    %v638 = vunpack.c.l.b16 %v137
    %v639 = vunpack.c.l.b16 %v138
    %v640 = vunpack.c.l.b16 %v139
    %v641 = vunpack.c.l.b16 %v140
    %v642 = vunpack.c.l.b16 %v141
    %v643 = vunpack.c.l.b16 %v142
    %v644 = vunpack.c.l.b16 %v143
    %v645 = vunpack.c.l.b16 %v144
    %v646 = vunpack.c.l.b16 %v145
    %v647 = vunpack.c.l.b16 %v146
    %v648 = vunpack.c.l.b16 %v147
    %v649 = vunpack.c.l.b16 %v148
    %v650 = vunpack.c.l.b16 %v149
    %v651 = vunpack.c.l.b16 %v150
    %v652 = vunpack.c.l.b16 %v151
    %v653 = vunpack.c.l.b16 %v152
    %v654 = vunpack.c.l.b16 %v153
    %v655 = vunpack.c.l.b16 %v154
    %v656 = vunpack.c.l.b16 %v155
    %v657 = vunpack.c.l.b16 %v156
    %v658 = vunpack.c.l.b16 %v157
    %v659 = vunpack.c.l.b16 %v158
    %v660 = vunpack.c.l.b16 %v159
    %v661 = vunpack.c.l.b16 %v160
    %v662 = vunpack.c.l.b16 %v161
    %v663 = vunpack.c.l.b16 %v162
    %v664 = vunpack.c.l.b16 %v163
    %v665 = vunpack.c.l.b16 %v164
    %v666 = vunpack.c.l.b16 %v165
    %v667 = vunpack.c.l.b16 %v166
    %v668 = vunpack.c.l.b16 %v167
    %v669 = vunpack.c.l.b16 %v168
    %v670 = vunpack.c.l.b16 %v169
    %v671 = vunpack.c.l.b16 %v170
    %v672 = vunpack.c.l.b16 %v171
    %v673 = vunpack.c.l.b16 %v172
    %v674 = vunpack.c.l.b16 %v173
    %v675 = vunpack.c.l.b16 %v174
    %v676 = vunpack.c.l.b16 %v175
    %v677 = vunpack.c.l.b16 %v176
    %v678 = vunpack.c.l.b16 %v177
    %v679 = vunpack.c.l.b16 %v178
    %v680 = vunpack.c.l.b16 %v179
    %v681 = vunpack.c.l.b16 %v180
    %v682 = vunpack.c.l.b16 %v181
    %v683 = vunpack.c.l.b16 %v182
    %v684 = vunpack.c.l.b16 %v183
    %v685 = vunpack.c.l.b16 %v184
    %v686 = vunpack.c.l.b16 %v185
    %v687 = vunpack.c.l.b16 %v186
    %v688 = vunpack.c.l.b16 %v187
    %v689 = vunpack.c.l.b16 %v188
    %v690 = vunpack.c.l.b16 %v189
    %v691 = vunpack.c.l.b16 %v190
    %v692 = vunpack.c.l.b16 %v191
    %v693 = vunpack.c.l.b16 %v192
    %v694 = vunpack.c.l.b16 %v193
    %v695 = vunpack.c.l.b16 %v194
    %v696 = vunpack.c.l.b16 %v195
    %v697 = vunpack.c.l.b16 %v196
    %v698 = vunpack.c.l.b16 %v197
    %v699 = vunpack.c.l.b16 %v198
    %v700 = vunpack.c.l.b16 %v199
    %v701 = vunpack.c.l.b16 %v200
    %v702 = vunpack.c.l.b16 %v201
    %v703 = vunpack.c.l.b16 %v202
    %v704 = vunpack.c.l.b16 %v203
    %v705 = vunpack.c.l.b16 %v204
    %v706 = vunpack.c.l.b16 %v205
    %v707 = vunpack.c.l.b16 %v206
    %v708 = vunpack.c.l.b16 %v207
    %v709 = vunpack.c.l.b16 %v208
    %v710 = vunpack.c.l.b16 %v209
    %v711 = vunpack.c.l.b16 %v210
    %v712 = vunpack.c.l.b16 %v211
    %v713 = vunpack.c.l.b16 %v212
    %v714 = vunpack.c.l.b16 %v213
    %v715 = vunpack.c.l.b16 %v214
    %v716 = vunpack.c.l.b16 %v215
    %v717 = vunpack.c.l.b16 %v216
    %v718 = vunpack.c.l.b16 %v217
    %v719 = vunpack.c.l.b16 %v218
    %v720 = vunpack.c.l.b16 %v219
    %v721 = vpack.c.b16 %v526, %v525
    %v722 = vpack.c.b16 %v528, %v527
    %v723 = vpack.c.b16 %v530, %v529
    %v724 = vpack.c.b16 %v532, %v531
    %v725 = vpack.c.b16 %v534, %v533
    %v726 = vpack.c.b16 %v536, %v535
    %v727 = vpack.c.b16 %v538, %v537
    %v728 = vpack.c.b16 %v540, %v539
    %v729 = vpack.c.b16 %v542, %v541
    %v730 = vpack.c.b16 %v544, %v543
    %v731 = vpack.c.b16 %v546, %v545
    %v732 = vpack.c.b16 %v548, %v547
    %v733 = vpack.c.b16 %v550, %v549
    %v734 = vpack.c.b16 %v552, %v551
    %v735 = vpack.c.b16 %v554, %v553
    %v736 = vpack.c.b16 %v556, %v555
    %v737 = vpack.c.b16 %v558, %v557
    %v738 = vpack.c.b16 %v560, %v559
    %v739 = vpack.c.b16 %v562, %v561
    %v740 = vpack.c.b16 %v564, %v563
    %v741 = vpack.c.b16 %v566, %v565
    %v742 = vpack.c.b16 %v568, %v567
    %v743 = vpack.c.b16 %v570, %v569
    %v744 = vpack.c.b16 %v572, %v571
    %v745 = vpack.c.b16 %v574, %v573
    %v746 = vpack.c.b16 %v576, %v575
    %v747 = vpack.c.b16 %v578, %v577
    %v748 = vpack.c.b16 %v580, %v579
    %v749 = vpack.c.b16 %v582, %v581
    %v750 = vpack.c.b16 %v584, %v583
    %v751 = vpack.c.b16 %v586, %v585
    %v752 = vpack.c.b16 %v588, %v587
    %v753 = vpack.c.b16 %v590, %v589
    %v754 = vpack.c.b16 %v592, %v591
    %v755 = vpack.c.b16 %v594, %v593
    %v756 = vpack.c.b16 %v596, %v595
    %v757 = vpack.c.b16 %v598, %v597
    %v758 = vpack.c.b16 %v600, %v599
    %v759 = vpack.c.b16 %v602, %v601
    %v760 = vpack.c.b16 %v604, %v603
    %v761 = vpack.c.b16 %v606, %v605
    %v762 = vpack.c.b16 %v608, %v607
    %v763 = vpack.c.b16 %v610, %v609
    %v764 = vpack.c.b16 %v612, %v611
    %v765 = vpack.c.b16 %v614, %v613
    %v766 = vpack.c.b16 %v616, %v615
    %v767 = vpack.c.b16 %v618, %v617
    %v768 = vpack.c.b16 %v620, %v619
    %v769 = vpack.c.b16 %v622, %v621
    %v770 = vpack.c.b16 %v624, %v623
    %v771 = vpack.c.b16 %v626, %v625
    %v772 = vpack.c.b16 %v628, %v627
    %v773 = vpack.c.b16 %v630, %v629
    %v774 = vpack.c.b16 %v632, %v631
    %v775 = vpack.c.b16 %v634, %v633
    %v776 = vpack.c.b16 %v636, %v635
    %v777 = vpack.c.b16 %v638, %v637
    %v778 = vpack.c.b16 %v640, %v639
    %v779 = vpack.c.b16 %v642, %v641
    %v780 = vpack.c.b16 %v644, %v643
    %v781 = vpack.c.b16 %v646, %v645
    %v782 = vpack.c.b16 %v648, %v647
    %v783 = vpack.c.b16 %v650, %v649
    %v784 = vpack.c.b16 %v652, %v651
    %v785 = vpack.c.b16 %v654, %v653
    %v786 = vpack.c.b16 %v656, %v655
    %v787 = vpack.c.b16 %v658, %v657
    %v788 = vpack.c.b16 %v660, %v659
    %v789 = vpack.c.b16 %v662, %v661
    %v790 = vpack.c.b16 %v664, %v663
    %v791 = vpack.c.b16 %v666, %v665
    %v792 = vpack.c.b16 %v668, %v667
    %v793 = vpack.c.b16 %v670, %v669
    %v794 = vpack.c.b16 %v672, %v671
    %v795 = vpack.c.b16 %v674, %v673
    %v796 = vpack.c.b16 %v676, %v675
    %v797 = vpack.c.b16 %v678, %v677
    %v798 = vpack.c.b16 %v680, %v679
    %v799 = vpack.c.b16 %v682, %v681
    %v800 = vpack.c.b16 %v684, %v683
    %v801 = vpack.c.b16 %v686, %v685
    %v802 = vpack.c.b16 %v688, %v687
    %v803 = vpack.c.b16 %v690, %v689
    %v804 = vpack.c.b16 %v692, %v691
    %v805 = vpack.c.b16 %v694, %v693
    %v806 = vpack.c.b16 %v696, %v695
    %v807 = vpack.c.b16 %v698, %v697
    %v808 = vpack.c.b16 %v700, %v699
    %v809 = vpack.c.b16 %v702, %v701
    %v810 = vpack.c.b16 %v704, %v703
    %v811 = vpack.c.b16 %v706, %v705
    %v812 = vpack.c.b16 %v708, %v707
    %v813 = vpack.c.b16 %v710, %v709
    %v814 = vpack.c.b16 %v712, %v711
    %v815 = vpack.c.b16 %v714, %v713
    %v816 = vpack.c.b16 %v716, %v715
    %v817 = vpack.c.b16 %v718, %v717
    %v818 = vpack.c.b16 %v720, %v719
    %vm917 = vcmask 261120
    %v919 = vsel %vm917, %v307, 0
    %921 = vmatprep.subr.bf16.mxu0 0
    %922 = vmatpush1.bf16.msra.mxu0 %v728
    %923 = vmatprep.subr.bf16.mxu0 0
    %924 = vmatpush1.bf16.msra.mxu0 %v727
    %925 = vmatprep.subr.bf16.mxu0 0
    %926 = vmatpush1.bf16.msra.mxu0 %v726
    %927 = vmatprep.subr.bf16.mxu0 0
    %928 = vmatpush1.bf16.msra.mxu0 %v725
    %929 = vmatprep.subr.bf16.mxu0 0
    %930 = vmatpush1.bf16.msra.mxu0 %v724
    %931 = vmatprep.subr.bf16.mxu0 0
    %932 = vmatpush1.bf16.msra.mxu0 %v723
    %933 = vmatprep.subr.bf16.mxu0 0
    %934 = vmatpush1.bf16.msra.mxu0 %v722
    %935 = vmatprep.subr.bf16.mxu0 0
    %936 = vmatpush1.bf16.msra.mxu0 %v721
    %937 = vmatprep.subr.bf16.mxu0 0
    %938 = vmatpush2.bf16.msra.mxu0 %v736
    %939 = vmatprep.subr.bf16.mxu0 0
    %940 = vmatpush2.bf16.msra.mxu0 %v735
    %941 = vmatprep.subr.bf16.mxu0 0
    %942 = vmatpush2.bf16.msra.mxu0 %v734
    %943 = vmatprep.subr.bf16.mxu0 0
    %944 = vmatpush2.bf16.msra.mxu0 %v733
    %945 = vmatprep.subr.bf16.mxu0 0
    %946 = vmatpush2.bf16.msra.mxu0 %v732
    %947 = vmatprep.subr.bf16.mxu0 0
    %948 = vmatpush2.bf16.msra.mxu0 %v731
    %949 = vmatprep.subr.bf16.mxu0 0
    %950 = vmatpush2.bf16.msra.mxu0 %v730
    %951 = vmatprep.subr.bf16.mxu0 0
    %952 = vmatpush2.bf16.msra.mxu0 %v729
    %953 = vmatprep.mubr.bf16.mxu0 %v266
    %954 = vmatmul.mubr.bf16.gmra.mxu0 %v252
    %v955 = vpop.f32.mrf.mxu0
    %v956 = vadd.f32 %v225, %v955
    %v957 = vpop.f32.mrf.mxu0
    %v958 = vpop.f32.mrf.mxu0
    %v959 = vpop.f32.mrf.mxu0
    %960 = vdwg.mxu0
    %961 = vmatprep.subr.bf16.mxu0 0
    %962 = vmatpush1.bf16.msra.mxu0 %v744
    %963 = vmatprep.subr.bf16.mxu0 0
    %964 = vmatpush1.bf16.msra.mxu0 %v743
    %965 = vmatprep.subr.bf16.mxu0 0
    %966 = vmatpush1.bf16.msra.mxu0 %v742
    %967 = vmatprep.subr.bf16.mxu0 0
    %968 = vmatpush1.bf16.msra.mxu0 %v741
    %969 = vmatprep.subr.bf16.mxu0 0
    %970 = vmatpush1.bf16.msra.mxu0 %v740
    %971 = vmatprep.subr.bf16.mxu0 0
    %972 = vmatpush1.bf16.msra.mxu0 %v739
    %973 = vmatprep.subr.bf16.mxu0 0
    %974 = vmatpush1.bf16.msra.mxu0 %v738
    %975 = vmatprep.subr.bf16.mxu0 0
    %976 = vmatpush1.bf16.msra.mxu0 %v737
    %977 = vmatprep.subr.bf16.mxu0 0
    %978 = vmatpush2.bf16.msra.mxu0 %v752
    %979 = vmatprep.subr.bf16.mxu0 0
    %980 = vmatpush2.bf16.msra.mxu0 %v751
    %981 = vmatprep.subr.bf16.mxu0 0
    %982 = vmatpush2.bf16.msra.mxu0 %v750
    %983 = vmatprep.subr.bf16.mxu0 0
    %984 = vmatpush2.bf16.msra.mxu0 %v749
    %985 = vmatprep.subr.bf16.mxu0 0
    %986 = vmatpush2.bf16.msra.mxu0 %v748
    %987 = vmatprep.subr.bf16.mxu0 0
    %988 = vmatpush2.bf16.msra.mxu0 %v747
    %989 = vmatprep.subr.bf16.mxu0 0
    %990 = vmatpush2.bf16.msra.mxu0 %v746
    %991 = vmatprep.subr.bf16.mxu0 0
    %992 = vmatpush2.bf16.msra.mxu0 %v745
    %993 = vmatprep.mubr.bf16.mxu0 %v276
    %994 = vmatmul.mubr.bf16.gmra.mxu0 %v274
    %v995 = vpop.f32.mrf.mxu0
    %v996 = vadd.f32 %v956, %v995
    %v997 = vpop.f32.mrf.mxu0
    %v998 = vpop.f32.mrf.mxu0
    %v999 = vpop.f32.mrf.mxu0
    %1000 = vdwg.mxu0
    %1001 = vmatprep.subr.bf16.mxu0 0
    %1002 = vmatpush1.bf16.msra.mxu0 %v760
    %1003 = vmatprep.subr.bf16.mxu0 0
    %1004 = vmatpush1.bf16.msra.mxu0 %v759
    %1005 = vmatprep.subr.bf16.mxu0 0
    %1006 = vmatpush1.bf16.msra.mxu0 %v758
    %1007 = vmatprep.subr.bf16.mxu0 0
    %1008 = vmatpush1.bf16.msra.mxu0 %v757
    %1009 = vmatprep.subr.bf16.mxu0 0
    %1010 = vmatpush1.bf16.msra.mxu0 %v756
    %1011 = vmatprep.subr.bf16.mxu0 0
    %1012 = vmatpush1.bf16.msra.mxu0 %v755
    %1013 = vmatprep.subr.bf16.mxu0 0
    %1014 = vmatpush1.bf16.msra.mxu0 %v754
    %1015 = vmatprep.subr.bf16.mxu0 0
    %1016 = vmatpush1.bf16.msra.mxu0 %v753
    %1017 = vmatprep.subr.bf16.mxu0 0
    %1018 = vmatpush2.bf16.msra.mxu0 %v768
    %1019 = vmatprep.subr.bf16.mxu0 0
    %1020 = vmatpush2.bf16.msra.mxu0 %v767
    %1021 = vmatprep.subr.bf16.mxu0 0
    %1022 = vmatpush2.bf16.msra.mxu0 %v766
    %1023 = vmatprep.subr.bf16.mxu0 0
    %1024 = vmatpush2.bf16.msra.mxu0 %v765
    %1025 = vmatprep.subr.bf16.mxu0 0
    %1026 = vmatpush2.bf16.msra.mxu0 %v764
    %1027 = vmatprep.subr.bf16.mxu0 0
    %1028 = vmatpush2.bf16.msra.mxu0 %v763
    %1029 = vmatprep.subr.bf16.mxu0 0
    %1030 = vmatpush2.bf16.msra.mxu0 %v762
    %1031 = vmatprep.subr.bf16.mxu0 0
    %1032 = vmatpush2.bf16.msra.mxu0 %v761
    %1033 = vmatprep.mubr.bf16.mxu0 %v273
    %1034 = vmatmul.mubr.bf16.gmra.mxu0 %v259
    %v1035 = vpop.f32.mrf.mxu0
    %v1036 = vadd.f32 %v996, %v1035
    %v1037 = vpop.f32.mrf.mxu0
    %v1038 = vpop.f32.mrf.mxu0
    %v1039 = vpop.f32.mrf.mxu0
    %1040 = vdwg.mxu0
    %1041 = vmatprep.subr.bf16.mxu0 0
    %1042 = vmatpush1.bf16.msra.mxu0 %v776
    %1043 = vmatprep.subr.bf16.mxu0 0
    %1044 = vmatpush1.bf16.msra.mxu0 %v775
    %1045 = vmatprep.subr.bf16.mxu0 0
    %1046 = vmatpush1.bf16.msra.mxu0 %v774
    %1047 = vmatprep.subr.bf16.mxu0 0
    %1048 = vmatpush1.bf16.msra.mxu0 %v773
    %1049 = vmatprep.subr.bf16.mxu0 0
    %1050 = vmatpush1.bf16.msra.mxu0 %v772
    %1051 = vmatprep.subr.bf16.mxu0 0
    %1052 = vmatpush1.bf16.msra.mxu0 %v771
    %1053 = vmatprep.subr.bf16.mxu0 0
    %1054 = vmatpush1.bf16.msra.mxu0 %v770
    %1055 = vmatprep.subr.bf16.mxu0 0
    %1056 = vmatpush1.bf16.msra.mxu0 %v769
    %1057 = vmatprep.subr.bf16.mxu0 0
    %1058 = vmatpush2.bf16.msra.mxu0 %v784
    %1059 = vmatprep.subr.bf16.mxu0 0
    %1060 = vmatpush2.bf16.msra.mxu0 %v783
    %1061 = vmatprep.subr.bf16.mxu0 0
    %1062 = vmatpush2.bf16.msra.mxu0 %v782
    %1063 = vmatprep.subr.bf16.mxu0 0
    %1064 = vmatpush2.bf16.msra.mxu0 %v781
    %1065 = vmatprep.subr.bf16.mxu0 0
    %1066 = vmatpush2.bf16.msra.mxu0 %v780
    %1067 = vmatprep.subr.bf16.mxu0 0
    %1068 = vmatpush2.bf16.msra.mxu0 %v779
    %1069 = vmatprep.subr.bf16.mxu0 0
    %1070 = vmatpush2.bf16.msra.mxu0 %v778
    %1071 = vmatprep.subr.bf16.mxu0 0
    %1072 = vmatpush2.bf16.msra.mxu0 %v777
    %1073 = vmatprep.mubr.bf16.mxu0 %v277
    %1074 = vmatmul.mubr.bf16.gmra.mxu0 %v275
    %v1075 = vpop.f32.mrf.mxu0
    %v1076 = vadd.f32 %v1036, %v1075
    %v1077 = vpop.f32.mrf.mxu0
    %v1078 = vpop.f32.mrf.mxu0
    %v1079 = vpop.f32.mrf.mxu0
    %1080 = vdwg.mxu0
    %1081 = vmatprep.subr.bf16.mxu0 0
    %1082 = vmatpush1.bf16.msra.mxu0 %v792
    %1083 = vmatprep.subr.bf16.mxu0 0
    %1084 = vmatpush1.bf16.msra.mxu0 %v791
    %1085 = vmatprep.subr.bf16.mxu0 0
    %1086 = vmatpush1.bf16.msra.mxu0 %v790
    %1087 = vmatprep.subr.bf16.mxu0 0
    %1088 = vmatpush1.bf16.msra.mxu0 %v789
    %1089 = vmatprep.subr.bf16.mxu0 0
    %1090 = vmatpush1.bf16.msra.mxu0 %v788
    %1091 = vmatprep.subr.bf16.mxu0 0
    %1092 = vmatpush1.bf16.msra.mxu0 %v787
    %1093 = vmatprep.subr.bf16.mxu0 0
    %1094 = vmatpush1.bf16.msra.mxu0 %v786
    %1095 = vmatprep.subr.bf16.mxu0 0
    %1096 = vmatpush1.bf16.msra.mxu0 %v785
    %1097 = vmatprep.subr.bf16.mxu0 0
    %1098 = vmatpush2.bf16.msra.mxu0 %v800
    %1099 = vmatprep.subr.bf16.mxu0 0
    %1100 = vmatpush2.bf16.msra.mxu0 %v799
    %1101 = vmatprep.subr.bf16.mxu0 0
    %1102 = vmatpush2.bf16.msra.mxu0 %v798
    %1103 = vmatprep.subr.bf16.mxu0 0
    %1104 = vmatpush2.bf16.msra.mxu0 %v797
    %1105 = vmatprep.subr.bf16.mxu0 0
    %1106 = vmatpush2.bf16.msra.mxu0 %v796
    %1107 = vmatprep.subr.bf16.mxu0 0
    %1108 = vmatpush2.bf16.msra.mxu0 %v795
    %1109 = vmatprep.subr.bf16.mxu0 0
    %1110 = vmatpush2.bf16.msra.mxu0 %v794
    %1111 = vmatprep.subr.bf16.mxu0 0
    %1112 = vmatpush2.bf16.msra.mxu0 %v793
    %1113 = vmatprep.mubr.bf16.mxu0 %v314
    %1114 = vmatmul.mubr.bf16.gmra.mxu0 %v300
    %v1115 = vpop.f32.mrf.mxu0
    %v1116 = vadd.f32 %v1076, %v1115
    %v1117 = vpop.f32.mrf.mxu0
    %v1118 = vpop.f32.mrf.mxu0
    %v1119 = vpop.f32.mrf.mxu0
    %1120 = vdwg.mxu0
    %1121 = vmatprep.subr.bf16.mxu0 0
    %1122 = vmatpush1.bf16.msra.mxu0 %v808
    %1123 = vmatprep.subr.bf16.mxu0 0
    %1124 = vmatpush1.bf16.msra.mxu0 %v807
    %1125 = vmatprep.subr.bf16.mxu0 0
    %1126 = vmatpush1.bf16.msra.mxu0 %v806
    %1127 = vmatprep.subr.bf16.mxu0 0
    %1128 = vmatpush1.bf16.msra.mxu0 %v805
    %1129 = vmatprep.subr.bf16.mxu0 0
    %1130 = vmatpush1.bf16.msra.mxu0 %v804
    %1131 = vmatprep.subr.bf16.mxu0 0
    %1132 = vmatpush1.bf16.msra.mxu0 %v803
    %1133 = vmatprep.subr.bf16.mxu0 0
    %1134 = vmatpush1.bf16.msra.mxu0 %v802
    %1135 = vmatprep.subr.bf16.mxu0 0
    %1136 = vmatpush1.bf16.msra.mxu0 %v801
    %1137 = vmatprep.subr.bf16.mxu0 0
    %1138 = vmatpush2.bf16.msra.mxu0 %v816
    %1139 = vmatprep.subr.bf16.mxu0 0
    %1140 = vmatpush2.bf16.msra.mxu0 %v815
    %1141 = vmatprep.subr.bf16.mxu0 0
    %1142 = vmatpush2.bf16.msra.mxu0 %v814
    %1143 = vmatprep.subr.bf16.mxu0 0
    %1144 = vmatpush2.bf16.msra.mxu0 %v813
    %1145 = vmatprep.subr.bf16.mxu0 0
    %1146 = vmatpush2.bf16.msra.mxu0 %v812
    %1147 = vmatprep.subr.bf16.mxu0 0
    %1148 = vmatpush2.bf16.msra.mxu0 %v811
    %1149 = vmatprep.subr.bf16.mxu0 0
    %1150 = vmatpush2.bf16.msra.mxu0 %v810
    %1151 = vmatprep.subr.bf16.mxu0 0
    %1152 = vmatpush2.bf16.msra.mxu0 %v809
    %1153 = vmatprep.mubr.bf16.mxu0 %v316
    %1154 = vmatmul.mubr.bf16.gmra.mxu0 %v315
    %v1155 = vpop.f32.mrf.mxu0
    %v1156 = vadd.f32 %v1116, %v1155
    %v1157 = vpop.f32.mrf.mxu0
    %v1158 = vpop.f32.mrf.mxu0
    %v1159 = vpop.f32.mrf.mxu0
    %1160 = vdwg.mxu0
    %1161 = vmatprep.subr.bf16.mxu0 0
    %1162 = vmatpush1.bf16.msra.mxu0 0
    %1163 = vmatprep.subr.bf16.mxu0 0
    %1164 = vmatpush1.bf16.msra.mxu0 0
    %1165 = vmatprep.subr.bf16.mxu0 0
    %1166 = vmatpush1.bf16.msra.mxu0 0
    %1167 = vmatprep.subr.bf16.mxu0 0
    %1168 = vmatpush1.bf16.msra.mxu0 0
    %1169 = vmatprep.subr.bf16.mxu0 0
    %1170 = vmatpush1.bf16.msra.mxu0 0
    %1171 = vmatprep.subr.bf16.mxu0 0
    %1172 = vmatpush1.bf16.msra.mxu0 0
    %1173 = vmatprep.subr.bf16.mxu0 0
    %1174 = vmatpush1.bf16.msra.mxu0 %v818
    %1175 = vmatprep.subr.bf16.mxu0 0
    %1176 = vmatpush1.bf16.msra.mxu0 %v817
    %1177 = vmatprep.subr.bf16.mxu0 0
    %1178 = vmatpush2.bf16.msra.mxu0 0
    %1179 = vmatprep.subr.bf16.mxu0 0
    %1180 = vmatpush2.bf16.msra.mxu0 0
    %1181 = vmatprep.subr.bf16.mxu0 0
    %1182 = vmatpush2.bf16.msra.mxu0 0
    %1183 = vmatprep.subr.bf16.mxu0 0
    %1184 = vmatpush2.bf16.msra.mxu0 0
    %1185 = vmatprep.subr.bf16.mxu0 0
    %1186 = vmatpush2.bf16.msra.mxu0 0
    %1187 = vmatprep.subr.bf16.mxu0 0
    %1188 = vmatpush2.bf16.msra.mxu0 0
    %1189 = vmatprep.subr.bf16.mxu0 0
    %1190 = vmatpush2.bf16.msra.mxu0 0
    %1191 = vmatprep.subr.bf16.mxu0 0
    %1192 = vmatpush2.bf16.msra.mxu0 0
    %1193 = vmatprep.mubr.bf16.mxu0 0
    %1194 = vmatmul.mubr.bf16.gmra.mxu0 %v919
    %v1195 = vpop.f32.mrf.mxu0
    %v1196 = vadd.f32 %v1156, %v1195
    %v1197 = vpop.f32.mrf.mxu0
    %v1198 = vpop.f32.mrf.mxu0
    %v1199 = vpop.f32.mrf.mxu0
    %1200 = vdwg.mxu0
    %v1201 = vmax.f32 %v1196, 0.0
    %v1202 = vpack.c.bf16 %v1201, %v1201
    %v1203 = vld [vmem:[%s3] sm:$0xf]
    %v1204 = vld [vmem:[%s3 + $0x4] sm:$0xf]
    %v1205 = vld [vmem:[%s3 + $0x8] sm:$0xf]
    %v1206 = vld [vmem:[%s3 + $0xc] sm:$0xf]
    %v1207 = vld [vmem:[%s3 + $0x10] sm:$0xf]
    %v1208 = vld [vmem:[%s3 + $0x14] sm:$0xf]
    %v1209 = vld [vmem:[%s3 + $0x18] sm:$0xf]
    %v1210 = vld [vmem:[%s3 + $0x1c] sm:$0xf]
    %v1211 = vld [vmem:[%s3 + $0x20] sm:$0xf]
    %v1212 = vld [vmem:[%s3 + $0x24] sm:$0xf]
    %v1213 = vld [vmem:[%s3 + $0x28] sm:$0xf]
    %v1214 = vld [vmem:[%s3 + $0x2c] sm:$0xf]
    %v1215 = vld [vmem:[%s3 + $0x30] sm:$0xf]
    %v1216 = vld [vmem:[%s3 + $0x34] sm:$0xf]
    %v1217 = vld [vmem:[%s3 + $0x38] sm:$0xf]
    %v1218 = vld [vmem:[%s3 + $0x3c] sm:$0xf]
    %v1219 = vld [vmem:[%s4] sm:$0x1]
    %v1221 = vlaneseq
    %v1222 = vshrl.u32 %v1221, 7
    %v1223 = vsub.s32 0, %v1222
    %v1224 = vrot.slane %v1219, %v1223
    %v1242 = vunpack.c.l.b16 %v1203
    %v1243 = vunpack.c.l.b16 %v1204
    %v1244 = vunpack.c.l.b16 %v1205
    %v1245 = vunpack.c.l.b16 %v1206
    %v1246 = vunpack.c.l.b16 %v1207
    %v1247 = vunpack.c.l.b16 %v1208
    %v1248 = vunpack.c.l.b16 %v1209
    %v1249 = vunpack.c.l.b16 %v1210
    %v1250 = vunpack.c.l.b16 %v1211
    %v1251 = vunpack.c.l.b16 %v1212
    %v1252 = vunpack.c.l.b16 %v1213
    %v1253 = vunpack.c.l.b16 %v1214
    %v1254 = vunpack.c.l.b16 %v1215
    %v1255 = vunpack.c.l.b16 %v1216
    %v1256 = vunpack.c.l.b16 %v1217
    %v1257 = vunpack.c.l.b16 %v1218
    %v1258 = vpack.c.b16 %v1243, %v1242
    %v1259 = vpack.c.b16 %v1245, %v1244
    %v1260 = vpack.c.b16 %v1247, %v1246
    %v1261 = vpack.c.b16 %v1249, %v1248
    %v1262 = vpack.c.b16 %v1251, %v1250
    %v1263 = vpack.c.b16 %v1253, %v1252
    %v1264 = vpack.c.b16 %v1255, %v1254
    %v1265 = vpack.c.b16 %v1257, %v1256
    %1274 = vmatprep.subr.bf16.mxu0 0
    %1275 = vmatpush1.bf16.msra.mxu0 %v1265
    %1276 = vmatprep.subr.bf16.mxu0 0
    %1277 = vmatpush1.bf16.msra.mxu0 %v1264
    %1278 = vmatprep.subr.bf16.mxu0 0
    %1279 = vmatpush1.bf16.msra.mxu0 %v1263
    %1280 = vmatprep.subr.bf16.mxu0 0
    %1281 = vmatpush1.bf16.msra.mxu0 %v1262
    %1282 = vmatprep.subr.bf16.mxu0 0
    %1283 = vmatpush1.bf16.msra.mxu0 %v1261
    %1284 = vmatprep.subr.bf16.mxu0 0
    %1285 = vmatpush1.bf16.msra.mxu0 %v1260
    %1286 = vmatprep.subr.bf16.mxu0 0
    %1287 = vmatpush1.bf16.msra.mxu0 %v1259
    %1288 = vmatprep.subr.bf16.mxu0 0
    %1289 = vmatpush1.bf16.msra.mxu0 %v1258
    %1290 = vmatprep.subr.bf16.mxu0 0
    %1291 = vmatpush2.bf16.msra.mxu0 0
    %1292 = vmatprep.subr.bf16.mxu0 0
    %1293 = vmatpush2.bf16.msra.mxu0 0
    %1294 = vmatprep.subr.bf16.mxu0 0
    %1295 = vmatpush2.bf16.msra.mxu0 0
    %1296 = vmatprep.subr.bf16.mxu0 0
    %1297 = vmatpush2.bf16.msra.mxu0 0
    %1298 = vmatprep.subr.bf16.mxu0 0
    %1299 = vmatpush2.bf16.msra.mxu0 0
    %1300 = vmatprep.subr.bf16.mxu0 0
    %1301 = vmatpush2.bf16.msra.mxu0 0
    %1302 = vmatprep.subr.bf16.mxu0 0
    %1303 = vmatpush2.bf16.msra.mxu0 0
    %1304 = vmatprep.subr.bf16.mxu0 0
    %1305 = vmatpush2.bf16.msra.mxu0 0
    %1306 = vmatprep.mubr.bf16.mxu0 0
    %1307 = vmatmul.mubr.bf16.gmra.mxu0 %v1202
    %v1308 = vpop.f32.mrf.mxu0
    %v1309 = vadd.f32 %v1224, %v1308
    %v1310 = vpop.f32.mrf.mxu0
    %v1311 = vpop.f32.mrf.mxu0
    %v1312 = vpop.f32.mrf.mxu0
    %1313 = vdwg.mxu0
    %vm1314 = vcmask 74752
    %1315 = vst.msk [vmem:[#allocation2] sm:$0x3] %vm1314, %v1309
    // Predicated region
    $region22: #{simple_cnn_forward.5} parent=1 // pred_check
      _
    $region23: #{simple_cnn_forward.5} parent=1 // pred_check_branch
      %1317 = sbr.rel (0) target = $region25
    $region24: #{simple_cnn_forward.5} parent=1 // pred_region
      %s1319 = ssub.s32 32, 32
      %1320 = vsyncadd [#allocation3], %s1319
      %s1322 = sshll.u32 [#allocation2], 4
      %s1323 = int_to_ptr.vmem [resolvable:$true] %s1322
      %1325 = dma.vmem_to_hbm [thread:$0]  %s1323, 32, %s5, [#allocation3]
    $region25: #{simple_cnn_forward.5} parent=1 // pred_fallthru
      _
    // Predicated region
    $region26: #{simple_cnn_forward.5} parent=1 // pred_check
      _
    $region27: #{simple_cnn_forward.5} parent=1 // pred_check_branch
      %1327 = sbr.rel (0) target = $region29
    $region28: #{simple_cnn_forward.5} parent=1 // pred_region
      %1328 = dma.done [#allocation3], 32
    $region29: #{simple_cnn_forward.5} parent=1 // pred_fallthru
      _
    %1329 = vsyncpa [#allocation3], 1

// kernel: simple_cnn_forward.4
$region0: #{simple_cnn_forward.4}
  #allocation0 [shape = 'u32[]', space=smem, size = 0x4, offset = 0x4, fixed_abs, tag = 'smem constant byte address 0x4 - core index']
  #allocation1 [shape = 'u32[144,128]{1,0:T(1,128)}', space=vmem, size = 0x12000, scoped, tag = 'internal scratch']
  %s0 = inlined_call_operand.vmem [shape: bf16[4,98,1152], index: 0, kind: input, shape index: {}]
  %s1 = inlined_call_operand.vmem [shape: bf16[1152,128], index: 1, kind: input, shape index: {}]
  %s2 = inlined_call_operand.vmem [shape: f32[1,128], index: 2, kind: input, shape index: {}]
  %s3 = inlined_call_operand.vmem [shape: bf16[98,128], index: 3, kind: output, shape index: {}]
  %s4 = sld [smem:[#allocation0]]
  $region22: #{simple_cnn_forward.4} parent=0
    _
  %s6 = ssub.s32 1, %s4
  %s7 = scalar_select 0, %s6, %s4
  // Predicated region
  $region2: #{simple_cnn_forward.4} parent=0 // pred_check
    _
  $region3: #{simple_cnn_forward.4} parent=0 // pred_check_branch
    %9 = sbr.rel (0) target = $region5
  $region4: #{simple_cnn_forward.4} parent=0 // pred_region
    _
  $region5: #{simple_cnn_forward.4} parent=0 // pred_fallthru
    _
  // Predicated region
  $region6: #{simple_cnn_forward.4} parent=0 // pred_check
    _
  $region7: #{simple_cnn_forward.4} parent=0 // pred_check_branch
    %11 = sbr.rel (0) target = $region9
  $region8: #{simple_cnn_forward.4} parent=0 // pred_region
    _
  $region9: #{simple_cnn_forward.4} parent=0 // pred_fallthru
    _
  // Predicated region
  $region10: #{simple_cnn_forward.4} parent=0 // pred_check
    _
  $region11: #{simple_cnn_forward.4} parent=0 // pred_check_branch
    %13 = sbr.rel (0) target = $region13
  $region12: #{simple_cnn_forward.4} parent=0 // pred_region
    _
  $region13: #{simple_cnn_forward.4} parent=0 // pred_fallthru
    _
  %v15 = vld [vmem:[%s1] sm:$0xf]
  %v16 = vld [vmem:[%s1 + $0x4] sm:$0xf]
  %v17 = vld [vmem:[%s1 + $0x8] sm:$0xf]
  %v18 = vld [vmem:[%s1 + $0xc] sm:$0xf]
  %v19 = vld [vmem:[%s1 + $0x10] sm:$0xf]
  %v20 = vld [vmem:[%s1 + $0x14] sm:$0xf]
  %v21 = vld [vmem:[%s1 + $0x18] sm:$0xf]
  %v22 = vld [vmem:[%s1 + $0x1c] sm:$0xf]
  %v23 = vld [vmem:[%s1 + $0x20] sm:$0xf]
  %v24 = vld [vmem:[%s1 + $0x24] sm:$0xf]
  %v25 = vld [vmem:[%s1 + $0x28] sm:$0xf]
  %v26 = vld [vmem:[%s1 + $0x2c] sm:$0xf]
  %v27 = vld [vmem:[%s1 + $0x30] sm:$0xf]
  %v28 = vld [vmem:[%s1 + $0x34] sm:$0xf]
  %v29 = vld [vmem:[%s1 + $0x38] sm:$0xf]
  %v30 = vld [vmem:[%s1 + $0x3c] sm:$0xf]
  %v31 = vld [vmem:[%s1 + $0x40] sm:$0xf]
  %v32 = vld [vmem:[%s1 + $0x44] sm:$0xf]
  %v33 = vld [vmem:[%s1 + $0x48] sm:$0xf]
  %v34 = vld [vmem:[%s1 + $0x4c] sm:$0xf]
  %v35 = vld [vmem:[%s1 + $0x50] sm:$0xf]
  %v36 = vld [vmem:[%s1 + $0x54] sm:$0xf]
  %v37 = vld [vmem:[%s1 + $0x58] sm:$0xf]
  %v38 = vld [vmem:[%s1 + $0x5c] sm:$0xf]
  %v39 = vld [vmem:[%s1 + $0x60] sm:$0xf]
  %v40 = vld [vmem:[%s1 + $0x64] sm:$0xf]
  %v41 = vld [vmem:[%s1 + $0x68] sm:$0xf]
  %v42 = vld [vmem:[%s1 + $0x6c] sm:$0xf]
  %v43 = vld [vmem:[%s1 + $0x70] sm:$0xf]
  %v44 = vld [vmem:[%s1 + $0x74] sm:$0xf]
  %v45 = vld [vmem:[%s1 + $0x78] sm:$0xf]
  %v46 = vld [vmem:[%s1 + $0x7c] sm:$0xf]
  %v47 = vld [vmem:[%s1 + $0x80] sm:$0xf]
  %v48 = vld [vmem:[%s1 + $0x84] sm:$0xf]
  %v49 = vld [vmem:[%s1 + $0x88] sm:$0xf]
  %v50 = vld [vmem:[%s1 + $0x8c] sm:$0xf]
  %v51 = vld [vmem:[%s1 + $0x90] sm:$0xf]
  %v52 = vld [vmem:[%s1 + $0x94] sm:$0xf]
  %v53 = vld [vmem:[%s1 + $0x98] sm:$0xf]
  %v54 = vld [vmem:[%s1 + $0x9c] sm:$0xf]
  %v55 = vld [vmem:[%s1 + $0xa0] sm:$0xf]
  %v56 = vld [vmem:[%s1 + $0xa4] sm:$0xf]
  %v57 = vld [vmem:[%s1 + $0xa8] sm:$0xf]
  %v58 = vld [vmem:[%s1 + $0xac] sm:$0xf]
  %v59 = vld [vmem:[%s1 + $0xb0] sm:$0xf]
  %v60 = vld [vmem:[%s1 + $0xb4] sm:$0xf]
  %v61 = vld [vmem:[%s1 + $0xb8] sm:$0xf]
  %v62 = vld [vmem:[%s1 + $0xbc] sm:$0xf]
  %v63 = vld [vmem:[%s1 + $0xc0] sm:$0xf]
  %v64 = vld [vmem:[%s1 + $0xc4] sm:$0xf]
  %v65 = vld [vmem:[%s1 + $0xc8] sm:$0xf]
  %v66 = vld [vmem:[%s1 + $0xcc] sm:$0xf]
  %v67 = vld [vmem:[%s1 + $0xd0] sm:$0xf]
  %v68 = vld [vmem:[%s1 + $0xd4] sm:$0xf]
  %v69 = vld [vmem:[%s1 + $0xd8] sm:$0xf]
  %v70 = vld [vmem:[%s1 + $0xdc] sm:$0xf]
  %v71 = vld [vmem:[%s1 + $0xe0] sm:$0xf]
  %v72 = vld [vmem:[%s1 + $0xe4] sm:$0xf]
  %v73 = vld [vmem:[%s1 + $0xe8] sm:$0xf]
  %v74 = vld [vmem:[%s1 + $0xec] sm:$0xf]
  %v75 = vld [vmem:[%s1 + $0xf0] sm:$0xf]
  %v76 = vld [vmem:[%s1 + $0xf4] sm:$0xf]
  %v77 = vld [vmem:[%s1 + $0xf8] sm:$0xf]
  %v78 = vld [vmem:[%s1 + $0xfc] sm:$0xf]
  %v79 = vld [vmem:[%s1 + $0x100] sm:$0xf]
  %v80 = vld [vmem:[%s1 + $0x104] sm:$0xf]
  %v81 = vld [vmem:[%s1 + $0x108] sm:$0xf]
  %v82 = vld [vmem:[%s1 + $0x10c] sm:$0xf]
  %v83 = vld [vmem:[%s1 + $0x110] sm:$0xf]
  %v84 = vld [vmem:[%s1 + $0x114] sm:$0xf]
  %v85 = vld [vmem:[%s1 + $0x118] sm:$0xf]
  %v86 = vld [vmem:[%s1 + $0x11c] sm:$0xf]
  %v87 = vld [vmem:[%s1 + $0x120] sm:$0xf]
  %v88 = vld [vmem:[%s1 + $0x124] sm:$0xf]
  %v89 = vld [vmem:[%s1 + $0x128] sm:$0xf]
  %v90 = vld [vmem:[%s1 + $0x12c] sm:$0xf]
  %v91 = vld [vmem:[%s1 + $0x130] sm:$0xf]
  %v92 = vld [vmem:[%s1 + $0x134] sm:$0xf]
  %v93 = vld [vmem:[%s1 + $0x138] sm:$0xf]
  %v94 = vld [vmem:[%s1 + $0x13c] sm:$0xf]
  %v95 = vld [vmem:[%s1 + $0x140] sm:$0xf]
  %v96 = vld [vmem:[%s1 + $0x144] sm:$0xf]
  %v97 = vld [vmem:[%s1 + $0x148] sm:$0xf]
  %v98 = vld [vmem:[%s1 + $0x14c] sm:$0xf]
  %v99 = vld [vmem:[%s1 + $0x150] sm:$0xf]
  %v100 = vld [vmem:[%s1 + $0x154] sm:$0xf]
  %v101 = vld [vmem:[%s1 + $0x158] sm:$0xf]
  %v102 = vld [vmem:[%s1 + $0x15c] sm:$0xf]
  %v103 = vld [vmem:[%s1 + $0x160] sm:$0xf]
  %v104 = vld [vmem:[%s1 + $0x164] sm:$0xf]
  %v105 = vld [vmem:[%s1 + $0x168] sm:$0xf]
  %v106 = vld [vmem:[%s1 + $0x16c] sm:$0xf]
  %v107 = vld [vmem:[%s1 + $0x170] sm:$0xf]
  %v108 = vld [vmem:[%s1 + $0x174] sm:$0xf]
  %v109 = vld [vmem:[%s1 + $0x178] sm:$0xf]
  %v110 = vld [vmem:[%s1 + $0x17c] sm:$0xf]
  %v111 = vld [vmem:[%s1 + $0x180] sm:$0xf]
  %v112 = vld [vmem:[%s1 + $0x184] sm:$0xf]
  %v113 = vld [vmem:[%s1 + $0x188] sm:$0xf]
  %v114 = vld [vmem:[%s1 + $0x18c] sm:$0xf]
  %v115 = vld [vmem:[%s1 + $0x190] sm:$0xf]
  %v116 = vld [vmem:[%s1 + $0x194] sm:$0xf]
  %v117 = vld [vmem:[%s1 + $0x198] sm:$0xf]
  %v118 = vld [vmem:[%s1 + $0x19c] sm:$0xf]
  %v119 = vld [vmem:[%s1 + $0x1a0] sm:$0xf]
  %v120 = vld [vmem:[%s1 + $0x1a4] sm:$0xf]
  %v121 = vld [vmem:[%s1 + $0x1a8] sm:$0xf]
  %v122 = vld [vmem:[%s1 + $0x1ac] sm:$0xf]
  %v123 = vld [vmem:[%s1 + $0x1b0] sm:$0xf]
  %v124 = vld [vmem:[%s1 + $0x1b4] sm:$0xf]
  %v125 = vld [vmem:[%s1 + $0x1b8] sm:$0xf]
  %v126 = vld [vmem:[%s1 + $0x1bc] sm:$0xf]
  %v127 = vld [vmem:[%s1 + $0x1c0] sm:$0xf]
  %v128 = vld [vmem:[%s1 + $0x1c4] sm:$0xf]
  %v129 = vld [vmem:[%s1 + $0x1c8] sm:$0xf]
  %v130 = vld [vmem:[%s1 + $0x1cc] sm:$0xf]
  %v131 = vld [vmem:[%s1 + $0x1d0] sm:$0xf]
  %v132 = vld [vmem:[%s1 + $0x1d4] sm:$0xf]
  %v133 = vld [vmem:[%s1 + $0x1d8] sm:$0xf]
  %v134 = vld [vmem:[%s1 + $0x1dc] sm:$0xf]
  %v135 = vld [vmem:[%s1 + $0x1e0] sm:$0xf]
  %v136 = vld [vmem:[%s1 + $0x1e4] sm:$0xf]
  %v137 = vld [vmem:[%s1 + $0x1e8] sm:$0xf]
  %v138 = vld [vmem:[%s1 + $0x1ec] sm:$0xf]
  %v139 = vld [vmem:[%s1 + $0x1f0] sm:$0xf]
  %v140 = vld [vmem:[%s1 + $0x1f4] sm:$0xf]
  %v141 = vld [vmem:[%s1 + $0x1f8] sm:$0xf]
  %v142 = vld [vmem:[%s1 + $0x1fc] sm:$0xf]
  %v143 = vld [vmem:[%s1 + $0x200] sm:$0xf]
  %v144 = vld [vmem:[%s1 + $0x204] sm:$0xf]
  %v145 = vld [vmem:[%s1 + $0x208] sm:$0xf]
  %v146 = vld [vmem:[%s1 + $0x20c] sm:$0xf]
  %v147 = vld [vmem:[%s1 + $0x210] sm:$0xf]
  %v148 = vld [vmem:[%s1 + $0x214] sm:$0xf]
  %v149 = vld [vmem:[%s1 + $0x218] sm:$0xf]
  %v150 = vld [vmem:[%s1 + $0x21c] sm:$0xf]
  %v151 = vld [vmem:[%s1 + $0x220] sm:$0xf]
  %v152 = vld [vmem:[%s1 + $0x224] sm:$0xf]
  %v153 = vld [vmem:[%s1 + $0x228] sm:$0xf]
  %v154 = vld [vmem:[%s1 + $0x22c] sm:$0xf]
  %v155 = vld [vmem:[%s1 + $0x230] sm:$0xf]
  %v156 = vld [vmem:[%s1 + $0x234] sm:$0xf]
  %v157 = vld [vmem:[%s1 + $0x238] sm:$0xf]
  %v158 = vld [vmem:[%s1 + $0x23c] sm:$0xf]
  %v159 = vld [vmem:[%s2] sm:$0x1]
  %v160 = vld [vmem:[%s0] sm:$0xff]
  %v161 = vld [vmem:[%s0 + $0x8] sm:$0xff]
  %v162 = vld [vmem:[%s0 + $0x10] sm:$0xff]
  %v163 = vld [vmem:[%s0 + $0x18] sm:$0xff]
  %v164 = vld [vmem:[%s0 + $0x20] sm:$0xf]
  %v165 = vld [vmem:[%s0 + $0x24] sm:$0xff]
  %v166 = vld [vmem:[%s0 + $0x2c] sm:$0xff]
  %v167 = vld [vmem:[%s0 + $0x34] sm:$0xff]
  %v168 = vld [vmem:[%s0 + $0x3c] sm:$0xff]
  %v169 = vld [vmem:[%s0 + $0x44] sm:$0xf]
  %v170 = vld [vmem:[%s0 + $0x48] sm:$0xff]
  %v171 = vld [vmem:[%s0 + $0x50] sm:$0xff]
  %v172 = vld [vmem:[%s0 + $0x58] sm:$0xff]
  %v173 = vld [vmem:[%s0 + $0x60] sm:$0xff]
  %v174 = vld [vmem:[%s0 + $0x68] sm:$0xf]
  %v175 = vld [vmem:[%s0 + $0x6c] sm:$0xff]
  %v176 = vld [vmem:[%s0 + $0x74] sm:$0xff]
  %v177 = vld [vmem:[%s0 + $0x7c] sm:$0xff]
  %v178 = vld [vmem:[%s0 + $0x84] sm:$0xff]
  %v179 = vld [vmem:[%s0 + $0x8c] sm:$0xf]
  %v180 = vld [vmem:[%s0 + $0x90] sm:$0xff]
  %v181 = vld [vmem:[%s0 + $0x98] sm:$0xff]
  %v182 = vld [vmem:[%s0 + $0xa0] sm:$0xff]
  %v183 = vld [vmem:[%s0 + $0xa8] sm:$0xff]
  %v184 = vld [vmem:[%s0 + $0xb0] sm:$0xf]
  %v185 = vld [vmem:[%s0 + $0xb4] sm:$0xff]
  %v186 = vld [vmem:[%s0 + $0xbc] sm:$0xff]
  %v187 = vld [vmem:[%s0 + $0xc4] sm:$0xff]
  %v188 = vld [vmem:[%s0 + $0xcc] sm:$0xff]
  %v189 = vld [vmem:[%s0 + $0xd4] sm:$0xf]
  %v190 = vld [vmem:[%s0 + $0xd8] sm:$0xff]
  %v191 = vld [vmem:[%s0 + $0xe0] sm:$0xff]
  %v192 = vld [vmem:[%s0 + $0xe8] sm:$0xff]
  %v193 = vld [vmem:[%s0 + $0xf0] sm:$0xff]
  %v194 = vld [vmem:[%s0 + $0xf8] sm:$0xf]
  %v195 = vld [vmem:[%s0 + $0xfc] sm:$0xff]
  %v196 = vld [vmem:[%s0 + $0x104] sm:$0xff]
  %v197 = vld [vmem:[%s0 + $0x10c] sm:$0xff]
  %v198 = vld [vmem:[%s0 + $0x114] sm:$0xff]
  %v199 = vld [vmem:[%s0 + $0x11c] sm:$0xf]
  %v200 = vld [vmem:[%s0 + $0x120] sm:$0xff]
  %v201 = vld [vmem:[%s0 + $0x128] sm:$0xff]
  %v202 = vld [vmem:[%s0 + $0x130] sm:$0xff]
  %v203 = vld [vmem:[%s0 + $0x138] sm:$0xff]
  %v204 = vld [vmem:[%s0 + $0x140] sm:$0xf]
  %v205 = vld [vmem:[%s0 + $0x144] sm:$0xff]
  %v206 = vld [vmem:[%s0 + $0x14c] sm:$0xff]
  %v207 = vld [vmem:[%s0 + $0x154] sm:$0xff]
  %v208 = vld [vmem:[%s0 + $0x15c] sm:$0xff]
  %v209 = vld [vmem:[%s0 + $0x164] sm:$0xf]
  %v210 = vld [vmem:[%s0 + $0x168] sm:$0xff]
  %v211 = vld [vmem:[%s0 + $0x170] sm:$0xff]
  %v212 = vld [vmem:[%s0 + $0x178] sm:$0xff]
  %v213 = vld [vmem:[%s0 + $0x180] sm:$0xff]
  %v214 = vld [vmem:[%s0 + $0x188] sm:$0xf]
  %v215 = vld [vmem:[%s0 + $0x18c] sm:$0xff]
  %v216 = vld [vmem:[%s0 + $0x194] sm:$0xff]
  %v217 = vld [vmem:[%s0 + $0x19c] sm:$0xff]
  %v218 = vld [vmem:[%s0 + $0x1a4] sm:$0xff]
  %v219 = vld [vmem:[%s0 + $0x1ac] sm:$0xf]
  %v220 = vld [vmem:[%s0 + $0x1b0] sm:$0x11]
  %v221 = vld [vmem:[%s0 + $0x1b8] sm:$0x11]
  %v222 = vld [vmem:[%s0 + $0x1c0] sm:$0x11]
  %v223 = vld [vmem:[%s0 + $0x1c8] sm:$0x11]
  %v224 = vld [vmem:[%s0 + $0x1d0] sm:$0x1]
  %v226 = vlaneseq
  %v227 = vshrl.u32 %v226, 7
  %v228 = vsub.s32 0, %v227
  %v229 = vrot.slane %v159, %v228
  %v296 = vunpack.c.l.b16 %v160
  %v297 = vunpack.c.h.b16 %v160
  %v298 = vunpack.c.l.b16 %v161
  %v299 = vunpack.c.h.b16 %v161
  %v300 = vunpack.c.l.b16 %v162
  %v301 = vunpack.c.h.b16 %v162
  %v302 = vunpack.c.l.b16 %v163
  %v303 = vunpack.c.h.b16 %v163
  %v304 = vunpack.c.l.b16 %v164
  %v305 = vunpack.c.l.b16 %v165
  %v306 = vunpack.c.h.b16 %v165
  %v307 = vunpack.c.l.b16 %v166
  %v308 = vunpack.c.h.b16 %v166
  %v309 = vunpack.c.l.b16 %v167
  %v310 = vunpack.c.h.b16 %v167
  %v311 = vunpack.c.l.b16 %v168
  %v312 = vunpack.c.h.b16 %v168
  %v313 = vunpack.c.l.b16 %v169
  %v314 = vunpack.c.l.b16 %v170
  %v315 = vunpack.c.h.b16 %v170
  %v316 = vunpack.c.l.b16 %v171
  %v317 = vunpack.c.h.b16 %v171
  %v318 = vunpack.c.l.b16 %v172
  %v319 = vunpack.c.h.b16 %v172
  %v320 = vunpack.c.l.b16 %v173
  %v321 = vunpack.c.h.b16 %v173
  %v322 = vunpack.c.l.b16 %v174
  %v323 = vunpack.c.l.b16 %v175
  %v324 = vunpack.c.h.b16 %v175
  %v325 = vunpack.c.l.b16 %v176
  %v326 = vunpack.c.h.b16 %v176
  %v327 = vunpack.c.l.b16 %v177
  %v328 = vunpack.c.h.b16 %v177
  %v329 = vunpack.c.l.b16 %v178
  %v330 = vunpack.c.h.b16 %v178
  %v331 = vunpack.c.l.b16 %v179
  %v332 = vunpack.c.l.b16 %v180
  %v333 = vunpack.c.h.b16 %v180
  %v334 = vunpack.c.l.b16 %v181
  %v335 = vunpack.c.h.b16 %v181
  %v336 = vunpack.c.l.b16 %v182
  %v337 = vunpack.c.h.b16 %v182
  %v338 = vunpack.c.l.b16 %v183
  %v339 = vunpack.c.h.b16 %v183
  %v340 = vunpack.c.l.b16 %v184
  %v341 = vunpack.c.l.b16 %v185
  %v342 = vunpack.c.h.b16 %v185
  %v343 = vunpack.c.l.b16 %v186
  %v344 = vunpack.c.h.b16 %v186
  %v345 = vunpack.c.l.b16 %v187
  %v346 = vunpack.c.h.b16 %v187
  %v347 = vunpack.c.l.b16 %v188
  %v348 = vunpack.c.h.b16 %v188
  %v349 = vunpack.c.l.b16 %v189
  %v350 = vunpack.c.l.b16 %v190
  %v351 = vunpack.c.h.b16 %v190
  %v352 = vunpack.c.l.b16 %v191
  %v353 = vunpack.c.h.b16 %v191
  %v354 = vunpack.c.l.b16 %v192
  %v355 = vunpack.c.h.b16 %v192
  %v356 = vunpack.c.l.b16 %v193
  %v357 = vunpack.c.h.b16 %v193
  %v358 = vunpack.c.l.b16 %v194
  %v359 = vunpack.c.l.b16 %v195
  %v360 = vunpack.c.h.b16 %v195
  %v361 = vunpack.c.l.b16 %v196
  %v362 = vunpack.c.h.b16 %v196
  %v363 = vunpack.c.l.b16 %v197
  %v364 = vunpack.c.h.b16 %v197
  %v365 = vunpack.c.l.b16 %v198
  %v366 = vunpack.c.h.b16 %v198
  %v367 = vunpack.c.l.b16 %v199
  %v368 = vunpack.c.l.b16 %v200
  %v369 = vunpack.c.h.b16 %v200
  %v370 = vunpack.c.l.b16 %v201
  %v371 = vunpack.c.h.b16 %v201
  %v372 = vunpack.c.l.b16 %v202
  %v373 = vunpack.c.h.b16 %v202
  %v374 = vunpack.c.l.b16 %v203
  %v375 = vunpack.c.h.b16 %v203
  %v376 = vunpack.c.l.b16 %v204
  %v377 = vunpack.c.l.b16 %v205
  %v378 = vunpack.c.h.b16 %v205
  %v379 = vunpack.c.l.b16 %v206
  %v380 = vunpack.c.h.b16 %v206
  %v381 = vunpack.c.l.b16 %v207
  %v382 = vunpack.c.h.b16 %v207
  %v383 = vunpack.c.l.b16 %v208
  %v384 = vunpack.c.h.b16 %v208
  %v385 = vunpack.c.l.b16 %v209
  %v386 = vunpack.c.l.b16 %v210
  %v387 = vunpack.c.h.b16 %v210
  %v388 = vunpack.c.l.b16 %v211
  %v389 = vunpack.c.h.b16 %v211
  %v390 = vunpack.c.l.b16 %v212
  %v391 = vunpack.c.h.b16 %v212
  %v392 = vunpack.c.l.b16 %v213
  %v393 = vunpack.c.h.b16 %v213
  %v394 = vunpack.c.l.b16 %v214
  %v395 = vunpack.c.l.b16 %v215
  %v396 = vunpack.c.h.b16 %v215
  %v397 = vunpack.c.l.b16 %v216
  %v398 = vunpack.c.h.b16 %v216
  %v399 = vunpack.c.l.b16 %v217
  %v400 = vunpack.c.h.b16 %v217
  %v401 = vunpack.c.l.b16 %v218
  %v402 = vunpack.c.h.b16 %v218
  %v403 = vunpack.c.l.b16 %v219
  %v404 = vunpack.c.l.b16 %v220
  %v405 = vunpack.c.h.b16 %v220
  %v406 = vunpack.c.l.b16 %v221
  %v407 = vunpack.c.h.b16 %v221
  %v408 = vunpack.c.l.b16 %v222
  %v409 = vunpack.c.h.b16 %v222
  %v410 = vunpack.c.l.b16 %v223
  %v411 = vunpack.c.h.b16 %v223
  %v412 = vunpack.c.l.b16 %v224
  %v413 = vpack.c.b16 %v305, %v296
  %v414 = vpack.c.b16 %v306, %v297
  %v415 = vpack.c.b16 %v307, %v298
  %v416 = vpack.c.b16 %v308, %v299
  %v417 = vpack.c.b16 %v309, %v300
  %v418 = vpack.c.b16 %v310, %v301
  %v419 = vpack.c.b16 %v311, %v302
  %v420 = vpack.c.b16 %v312, %v303
  %v421 = vpack.c.b16 %v313, %v304
  %v422 = vpack.c.b16 %v323, %v314
  %v423 = vpack.c.b16 %v324, %v315
  %v424 = vpack.c.b16 %v325, %v316
  %v425 = vpack.c.b16 %v326, %v317
  %v426 = vpack.c.b16 %v327, %v318
  %v427 = vpack.c.b16 %v328, %v319
  %v428 = vpack.c.b16 %v329, %v320
  %v429 = vpack.c.b16 %v330, %v321
  %v430 = vpack.c.b16 %v331, %v322
  %v431 = vpack.c.b16 %v341, %v332
  %v432 = vpack.c.b16 %v342, %v333
  %v433 = vpack.c.b16 %v343, %v334
  %v434 = vpack.c.b16 %v344, %v335
  %v435 = vpack.c.b16 %v345, %v336
  %v436 = vpack.c.b16 %v346, %v337
  %v437 = vpack.c.b16 %v347, %v338
  %v438 = vpack.c.b16 %v348, %v339
  %v439 = vpack.c.b16 %v349, %v340
  %v440 = vpack.c.b16 %v359, %v350
  %v441 = vpack.c.b16 %v360, %v351
  %v442 = vpack.c.b16 %v361, %v352
  %v443 = vpack.c.b16 %v362, %v353
  %v444 = vpack.c.b16 %v363, %v354
  %v445 = vpack.c.b16 %v364, %v355
  %v446 = vpack.c.b16 %v365, %v356
  %v447 = vpack.c.b16 %v366, %v357
  %v448 = vpack.c.b16 %v367, %v358
  %v449 = vpack.c.b16 %v377, %v368
  %v450 = vpack.c.b16 %v378, %v369
  %v451 = vpack.c.b16 %v379, %v370
  %v452 = vpack.c.b16 %v380, %v371
  %v453 = vpack.c.b16 %v381, %v372
  %v454 = vpack.c.b16 %v382, %v373
  %v455 = vpack.c.b16 %v383, %v374
  %v456 = vpack.c.b16 %v384, %v375
  %v457 = vpack.c.b16 %v385, %v376
  %v458 = vpack.c.b16 %v395, %v386
  %v459 = vpack.c.b16 %v396, %v387
  %v460 = vpack.c.b16 %v397, %v388
  %v461 = vpack.c.b16 %v398, %v389
  %v462 = vpack.c.b16 %v399, %v390
  %v463 = vpack.c.b16 %v400, %v391
  %v464 = vpack.c.b16 %v401, %v392
  %v465 = vpack.c.b16 %v402, %v393
  %v466 = vpack.c.b16 %v403, %v394
  %v467 = vpack.c.b16 %v404, %v404
  %v468 = vpack.c.b16 %v405, %v405
  %v469 = vpack.c.b16 %v406, %v406
  %v470 = vpack.c.b16 %v407, %v407
  %v471 = vpack.c.b16 %v408, %v408
  %v472 = vpack.c.b16 %v409, %v409
  %v473 = vpack.c.b16 %v410, %v410
  %v474 = vpack.c.b16 %v411, %v411
  %v475 = vpack.c.b16 %v412, %v412
  %v683 = vunpack.c.l.b16 %v15
  %v684 = vunpack.c.l.b16 %v16
  %v685 = vunpack.c.l.b16 %v17
  %v686 = vunpack.c.l.b16 %v18
  %v687 = vunpack.c.l.b16 %v19
  %v688 = vunpack.c.l.b16 %v20
  %v689 = vunpack.c.l.b16 %v21
  %v690 = vunpack.c.l.b16 %v22
  %v691 = vunpack.c.l.b16 %v23
  %v692 = vunpack.c.l.b16 %v24
  %v693 = vunpack.c.l.b16 %v25
  %v694 = vunpack.c.l.b16 %v26
  %v695 = vunpack.c.l.b16 %v27
  %v696 = vunpack.c.l.b16 %v28
  %v697 = vunpack.c.l.b16 %v29
  %v698 = vunpack.c.l.b16 %v30
  %v699 = vunpack.c.l.b16 %v31
  %v700 = vunpack.c.l.b16 %v32
  %v701 = vunpack.c.l.b16 %v33
  %v702 = vunpack.c.l.b16 %v34
  %v703 = vunpack.c.l.b16 %v35
  %v704 = vunpack.c.l.b16 %v36
  %v705 = vunpack.c.l.b16 %v37
  %v706 = vunpack.c.l.b16 %v38
  %v707 = vunpack.c.l.b16 %v39
  %v708 = vunpack.c.l.b16 %v40
  %v709 = vunpack.c.l.b16 %v41
  %v710 = vunpack.c.l.b16 %v42
  %v711 = vunpack.c.l.b16 %v43
  %v712 = vunpack.c.l.b16 %v44
  %v713 = vunpack.c.l.b16 %v45
  %v714 = vunpack.c.l.b16 %v46
  %v715 = vunpack.c.l.b16 %v47
  %v716 = vunpack.c.l.b16 %v48
  %v717 = vunpack.c.l.b16 %v49
  %v718 = vunpack.c.l.b16 %v50
  %v719 = vunpack.c.l.b16 %v51
  %v720 = vunpack.c.l.b16 %v52
  %v721 = vunpack.c.l.b16 %v53
  %v722 = vunpack.c.l.b16 %v54
  %v723 = vunpack.c.l.b16 %v55
  %v724 = vunpack.c.l.b16 %v56
  %v725 = vunpack.c.l.b16 %v57
  %v726 = vunpack.c.l.b16 %v58
  %v727 = vunpack.c.l.b16 %v59
  %v728 = vunpack.c.l.b16 %v60
  %v729 = vunpack.c.l.b16 %v61
  %v730 = vunpack.c.l.b16 %v62
  %v731 = vunpack.c.l.b16 %v63
  %v732 = vunpack.c.l.b16 %v64
  %v733 = vunpack.c.l.b16 %v65
  %v734 = vunpack.c.l.b16 %v66
  %v735 = vunpack.c.l.b16 %v67
  %v736 = vunpack.c.l.b16 %v68
  %v737 = vunpack.c.l.b16 %v69
  %v738 = vunpack.c.l.b16 %v70
  %v739 = vunpack.c.l.b16 %v71
  %v740 = vunpack.c.l.b16 %v72
  %v741 = vunpack.c.l.b16 %v73
  %v742 = vunpack.c.l.b16 %v74
  %v743 = vunpack.c.l.b16 %v75
  %v744 = vunpack.c.l.b16 %v76
  %v745 = vunpack.c.l.b16 %v77
  %v746 = vunpack.c.l.b16 %v78
  %v747 = vunpack.c.l.b16 %v79
  %v748 = vunpack.c.l.b16 %v80
  %v749 = vunpack.c.l.b16 %v81
  %v750 = vunpack.c.l.b16 %v82
  %v751 = vunpack.c.l.b16 %v83
  %v752 = vunpack.c.l.b16 %v84
  %v753 = vunpack.c.l.b16 %v85
  %v754 = vunpack.c.l.b16 %v86
  %v755 = vunpack.c.l.b16 %v87
  %v756 = vunpack.c.l.b16 %v88
  %v757 = vunpack.c.l.b16 %v89
  %v758 = vunpack.c.l.b16 %v90
  %v759 = vunpack.c.l.b16 %v91
  %v760 = vunpack.c.l.b16 %v92
  %v761 = vunpack.c.l.b16 %v93
  %v762 = vunpack.c.l.b16 %v94
  %v763 = vunpack.c.l.b16 %v95
  %v764 = vunpack.c.l.b16 %v96
  %v765 = vunpack.c.l.b16 %v97
  %v766 = vunpack.c.l.b16 %v98
  %v767 = vunpack.c.l.b16 %v99
  %v768 = vunpack.c.l.b16 %v100
  %v769 = vunpack.c.l.b16 %v101
  %v770 = vunpack.c.l.b16 %v102
  %v771 = vunpack.c.l.b16 %v103
  %v772 = vunpack.c.l.b16 %v104
  %v773 = vunpack.c.l.b16 %v105
  %v774 = vunpack.c.l.b16 %v106
  %v775 = vunpack.c.l.b16 %v107
  %v776 = vunpack.c.l.b16 %v108
  %v777 = vunpack.c.l.b16 %v109
  %v778 = vunpack.c.l.b16 %v110
  %v779 = vunpack.c.l.b16 %v111
  %v780 = vunpack.c.l.b16 %v112
  %v781 = vunpack.c.l.b16 %v113
  %v782 = vunpack.c.l.b16 %v114
  %v783 = vunpack.c.l.b16 %v115
  %v784 = vunpack.c.l.b16 %v116
  %v785 = vunpack.c.l.b16 %v117
  %v786 = vunpack.c.l.b16 %v118
  %v787 = vunpack.c.l.b16 %v119
  %v788 = vunpack.c.l.b16 %v120
  %v789 = vunpack.c.l.b16 %v121
  %v790 = vunpack.c.l.b16 %v122
  %v791 = vunpack.c.l.b16 %v123
  %v792 = vunpack.c.l.b16 %v124
  %v793 = vunpack.c.l.b16 %v125
  %v794 = vunpack.c.l.b16 %v126
  %v795 = vunpack.c.l.b16 %v127
  %v796 = vunpack.c.l.b16 %v128
  %v797 = vunpack.c.l.b16 %v129
  %v798 = vunpack.c.l.b16 %v130
  %v799 = vunpack.c.l.b16 %v131
  %v800 = vunpack.c.l.b16 %v132
  %v801 = vunpack.c.l.b16 %v133
  %v802 = vunpack.c.l.b16 %v134
  %v803 = vunpack.c.l.b16 %v135
  %v804 = vunpack.c.l.b16 %v136
  %v805 = vunpack.c.l.b16 %v137
  %v806 = vunpack.c.l.b16 %v138
  %v807 = vunpack.c.l.b16 %v139
  %v808 = vunpack.c.l.b16 %v140
  %v809 = vunpack.c.l.b16 %v141
  %v810 = vunpack.c.l.b16 %v142
  %v811 = vunpack.c.l.b16 %v143
  %v812 = vunpack.c.l.b16 %v144
  %v813 = vunpack.c.l.b16 %v145
  %v814 = vunpack.c.l.b16 %v146
  %v815 = vunpack.c.l.b16 %v147
  %v816 = vunpack.c.l.b16 %v148
  %v817 = vunpack.c.l.b16 %v149
  %v818 = vunpack.c.l.b16 %v150
  %v819 = vunpack.c.l.b16 %v151
  %v820 = vunpack.c.l.b16 %v152
  %v821 = vunpack.c.l.b16 %v153
  %v822 = vunpack.c.l.b16 %v154
  %v823 = vunpack.c.l.b16 %v155
  %v824 = vunpack.c.l.b16 %v156
  %v825 = vunpack.c.l.b16 %v157
  %v826 = vunpack.c.l.b16 %v158
  %v827 = vpack.c.b16 %v684, %v683
  %v828 = vpack.c.b16 %v686, %v685
  %v829 = vpack.c.b16 %v688, %v687
  %v830 = vpack.c.b16 %v690, %v689
  %v831 = vpack.c.b16 %v692, %v691
  %v832 = vpack.c.b16 %v694, %v693
  %v833 = vpack.c.b16 %v696, %v695
  %v834 = vpack.c.b16 %v698, %v697
  %v835 = vpack.c.b16 %v700, %v699
  %v836 = vpack.c.b16 %v702, %v701
  %v837 = vpack.c.b16 %v704, %v703
  %v838 = vpack.c.b16 %v706, %v705
  %v839 = vpack.c.b16 %v708, %v707
  %v840 = vpack.c.b16 %v710, %v709
  %v841 = vpack.c.b16 %v712, %v711
  %v842 = vpack.c.b16 %v714, %v713
  %v843 = vpack.c.b16 %v716, %v715
  %v844 = vpack.c.b16 %v718, %v717
  %v845 = vpack.c.b16 %v720, %v719
  %v846 = vpack.c.b16 %v722, %v721
  %v847 = vpack.c.b16 %v724, %v723
  %v848 = vpack.c.b16 %v726, %v725
  %v849 = vpack.c.b16 %v728, %v727
  %v850 = vpack.c.b16 %v730, %v729
  %v851 = vpack.c.b16 %v732, %v731
  %v852 = vpack.c.b16 %v734, %v733
  %v853 = vpack.c.b16 %v736, %v735
  %v854 = vpack.c.b16 %v738, %v737
  %v855 = vpack.c.b16 %v740, %v739
  %v856 = vpack.c.b16 %v742, %v741
  %v857 = vpack.c.b16 %v744, %v743
  %v858 = vpack.c.b16 %v746, %v745
  %v859 = vpack.c.b16 %v748, %v747
  %v860 = vpack.c.b16 %v750, %v749
  %v861 = vpack.c.b16 %v752, %v751
  %v862 = vpack.c.b16 %v754, %v753
  %v863 = vpack.c.b16 %v756, %v755
  %v864 = vpack.c.b16 %v758, %v757
  %v865 = vpack.c.b16 %v760, %v759
  %v866 = vpack.c.b16 %v762, %v761
  %v867 = vpack.c.b16 %v764, %v763
  %v868 = vpack.c.b16 %v766, %v765
  %v869 = vpack.c.b16 %v768, %v767
  %v870 = vpack.c.b16 %v770, %v769
  %v871 = vpack.c.b16 %v772, %v771
  %v872 = vpack.c.b16 %v774, %v773
  %v873 = vpack.c.b16 %v776, %v775
  %v874 = vpack.c.b16 %v778, %v777
  %v875 = vpack.c.b16 %v780, %v779
  %v876 = vpack.c.b16 %v782, %v781
  %v877 = vpack.c.b16 %v784, %v783
  %v878 = vpack.c.b16 %v786, %v785
  %v879 = vpack.c.b16 %v788, %v787
  %v880 = vpack.c.b16 %v790, %v789
  %v881 = vpack.c.b16 %v792, %v791
  %v882 = vpack.c.b16 %v794, %v793
  %v883 = vpack.c.b16 %v796, %v795
  %v884 = vpack.c.b16 %v798, %v797
  %v885 = vpack.c.b16 %v800, %v799
  %v886 = vpack.c.b16 %v802, %v801
  %v887 = vpack.c.b16 %v804, %v803
  %v888 = vpack.c.b16 %v806, %v805
  %v889 = vpack.c.b16 %v808, %v807
  %v890 = vpack.c.b16 %v810, %v809
  %v891 = vpack.c.b16 %v812, %v811
  %v892 = vpack.c.b16 %v814, %v813
  %v893 = vpack.c.b16 %v816, %v815
  %v894 = vpack.c.b16 %v818, %v817
  %v895 = vpack.c.b16 %v820, %v819
  %v896 = vpack.c.b16 %v822, %v821
  %v897 = vpack.c.b16 %v824, %v823
  %v898 = vpack.c.b16 %v826, %v825
  %971 = vmatprep.subr.bf16.mxu0 0
  %972 = vmatpush1.bf16.msra.mxu0 %v834
  %973 = vmatprep.subr.bf16.mxu0 0
  %974 = vmatpush1.bf16.msra.mxu0 %v833
  %975 = vmatprep.subr.bf16.mxu0 0
  %976 = vmatpush1.bf16.msra.mxu0 %v832
  %977 = vmatprep.subr.bf16.mxu0 0
  %978 = vmatpush1.bf16.msra.mxu0 %v831
  %979 = vmatprep.subr.bf16.mxu0 0
  %980 = vmatpush1.bf16.msra.mxu0 %v830
  %981 = vmatprep.subr.bf16.mxu0 0
  %982 = vmatpush1.bf16.msra.mxu0 %v829
  %983 = vmatprep.subr.bf16.mxu0 0
  %984 = vmatpush1.bf16.msra.mxu0 %v828
  %985 = vmatprep.subr.bf16.mxu0 0
  %986 = vmatpush1.bf16.msra.mxu0 %v827
  %987 = vmatprep.subr.bf16.mxu0 0
  %988 = vmatpush2.bf16.msra.mxu0 %v842
  %989 = vmatprep.subr.bf16.mxu0 0
  %990 = vmatpush2.bf16.msra.mxu0 %v841
  %991 = vmatprep.subr.bf16.mxu0 0
  %992 = vmatpush2.bf16.msra.mxu0 %v840
  %993 = vmatprep.subr.bf16.mxu0 0
  %994 = vmatpush2.bf16.msra.mxu0 %v839
  %995 = vmatprep.subr.bf16.mxu0 0
  %996 = vmatpush2.bf16.msra.mxu0 %v838
  %997 = vmatprep.subr.bf16.mxu0 0
  %998 = vmatpush2.bf16.msra.mxu0 %v837
  %999 = vmatprep.subr.bf16.mxu0 0
  %1000 = vmatpush2.bf16.msra.mxu0 %v836
  %1001 = vmatprep.subr.bf16.mxu0 0
  %1002 = vmatpush2.bf16.msra.mxu0 %v835
  %1003 = vmatprep.mubr.bf16.mxu0 %v414
  %1004 = vmatmul.mubr.bf16.gmra.mxu0 %v413
  %v1005 = vpop.f32.mrf.mxu0
  %v1006 = vadd.f32 %v229, %v1005
  %v1007 = vpop.f32.mrf.mxu0
  %v1008 = vpop.f32.mrf.mxu0
  %v1009 = vadd.f32 %v229, %v1008
  %v1010 = vpop.f32.mrf.mxu0
  %1011 = vmatprep.mubr.bf16.mxu0 %v423
  %1012 = vmatmul.mubr.bf16.gmra.mxu0 %v422
  %v1013 = vpop.f32.mrf.mxu0
  %v1014 = vadd.f32 %v229, %v1013
  %v1015 = vpop.f32.mrf.mxu0
  %v1016 = vpop.f32.mrf.mxu0
  %v1017 = vadd.f32 %v229, %v1016
  %v1018 = vpop.f32.mrf.mxu0
  %1019 = vmatprep.mubr.bf16.mxu0 %v432
  %1020 = vmatmul.mubr.bf16.gmra.mxu0 %v431
  %v1021 = vpop.f32.mrf.mxu0
  %v1022 = vadd.f32 %v229, %v1021
  %v1023 = vpop.f32.mrf.mxu0
  %v1024 = vpop.f32.mrf.mxu0
  %v1025 = vadd.f32 %v229, %v1024
  %v1026 = vpop.f32.mrf.mxu0
  %1027 = vmatprep.mubr.bf16.mxu0 %v441
  %1028 = vmatmul.mubr.bf16.gmra.mxu0 %v440
  %v1029 = vpop.f32.mrf.mxu0
  %v1030 = vadd.f32 %v229, %v1029
  %v1031 = vpop.f32.mrf.mxu0
  %v1032 = vpop.f32.mrf.mxu0
  %v1033 = vadd.f32 %v229, %v1032
  %v1034 = vpop.f32.mrf.mxu0
  %1035 = vmatprep.mubr.bf16.mxu0 %v450
  %1036 = vmatmul.mubr.bf16.gmra.mxu0 %v449
  %v1037 = vpop.f32.mrf.mxu0
  %v1038 = vadd.f32 %v229, %v1037
  %v1039 = vpop.f32.mrf.mxu0
  %v1040 = vpop.f32.mrf.mxu0
  %v1041 = vadd.f32 %v229, %v1040
  %v1042 = vpop.f32.mrf.mxu0
  %1043 = vmatprep.mubr.bf16.mxu0 %v459
  %1044 = vmatmul.mubr.bf16.gmra.mxu0 %v458
  %v1045 = vpop.f32.mrf.mxu0
  %v1046 = vadd.f32 %v229, %v1045
  %v1047 = vpop.f32.mrf.mxu0
  %v1048 = vpop.f32.mrf.mxu0
  %v1049 = vadd.f32 %v229, %v1048
  %v1050 = vpop.f32.mrf.mxu0
  %1051 = vmatprep.mubr.bf16.mxu0 %v468
  %1052 = vmatmul.mubr.bf16.gmra.mxu0 %v467
  %v1053 = vpop.f32.mrf.mxu0
  %v1054 = vadd.f32 %v229, %v1053
  %v1055 = vpop.f32.mrf.mxu0
  %v1056 = vpop.f32.mrf.mxu0
  %v1057 = vpop.f32.mrf.mxu0
  %1058 = vdwg.mxu0
  %1059 = vmatprep.subr.bf16.mxu0 0
  %1060 = vmatpush1.bf16.msra.mxu0 %v850
  %1061 = vmatprep.subr.bf16.mxu0 0
  %1062 = vmatpush1.bf16.msra.mxu0 %v849
  %1063 = vmatprep.subr.bf16.mxu0 0
  %1064 = vmatpush1.bf16.msra.mxu0 %v848
  %1065 = vmatprep.subr.bf16.mxu0 0
  %1066 = vmatpush1.bf16.msra.mxu0 %v847
  %1067 = vmatprep.subr.bf16.mxu0 0
  %1068 = vmatpush1.bf16.msra.mxu0 %v846
  %1069 = vmatprep.subr.bf16.mxu0 0
  %1070 = vmatpush1.bf16.msra.mxu0 %v845
  %1071 = vmatprep.subr.bf16.mxu0 0
  %1072 = vmatpush1.bf16.msra.mxu0 %v844
  %1073 = vmatprep.subr.bf16.mxu0 0
  %1074 = vmatpush1.bf16.msra.mxu0 %v843
  %1075 = vmatprep.subr.bf16.mxu0 0
  %1076 = vmatpush2.bf16.msra.mxu0 %v858
  %1077 = vmatprep.subr.bf16.mxu0 0
  %1078 = vmatpush2.bf16.msra.mxu0 %v857
  %1079 = vmatprep.subr.bf16.mxu0 0
  %1080 = vmatpush2.bf16.msra.mxu0 %v856
  %1081 = vmatprep.subr.bf16.mxu0 0
  %1082 = vmatpush2.bf16.msra.mxu0 %v855
  %1083 = vmatprep.subr.bf16.mxu0 0
  %1084 = vmatpush2.bf16.msra.mxu0 %v854
  %1085 = vmatprep.subr.bf16.mxu0 0
  %1086 = vmatpush2.bf16.msra.mxu0 %v853
  %1087 = vmatprep.subr.bf16.mxu0 0
  %1088 = vmatpush2.bf16.msra.mxu0 %v852
  %1089 = vmatprep.subr.bf16.mxu0 0
  %1090 = vmatpush2.bf16.msra.mxu0 %v851
  %1091 = vmatprep.mubr.bf16.mxu0 %v416
  %1092 = vmatmul.mubr.bf16.gmra.mxu0 %v415
  %v1093 = vpop.f32.mrf.mxu0
  %v1094 = vadd.f32 %v1006, %v1093
  %v1095 = vpop.f32.mrf.mxu0
  %v1096 = vpop.f32.mrf.mxu0
  %v1097 = vadd.f32 %v1009, %v1096
  %v1098 = vpop.f32.mrf.mxu0
  %1099 = vmatprep.mubr.bf16.mxu0 %v425
  %1100 = vmatmul.mubr.bf16.gmra.mxu0 %v424
  %v1101 = vpop.f32.mrf.mxu0
  %v1102 = vadd.f32 %v1014, %v1101
  %v1103 = vpop.f32.mrf.mxu0
  %v1104 = vpop.f32.mrf.mxu0
  %v1105 = vadd.f32 %v1017, %v1104
  %v1106 = vpop.f32.mrf.mxu0
  %1107 = vmatprep.mubr.bf16.mxu0 %v434
  %1108 = vmatmul.mubr.bf16.gmra.mxu0 %v433
  %v1109 = vpop.f32.mrf.mxu0
  %v1110 = vadd.f32 %v1022, %v1109
  %v1111 = vpop.f32.mrf.mxu0
  %v1112 = vpop.f32.mrf.mxu0
  %v1113 = vadd.f32 %v1025, %v1112
  %v1114 = vpop.f32.mrf.mxu0
  %1115 = vmatprep.mubr.bf16.mxu0 %v443
  %1116 = vmatmul.mubr.bf16.gmra.mxu0 %v442
  %v1117 = vpop.f32.mrf.mxu0
  %v1118 = vadd.f32 %v1030, %v1117
  %v1119 = vpop.f32.mrf.mxu0
  %v1120 = vpop.f32.mrf.mxu0
  %v1121 = vadd.f32 %v1033, %v1120
  %v1122 = vpop.f32.mrf.mxu0
  %1123 = vmatprep.mubr.bf16.mxu0 %v452
  %1124 = vmatmul.mubr.bf16.gmra.mxu0 %v451
  %v1125 = vpop.f32.mrf.mxu0
  %v1126 = vadd.f32 %v1038, %v1125
  %v1127 = vpop.f32.mrf.mxu0
  %v1128 = vpop.f32.mrf.mxu0
  %v1129 = vadd.f32 %v1041, %v1128
  %v1130 = vpop.f32.mrf.mxu0
  %1131 = vmatprep.mubr.bf16.mxu0 %v461
  %1132 = vmatmul.mubr.bf16.gmra.mxu0 %v460
  %v1133 = vpop.f32.mrf.mxu0
  %v1134 = vadd.f32 %v1046, %v1133
  %v1135 = vpop.f32.mrf.mxu0
  %v1136 = vpop.f32.mrf.mxu0
  %v1137 = vadd.f32 %v1049, %v1136
  %v1138 = vpop.f32.mrf.mxu0
  %1139 = vmatprep.mubr.bf16.mxu0 %v470
  %1140 = vmatmul.mubr.bf16.gmra.mxu0 %v469
  %v1141 = vpop.f32.mrf.mxu0
  %v1142 = vadd.f32 %v1054, %v1141
  %v1143 = vpop.f32.mrf.mxu0
  %v1144 = vpop.f32.mrf.mxu0
  %v1145 = vpop.f32.mrf.mxu0
  %1146 = vdwg.mxu0
  %1147 = vmatprep.subr.bf16.mxu0 0
  %1148 = vmatpush1.bf16.msra.mxu0 %v866
  %1149 = vmatprep.subr.bf16.mxu0 0
  %1150 = vmatpush1.bf16.msra.mxu0 %v865
  %1151 = vmatprep.subr.bf16.mxu0 0
  %1152 = vmatpush1.bf16.msra.mxu0 %v864
  %1153 = vmatprep.subr.bf16.mxu0 0
  %1154 = vmatpush1.bf16.msra.mxu0 %v863
  %1155 = vmatprep.subr.bf16.mxu0 0
  %1156 = vmatpush1.bf16.msra.mxu0 %v862
  %1157 = vmatprep.subr.bf16.mxu0 0
  %1158 = vmatpush1.bf16.msra.mxu0 %v861
  %1159 = vmatprep.subr.bf16.mxu0 0
  %1160 = vmatpush1.bf16.msra.mxu0 %v860
  %1161 = vmatprep.subr.bf16.mxu0 0
  %1162 = vmatpush1.bf16.msra.mxu0 %v859
  %1163 = vmatprep.subr.bf16.mxu0 0
  %1164 = vmatpush2.bf16.msra.mxu0 %v874
  %1165 = vmatprep.subr.bf16.mxu0 0
  %1166 = vmatpush2.bf16.msra.mxu0 %v873
  %1167 = vmatprep.subr.bf16.mxu0 0
  %1168 = vmatpush2.bf16.msra.mxu0 %v872
  %1169 = vmatprep.subr.bf16.mxu0 0
  %1170 = vmatpush2.bf16.msra.mxu0 %v871
  %1171 = vmatprep.subr.bf16.mxu0 0
  %1172 = vmatpush2.bf16.msra.mxu0 %v870
  %1173 = vmatprep.subr.bf16.mxu0 0
  %1174 = vmatpush2.bf16.msra.mxu0 %v869
  %1175 = vmatprep.subr.bf16.mxu0 0
  %1176 = vmatpush2.bf16.msra.mxu0 %v868
  %1177 = vmatprep.subr.bf16.mxu0 0
  %1178 = vmatpush2.bf16.msra.mxu0 %v867
  %1179 = vmatprep.mubr.bf16.mxu0 %v418
  %1180 = vmatmul.mubr.bf16.gmra.mxu0 %v417
  %v1181 = vpop.f32.mrf.mxu0
  %v1182 = vadd.f32 %v1094, %v1181
  %v1183 = vpop.f32.mrf.mxu0
  %v1184 = vpop.f32.mrf.mxu0
  %v1185 = vadd.f32 %v1097, %v1184
  %v1186 = vpop.f32.mrf.mxu0
  %1187 = vmatprep.mubr.bf16.mxu0 %v427
  %1188 = vmatmul.mubr.bf16.gmra.mxu0 %v426
  %v1189 = vpop.f32.mrf.mxu0
  %v1190 = vadd.f32 %v1102, %v1189
  %v1191 = vpop.f32.mrf.mxu0
  %v1192 = vpop.f32.mrf.mxu0
  %v1193 = vadd.f32 %v1105, %v1192
  %v1194 = vpop.f32.mrf.mxu0
  %1195 = vmatprep.mubr.bf16.mxu0 %v436
  %1196 = vmatmul.mubr.bf16.gmra.mxu0 %v435
  %v1197 = vpop.f32.mrf.mxu0
  %v1198 = vadd.f32 %v1110, %v1197
  %v1199 = vpop.f32.mrf.mxu0
  %v1200 = vpop.f32.mrf.mxu0
  %v1201 = vadd.f32 %v1113, %v1200
  %v1202 = vpop.f32.mrf.mxu0
  %1203 = vmatprep.mubr.bf16.mxu0 %v445
  %1204 = vmatmul.mubr.bf16.gmra.mxu0 %v444
  %v1205 = vpop.f32.mrf.mxu0
  %v1206 = vadd.f32 %v1118, %v1205
  %v1207 = vpop.f32.mrf.mxu0
  %v1208 = vpop.f32.mrf.mxu0
  %v1209 = vadd.f32 %v1121, %v1208
  %v1210 = vpop.f32.mrf.mxu0
  %1211 = vmatprep.mubr.bf16.mxu0 %v454
  %1212 = vmatmul.mubr.bf16.gmra.mxu0 %v453
  %v1213 = vpop.f32.mrf.mxu0
  %v1214 = vadd.f32 %v1126, %v1213
  %v1215 = vpop.f32.mrf.mxu0
  %v1216 = vpop.f32.mrf.mxu0
  %v1217 = vadd.f32 %v1129, %v1216
  %v1218 = vpop.f32.mrf.mxu0
  %1219 = vmatprep.mubr.bf16.mxu0 %v463
  %1220 = vmatmul.mubr.bf16.gmra.mxu0 %v462
  %v1221 = vpop.f32.mrf.mxu0
  %v1222 = vadd.f32 %v1134, %v1221
  %v1223 = vpop.f32.mrf.mxu0
  %v1224 = vpop.f32.mrf.mxu0
  %v1225 = vadd.f32 %v1137, %v1224
  %v1226 = vpop.f32.mrf.mxu0
  %1227 = vmatprep.mubr.bf16.mxu0 %v472
  %1228 = vmatmul.mubr.bf16.gmra.mxu0 %v471
  %v1229 = vpop.f32.mrf.mxu0
  %v1230 = vadd.f32 %v1142, %v1229
  %v1231 = vpop.f32.mrf.mxu0
  %v1232 = vpop.f32.mrf.mxu0
  %v1233 = vpop.f32.mrf.mxu0
  %1234 = vdwg.mxu0
  %1235 = vmatprep.subr.bf16.mxu0 0
  %1236 = vmatpush1.bf16.msra.mxu0 %v882
  %1237 = vmatprep.subr.bf16.mxu0 0
  %1238 = vmatpush1.bf16.msra.mxu0 %v881
  %1239 = vmatprep.subr.bf16.mxu0 0
  %1240 = vmatpush1.bf16.msra.mxu0 %v880
  %1241 = vmatprep.subr.bf16.mxu0 0
  %1242 = vmatpush1.bf16.msra.mxu0 %v879
  %1243 = vmatprep.subr.bf16.mxu0 0
  %1244 = vmatpush1.bf16.msra.mxu0 %v878
  %1245 = vmatprep.subr.bf16.mxu0 0
  %1246 = vmatpush1.bf16.msra.mxu0 %v877
  %1247 = vmatprep.subr.bf16.mxu0 0
  %1248 = vmatpush1.bf16.msra.mxu0 %v876
  %1249 = vmatprep.subr.bf16.mxu0 0
  %1250 = vmatpush1.bf16.msra.mxu0 %v875
  %1251 = vmatprep.subr.bf16.mxu0 0
  %1252 = vmatpush2.bf16.msra.mxu0 %v890
  %1253 = vmatprep.subr.bf16.mxu0 0
  %1254 = vmatpush2.bf16.msra.mxu0 %v889
  %1255 = vmatprep.subr.bf16.mxu0 0
  %1256 = vmatpush2.bf16.msra.mxu0 %v888
  %1257 = vmatprep.subr.bf16.mxu0 0
  %1258 = vmatpush2.bf16.msra.mxu0 %v887
  %1259 = vmatprep.subr.bf16.mxu0 0
  %1260 = vmatpush2.bf16.msra.mxu0 %v886
  %1261 = vmatprep.subr.bf16.mxu0 0
  %1262 = vmatpush2.bf16.msra.mxu0 %v885
  %1263 = vmatprep.subr.bf16.mxu0 0
  %1264 = vmatpush2.bf16.msra.mxu0 %v884
  %1265 = vmatprep.subr.bf16.mxu0 0
  %1266 = vmatpush2.bf16.msra.mxu0 %v883
  %1267 = vmatprep.mubr.bf16.mxu0 %v420
  %1268 = vmatmul.mubr.bf16.gmra.mxu0 %v419
  %v1269 = vpop.f32.mrf.mxu0
  %v1270 = vadd.f32 %v1182, %v1269
  %v1271 = vpop.f32.mrf.mxu0
  %v1272 = vpop.f32.mrf.mxu0
  %v1273 = vadd.f32 %v1185, %v1272
  %v1274 = vpop.f32.mrf.mxu0
  %1275 = vmatprep.mubr.bf16.mxu0 %v429
  %1276 = vmatmul.mubr.bf16.gmra.mxu0 %v428
  %v1277 = vpop.f32.mrf.mxu0
  %v1278 = vadd.f32 %v1190, %v1277
  %v1279 = vpop.f32.mrf.mxu0
  %v1280 = vpop.f32.mrf.mxu0
  %v1281 = vadd.f32 %v1193, %v1280
  %v1282 = vpop.f32.mrf.mxu0
  %1283 = vmatprep.mubr.bf16.mxu0 %v438
  %1284 = vmatmul.mubr.bf16.gmra.mxu0 %v437
  %v1285 = vpop.f32.mrf.mxu0
  %v1286 = vadd.f32 %v1198, %v1285
  %v1287 = vpop.f32.mrf.mxu0
  %v1288 = vpop.f32.mrf.mxu0
  %v1289 = vadd.f32 %v1201, %v1288
  %v1290 = vpop.f32.mrf.mxu0
  %1291 = vmatprep.mubr.bf16.mxu0 %v447
  %1292 = vmatmul.mubr.bf16.gmra.mxu0 %v446
  %v1293 = vpop.f32.mrf.mxu0
  %v1294 = vadd.f32 %v1206, %v1293
  %v1295 = vpop.f32.mrf.mxu0
  %v1296 = vpop.f32.mrf.mxu0
  %v1297 = vadd.f32 %v1209, %v1296
  %v1298 = vpop.f32.mrf.mxu0
  %1299 = vmatprep.mubr.bf16.mxu0 %v456
  %1300 = vmatmul.mubr.bf16.gmra.mxu0 %v455
  %v1301 = vpop.f32.mrf.mxu0
  %v1302 = vadd.f32 %v1214, %v1301
  %v1303 = vpop.f32.mrf.mxu0
  %v1304 = vpop.f32.mrf.mxu0
  %v1305 = vadd.f32 %v1217, %v1304
  %v1306 = vpop.f32.mrf.mxu0
  %1307 = vmatprep.mubr.bf16.mxu0 %v465
  %1308 = vmatmul.mubr.bf16.gmra.mxu0 %v464
  %v1309 = vpop.f32.mrf.mxu0
  %v1310 = vadd.f32 %v1222, %v1309
  %v1311 = vpop.f32.mrf.mxu0
  %v1312 = vpop.f32.mrf.mxu0
  %v1313 = vadd.f32 %v1225, %v1312
  %v1314 = vpop.f32.mrf.mxu0
  %1315 = vmatprep.mubr.bf16.mxu0 %v474
  %1316 = vmatmul.mubr.bf16.gmra.mxu0 %v473
  %v1317 = vpop.f32.mrf.mxu0
  %v1318 = vadd.f32 %v1230, %v1317
  %v1319 = vpop.f32.mrf.mxu0
  %v1320 = vpop.f32.mrf.mxu0
  %v1321 = vpop.f32.mrf.mxu0
  %1322 = vdwg.mxu0
  %1323 = vmatprep.subr.bf16.mxu0 0
  %1324 = vmatpush1.bf16.msra.mxu0 %v898
  %1325 = vmatprep.subr.bf16.mxu0 0
  %1326 = vmatpush1.bf16.msra.mxu0 %v897
  %1327 = vmatprep.subr.bf16.mxu0 0
  %1328 = vmatpush1.bf16.msra.mxu0 %v896
  %1329 = vmatprep.subr.bf16.mxu0 0
  %1330 = vmatpush1.bf16.msra.mxu0 %v895
  %1331 = vmatprep.subr.bf16.mxu0 0
  %1332 = vmatpush1.bf16.msra.mxu0 %v894
  %1333 = vmatprep.subr.bf16.mxu0 0
  %1334 = vmatpush1.bf16.msra.mxu0 %v893
  %1335 = vmatprep.subr.bf16.mxu0 0
  %1336 = vmatpush1.bf16.msra.mxu0 %v892
  %1337 = vmatprep.subr.bf16.mxu0 0
  %1338 = vmatpush1.bf16.msra.mxu0 %v891
  %1339 = vmatprep.subr.bf16.mxu0 0
  %1340 = vmatpush2.bf16.msra.mxu0 0
  %1341 = vmatprep.subr.bf16.mxu0 0
  %1342 = vmatpush2.bf16.msra.mxu0 0
  %1343 = vmatprep.subr.bf16.mxu0 0
  %1344 = vmatpush2.bf16.msra.mxu0 0
  %1345 = vmatprep.subr.bf16.mxu0 0
  %1346 = vmatpush2.bf16.msra.mxu0 0
  %1347 = vmatprep.subr.bf16.mxu0 0
  %1348 = vmatpush2.bf16.msra.mxu0 0
  %1349 = vmatprep.subr.bf16.mxu0 0
  %1350 = vmatpush2.bf16.msra.mxu0 0
  %1351 = vmatprep.subr.bf16.mxu0 0
  %1352 = vmatpush2.bf16.msra.mxu0 0
  %1353 = vmatprep.subr.bf16.mxu0 0
  %1354 = vmatpush2.bf16.msra.mxu0 0
  %1355 = vmatprep.mubr.bf16.mxu0 0
  %1356 = vmatmul.mubr.bf16.gmra.mxu0 %v421
  %v1357 = vpop.f32.mrf.mxu0
  %v1358 = vadd.f32 %v1270, %v1357
  %v1359 = vpop.f32.mrf.mxu0
  %v1360 = vpop.f32.mrf.mxu0
  %v1361 = vadd.f32 %v1273, %v1360
  %v1362 = vpop.f32.mrf.mxu0
  %1363 = vmatprep.mubr.bf16.mxu0 0
  %1364 = vmatmul.mubr.bf16.gmra.mxu0 %v430
  %v1365 = vpop.f32.mrf.mxu0
  %v1366 = vadd.f32 %v1278, %v1365
  %v1367 = vpop.f32.mrf.mxu0
  %v1368 = vpop.f32.mrf.mxu0
  %v1369 = vadd.f32 %v1281, %v1368
  %v1370 = vpop.f32.mrf.mxu0
  %1371 = vmatprep.mubr.bf16.mxu0 0
  %1372 = vmatmul.mubr.bf16.gmra.mxu0 %v439
  %v1373 = vpop.f32.mrf.mxu0
  %v1374 = vadd.f32 %v1286, %v1373
  %v1375 = vpop.f32.mrf.mxu0
  %v1376 = vpop.f32.mrf.mxu0
  %v1377 = vadd.f32 %v1289, %v1376
  %v1378 = vpop.f32.mrf.mxu0
  %1379 = vmatprep.mubr.bf16.mxu0 0
  %1380 = vmatmul.mubr.bf16.gmra.mxu0 %v448
  %v1381 = vpop.f32.mrf.mxu0
  %v1382 = vadd.f32 %v1294, %v1381
  %v1383 = vpop.f32.mrf.mxu0
  %v1384 = vpop.f32.mrf.mxu0
  %v1385 = vadd.f32 %v1297, %v1384
  %v1386 = vpop.f32.mrf.mxu0
  %1387 = vmatprep.mubr.bf16.mxu0 0
  %1388 = vmatmul.mubr.bf16.gmra.mxu0 %v457
  %v1389 = vpop.f32.mrf.mxu0
  %v1390 = vadd.f32 %v1302, %v1389
  %v1391 = vpop.f32.mrf.mxu0
  %v1392 = vpop.f32.mrf.mxu0
  %v1393 = vadd.f32 %v1305, %v1392
  %v1394 = vpop.f32.mrf.mxu0
  %1395 = vmatprep.mubr.bf16.mxu0 0
  %1396 = vmatmul.mubr.bf16.gmra.mxu0 %v466
  %v1397 = vpop.f32.mrf.mxu0
  %v1398 = vadd.f32 %v1310, %v1397
  %v1399 = vpop.f32.mrf.mxu0
  %v1400 = vpop.f32.mrf.mxu0
  %v1401 = vadd.f32 %v1313, %v1400
  %v1402 = vpop.f32.mrf.mxu0
  %1403 = vmatprep.mubr.bf16.mxu0 0
  %1404 = vmatmul.mubr.bf16.gmra.mxu0 %v475
  %v1405 = vpop.f32.mrf.mxu0
  %v1406 = vadd.f32 %v1318, %v1405
  %v1407 = vpop.f32.mrf.mxu0
  %v1408 = vpop.f32.mrf.mxu0
  %v1409 = vpop.f32.mrf.mxu0
  %1410 = vdwg.mxu0
  %v1411 = vmax.f32 %v1358, 0.0
  %v1412 = vmax.f32 %v1361, 0.0
  %v1413 = vmax.f32 %v1366, 0.0
  %v1414 = vmax.f32 %v1369, 0.0
  %v1415 = vmax.f32 %v1374, 0.0
  %v1416 = vmax.f32 %v1377, 0.0
  %v1417 = vmax.f32 %v1382, 0.0
  %v1418 = vmax.f32 %v1385, 0.0
  %v1419 = vmax.f32 %v1390, 0.0
  %v1420 = vmax.f32 %v1393, 0.0
  %v1421 = vmax.f32 %v1398, 0.0
  %v1422 = vmax.f32 %v1401, 0.0
  %v1423 = vmax.f32 %v1406, 0.0
  %s1424 = scalar_lea.vmem %s0, 468
  %v1425 = vld [vmem:[%s1424] sm:$0xff]
  %v1426 = vld [vmem:[%s1424 + $0x8] sm:$0xff]
  %v1427 = vld [vmem:[%s1424 + $0x10] sm:$0xff]
  %v1428 = vld [vmem:[%s1424 + $0x18] sm:$0xff]
  %v1429 = vld [vmem:[%s1424 + $0x20] sm:$0xf]
  %v1430 = vld [vmem:[%s1424 + $0x24] sm:$0xff]
  %v1431 = vld [vmem:[%s1424 + $0x2c] sm:$0xff]
  %v1432 = vld [vmem:[%s1424 + $0x34] sm:$0xff]
  %v1433 = vld [vmem:[%s1424 + $0x3c] sm:$0xff]
  %v1434 = vld [vmem:[%s1424 + $0x44] sm:$0xf]
  %v1435 = vld [vmem:[%s1424 + $0x48] sm:$0xff]
  %v1436 = vld [vmem:[%s1424 + $0x50] sm:$0xff]
  %v1437 = vld [vmem:[%s1424 + $0x58] sm:$0xff]
  %v1438 = vld [vmem:[%s1424 + $0x60] sm:$0xff]
  %v1439 = vld [vmem:[%s1424 + $0x68] sm:$0xf]
  %v1440 = vld [vmem:[%s1424 + $0x6c] sm:$0xff]
  %v1441 = vld [vmem:[%s1424 + $0x74] sm:$0xff]
  %v1442 = vld [vmem:[%s1424 + $0x7c] sm:$0xff]
  %v1443 = vld [vmem:[%s1424 + $0x84] sm:$0xff]
  %v1444 = vld [vmem:[%s1424 + $0x8c] sm:$0xf]
  %v1445 = vld [vmem:[%s1424 + $0x90] sm:$0xff]
  %v1446 = vld [vmem:[%s1424 + $0x98] sm:$0xff]
  %v1447 = vld [vmem:[%s1424 + $0xa0] sm:$0xff]
  %v1448 = vld [vmem:[%s1424 + $0xa8] sm:$0xff]
  %v1449 = vld [vmem:[%s1424 + $0xb0] sm:$0xf]
  %v1450 = vld [vmem:[%s1424 + $0xb4] sm:$0xff]
  %v1451 = vld [vmem:[%s1424 + $0xbc] sm:$0xff]
  %v1452 = vld [vmem:[%s1424 + $0xc4] sm:$0xff]
  %v1453 = vld [vmem:[%s1424 + $0xcc] sm:$0xff]
  %v1454 = vld [vmem:[%s1424 + $0xd4] sm:$0xf]
  %v1455 = vld [vmem:[%s1424 + $0xd8] sm:$0xff]
  %v1456 = vld [vmem:[%s1424 + $0xe0] sm:$0xff]
  %v1457 = vld [vmem:[%s1424 + $0xe8] sm:$0xff]
  %v1458 = vld [vmem:[%s1424 + $0xf0] sm:$0xff]
  %v1459 = vld [vmem:[%s1424 + $0xf8] sm:$0xf]
  %v1460 = vld [vmem:[%s1424 + $0xfc] sm:$0xff]
  %v1461 = vld [vmem:[%s1424 + $0x104] sm:$0xff]
  %v1462 = vld [vmem:[%s1424 + $0x10c] sm:$0xff]
  %v1463 = vld [vmem:[%s1424 + $0x114] sm:$0xff]
  %v1464 = vld [vmem:[%s1424 + $0x11c] sm:$0xf]
  %v1465 = vld [vmem:[%s1424 + $0x120] sm:$0xff]
  %v1466 = vld [vmem:[%s1424 + $0x128] sm:$0xff]
  %v1467 = vld [vmem:[%s1424 + $0x130] sm:$0xff]
  %v1468 = vld [vmem:[%s1424 + $0x138] sm:$0xff]
  %v1469 = vld [vmem:[%s1424 + $0x140] sm:$0xf]
  %v1470 = vld [vmem:[%s1424 + $0x144] sm:$0xff]
  %v1471 = vld [vmem:[%s1424 + $0x14c] sm:$0xff]
  %v1472 = vld [vmem:[%s1424 + $0x154] sm:$0xff]
  %v1473 = vld [vmem:[%s1424 + $0x15c] sm:$0xff]
  %v1474 = vld [vmem:[%s1424 + $0x164] sm:$0xf]
  %v1475 = vld [vmem:[%s1424 + $0x168] sm:$0xff]
  %v1476 = vld [vmem:[%s1424 + $0x170] sm:$0xff]
  %v1477 = vld [vmem:[%s1424 + $0x178] sm:$0xff]
  %v1478 = vld [vmem:[%s1424 + $0x180] sm:$0xff]
  %v1479 = vld [vmem:[%s1424 + $0x188] sm:$0xf]
  %v1480 = vld [vmem:[%s1424 + $0x18c] sm:$0xff]
  %v1481 = vld [vmem:[%s1424 + $0x194] sm:$0xff]
  %v1482 = vld [vmem:[%s1424 + $0x19c] sm:$0xff]
  %v1483 = vld [vmem:[%s1424 + $0x1a4] sm:$0xff]
  %v1484 = vld [vmem:[%s1424 + $0x1ac] sm:$0xf]
  %v1485 = vld [vmem:[%s1424 + $0x1b0] sm:$0x11]
  %v1486 = vld [vmem:[%s1424 + $0x1b8] sm:$0x11]
  %v1487 = vld [vmem:[%s1424 + $0x1c0] sm:$0x11]
  %v1488 = vld [vmem:[%s1424 + $0x1c8] sm:$0x11]
  %v1489 = vld [vmem:[%s1424 + $0x1d0] sm:$0x1]
  %v1555 = vunpack.c.l.b16 %v1425
  %v1556 = vunpack.c.h.b16 %v1425
  %v1557 = vunpack.c.l.b16 %v1426
  %v1558 = vunpack.c.h.b16 %v1426
  %v1559 = vunpack.c.l.b16 %v1427
  %v1560 = vunpack.c.h.b16 %v1427
  %v1561 = vunpack.c.l.b16 %v1428
  %v1562 = vunpack.c.h.b16 %v1428
  %v1563 = vunpack.c.l.b16 %v1429
  %v1564 = vunpack.c.l.b16 %v1430
  %v1565 = vunpack.c.h.b16 %v1430
  %v1566 = vunpack.c.l.b16 %v1431
  %v1567 = vunpack.c.h.b16 %v1431
  %v1568 = vunpack.c.l.b16 %v1432
  %v1569 = vunpack.c.h.b16 %v1432
  %v1570 = vunpack.c.l.b16 %v1433
  %v1571 = vunpack.c.h.b16 %v1433
  %v1572 = vunpack.c.l.b16 %v1434
  %v1573 = vunpack.c.l.b16 %v1435
  %v1574 = vunpack.c.h.b16 %v1435
  %v1575 = vunpack.c.l.b16 %v1436
  %v1576 = vunpack.c.h.b16 %v1436
  %v1577 = vunpack.c.l.b16 %v1437
  %v1578 = vunpack.c.h.b16 %v1437
  %v1579 = vunpack.c.l.b16 %v1438
  %v1580 = vunpack.c.h.b16 %v1438
  %v1581 = vunpack.c.l.b16 %v1439
  %v1582 = vunpack.c.l.b16 %v1440
  %v1583 = vunpack.c.h.b16 %v1440
  %v1584 = vunpack.c.l.b16 %v1441
  %v1585 = vunpack.c.h.b16 %v1441
  %v1586 = vunpack.c.l.b16 %v1442
  %v1587 = vunpack.c.h.b16 %v1442
  %v1588 = vunpack.c.l.b16 %v1443
  %v1589 = vunpack.c.h.b16 %v1443
  %v1590 = vunpack.c.l.b16 %v1444
  %v1591 = vunpack.c.l.b16 %v1445
  %v1592 = vunpack.c.h.b16 %v1445
  %v1593 = vunpack.c.l.b16 %v1446
  %v1594 = vunpack.c.h.b16 %v1446
  %v1595 = vunpack.c.l.b16 %v1447
  %v1596 = vunpack.c.h.b16 %v1447
  %v1597 = vunpack.c.l.b16 %v1448
  %v1598 = vunpack.c.h.b16 %v1448
  %v1599 = vunpack.c.l.b16 %v1449
  %v1600 = vunpack.c.l.b16 %v1450
  %v1601 = vunpack.c.h.b16 %v1450
  %v1602 = vunpack.c.l.b16 %v1451
  %v1603 = vunpack.c.h.b16 %v1451
  %v1604 = vunpack.c.l.b16 %v1452
  %v1605 = vunpack.c.h.b16 %v1452
  %v1606 = vunpack.c.l.b16 %v1453
  %v1607 = vunpack.c.h.b16 %v1453
  %v1608 = vunpack.c.l.b16 %v1454
  %v1609 = vunpack.c.l.b16 %v1455
  %v1610 = vunpack.c.h.b16 %v1455
  %v1611 = vunpack.c.l.b16 %v1456
  %v1612 = vunpack.c.h.b16 %v1456
  %v1613 = vunpack.c.l.b16 %v1457
  %v1614 = vunpack.c.h.b16 %v1457
  %v1615 = vunpack.c.l.b16 %v1458
  %v1616 = vunpack.c.h.b16 %v1458
  %v1617 = vunpack.c.l.b16 %v1459
  %v1618 = vunpack.c.l.b16 %v1460
  %v1619 = vunpack.c.h.b16 %v1460
  %v1620 = vunpack.c.l.b16 %v1461
  %v1621 = vunpack.c.h.b16 %v1461
  %v1622 = vunpack.c.l.b16 %v1462
  %v1623 = vunpack.c.h.b16 %v1462
  %v1624 = vunpack.c.l.b16 %v1463
  %v1625 = vunpack.c.h.b16 %v1463
  %v1626 = vunpack.c.l.b16 %v1464
  %v1627 = vunpack.c.l.b16 %v1465
  %v1628 = vunpack.c.h.b16 %v1465
  %v1629 = vunpack.c.l.b16 %v1466
  %v1630 = vunpack.c.h.b16 %v1466
  %v1631 = vunpack.c.l.b16 %v1467
  %v1632 = vunpack.c.h.b16 %v1467
  %v1633 = vunpack.c.l.b16 %v1468
  %v1634 = vunpack.c.h.b16 %v1468
  %v1635 = vunpack.c.l.b16 %v1469
  %v1636 = vunpack.c.l.b16 %v1470
  %v1637 = vunpack.c.h.b16 %v1470
  %v1638 = vunpack.c.l.b16 %v1471
  %v1639 = vunpack.c.h.b16 %v1471
  %v1640 = vunpack.c.l.b16 %v1472
  %v1641 = vunpack.c.h.b16 %v1472
  %v1642 = vunpack.c.l.b16 %v1473
  %v1643 = vunpack.c.h.b16 %v1473
  %v1644 = vunpack.c.l.b16 %v1474
  %v1645 = vunpack.c.l.b16 %v1475
  %v1646 = vunpack.c.h.b16 %v1475
  %v1647 = vunpack.c.l.b16 %v1476
  %v1648 = vunpack.c.h.b16 %v1476
  %v1649 = vunpack.c.l.b16 %v1477
  %v1650 = vunpack.c.h.b16 %v1477
  %v1651 = vunpack.c.l.b16 %v1478
  %v1652 = vunpack.c.h.b16 %v1478
  %v1653 = vunpack.c.l.b16 %v1479
  %v1654 = vunpack.c.l.b16 %v1480
  %v1655 = vunpack.c.h.b16 %v1480
  %v1656 = vunpack.c.l.b16 %v1481
  %v1657 = vunpack.c.h.b16 %v1481
  %v1658 = vunpack.c.l.b16 %v1482
  %v1659 = vunpack.c.h.b16 %v1482
  %v1660 = vunpack.c.l.b16 %v1483
  %v1661 = vunpack.c.h.b16 %v1483
  %v1662 = vunpack.c.l.b16 %v1484
  %v1663 = vunpack.c.l.b16 %v1485
  %v1664 = vunpack.c.h.b16 %v1485
  %v1665 = vunpack.c.l.b16 %v1486
  %v1666 = vunpack.c.h.b16 %v1486
  %v1667 = vunpack.c.l.b16 %v1487
  %v1668 = vunpack.c.h.b16 %v1487
  %v1669 = vunpack.c.l.b16 %v1488
  %v1670 = vunpack.c.h.b16 %v1488
  %v1671 = vunpack.c.l.b16 %v1489
  %v1672 = vpack.c.b16 %v1564, %v1555
  %v1673 = vpack.c.b16 %v1565, %v1556
  %v1674 = vpack.c.b16 %v1566, %v1557
  %v1675 = vpack.c.b16 %v1567, %v1558
  %v1676 = vpack.c.b16 %v1568, %v1559
  %v1677 = vpack.c.b16 %v1569, %v1560
  %v1678 = vpack.c.b16 %v1570, %v1561
  %v1679 = vpack.c.b16 %v1571, %v1562
  %v1680 = vpack.c.b16 %v1572, %v1563
  %v1681 = vpack.c.b16 %v1582, %v1573
  %v1682 = vpack.c.b16 %v1583, %v1574
  %v1683 = vpack.c.b16 %v1584, %v1575
  %v1684 = vpack.c.b16 %v1585, %v1576
  %v1685 = vpack.c.b16 %v1586, %v1577
  %v1686 = vpack.c.b16 %v1587, %v1578
  %v1687 = vpack.c.b16 %v1588, %v1579
  %v1688 = vpack.c.b16 %v1589, %v1580
  %v1689 = vpack.c.b16 %v1590, %v1581
  %v1690 = vpack.c.b16 %v1600, %v1591
  %v1691 = vpack.c.b16 %v1601, %v1592
  %v1692 = vpack.c.b16 %v1602, %v1593
  %v1693 = vpack.c.b16 %v1603, %v1594
  %v1694 = vpack.c.b16 %v1604, %v1595
  %v1695 = vpack.c.b16 %v1605, %v1596
  %v1696 = vpack.c.b16 %v1606, %v1597
  %v1697 = vpack.c.b16 %v1607, %v1598
  %v1698 = vpack.c.b16 %v1608, %v1599
  %v1699 = vpack.c.b16 %v1618, %v1609
  %v1700 = vpack.c.b16 %v1619, %v1610
  %v1701 = vpack.c.b16 %v1620, %v1611
  %v1702 = vpack.c.b16 %v1621, %v1612
  %v1703 = vpack.c.b16 %v1622, %v1613
  %v1704 = vpack.c.b16 %v1623, %v1614
  %v1705 = vpack.c.b16 %v1624, %v1615
  %v1706 = vpack.c.b16 %v1625, %v1616
  %v1707 = vpack.c.b16 %v1626, %v1617
  %v1708 = vpack.c.b16 %v1636, %v1627
  %v1709 = vpack.c.b16 %v1637, %v1628
  %v1710 = vpack.c.b16 %v1638, %v1629
  %v1711 = vpack.c.b16 %v1639, %v1630
  %v1712 = vpack.c.b16 %v1640, %v1631
  %v1713 = vpack.c.b16 %v1641, %v1632
  %v1714 = vpack.c.b16 %v1642, %v1633
  %v1715 = vpack.c.b16 %v1643, %v1634
  %v1716 = vpack.c.b16 %v1644, %v1635
  %v1717 = vpack.c.b16 %v1654, %v1645
  %v1718 = vpack.c.b16 %v1655, %v1646
  %v1719 = vpack.c.b16 %v1656, %v1647
  %v1720 = vpack.c.b16 %v1657, %v1648
  %v1721 = vpack.c.b16 %v1658, %v1649
  %v1722 = vpack.c.b16 %v1659, %v1650
  %v1723 = vpack.c.b16 %v1660, %v1651
  %v1724 = vpack.c.b16 %v1661, %v1652
  %v1725 = vpack.c.b16 %v1662, %v1653
  %v1726 = vpack.c.b16 %v1663, %v1663
  %v1727 = vpack.c.b16 %v1664, %v1664
  %v1728 = vpack.c.b16 %v1665, %v1665
  %v1729 = vpack.c.b16 %v1666, %v1666
  %v1730 = vpack.c.b16 %v1667, %v1667
  %v1731 = vpack.c.b16 %v1668, %v1668
  %v1732 = vpack.c.b16 %v1669, %v1669
  %v1733 = vpack.c.b16 %v1670, %v1670
  %v1734 = vpack.c.b16 %v1671, %v1671
  %1798 = vmatprep.subr.bf16.mxu0 0
  %1799 = vmatpush1.bf16.msra.mxu0 %v834
  %1800 = vmatprep.subr.bf16.mxu0 0
  %1801 = vmatpush1.bf16.msra.mxu0 %v833
  %1802 = vmatprep.subr.bf16.mxu0 0
  %1803 = vmatpush1.bf16.msra.mxu0 %v832
  %1804 = vmatprep.subr.bf16.mxu0 0
  %1805 = vmatpush1.bf16.msra.mxu0 %v831
  %1806 = vmatprep.subr.bf16.mxu0 0
  %1807 = vmatpush1.bf16.msra.mxu0 %v830
  %1808 = vmatprep.subr.bf16.mxu0 0
  %1809 = vmatpush1.bf16.msra.mxu0 %v829
  %1810 = vmatprep.subr.bf16.mxu0 0
  %1811 = vmatpush1.bf16.msra.mxu0 %v828
  %1812 = vmatprep.subr.bf16.mxu0 0
  %1813 = vmatpush1.bf16.msra.mxu0 %v827
  %1814 = vmatprep.subr.bf16.mxu0 0
  %1815 = vmatpush2.bf16.msra.mxu0 %v842
  %1816 = vmatprep.subr.bf16.mxu0 0
  %1817 = vmatpush2.bf16.msra.mxu0 %v841
  %1818 = vmatprep.subr.bf16.mxu0 0
  %1819 = vmatpush2.bf16.msra.mxu0 %v840
  %1820 = vmatprep.subr.bf16.mxu0 0
  %1821 = vmatpush2.bf16.msra.mxu0 %v839
  %1822 = vmatprep.subr.bf16.mxu0 0
  %1823 = vmatpush2.bf16.msra.mxu0 %v838
  %1824 = vmatprep.subr.bf16.mxu0 0
  %1825 = vmatpush2.bf16.msra.mxu0 %v837
  %1826 = vmatprep.subr.bf16.mxu0 0
  %1827 = vmatpush2.bf16.msra.mxu0 %v836
  %1828 = vmatprep.subr.bf16.mxu0 0
  %1829 = vmatpush2.bf16.msra.mxu0 %v835
  %1830 = vmatprep.mubr.bf16.mxu0 %v1673
  %1831 = vmatmul.mubr.bf16.gmra.mxu0 %v1672
  %v1832 = vpop.f32.mrf.mxu0
  %v1833 = vadd.f32 %v229, %v1832
  %v1834 = vpop.f32.mrf.mxu0
  %v1835 = vpop.f32.mrf.mxu0
  %v1836 = vadd.f32 %v229, %v1835
  %v1837 = vpop.f32.mrf.mxu0
  %1838 = vmatprep.mubr.bf16.mxu0 %v1682
  %1839 = vmatmul.mubr.bf16.gmra.mxu0 %v1681
  %v1840 = vpop.f32.mrf.mxu0
  %v1841 = vadd.f32 %v229, %v1840
  %v1842 = vpop.f32.mrf.mxu0
  %v1843 = vpop.f32.mrf.mxu0
  %v1844 = vadd.f32 %v229, %v1843
  %v1845 = vpop.f32.mrf.mxu0
  %1846 = vmatprep.mubr.bf16.mxu0 %v1691
  %1847 = vmatmul.mubr.bf16.gmra.mxu0 %v1690
  %v1848 = vpop.f32.mrf.mxu0
  %v1849 = vadd.f32 %v229, %v1848
  %v1850 = vpop.f32.mrf.mxu0
  %v1851 = vpop.f32.mrf.mxu0
  %v1852 = vadd.f32 %v229, %v1851
  %v1853 = vpop.f32.mrf.mxu0
  %1854 = vmatprep.mubr.bf16.mxu0 %v1700
  %1855 = vmatmul.mubr.bf16.gmra.mxu0 %v1699
  %v1856 = vpop.f32.mrf.mxu0
  %v1857 = vadd.f32 %v229, %v1856
  %v1858 = vpop.f32.mrf.mxu0
  %v1859 = vpop.f32.mrf.mxu0
  %v1860 = vadd.f32 %v229, %v1859
  %v1861 = vpop.f32.mrf.mxu0
  %1862 = vmatprep.mubr.bf16.mxu0 %v1709
  %1863 = vmatmul.mubr.bf16.gmra.mxu0 %v1708
  %v1864 = vpop.f32.mrf.mxu0
  %v1865 = vadd.f32 %v229, %v1864
  %v1866 = vpop.f32.mrf.mxu0
  %v1867 = vpop.f32.mrf.mxu0
  %v1868 = vadd.f32 %v229, %v1867
  %v1869 = vpop.f32.mrf.mxu0
  %1870 = vmatprep.mubr.bf16.mxu0 %v1718
  %1871 = vmatmul.mubr.bf16.gmra.mxu0 %v1717
  %v1872 = vpop.f32.mrf.mxu0
  %v1873 = vadd.f32 %v229, %v1872
  %v1874 = vpop.f32.mrf.mxu0
  %v1875 = vpop.f32.mrf.mxu0
  %v1876 = vadd.f32 %v229, %v1875
  %v1877 = vpop.f32.mrf.mxu0
  %1878 = vmatprep.mubr.bf16.mxu0 %v1727
  %1879 = vmatmul.mubr.bf16.gmra.mxu0 %v1726
  %v1880 = vpop.f32.mrf.mxu0
  %v1881 = vadd.f32 %v229, %v1880
  %v1882 = vpop.f32.mrf.mxu0
  %v1883 = vpop.f32.mrf.mxu0
  %v1884 = vpop.f32.mrf.mxu0
  %1885 = vdwg.mxu0
  %1886 = vmatprep.subr.bf16.mxu0 0
  %1887 = vmatpush1.bf16.msra.mxu0 %v850
  %1888 = vmatprep.subr.bf16.mxu0 0
  %1889 = vmatpush1.bf16.msra.mxu0 %v849
  %1890 = vmatprep.subr.bf16.mxu0 0
  %1891 = vmatpush1.bf16.msra.mxu0 %v848
  %1892 = vmatprep.subr.bf16.mxu0 0
  %1893 = vmatpush1.bf16.msra.mxu0 %v847
  %1894 = vmatprep.subr.bf16.mxu0 0
  %1895 = vmatpush1.bf16.msra.mxu0 %v846
  %1896 = vmatprep.subr.bf16.mxu0 0
  %1897 = vmatpush1.bf16.msra.mxu0 %v845
  %1898 = vmatprep.subr.bf16.mxu0 0
  %1899 = vmatpush1.bf16.msra.mxu0 %v844
  %1900 = vmatprep.subr.bf16.mxu0 0
  %1901 = vmatpush1.bf16.msra.mxu0 %v843
  %1902 = vmatprep.subr.bf16.mxu0 0
  %1903 = vmatpush2.bf16.msra.mxu0 %v858
  %1904 = vmatprep.subr.bf16.mxu0 0
  %1905 = vmatpush2.bf16.msra.mxu0 %v857
  %1906 = vmatprep.subr.bf16.mxu0 0
  %1907 = vmatpush2.bf16.msra.mxu0 %v856
  %1908 = vmatprep.subr.bf16.mxu0 0
  %1909 = vmatpush2.bf16.msra.mxu0 %v855
  %1910 = vmatprep.subr.bf16.mxu0 0
  %1911 = vmatpush2.bf16.msra.mxu0 %v854
  %1912 = vmatprep.subr.bf16.mxu0 0
  %1913 = vmatpush2.bf16.msra.mxu0 %v853
  %1914 = vmatprep.subr.bf16.mxu0 0
  %1915 = vmatpush2.bf16.msra.mxu0 %v852
  %1916 = vmatprep.subr.bf16.mxu0 0
  %1917 = vmatpush2.bf16.msra.mxu0 %v851
  %1918 = vmatprep.mubr.bf16.mxu0 %v1675
  %1919 = vmatmul.mubr.bf16.gmra.mxu0 %v1674
  %v1920 = vpop.f32.mrf.mxu0
  %v1921 = vadd.f32 %v1833, %v1920
  %v1922 = vpop.f32.mrf.mxu0
  %v1923 = vpop.f32.mrf.mxu0
  %v1924 = vadd.f32 %v1836, %v1923
  %v1925 = vpop.f32.mrf.mxu0
  %1926 = vmatprep.mubr.bf16.mxu0 %v1684
  %1927 = vmatmul.mubr.bf16.gmra.mxu0 %v1683
  %v1928 = vpop.f32.mrf.mxu0
  %v1929 = vadd.f32 %v1841, %v1928
  %v1930 = vpop.f32.mrf.mxu0
  %v1931 = vpop.f32.mrf.mxu0
  %v1932 = vadd.f32 %v1844, %v1931
  %v1933 = vpop.f32.mrf.mxu0
  %1934 = vmatprep.mubr.bf16.mxu0 %v1693
  %1935 = vmatmul.mubr.bf16.gmra.mxu0 %v1692
  %v1936 = vpop.f32.mrf.mxu0
  %v1937 = vadd.f32 %v1849, %v1936
  %v1938 = vpop.f32.mrf.mxu0
  %v1939 = vpop.f32.mrf.mxu0
  %v1940 = vadd.f32 %v1852, %v1939
  %v1941 = vpop.f32.mrf.mxu0
  %1942 = vmatprep.mubr.bf16.mxu0 %v1702
  %1943 = vmatmul.mubr.bf16.gmra.mxu0 %v1701
  %v1944 = vpop.f32.mrf.mxu0
  %v1945 = vadd.f32 %v1857, %v1944
  %v1946 = vpop.f32.mrf.mxu0
  %v1947 = vpop.f32.mrf.mxu0
  %v1948 = vadd.f32 %v1860, %v1947
  %v1949 = vpop.f32.mrf.mxu0
  %1950 = vmatprep.mubr.bf16.mxu0 %v1711
  %1951 = vmatmul.mubr.bf16.gmra.mxu0 %v1710
  %v1952 = vpop.f32.mrf.mxu0
  %v1953 = vadd.f32 %v1865, %v1952
  %v1954 = vpop.f32.mrf.mxu0
  %v1955 = vpop.f32.mrf.mxu0
  %v1956 = vadd.f32 %v1868, %v1955
  %v1957 = vpop.f32.mrf.mxu0
  %1958 = vmatprep.mubr.bf16.mxu0 %v1720
  %1959 = vmatmul.mubr.bf16.gmra.mxu0 %v1719
  %v1960 = vpop.f32.mrf.mxu0
  %v1961 = vadd.f32 %v1873, %v1960
  %v1962 = vpop.f32.mrf.mxu0
  %v1963 = vpop.f32.mrf.mxu0
  %v1964 = vadd.f32 %v1876, %v1963
  %v1965 = vpop.f32.mrf.mxu0
  %1966 = vmatprep.mubr.bf16.mxu0 %v1729
  %1967 = vmatmul.mubr.bf16.gmra.mxu0 %v1728
  %v1968 = vpop.f32.mrf.mxu0
  %v1969 = vadd.f32 %v1881, %v1968
  %v1970 = vpop.f32.mrf.mxu0
  %v1971 = vpop.f32.mrf.mxu0
  %v1972 = vpop.f32.mrf.mxu0
  %1973 = vdwg.mxu0
  %1974 = vmatprep.subr.bf16.mxu0 0
  %1975 = vmatpush1.bf16.msra.mxu0 %v866
  %1976 = vmatprep.subr.bf16.mxu0 0
  %1977 = vmatpush1.bf16.msra.mxu0 %v865
  %1978 = vmatprep.subr.bf16.mxu0 0
  %1979 = vmatpush1.bf16.msra.mxu0 %v864
  %1980 = vmatprep.subr.bf16.mxu0 0
  %1981 = vmatpush1.bf16.msra.mxu0 %v863
  %1982 = vmatprep.subr.bf16.mxu0 0
  %1983 = vmatpush1.bf16.msra.mxu0 %v862
  %1984 = vmatprep.subr.bf16.mxu0 0
  %1985 = vmatpush1.bf16.msra.mxu0 %v861
  %1986 = vmatprep.subr.bf16.mxu0 0
  %1987 = vmatpush1.bf16.msra.mxu0 %v860
  %1988 = vmatprep.subr.bf16.mxu0 0
  %1989 = vmatpush1.bf16.msra.mxu0 %v859
  %1990 = vmatprep.subr.bf16.mxu0 0
  %1991 = vmatpush2.bf16.msra.mxu0 %v874
  %1992 = vmatprep.subr.bf16.mxu0 0
  %1993 = vmatpush2.bf16.msra.mxu0 %v873
  %1994 = vmatprep.subr.bf16.mxu0 0
  %1995 = vmatpush2.bf16.msra.mxu0 %v872
  %1996 = vmatprep.subr.bf16.mxu0 0
  %1997 = vmatpush2.bf16.msra.mxu0 %v871
  %1998 = vmatprep.subr.bf16.mxu0 0
  %1999 = vmatpush2.bf16.msra.mxu0 %v870
  %2000 = vmatprep.subr.bf16.mxu0 0
  %2001 = vmatpush2.bf16.msra.mxu0 %v869
  %2002 = vmatprep.subr.bf16.mxu0 0
  %2003 = vmatpush2.bf16.msra.mxu0 %v868
  %2004 = vmatprep.subr.bf16.mxu0 0
  %2005 = vmatpush2.bf16.msra.mxu0 %v867
  %2006 = vmatprep.mubr.bf16.mxu0 %v1677
  %2007 = vmatmul.mubr.bf16.gmra.mxu0 %v1676
  %v2008 = vpop.f32.mrf.mxu0
  %v2009 = vadd.f32 %v1921, %v2008
  %v2010 = vpop.f32.mrf.mxu0
  %v2011 = vpop.f32.mrf.mxu0
  %v2012 = vadd.f32 %v1924, %v2011
  %v2013 = vpop.f32.mrf.mxu0
  %2014 = vmatprep.mubr.bf16.mxu0 %v1686
  %2015 = vmatmul.mubr.bf16.gmra.mxu0 %v1685
  %v2016 = vpop.f32.mrf.mxu0
  %v2017 = vadd.f32 %v1929, %v2016
  %v2018 = vpop.f32.mrf.mxu0
  %v2019 = vpop.f32.mrf.mxu0
  %v2020 = vadd.f32 %v1932, %v2019
  %v2021 = vpop.f32.mrf.mxu0
  %2022 = vmatprep.mubr.bf16.mxu0 %v1695
  %2023 = vmatmul.mubr.bf16.gmra.mxu0 %v1694
  %v2024 = vpop.f32.mrf.mxu0
  %v2025 = vadd.f32 %v1937, %v2024
  %v2026 = vpop.f32.mrf.mxu0
  %v2027 = vpop.f32.mrf.mxu0
  %v2028 = vadd.f32 %v1940, %v2027
  %v2029 = vpop.f32.mrf.mxu0
  %2030 = vmatprep.mubr.bf16.mxu0 %v1704
  %2031 = vmatmul.mubr.bf16.gmra.mxu0 %v1703
  %v2032 = vpop.f32.mrf.mxu0
  %v2033 = vadd.f32 %v1945, %v2032
  %v2034 = vpop.f32.mrf.mxu0
  %v2035 = vpop.f32.mrf.mxu0
  %v2036 = vadd.f32 %v1948, %v2035
  %v2037 = vpop.f32.mrf.mxu0
  %2038 = vmatprep.mubr.bf16.mxu0 %v1713
  %2039 = vmatmul.mubr.bf16.gmra.mxu0 %v1712
  %v2040 = vpop.f32.mrf.mxu0
  %v2041 = vadd.f32 %v1953, %v2040
  %v2042 = vpop.f32.mrf.mxu0
  %v2043 = vpop.f32.mrf.mxu0
  %v2044 = vadd.f32 %v1956, %v2043
  %v2045 = vpop.f32.mrf.mxu0
  %2046 = vmatprep.mubr.bf16.mxu0 %v1722
  %2047 = vmatmul.mubr.bf16.gmra.mxu0 %v1721
  %v2048 = vpop.f32.mrf.mxu0
  %v2049 = vadd.f32 %v1961, %v2048
  %v2050 = vpop.f32.mrf.mxu0
  %v2051 = vpop.f32.mrf.mxu0
  %v2052 = vadd.f32 %v1964, %v2051
  %v2053 = vpop.f32.mrf.mxu0
  %2054 = vmatprep.mubr.bf16.mxu0 %v1731
  %2055 = vmatmul.mubr.bf16.gmra.mxu0 %v1730
  %v2056 = vpop.f32.mrf.mxu0
  %v2057 = vadd.f32 %v1969, %v2056
  %v2058 = vpop.f32.mrf.mxu0
  %v2059 = vpop.f32.mrf.mxu0
  %v2060 = vpop.f32.mrf.mxu0
  %2061 = vdwg.mxu0
  %2062 = vmatprep.subr.bf16.mxu0 0
  %2063 = vmatpush1.bf16.msra.mxu0 %v882
  %2064 = vmatprep.subr.bf16.mxu0 0
  %2065 = vmatpush1.bf16.msra.mxu0 %v881
  %2066 = vmatprep.subr.bf16.mxu0 0
  %2067 = vmatpush1.bf16.msra.mxu0 %v880
  %2068 = vmatprep.subr.bf16.mxu0 0
  %2069 = vmatpush1.bf16.msra.mxu0 %v879
  %2070 = vmatprep.subr.bf16.mxu0 0
  %2071 = vmatpush1.bf16.msra.mxu0 %v878
  %2072 = vmatprep.subr.bf16.mxu0 0
  %2073 = vmatpush1.bf16.msra.mxu0 %v877
  %2074 = vmatprep.subr.bf16.mxu0 0
  %2075 = vmatpush1.bf16.msra.mxu0 %v876
  %2076 = vmatprep.subr.bf16.mxu0 0
  %2077 = vmatpush1.bf16.msra.mxu0 %v875
  %2078 = vmatprep.subr.bf16.mxu0 0
  %2079 = vmatpush2.bf16.msra.mxu0 %v890
  %2080 = vmatprep.subr.bf16.mxu0 0
  %2081 = vmatpush2.bf16.msra.mxu0 %v889
  %2082 = vmatprep.subr.bf16.mxu0 0
  %2083 = vmatpush2.bf16.msra.mxu0 %v888
  %2084 = vmatprep.subr.bf16.mxu0 0
  %2085 = vmatpush2.bf16.msra.mxu0 %v887
  %2086 = vmatprep.subr.bf16.mxu0 0
  %2087 = vmatpush2.bf16.msra.mxu0 %v886
  %2088 = vmatprep.subr.bf16.mxu0 0
  %2089 = vmatpush2.bf16.msra.mxu0 %v885
  %2090 = vmatprep.subr.bf16.mxu0 0
  %2091 = vmatpush2.bf16.msra.mxu0 %v884
  %2092 = vmatprep.subr.bf16.mxu0 0
  %2093 = vmatpush2.bf16.msra.mxu0 %v883
  %2094 = vmatprep.mubr.bf16.mxu0 %v1679
  %2095 = vmatmul.mubr.bf16.gmra.mxu0 %v1678
  %v2096 = vpop.f32.mrf.mxu0
  %v2097 = vadd.f32 %v2009, %v2096
  %v2098 = vpop.f32.mrf.mxu0
  %v2099 = vpop.f32.mrf.mxu0
  %v2100 = vadd.f32 %v2012, %v2099
  %v2101 = vpop.f32.mrf.mxu0
  %2102 = vmatprep.mubr.bf16.mxu0 %v1688
  %2103 = vmatmul.mubr.bf16.gmra.mxu0 %v1687
  %v2104 = vpop.f32.mrf.mxu0
  %v2105 = vadd.f32 %v2017, %v2104
  %v2106 = vpop.f32.mrf.mxu0
  %v2107 = vpop.f32.mrf.mxu0
  %v2108 = vadd.f32 %v2020, %v2107
  %v2109 = vpop.f32.mrf.mxu0
  %2110 = vmatprep.mubr.bf16.mxu0 %v1697
  %2111 = vmatmul.mubr.bf16.gmra.mxu0 %v1696
  %v2112 = vpop.f32.mrf.mxu0
  %v2113 = vadd.f32 %v2025, %v2112
  %v2114 = vpop.f32.mrf.mxu0
  %v2115 = vpop.f32.mrf.mxu0
  %v2116 = vadd.f32 %v2028, %v2115
  %v2117 = vpop.f32.mrf.mxu0
  %2118 = vmatprep.mubr.bf16.mxu0 %v1706
  %2119 = vmatmul.mubr.bf16.gmra.mxu0 %v1705
  %v2120 = vpop.f32.mrf.mxu0
  %v2121 = vadd.f32 %v2033, %v2120
  %v2122 = vpop.f32.mrf.mxu0
  %v2123 = vpop.f32.mrf.mxu0
  %v2124 = vadd.f32 %v2036, %v2123
  %v2125 = vpop.f32.mrf.mxu0
  %2126 = vmatprep.mubr.bf16.mxu0 %v1715
  %2127 = vmatmul.mubr.bf16.gmra.mxu0 %v1714
  %v2128 = vpop.f32.mrf.mxu0
  %v2129 = vadd.f32 %v2041, %v2128
  %v2130 = vpop.f32.mrf.mxu0
  %v2131 = vpop.f32.mrf.mxu0
  %v2132 = vadd.f32 %v2044, %v2131
  %v2133 = vpop.f32.mrf.mxu0
  %2134 = vmatprep.mubr.bf16.mxu0 %v1724
  %2135 = vmatmul.mubr.bf16.gmra.mxu0 %v1723
  %v2136 = vpop.f32.mrf.mxu0
  %v2137 = vadd.f32 %v2049, %v2136
  %v2138 = vpop.f32.mrf.mxu0
  %v2139 = vpop.f32.mrf.mxu0
  %v2140 = vadd.f32 %v2052, %v2139
  %v2141 = vpop.f32.mrf.mxu0
  %2142 = vmatprep.mubr.bf16.mxu0 %v1733
  %2143 = vmatmul.mubr.bf16.gmra.mxu0 %v1732
  %v2144 = vpop.f32.mrf.mxu0
  %v2145 = vadd.f32 %v2057, %v2144
  %v2146 = vpop.f32.mrf.mxu0
  %v2147 = vpop.f32.mrf.mxu0
  %v2148 = vpop.f32.mrf.mxu0
  %2149 = vdwg.mxu0
  %2150 = vmatprep.subr.bf16.mxu0 0
  %2151 = vmatpush1.bf16.msra.mxu0 %v898
  %2152 = vmatprep.subr.bf16.mxu0 0
  %2153 = vmatpush1.bf16.msra.mxu0 %v897
  %2154 = vmatprep.subr.bf16.mxu0 0
  %2155 = vmatpush1.bf16.msra.mxu0 %v896
  %2156 = vmatprep.subr.bf16.mxu0 0
  %2157 = vmatpush1.bf16.msra.mxu0 %v895
  %2158 = vmatprep.subr.bf16.mxu0 0
  %2159 = vmatpush1.bf16.msra.mxu0 %v894
  %2160 = vmatprep.subr.bf16.mxu0 0
  %2161 = vmatpush1.bf16.msra.mxu0 %v893
  %2162 = vmatprep.subr.bf16.mxu0 0
  %2163 = vmatpush1.bf16.msra.mxu0 %v892
  %2164 = vmatprep.subr.bf16.mxu0 0
  %2165 = vmatpush1.bf16.msra.mxu0 %v891
  %2166 = vmatprep.subr.bf16.mxu0 0
  %2167 = vmatpush2.bf16.msra.mxu0 0
  %2168 = vmatprep.subr.bf16.mxu0 0
  %2169 = vmatpush2.bf16.msra.mxu0 0
  %2170 = vmatprep.subr.bf16.mxu0 0
  %2171 = vmatpush2.bf16.msra.mxu0 0
  %2172 = vmatprep.subr.bf16.mxu0 0
  %2173 = vmatpush2.bf16.msra.mxu0 0
  %2174 = vmatprep.subr.bf16.mxu0 0
  %2175 = vmatpush2.bf16.msra.mxu0 0
  %2176 = vmatprep.subr.bf16.mxu0 0
  %2177 = vmatpush2.bf16.msra.mxu0 0
  %2178 = vmatprep.subr.bf16.mxu0 0
  %2179 = vmatpush2.bf16.msra.mxu0 0
  %2180 = vmatprep.subr.bf16.mxu0 0
  %2181 = vmatpush2.bf16.msra.mxu0 0
  %2182 = vmatprep.mubr.bf16.mxu0 0
  %2183 = vmatmul.mubr.bf16.gmra.mxu0 %v1680
  %v2184 = vpop.f32.mrf.mxu0
  %v2185 = vadd.f32 %v2097, %v2184
  %v2186 = vpop.f32.mrf.mxu0
  %v2187 = vpop.f32.mrf.mxu0
  %v2188 = vadd.f32 %v2100, %v2187
  %v2189 = vpop.f32.mrf.mxu0
  %2190 = vmatprep.mubr.bf16.mxu0 0
  %2191 = vmatmul.mubr.bf16.gmra.mxu0 %v1689
  %v2192 = vpop.f32.mrf.mxu0
  %v2193 = vadd.f32 %v2105, %v2192
  %v2194 = vpop.f32.mrf.mxu0
  %v2195 = vpop.f32.mrf.mxu0
  %v2196 = vadd.f32 %v2108, %v2195
  %v2197 = vpop.f32.mrf.mxu0
  %2198 = vmatprep.mubr.bf16.mxu0 0
  %2199 = vmatmul.mubr.bf16.gmra.mxu0 %v1698
  %v2200 = vpop.f32.mrf.mxu0
  %v2201 = vadd.f32 %v2113, %v2200
  %v2202 = vpop.f32.mrf.mxu0
  %v2203 = vpop.f32.mrf.mxu0
  %v2204 = vadd.f32 %v2116, %v2203
  %v2205 = vpop.f32.mrf.mxu0
  %2206 = vmatprep.mubr.bf16.mxu0 0
  %2207 = vmatmul.mubr.bf16.gmra.mxu0 %v1707
  %v2208 = vpop.f32.mrf.mxu0
  %v2209 = vadd.f32 %v2121, %v2208
  %v2210 = vpop.f32.mrf.mxu0
  %v2211 = vpop.f32.mrf.mxu0
  %v2212 = vadd.f32 %v2124, %v2211
  %v2213 = vpop.f32.mrf.mxu0
  %2214 = vmatprep.mubr.bf16.mxu0 0
  %2215 = vmatmul.mubr.bf16.gmra.mxu0 %v1716
  %v2216 = vpop.f32.mrf.mxu0
  %v2217 = vadd.f32 %v2129, %v2216
  %v2218 = vpop.f32.mrf.mxu0
  %v2219 = vpop.f32.mrf.mxu0
  %v2220 = vadd.f32 %v2132, %v2219
  %v2221 = vpop.f32.mrf.mxu0
  %2222 = vmatprep.mubr.bf16.mxu0 0
  %2223 = vmatmul.mubr.bf16.gmra.mxu0 %v1725
  %v2224 = vpop.f32.mrf.mxu0
  %v2225 = vadd.f32 %v2137, %v2224
  %v2226 = vpop.f32.mrf.mxu0
  %v2227 = vpop.f32.mrf.mxu0
  %v2228 = vadd.f32 %v2140, %v2227
  %v2229 = vpop.f32.mrf.mxu0
  %2230 = vmatprep.mubr.bf16.mxu0 0
  %2231 = vmatmul.mubr.bf16.gmra.mxu0 %v1734
  %v2232 = vpop.f32.mrf.mxu0
  %v2233 = vadd.f32 %v2145, %v2232
  %v2234 = vpop.f32.mrf.mxu0
  %v2235 = vpop.f32.mrf.mxu0
  %v2236 = vpop.f32.mrf.mxu0
  %2237 = vdwg.mxu0
  %v2238 = vmax.f32 %v2185, 0.0
  %v2239 = vmax.f32 %v2188, 0.0
  %v2240 = vmax.f32 %v2193, 0.0
  %v2241 = vmax.f32 %v2196, 0.0
  %v2242 = vmax.f32 %v2201, 0.0
  %v2243 = vmax.f32 %v2204, 0.0
  %v2244 = vmax.f32 %v2209, 0.0
  %v2245 = vmax.f32 %v2212, 0.0
  %v2246 = vmax.f32 %v2217, 0.0
  %v2247 = vmax.f32 %v2220, 0.0
  %v2248 = vmax.f32 %v2225, 0.0
  %v2249 = vmax.f32 %v2228, 0.0
  %v2250 = vmax.f32 %v2233, 0.0
  %v2251 = vmax.f32 %v1411, %v2238
  %v2252 = vmax.f32 %v1412, %v2239
  %v2253 = vmax.f32 %v1413, %v2240
  %v2254 = vmax.f32 %v1414, %v2241
  %v2255 = vmax.f32 %v1415, %v2242
  %v2256 = vmax.f32 %v1416, %v2243
  %v2257 = vmax.f32 %v1417, %v2244
  %v2258 = vmax.f32 %v1418, %v2245
  %v2259 = vmax.f32 %v1419, %v2246
  %v2260 = vmax.f32 %v1420, %v2247
  %v2261 = vmax.f32 %v1421, %v2248
  %v2262 = vmax.f32 %v1422, %v2249
  %v2263 = vmax.f32 %v1423, %v2250
  %s2264 = scalar_lea.vmem %s0, 936
  %v2265 = vld [vmem:[%s2264] sm:$0xff]
  %v2266 = vld [vmem:[%s2264 + $0x8] sm:$0xff]
  %v2267 = vld [vmem:[%s2264 + $0x10] sm:$0xff]
  %v2268 = vld [vmem:[%s2264 + $0x18] sm:$0xff]
  %v2269 = vld [vmem:[%s2264 + $0x20] sm:$0xf]
  %v2270 = vld [vmem:[%s2264 + $0x24] sm:$0xff]
  %v2271 = vld [vmem:[%s2264 + $0x2c] sm:$0xff]
  %v2272 = vld [vmem:[%s2264 + $0x34] sm:$0xff]
  %v2273 = vld [vmem:[%s2264 + $0x3c] sm:$0xff]
  %v2274 = vld [vmem:[%s2264 + $0x44] sm:$0xf]
  %v2275 = vld [vmem:[%s2264 + $0x48] sm:$0xff]
  %v2276 = vld [vmem:[%s2264 + $0x50] sm:$0xff]
  %v2277 = vld [vmem:[%s2264 + $0x58] sm:$0xff]
  %v2278 = vld [vmem:[%s2264 + $0x60] sm:$0xff]
  %v2279 = vld [vmem:[%s2264 + $0x68] sm:$0xf]
  %v2280 = vld [vmem:[%s2264 + $0x6c] sm:$0xff]
  %v2281 = vld [vmem:[%s2264 + $0x74] sm:$0xff]
  %v2282 = vld [vmem:[%s2264 + $0x7c] sm:$0xff]
  %v2283 = vld [vmem:[%s2264 + $0x84] sm:$0xff]
  %v2284 = vld [vmem:[%s2264 + $0x8c] sm:$0xf]
  %v2285 = vld [vmem:[%s2264 + $0x90] sm:$0xff]
  %v2286 = vld [vmem:[%s2264 + $0x98] sm:$0xff]
  %v2287 = vld [vmem:[%s2264 + $0xa0] sm:$0xff]
  %v2288 = vld [vmem:[%s2264 + $0xa8] sm:$0xff]
  %v2289 = vld [vmem:[%s2264 + $0xb0] sm:$0xf]
  %v2290 = vld [vmem:[%s2264 + $0xb4] sm:$0xff]
  %v2291 = vld [vmem:[%s2264 + $0xbc] sm:$0xff]
  %v2292 = vld [vmem:[%s2264 + $0xc4] sm:$0xff]
  %v2293 = vld [vmem:[%s2264 + $0xcc] sm:$0xff]
  %v2294 = vld [vmem:[%s2264 + $0xd4] sm:$0xf]
  %v2295 = vld [vmem:[%s2264 + $0xd8] sm:$0xff]
  %v2296 = vld [vmem:[%s2264 + $0xe0] sm:$0xff]
  %v2297 = vld [vmem:[%s2264 + $0xe8] sm:$0xff]
  %v2298 = vld [vmem:[%s2264 + $0xf0] sm:$0xff]
  %v2299 = vld [vmem:[%s2264 + $0xf8] sm:$0xf]
  %v2300 = vld [vmem:[%s2264 + $0xfc] sm:$0xff]
  %v2301 = vld [vmem:[%s2264 + $0x104] sm:$0xff]
  %v2302 = vld [vmem:[%s2264 + $0x10c] sm:$0xff]
  %v2303 = vld [vmem:[%s2264 + $0x114] sm:$0xff]
  %v2304 = vld [vmem:[%s2264 + $0x11c] sm:$0xf]
  %v2305 = vld [vmem:[%s2264 + $0x120] sm:$0xff]
  %v2306 = vld [vmem:[%s2264 + $0x128] sm:$0xff]
  %v2307 = vld [vmem:[%s2264 + $0x130] sm:$0xff]
  %v2308 = vld [vmem:[%s2264 + $0x138] sm:$0xff]
  %v2309 = vld [vmem:[%s2264 + $0x140] sm:$0xf]
  %v2310 = vld [vmem:[%s2264 + $0x144] sm:$0xff]
  %v2311 = vld [vmem:[%s2264 + $0x14c] sm:$0xff]
  %v2312 = vld [vmem:[%s2264 + $0x154] sm:$0xff]
  %v2313 = vld [vmem:[%s2264 + $0x15c] sm:$0xff]
  %v2314 = vld [vmem:[%s2264 + $0x164] sm:$0xf]
  %v2315 = vld [vmem:[%s2264 + $0x168] sm:$0xff]
  %v2316 = vld [vmem:[%s2264 + $0x170] sm:$0xff]
  %v2317 = vld [vmem:[%s2264 + $0x178] sm:$0xff]
  %v2318 = vld [vmem:[%s2264 + $0x180] sm:$0xff]
  %v2319 = vld [vmem:[%s2264 + $0x188] sm:$0xf]
  %v2320 = vld [vmem:[%s2264 + $0x18c] sm:$0xff]
  %v2321 = vld [vmem:[%s2264 + $0x194] sm:$0xff]
  %v2322 = vld [vmem:[%s2264 + $0x19c] sm:$0xff]
  %v2323 = vld [vmem:[%s2264 + $0x1a4] sm:$0xff]
  %v2324 = vld [vmem:[%s2264 + $0x1ac] sm:$0xf]
  %v2325 = vld [vmem:[%s2264 + $0x1b0] sm:$0x11]
  %v2326 = vld [vmem:[%s2264 + $0x1b8] sm:$0x11]
  %v2327 = vld [vmem:[%s2264 + $0x1c0] sm:$0x11]
  %v2328 = vld [vmem:[%s2264 + $0x1c8] sm:$0x11]
  %v2329 = vld [vmem:[%s2264 + $0x1d0] sm:$0x1]
  %v2395 = vunpack.c.l.b16 %v2265
  %v2396 = vunpack.c.h.b16 %v2265
  %v2397 = vunpack.c.l.b16 %v2266
  %v2398 = vunpack.c.h.b16 %v2266
  %v2399 = vunpack.c.l.b16 %v2267
  %v2400 = vunpack.c.h.b16 %v2267
  %v2401 = vunpack.c.l.b16 %v2268
  %v2402 = vunpack.c.h.b16 %v2268
  %v2403 = vunpack.c.l.b16 %v2269
  %v2404 = vunpack.c.l.b16 %v2270
  %v2405 = vunpack.c.h.b16 %v2270
  %v2406 = vunpack.c.l.b16 %v2271
  %v2407 = vunpack.c.h.b16 %v2271
  %v2408 = vunpack.c.l.b16 %v2272
  %v2409 = vunpack.c.h.b16 %v2272
  %v2410 = vunpack.c.l.b16 %v2273
  %v2411 = vunpack.c.h.b16 %v2273
  %v2412 = vunpack.c.l.b16 %v2274
  %v2413 = vunpack.c.l.b16 %v2275
  %v2414 = vunpack.c.h.b16 %v2275
  %v2415 = vunpack.c.l.b16 %v2276
  %v2416 = vunpack.c.h.b16 %v2276
  %v2417 = vunpack.c.l.b16 %v2277
  %v2418 = vunpack.c.h.b16 %v2277
  %v2419 = vunpack.c.l.b16 %v2278
  %v2420 = vunpack.c.h.b16 %v2278
  %v2421 = vunpack.c.l.b16 %v2279
  %v2422 = vunpack.c.l.b16 %v2280
  %v2423 = vunpack.c.h.b16 %v2280
  %v2424 = vunpack.c.l.b16 %v2281
  %v2425 = vunpack.c.h.b16 %v2281
  %v2426 = vunpack.c.l.b16 %v2282
  %v2427 = vunpack.c.h.b16 %v2282
  %v2428 = vunpack.c.l.b16 %v2283
  %v2429 = vunpack.c.h.b16 %v2283
  %v2430 = vunpack.c.l.b16 %v2284
  %v2431 = vunpack.c.l.b16 %v2285
  %v2432 = vunpack.c.h.b16 %v2285
  %v2433 = vunpack.c.l.b16 %v2286
  %v2434 = vunpack.c.h.b16 %v2286
  %v2435 = vunpack.c.l.b16 %v2287
  %v2436 = vunpack.c.h.b16 %v2287
  %v2437 = vunpack.c.l.b16 %v2288
  %v2438 = vunpack.c.h.b16 %v2288
  %v2439 = vunpack.c.l.b16 %v2289
  %v2440 = vunpack.c.l.b16 %v2290
  %v2441 = vunpack.c.h.b16 %v2290
  %v2442 = vunpack.c.l.b16 %v2291
  %v2443 = vunpack.c.h.b16 %v2291
  %v2444 = vunpack.c.l.b16 %v2292
  %v2445 = vunpack.c.h.b16 %v2292
  %v2446 = vunpack.c.l.b16 %v2293
  %v2447 = vunpack.c.h.b16 %v2293
  %v2448 = vunpack.c.l.b16 %v2294
  %v2449 = vunpack.c.l.b16 %v2295
  %v2450 = vunpack.c.h.b16 %v2295
  %v2451 = vunpack.c.l.b16 %v2296
  %v2452 = vunpack.c.h.b16 %v2296
  %v2453 = vunpack.c.l.b16 %v2297
  %v2454 = vunpack.c.h.b16 %v2297
  %v2455 = vunpack.c.l.b16 %v2298
  %v2456 = vunpack.c.h.b16 %v2298
  %v2457 = vunpack.c.l.b16 %v2299
  %v2458 = vunpack.c.l.b16 %v2300
  %v2459 = vunpack.c.h.b16 %v2300
  %v2460 = vunpack.c.l.b16 %v2301
  %v2461 = vunpack.c.h.b16 %v2301
  %v2462 = vunpack.c.l.b16 %v2302
  %v2463 = vunpack.c.h.b16 %v2302
  %v2464 = vunpack.c.l.b16 %v2303
  %v2465 = vunpack.c.h.b16 %v2303
  %v2466 = vunpack.c.l.b16 %v2304
  %v2467 = vunpack.c.l.b16 %v2305
  %v2468 = vunpack.c.h.b16 %v2305
  %v2469 = vunpack.c.l.b16 %v2306
  %v2470 = vunpack.c.h.b16 %v2306
  %v2471 = vunpack.c.l.b16 %v2307
  %v2472 = vunpack.c.h.b16 %v2307
  %v2473 = vunpack.c.l.b16 %v2308
  %v2474 = vunpack.c.h.b16 %v2308
  %v2475 = vunpack.c.l.b16 %v2309
  %v2476 = vunpack.c.l.b16 %v2310
  %v2477 = vunpack.c.h.b16 %v2310
  %v2478 = vunpack.c.l.b16 %v2311
  %v2479 = vunpack.c.h.b16 %v2311
  %v2480 = vunpack.c.l.b16 %v2312
  %v2481 = vunpack.c.h.b16 %v2312
  %v2482 = vunpack.c.l.b16 %v2313
  %v2483 = vunpack.c.h.b16 %v2313
  %v2484 = vunpack.c.l.b16 %v2314
  %v2485 = vunpack.c.l.b16 %v2315
  %v2486 = vunpack.c.h.b16 %v2315
  %v2487 = vunpack.c.l.b16 %v2316
  %v2488 = vunpack.c.h.b16 %v2316
  %v2489 = vunpack.c.l.b16 %v2317
  %v2490 = vunpack.c.h.b16 %v2317
  %v2491 = vunpack.c.l.b16 %v2318
  %v2492 = vunpack.c.h.b16 %v2318
  %v2493 = vunpack.c.l.b16 %v2319
  %v2494 = vunpack.c.l.b16 %v2320
  %v2495 = vunpack.c.h.b16 %v2320
  %v2496 = vunpack.c.l.b16 %v2321
  %v2497 = vunpack.c.h.b16 %v2321
  %v2498 = vunpack.c.l.b16 %v2322
  %v2499 = vunpack.c.h.b16 %v2322
  %v2500 = vunpack.c.l.b16 %v2323
  %v2501 = vunpack.c.h.b16 %v2323
  %v2502 = vunpack.c.l.b16 %v2324
  %v2503 = vunpack.c.l.b16 %v2325
  %v2504 = vunpack.c.h.b16 %v2325
  %v2505 = vunpack.c.l.b16 %v2326
  %v2506 = vunpack.c.h.b16 %v2326
  %v2507 = vunpack.c.l.b16 %v2327
  %v2508 = vunpack.c.h.b16 %v2327
  %v2509 = vunpack.c.l.b16 %v2328
  %v2510 = vunpack.c.h.b16 %v2328
  %v2511 = vunpack.c.l.b16 %v2329
  %v2512 = vpack.c.b16 %v2404, %v2395
  %v2513 = vpack.c.b16 %v2405, %v2396
  %v2514 = vpack.c.b16 %v2406, %v2397
  %v2515 = vpack.c.b16 %v2407, %v2398
  %v2516 = vpack.c.b16 %v2408, %v2399
  %v2517 = vpack.c.b16 %v2409, %v2400
  %v2518 = vpack.c.b16 %v2410, %v2401
  %v2519 = vpack.c.b16 %v2411, %v2402
  %v2520 = vpack.c.b16 %v2412, %v2403
  %v2521 = vpack.c.b16 %v2422, %v2413
  %v2522 = vpack.c.b16 %v2423, %v2414
  %v2523 = vpack.c.b16 %v2424, %v2415
  %v2524 = vpack.c.b16 %v2425, %v2416
  %v2525 = vpack.c.b16 %v2426, %v2417
  %v2526 = vpack.c.b16 %v2427, %v2418
  %v2527 = vpack.c.b16 %v2428, %v2419
  %v2528 = vpack.c.b16 %v2429, %v2420
  %v2529 = vpack.c.b16 %v2430, %v2421
  %v2530 = vpack.c.b16 %v2440, %v2431
  %v2531 = vpack.c.b16 %v2441, %v2432
  %v2532 = vpack.c.b16 %v2442, %v2433
  %v2533 = vpack.c.b16 %v2443, %v2434
  %v2534 = vpack.c.b16 %v2444, %v2435
  %v2535 = vpack.c.b16 %v2445, %v2436
  %v2536 = vpack.c.b16 %v2446, %v2437
  %v2537 = vpack.c.b16 %v2447, %v2438
  %v2538 = vpack.c.b16 %v2448, %v2439
  %v2539 = vpack.c.b16 %v2458, %v2449
  %v2540 = vpack.c.b16 %v2459, %v2450
  %v2541 = vpack.c.b16 %v2460, %v2451
  %v2542 = vpack.c.b16 %v2461, %v2452
  %v2543 = vpack.c.b16 %v2462, %v2453
  %v2544 = vpack.c.b16 %v2463, %v2454
  %v2545 = vpack.c.b16 %v2464, %v2455
  %v2546 = vpack.c.b16 %v2465, %v2456
  %v2547 = vpack.c.b16 %v2466, %v2457
  %v2548 = vpack.c.b16 %v2476, %v2467
  %v2549 = vpack.c.b16 %v2477, %v2468
  %v2550 = vpack.c.b16 %v2478, %v2469
  %v2551 = vpack.c.b16 %v2479, %v2470
  %v2552 = vpack.c.b16 %v2480, %v2471
  %v2553 = vpack.c.b16 %v2481, %v2472
  %v2554 = vpack.c.b16 %v2482, %v2473
  %v2555 = vpack.c.b16 %v2483, %v2474
  %v2556 = vpack.c.b16 %v2484, %v2475
  %v2557 = vpack.c.b16 %v2494, %v2485
  %v2558 = vpack.c.b16 %v2495, %v2486
  %v2559 = vpack.c.b16 %v2496, %v2487
  %v2560 = vpack.c.b16 %v2497, %v2488
  %v2561 = vpack.c.b16 %v2498, %v2489
  %v2562 = vpack.c.b16 %v2499, %v2490
  %v2563 = vpack.c.b16 %v2500, %v2491
  %v2564 = vpack.c.b16 %v2501, %v2492
  %v2565 = vpack.c.b16 %v2502, %v2493
  %v2566 = vpack.c.b16 %v2503, %v2503
  %v2567 = vpack.c.b16 %v2504, %v2504
  %v2568 = vpack.c.b16 %v2505, %v2505
  %v2569 = vpack.c.b16 %v2506, %v2506
  %v2570 = vpack.c.b16 %v2507, %v2507
  %v2571 = vpack.c.b16 %v2508, %v2508
  %v2572 = vpack.c.b16 %v2509, %v2509
  %v2573 = vpack.c.b16 %v2510, %v2510
  %v2574 = vpack.c.b16 %v2511, %v2511
  %2638 = vmatprep.subr.bf16.mxu0 0
  %2639 = vmatpush1.bf16.msra.mxu0 %v834
  %2640 = vmatprep.subr.bf16.mxu0 0
  %2641 = vmatpush1.bf16.msra.mxu0 %v833
  %2642 = vmatprep.subr.bf16.mxu0 0
  %2643 = vmatpush1.bf16.msra.mxu0 %v832
  %2644 = vmatprep.subr.bf16.mxu0 0
  %2645 = vmatpush1.bf16.msra.mxu0 %v831
  %2646 = vmatprep.subr.bf16.mxu0 0
  %2647 = vmatpush1.bf16.msra.mxu0 %v830
  %2648 = vmatprep.subr.bf16.mxu0 0
  %2649 = vmatpush1.bf16.msra.mxu0 %v829
  %2650 = vmatprep.subr.bf16.mxu0 0
  %2651 = vmatpush1.bf16.msra.mxu0 %v828
  %2652 = vmatprep.subr.bf16.mxu0 0
  %2653 = vmatpush1.bf16.msra.mxu0 %v827
  %2654 = vmatprep.subr.bf16.mxu0 0
  %2655 = vmatpush2.bf16.msra.mxu0 %v842
  %2656 = vmatprep.subr.bf16.mxu0 0
  %2657 = vmatpush2.bf16.msra.mxu0 %v841
  %2658 = vmatprep.subr.bf16.mxu0 0
  %2659 = vmatpush2.bf16.msra.mxu0 %v840
  %2660 = vmatprep.subr.bf16.mxu0 0
  %2661 = vmatpush2.bf16.msra.mxu0 %v839
  %2662 = vmatprep.subr.bf16.mxu0 0
  %2663 = vmatpush2.bf16.msra.mxu0 %v838
  %2664 = vmatprep.subr.bf16.mxu0 0
  %2665 = vmatpush2.bf16.msra.mxu0 %v837
  %2666 = vmatprep.subr.bf16.mxu0 0
  %2667 = vmatpush2.bf16.msra.mxu0 %v836
  %2668 = vmatprep.subr.bf16.mxu0 0
  %2669 = vmatpush2.bf16.msra.mxu0 %v835
  %2670 = vmatprep.mubr.bf16.mxu0 %v2513
  %2671 = vmatmul.mubr.bf16.gmra.mxu0 %v2512
  %v2672 = vpop.f32.mrf.mxu0
  %v2673 = vadd.f32 %v229, %v2672
  %v2674 = vpop.f32.mrf.mxu0
  %v2675 = vpop.f32.mrf.mxu0
  %v2676 = vadd.f32 %v229, %v2675
  %v2677 = vpop.f32.mrf.mxu0
  %2678 = vmatprep.mubr.bf16.mxu0 %v2522
  %2679 = vmatmul.mubr.bf16.gmra.mxu0 %v2521
  %v2680 = vpop.f32.mrf.mxu0
  %v2681 = vadd.f32 %v229, %v2680
  %v2682 = vpop.f32.mrf.mxu0
  %v2683 = vpop.f32.mrf.mxu0
  %v2684 = vadd.f32 %v229, %v2683
  %v2685 = vpop.f32.mrf.mxu0
  %2686 = vmatprep.mubr.bf16.mxu0 %v2531
  %2687 = vmatmul.mubr.bf16.gmra.mxu0 %v2530
  %v2688 = vpop.f32.mrf.mxu0
  %v2689 = vadd.f32 %v229, %v2688
  %v2690 = vpop.f32.mrf.mxu0
  %v2691 = vpop.f32.mrf.mxu0
  %v2692 = vadd.f32 %v229, %v2691
  %v2693 = vpop.f32.mrf.mxu0
  %2694 = vmatprep.mubr.bf16.mxu0 %v2540
  %2695 = vmatmul.mubr.bf16.gmra.mxu0 %v2539
  %v2696 = vpop.f32.mrf.mxu0
  %v2697 = vadd.f32 %v229, %v2696
  %v2698 = vpop.f32.mrf.mxu0
  %v2699 = vpop.f32.mrf.mxu0
  %v2700 = vadd.f32 %v229, %v2699
  %v2701 = vpop.f32.mrf.mxu0
  %2702 = vmatprep.mubr.bf16.mxu0 %v2549
  %2703 = vmatmul.mubr.bf16.gmra.mxu0 %v2548
  %v2704 = vpop.f32.mrf.mxu0
  %v2705 = vadd.f32 %v229, %v2704
  %v2706 = vpop.f32.mrf.mxu0
  %v2707 = vpop.f32.mrf.mxu0
  %v2708 = vadd.f32 %v229, %v2707
  %v2709 = vpop.f32.mrf.mxu0
  %2710 = vmatprep.mubr.bf16.mxu0 %v2558
  %2711 = vmatmul.mubr.bf16.gmra.mxu0 %v2557
  %v2712 = vpop.f32.mrf.mxu0
  %v2713 = vadd.f32 %v229, %v2712
  %v2714 = vpop.f32.mrf.mxu0
  %v2715 = vpop.f32.mrf.mxu0
  %v2716 = vadd.f32 %v229, %v2715
  %v2717 = vpop.f32.mrf.mxu0
  %2718 = vmatprep.mubr.bf16.mxu0 %v2567
  %2719 = vmatmul.mubr.bf16.gmra.mxu0 %v2566
  %v2720 = vpop.f32.mrf.mxu0
  %v2721 = vadd.f32 %v229, %v2720
  %v2722 = vpop.f32.mrf.mxu0
  %v2723 = vpop.f32.mrf.mxu0
  %v2724 = vpop.f32.mrf.mxu0
  %2725 = vdwg.mxu0
  %2726 = vmatprep.subr.bf16.mxu0 0
  %2727 = vmatpush1.bf16.msra.mxu0 %v850
  %2728 = vmatprep.subr.bf16.mxu0 0
  %2729 = vmatpush1.bf16.msra.mxu0 %v849
  %2730 = vmatprep.subr.bf16.mxu0 0
  %2731 = vmatpush1.bf16.msra.mxu0 %v848
  %2732 = vmatprep.subr.bf16.mxu0 0
  %2733 = vmatpush1.bf16.msra.mxu0 %v847
  %2734 = vmatprep.subr.bf16.mxu0 0
  %2735 = vmatpush1.bf16.msra.mxu0 %v846
  %2736 = vmatprep.subr.bf16.mxu0 0
  %2737 = vmatpush1.bf16.msra.mxu0 %v845
  %2738 = vmatprep.subr.bf16.mxu0 0
  %2739 = vmatpush1.bf16.msra.mxu0 %v844
  %2740 = vmatprep.subr.bf16.mxu0 0
  %2741 = vmatpush1.bf16.msra.mxu0 %v843
  %2742 = vmatprep.subr.bf16.mxu0 0
  %2743 = vmatpush2.bf16.msra.mxu0 %v858
  %2744 = vmatprep.subr.bf16.mxu0 0
  %2745 = vmatpush2.bf16.msra.mxu0 %v857
  %2746 = vmatprep.subr.bf16.mxu0 0
  %2747 = vmatpush2.bf16.msra.mxu0 %v856
  %2748 = vmatprep.subr.bf16.mxu0 0
  %2749 = vmatpush2.bf16.msra.mxu0 %v855
  %2750 = vmatprep.subr.bf16.mxu0 0
  %2751 = vmatpush2.bf16.msra.mxu0 %v854
  %2752 = vmatprep.subr.bf16.mxu0 0
  %2753 = vmatpush2.bf16.msra.mxu0 %v853
  %2754 = vmatprep.subr.bf16.mxu0 0
  %2755 = vmatpush2.bf16.msra.mxu0 %v852
  %2756 = vmatprep.subr.bf16.mxu0 0
  %2757 = vmatpush2.bf16.msra.mxu0 %v851
  %2758 = vmatprep.mubr.bf16.mxu0 %v2515
  %2759 = vmatmul.mubr.bf16.gmra.mxu0 %v2514
  %v2760 = vpop.f32.mrf.mxu0
  %v2761 = vadd.f32 %v2673, %v2760
  %v2762 = vpop.f32.mrf.mxu0
  %v2763 = vpop.f32.mrf.mxu0
  %v2764 = vadd.f32 %v2676, %v2763
  %v2765 = vpop.f32.mrf.mxu0
  %2766 = vmatprep.mubr.bf16.mxu0 %v2524
  %2767 = vmatmul.mubr.bf16.gmra.mxu0 %v2523
  %v2768 = vpop.f32.mrf.mxu0
  %v2769 = vadd.f32 %v2681, %v2768
  %v2770 = vpop.f32.mrf.mxu0
  %v2771 = vpop.f32.mrf.mxu0
  %v2772 = vadd.f32 %v2684, %v2771
  %v2773 = vpop.f32.mrf.mxu0
  %2774 = vmatprep.mubr.bf16.mxu0 %v2533
  %2775 = vmatmul.mubr.bf16.gmra.mxu0 %v2532
  %v2776 = vpop.f32.mrf.mxu0
  %v2777 = vadd.f32 %v2689, %v2776
  %v2778 = vpop.f32.mrf.mxu0
  %v2779 = vpop.f32.mrf.mxu0
  %v2780 = vadd.f32 %v2692, %v2779
  %v2781 = vpop.f32.mrf.mxu0
  %2782 = vmatprep.mubr.bf16.mxu0 %v2542
  %2783 = vmatmul.mubr.bf16.gmra.mxu0 %v2541
  %v2784 = vpop.f32.mrf.mxu0
  %v2785 = vadd.f32 %v2697, %v2784
  %v2786 = vpop.f32.mrf.mxu0
  %v2787 = vpop.f32.mrf.mxu0
  %v2788 = vadd.f32 %v2700, %v2787
  %v2789 = vpop.f32.mrf.mxu0
  %2790 = vmatprep.mubr.bf16.mxu0 %v2551
  %2791 = vmatmul.mubr.bf16.gmra.mxu0 %v2550
  %v2792 = vpop.f32.mrf.mxu0
  %v2793 = vadd.f32 %v2705, %v2792
  %v2794 = vpop.f32.mrf.mxu0
  %v2795 = vpop.f32.mrf.mxu0
  %v2796 = vadd.f32 %v2708, %v2795
  %v2797 = vpop.f32.mrf.mxu0
  %2798 = vmatprep.mubr.bf16.mxu0 %v2560
  %2799 = vmatmul.mubr.bf16.gmra.mxu0 %v2559
  %v2800 = vpop.f32.mrf.mxu0
  %v2801 = vadd.f32 %v2713, %v2800
  %v2802 = vpop.f32.mrf.mxu0
  %v2803 = vpop.f32.mrf.mxu0
  %v2804 = vadd.f32 %v2716, %v2803
  %v2805 = vpop.f32.mrf.mxu0
  %2806 = vmatprep.mubr.bf16.mxu0 %v2569
  %2807 = vmatmul.mubr.bf16.gmra.mxu0 %v2568
  %v2808 = vpop.f32.mrf.mxu0
  %v2809 = vadd.f32 %v2721, %v2808
  %v2810 = vpop.f32.mrf.mxu0
  %v2811 = vpop.f32.mrf.mxu0
  %v2812 = vpop.f32.mrf.mxu0
  %2813 = vdwg.mxu0
  %2814 = vmatprep.subr.bf16.mxu0 0
  %2815 = vmatpush1.bf16.msra.mxu0 %v866
  %2816 = vmatprep.subr.bf16.mxu0 0
  %2817 = vmatpush1.bf16.msra.mxu0 %v865
  %2818 = vmatprep.subr.bf16.mxu0 0
  %2819 = vmatpush1.bf16.msra.mxu0 %v864
  %2820 = vmatprep.subr.bf16.mxu0 0
  %2821 = vmatpush1.bf16.msra.mxu0 %v863
  %2822 = vmatprep.subr.bf16.mxu0 0
  %2823 = vmatpush1.bf16.msra.mxu0 %v862
  %2824 = vmatprep.subr.bf16.mxu0 0
  %2825 = vmatpush1.bf16.msra.mxu0 %v861
  %2826 = vmatprep.subr.bf16.mxu0 0
  %2827 = vmatpush1.bf16.msra.mxu0 %v860
  %2828 = vmatprep.subr.bf16.mxu0 0
  %2829 = vmatpush1.bf16.msra.mxu0 %v859
  %2830 = vmatprep.subr.bf16.mxu0 0
  %2831 = vmatpush2.bf16.msra.mxu0 %v874
  %2832 = vmatprep.subr.bf16.mxu0 0
  %2833 = vmatpush2.bf16.msra.mxu0 %v873
  %2834 = vmatprep.subr.bf16.mxu0 0
  %2835 = vmatpush2.bf16.msra.mxu0 %v872
  %2836 = vmatprep.subr.bf16.mxu0 0
  %2837 = vmatpush2.bf16.msra.mxu0 %v871
  %2838 = vmatprep.subr.bf16.mxu0 0
  %2839 = vmatpush2.bf16.msra.mxu0 %v870
  %2840 = vmatprep.subr.bf16.mxu0 0
  %2841 = vmatpush2.bf16.msra.mxu0 %v869
  %2842 = vmatprep.subr.bf16.mxu0 0
  %2843 = vmatpush2.bf16.msra.mxu0 %v868
  %2844 = vmatprep.subr.bf16.mxu0 0
  %2845 = vmatpush2.bf16.msra.mxu0 %v867
  %2846 = vmatprep.mubr.bf16.mxu0 %v2517
  %2847 = vmatmul.mubr.bf16.gmra.mxu0 %v2516
  %v2848 = vpop.f32.mrf.mxu0
  %v2849 = vadd.f32 %v2761, %v2848
  %v2850 = vpop.f32.mrf.mxu0
  %v2851 = vpop.f32.mrf.mxu0
  %v2852 = vadd.f32 %v2764, %v2851
  %v2853 = vpop.f32.mrf.mxu0
  %2854 = vmatprep.mubr.bf16.mxu0 %v2526
  %2855 = vmatmul.mubr.bf16.gmra.mxu0 %v2525
  %v2856 = vpop.f32.mrf.mxu0
  %v2857 = vadd.f32 %v2769, %v2856
  %v2858 = vpop.f32.mrf.mxu0
  %v2859 = vpop.f32.mrf.mxu0
  %v2860 = vadd.f32 %v2772, %v2859
  %v2861 = vpop.f32.mrf.mxu0
  %2862 = vmatprep.mubr.bf16.mxu0 %v2535
  %2863 = vmatmul.mubr.bf16.gmra.mxu0 %v2534
  %v2864 = vpop.f32.mrf.mxu0
  %v2865 = vadd.f32 %v2777, %v2864
  %v2866 = vpop.f32.mrf.mxu0
  %v2867 = vpop.f32.mrf.mxu0
  %v2868 = vadd.f32 %v2780, %v2867
  %v2869 = vpop.f32.mrf.mxu0
  %2870 = vmatprep.mubr.bf16.mxu0 %v2544
  %2871 = vmatmul.mubr.bf16.gmra.mxu0 %v2543
  %v2872 = vpop.f32.mrf.mxu0
  %v2873 = vadd.f32 %v2785, %v2872
  %v2874 = vpop.f32.mrf.mxu0
  %v2875 = vpop.f32.mrf.mxu0
  %v2876 = vadd.f32 %v2788, %v2875
  %v2877 = vpop.f32.mrf.mxu0
  %2878 = vmatprep.mubr.bf16.mxu0 %v2553
  %2879 = vmatmul.mubr.bf16.gmra.mxu0 %v2552
  %v2880 = vpop.f32.mrf.mxu0
  %v2881 = vadd.f32 %v2793, %v2880
  %v2882 = vpop.f32.mrf.mxu0
  %v2883 = vpop.f32.mrf.mxu0
  %v2884 = vadd.f32 %v2796, %v2883
  %v2885 = vpop.f32.mrf.mxu0
  %2886 = vmatprep.mubr.bf16.mxu0 %v2562
  %2887 = vmatmul.mubr.bf16.gmra.mxu0 %v2561
  %v2888 = vpop.f32.mrf.mxu0
  %v2889 = vadd.f32 %v2801, %v2888
  %v2890 = vpop.f32.mrf.mxu0
  %v2891 = vpop.f32.mrf.mxu0
  %v2892 = vadd.f32 %v2804, %v2891
  %v2893 = vpop.f32.mrf.mxu0
  %2894 = vmatprep.mubr.bf16.mxu0 %v2571
  %2895 = vmatmul.mubr.bf16.gmra.mxu0 %v2570
  %v2896 = vpop.f32.mrf.mxu0
  %v2897 = vadd.f32 %v2809, %v2896
  %v2898 = vpop.f32.mrf.mxu0
  %v2899 = vpop.f32.mrf.mxu0
  %v2900 = vpop.f32.mrf.mxu0
  %2901 = vdwg.mxu0
  %2902 = vmatprep.subr.bf16.mxu0 0
  %2903 = vmatpush1.bf16.msra.mxu0 %v882
  %2904 = vmatprep.subr.bf16.mxu0 0
  %2905 = vmatpush1.bf16.msra.mxu0 %v881
  %2906 = vmatprep.subr.bf16.mxu0 0
  %2907 = vmatpush1.bf16.msra.mxu0 %v880
  %2908 = vmatprep.subr.bf16.mxu0 0
  %2909 = vmatpush1.bf16.msra.mxu0 %v879
  %2910 = vmatprep.subr.bf16.mxu0 0
  %2911 = vmatpush1.bf16.msra.mxu0 %v878
  %2912 = vmatprep.subr.bf16.mxu0 0
  %2913 = vmatpush1.bf16.msra.mxu0 %v877
  %2914 = vmatprep.subr.bf16.mxu0 0
  %2915 = vmatpush1.bf16.msra.mxu0 %v876
  %2916 = vmatprep.subr.bf16.mxu0 0
  %2917 = vmatpush1.bf16.msra.mxu0 %v875
  %2918 = vmatprep.subr.bf16.mxu0 0
  %2919 = vmatpush2.bf16.msra.mxu0 %v890
  %2920 = vmatprep.subr.bf16.mxu0 0
  %2921 = vmatpush2.bf16.msra.mxu0 %v889
  %2922 = vmatprep.subr.bf16.mxu0 0
  %2923 = vmatpush2.bf16.msra.mxu0 %v888
  %2924 = vmatprep.subr.bf16.mxu0 0
  %2925 = vmatpush2.bf16.msra.mxu0 %v887
  %2926 = vmatprep.subr.bf16.mxu0 0
  %2927 = vmatpush2.bf16.msra.mxu0 %v886
  %2928 = vmatprep.subr.bf16.mxu0 0
  %2929 = vmatpush2.bf16.msra.mxu0 %v885
  %2930 = vmatprep.subr.bf16.mxu0 0
  %2931 = vmatpush2.bf16.msra.mxu0 %v884
  %2932 = vmatprep.subr.bf16.mxu0 0
  %2933 = vmatpush2.bf16.msra.mxu0 %v883
  %2934 = vmatprep.mubr.bf16.mxu0 %v2519
  %2935 = vmatmul.mubr.bf16.gmra.mxu0 %v2518
  %v2936 = vpop.f32.mrf.mxu0
  %v2937 = vadd.f32 %v2849, %v2936
  %v2938 = vpop.f32.mrf.mxu0
  %v2939 = vpop.f32.mrf.mxu0
  %v2940 = vadd.f32 %v2852, %v2939
  %v2941 = vpop.f32.mrf.mxu0
  %2942 = vmatprep.mubr.bf16.mxu0 %v2528
  %2943 = vmatmul.mubr.bf16.gmra.mxu0 %v2527
  %v2944 = vpop.f32.mrf.mxu0
  %v2945 = vadd.f32 %v2857, %v2944
  %v2946 = vpop.f32.mrf.mxu0
  %v2947 = vpop.f32.mrf.mxu0
  %v2948 = vadd.f32 %v2860, %v2947
  %v2949 = vpop.f32.mrf.mxu0
  %2950 = vmatprep.mubr.bf16.mxu0 %v2537
  %2951 = vmatmul.mubr.bf16.gmra.mxu0 %v2536
  %v2952 = vpop.f32.mrf.mxu0
  %v2953 = vadd.f32 %v2865, %v2952
  %v2954 = vpop.f32.mrf.mxu0
  %v2955 = vpop.f32.mrf.mxu0
  %v2956 = vadd.f32 %v2868, %v2955
  %v2957 = vpop.f32.mrf.mxu0
  %2958 = vmatprep.mubr.bf16.mxu0 %v2546
  %2959 = vmatmul.mubr.bf16.gmra.mxu0 %v2545
  %v2960 = vpop.f32.mrf.mxu0
  %v2961 = vadd.f32 %v2873, %v2960
  %v2962 = vpop.f32.mrf.mxu0
  %v2963 = vpop.f32.mrf.mxu0
  %v2964 = vadd.f32 %v2876, %v2963
  %v2965 = vpop.f32.mrf.mxu0
  %2966 = vmatprep.mubr.bf16.mxu0 %v2555
  %2967 = vmatmul.mubr.bf16.gmra.mxu0 %v2554
  %v2968 = vpop.f32.mrf.mxu0
  %v2969 = vadd.f32 %v2881, %v2968
  %v2970 = vpop.f32.mrf.mxu0
  %v2971 = vpop.f32.mrf.mxu0
  %v2972 = vadd.f32 %v2884, %v2971
  %v2973 = vpop.f32.mrf.mxu0
  %2974 = vmatprep.mubr.bf16.mxu0 %v2564
  %2975 = vmatmul.mubr.bf16.gmra.mxu0 %v2563
  %v2976 = vpop.f32.mrf.mxu0
  %v2977 = vadd.f32 %v2889, %v2976
  %v2978 = vpop.f32.mrf.mxu0
  %v2979 = vpop.f32.mrf.mxu0
  %v2980 = vadd.f32 %v2892, %v2979
  %v2981 = vpop.f32.mrf.mxu0
  %2982 = vmatprep.mubr.bf16.mxu0 %v2573
  %2983 = vmatmul.mubr.bf16.gmra.mxu0 %v2572
  %v2984 = vpop.f32.mrf.mxu0
  %v2985 = vadd.f32 %v2897, %v2984
  %v2986 = vpop.f32.mrf.mxu0
  %v2987 = vpop.f32.mrf.mxu0
  %v2988 = vpop.f32.mrf.mxu0
  %2989 = vdwg.mxu0
  %2990 = vmatprep.subr.bf16.mxu0 0
  %2991 = vmatpush1.bf16.msra.mxu0 %v898
  %2992 = vmatprep.subr.bf16.mxu0 0
  %2993 = vmatpush1.bf16.msra.mxu0 %v897
  %2994 = vmatprep.subr.bf16.mxu0 0
  %2995 = vmatpush1.bf16.msra.mxu0 %v896
  %2996 = vmatprep.subr.bf16.mxu0 0
  %2997 = vmatpush1.bf16.msra.mxu0 %v895
  %2998 = vmatprep.subr.bf16.mxu0 0
  %2999 = vmatpush1.bf16.msra.mxu0 %v894
  %3000 = vmatprep.subr.bf16.mxu0 0
  %3001 = vmatpush1.bf16.msra.mxu0 %v893
  %3002 = vmatprep.subr.bf16.mxu0 0
  %3003 = vmatpush1.bf16.msra.mxu0 %v892
  %3004 = vmatprep.subr.bf16.mxu0 0
  %3005 = vmatpush1.bf16.msra.mxu0 %v891
  %3006 = vmatprep.subr.bf16.mxu0 0
  %3007 = vmatpush2.bf16.msra.mxu0 0
  %3008 = vmatprep.subr.bf16.mxu0 0
  %3009 = vmatpush2.bf16.msra.mxu0 0
  %3010 = vmatprep.subr.bf16.mxu0 0
  %3011 = vmatpush2.bf16.msra.mxu0 0
  %3012 = vmatprep.subr.bf16.mxu0 0
  %3013 = vmatpush2.bf16.msra.mxu0 0
  %3014 = vmatprep.subr.bf16.mxu0 0
  %3015 = vmatpush2.bf16.msra.mxu0 0
  %3016 = vmatprep.subr.bf16.mxu0 0
  %3017 = vmatpush2.bf16.msra.mxu0 0
  %3018 = vmatprep.subr.bf16.mxu0 0
  %3019 = vmatpush2.bf16.msra.mxu0 0
  %3020 = vmatprep.subr.bf16.mxu0 0
  %3021 = vmatpush2.bf16.msra.mxu0 0
  %3022 = vmatprep.mubr.bf16.mxu0 0
  %3023 = vmatmul.mubr.bf16.gmra.mxu0 %v2520
  %v3024 = vpop.f32.mrf.mxu0
  %v3025 = vadd.f32 %v2937, %v3024
  %v3026 = vpop.f32.mrf.mxu0
  %v3027 = vpop.f32.mrf.mxu0
  %v3028 = vadd.f32 %v2940, %v3027
  %v3029 = vpop.f32.mrf.mxu0
  %3030 = vmatprep.mubr.bf16.mxu0 0
  %3031 = vmatmul.mubr.bf16.gmra.mxu0 %v2529
  %v3032 = vpop.f32.mrf.mxu0
  %v3033 = vadd.f32 %v2945, %v3032
  %v3034 = vpop.f32.mrf.mxu0
  %v3035 = vpop.f32.mrf.mxu0
  %v3036 = vadd.f32 %v2948, %v3035
  %v3037 = vpop.f32.mrf.mxu0
  %3038 = vmatprep.mubr.bf16.mxu0 0
  %3039 = vmatmul.mubr.bf16.gmra.mxu0 %v2538
  %v3040 = vpop.f32.mrf.mxu0
  %v3041 = vadd.f32 %v2953, %v3040
  %v3042 = vpop.f32.mrf.mxu0
  %v3043 = vpop.f32.mrf.mxu0
  %v3044 = vadd.f32 %v2956, %v3043
  %v3045 = vpop.f32.mrf.mxu0
  %3046 = vmatprep.mubr.bf16.mxu0 0
  %3047 = vmatmul.mubr.bf16.gmra.mxu0 %v2547
  %v3048 = vpop.f32.mrf.mxu0
  %v3049 = vadd.f32 %v2961, %v3048
  %v3050 = vpop.f32.mrf.mxu0
  %v3051 = vpop.f32.mrf.mxu0
  %v3052 = vadd.f32 %v2964, %v3051
  %v3053 = vpop.f32.mrf.mxu0
  %3054 = vmatprep.mubr.bf16.mxu0 0
  %3055 = vmatmul.mubr.bf16.gmra.mxu0 %v2556
  %v3056 = vpop.f32.mrf.mxu0
  %v3057 = vadd.f32 %v2969, %v3056
  %v3058 = vpop.f32.mrf.mxu0
  %v3059 = vpop.f32.mrf.mxu0
  %v3060 = vadd.f32 %v2972, %v3059
  %v3061 = vpop.f32.mrf.mxu0
  %3062 = vmatprep.mubr.bf16.mxu0 0
  %3063 = vmatmul.mubr.bf16.gmra.mxu0 %v2565
  %v3064 = vpop.f32.mrf.mxu0
  %v3065 = vadd.f32 %v2977, %v3064
  %v3066 = vpop.f32.mrf.mxu0
  %v3067 = vpop.f32.mrf.mxu0
  %v3068 = vadd.f32 %v2980, %v3067
  %v3069 = vpop.f32.mrf.mxu0
  %3070 = vmatprep.mubr.bf16.mxu0 0
  %3071 = vmatmul.mubr.bf16.gmra.mxu0 %v2574
  %v3072 = vpop.f32.mrf.mxu0
  %v3073 = vadd.f32 %v2985, %v3072
  %v3074 = vpop.f32.mrf.mxu0
  %v3075 = vpop.f32.mrf.mxu0
  %v3076 = vpop.f32.mrf.mxu0
  %3077 = vdwg.mxu0
  %v3078 = vmax.f32 %v3025, 0.0
  %v3079 = vmax.f32 %v3028, 0.0
  %v3080 = vmax.f32 %v3033, 0.0
  %v3081 = vmax.f32 %v3036, 0.0
  %v3082 = vmax.f32 %v3041, 0.0
  %v3083 = vmax.f32 %v3044, 0.0
  %v3084 = vmax.f32 %v3049, 0.0
  %v3085 = vmax.f32 %v3052, 0.0
  %v3086 = vmax.f32 %v3057, 0.0
  %v3087 = vmax.f32 %v3060, 0.0
  %v3088 = vmax.f32 %v3065, 0.0
  %v3089 = vmax.f32 %v3068, 0.0
  %v3090 = vmax.f32 %v3073, 0.0
  %s3091 = scalar_lea.vmem %s0, 1404
  %v3092 = vld [vmem:[%s3091] sm:$0xff]
  %v3093 = vld [vmem:[%s3091 + $0x8] sm:$0xff]
  %v3094 = vld [vmem:[%s3091 + $0x10] sm:$0xff]
  %v3095 = vld [vmem:[%s3091 + $0x18] sm:$0xff]
  %v3096 = vld [vmem:[%s3091 + $0x20] sm:$0xf]
  %v3097 = vld [vmem:[%s3091 + $0x24] sm:$0xff]
  %v3098 = vld [vmem:[%s3091 + $0x2c] sm:$0xff]
  %v3099 = vld [vmem:[%s3091 + $0x34] sm:$0xff]
  %v3100 = vld [vmem:[%s3091 + $0x3c] sm:$0xff]
  %v3101 = vld [vmem:[%s3091 + $0x44] sm:$0xf]
  %v3102 = vld [vmem:[%s3091 + $0x48] sm:$0xff]
  %v3103 = vld [vmem:[%s3091 + $0x50] sm:$0xff]
  %v3104 = vld [vmem:[%s3091 + $0x58] sm:$0xff]
  %v3105 = vld [vmem:[%s3091 + $0x60] sm:$0xff]
  %v3106 = vld [vmem:[%s3091 + $0x68] sm:$0xf]
  %v3107 = vld [vmem:[%s3091 + $0x6c] sm:$0xff]
  %v3108 = vld [vmem:[%s3091 + $0x74] sm:$0xff]
  %v3109 = vld [vmem:[%s3091 + $0x7c] sm:$0xff]
  %v3110 = vld [vmem:[%s3091 + $0x84] sm:$0xff]
  %v3111 = vld [vmem:[%s3091 + $0x8c] sm:$0xf]
  %v3112 = vld [vmem:[%s3091 + $0x90] sm:$0xff]
  %v3113 = vld [vmem:[%s3091 + $0x98] sm:$0xff]
  %v3114 = vld [vmem:[%s3091 + $0xa0] sm:$0xff]
  %v3115 = vld [vmem:[%s3091 + $0xa8] sm:$0xff]
  %v3116 = vld [vmem:[%s3091 + $0xb0] sm:$0xf]
  %v3117 = vld [vmem:[%s3091 + $0xb4] sm:$0xff]
  %v3118 = vld [vmem:[%s3091 + $0xbc] sm:$0xff]
  %v3119 = vld [vmem:[%s3091 + $0xc4] sm:$0xff]
  %v3120 = vld [vmem:[%s3091 + $0xcc] sm:$0xff]
  %v3121 = vld [vmem:[%s3091 + $0xd4] sm:$0xf]
  %v3122 = vld [vmem:[%s3091 + $0xd8] sm:$0xff]
  %v3123 = vld [vmem:[%s3091 + $0xe0] sm:$0xff]
  %v3124 = vld [vmem:[%s3091 + $0xe8] sm:$0xff]
  %v3125 = vld [vmem:[%s3091 + $0xf0] sm:$0xff]
  %v3126 = vld [vmem:[%s3091 + $0xf8] sm:$0xf]
  %v3127 = vld [vmem:[%s3091 + $0xfc] sm:$0xff]
  %v3128 = vld [vmem:[%s3091 + $0x104] sm:$0xff]
  %v3129 = vld [vmem:[%s3091 + $0x10c] sm:$0xff]
  %v3130 = vld [vmem:[%s3091 + $0x114] sm:$0xff]
  %v3131 = vld [vmem:[%s3091 + $0x11c] sm:$0xf]
  %v3132 = vld [vmem:[%s3091 + $0x120] sm:$0xff]
  %v3133 = vld [vmem:[%s3091 + $0x128] sm:$0xff]
  %v3134 = vld [vmem:[%s3091 + $0x130] sm:$0xff]
  %v3135 = vld [vmem:[%s3091 + $0x138] sm:$0xff]
  %v3136 = vld [vmem:[%s3091 + $0x140] sm:$0xf]
  %v3137 = vld [vmem:[%s3091 + $0x144] sm:$0xff]
  %v3138 = vld [vmem:[%s3091 + $0x14c] sm:$0xff]
  %v3139 = vld [vmem:[%s3091 + $0x154] sm:$0xff]
  %v3140 = vld [vmem:[%s3091 + $0x15c] sm:$0xff]
  %v3141 = vld [vmem:[%s3091 + $0x164] sm:$0xf]
  %v3142 = vld [vmem:[%s3091 + $0x168] sm:$0xff]
  %v3143 = vld [vmem:[%s3091 + $0x170] sm:$0xff]
  %v3144 = vld [vmem:[%s3091 + $0x178] sm:$0xff]
  %v3145 = vld [vmem:[%s3091 + $0x180] sm:$0xff]
  %v3146 = vld [vmem:[%s3091 + $0x188] sm:$0xf]
  %v3147 = vld [vmem:[%s3091 + $0x18c] sm:$0xff]
  %v3148 = vld [vmem:[%s3091 + $0x194] sm:$0xff]
  %v3149 = vld [vmem:[%s3091 + $0x19c] sm:$0xff]
  %v3150 = vld [vmem:[%s3091 + $0x1a4] sm:$0xff]
  %v3151 = vld [vmem:[%s3091 + $0x1ac] sm:$0xf]
  %v3152 = vld [vmem:[%s3091 + $0x1b0] sm:$0x11]
  %v3153 = vld [vmem:[%s3091 + $0x1b8] sm:$0x11]
  %v3154 = vld [vmem:[%s3091 + $0x1c0] sm:$0x11]
  %v3155 = vld [vmem:[%s3091 + $0x1c8] sm:$0x11]
  %v3156 = vld [vmem:[%s3091 + $0x1d0] sm:$0x1]
  %v3222 = vunpack.c.l.b16 %v3092
  %v3223 = vunpack.c.h.b16 %v3092
  %v3224 = vunpack.c.l.b16 %v3093
  %v3225 = vunpack.c.h.b16 %v3093
  %v3226 = vunpack.c.l.b16 %v3094
  %v3227 = vunpack.c.h.b16 %v3094
  %v3228 = vunpack.c.l.b16 %v3095
  %v3229 = vunpack.c.h.b16 %v3095
  %v3230 = vunpack.c.l.b16 %v3096
  %v3231 = vunpack.c.l.b16 %v3097
  %v3232 = vunpack.c.h.b16 %v3097
  %v3233 = vunpack.c.l.b16 %v3098
  %v3234 = vunpack.c.h.b16 %v3098
  %v3235 = vunpack.c.l.b16 %v3099
  %v3236 = vunpack.c.h.b16 %v3099
  %v3237 = vunpack.c.l.b16 %v3100
  %v3238 = vunpack.c.h.b16 %v3100
  %v3239 = vunpack.c.l.b16 %v3101
  %v3240 = vunpack.c.l.b16 %v3102
  %v3241 = vunpack.c.h.b16 %v3102
  %v3242 = vunpack.c.l.b16 %v3103
  %v3243 = vunpack.c.h.b16 %v3103
  %v3244 = vunpack.c.l.b16 %v3104
  %v3245 = vunpack.c.h.b16 %v3104
  %v3246 = vunpack.c.l.b16 %v3105
  %v3247 = vunpack.c.h.b16 %v3105
  %v3248 = vunpack.c.l.b16 %v3106
  %v3249 = vunpack.c.l.b16 %v3107
  %v3250 = vunpack.c.h.b16 %v3107
  %v3251 = vunpack.c.l.b16 %v3108
  %v3252 = vunpack.c.h.b16 %v3108
  %v3253 = vunpack.c.l.b16 %v3109
  %v3254 = vunpack.c.h.b16 %v3109
  %v3255 = vunpack.c.l.b16 %v3110
  %v3256 = vunpack.c.h.b16 %v3110
  %v3257 = vunpack.c.l.b16 %v3111
  %v3258 = vunpack.c.l.b16 %v3112
  %v3259 = vunpack.c.h.b16 %v3112
  %v3260 = vunpack.c.l.b16 %v3113
  %v3261 = vunpack.c.h.b16 %v3113
  %v3262 = vunpack.c.l.b16 %v3114
  %v3263 = vunpack.c.h.b16 %v3114
  %v3264 = vunpack.c.l.b16 %v3115
  %v3265 = vunpack.c.h.b16 %v3115
  %v3266 = vunpack.c.l.b16 %v3116
  %v3267 = vunpack.c.l.b16 %v3117
  %v3268 = vunpack.c.h.b16 %v3117
  %v3269 = vunpack.c.l.b16 %v3118
  %v3270 = vunpack.c.h.b16 %v3118
  %v3271 = vunpack.c.l.b16 %v3119
  %v3272 = vunpack.c.h.b16 %v3119
  %v3273 = vunpack.c.l.b16 %v3120
  %v3274 = vunpack.c.h.b16 %v3120
  %v3275 = vunpack.c.l.b16 %v3121
  %v3276 = vunpack.c.l.b16 %v3122
  %v3277 = vunpack.c.h.b16 %v3122
  %v3278 = vunpack.c.l.b16 %v3123
  %v3279 = vunpack.c.h.b16 %v3123
  %v3280 = vunpack.c.l.b16 %v3124
  %v3281 = vunpack.c.h.b16 %v3124
  %v3282 = vunpack.c.l.b16 %v3125
  %v3283 = vunpack.c.h.b16 %v3125
  %v3284 = vunpack.c.l.b16 %v3126
  %v3285 = vunpack.c.l.b16 %v3127
  %v3286 = vunpack.c.h.b16 %v3127
  %v3287 = vunpack.c.l.b16 %v3128
  %v3288 = vunpack.c.h.b16 %v3128
  %v3289 = vunpack.c.l.b16 %v3129
  %v3290 = vunpack.c.h.b16 %v3129
  %v3291 = vunpack.c.l.b16 %v3130
  %v3292 = vunpack.c.h.b16 %v3130
  %v3293 = vunpack.c.l.b16 %v3131
  %v3294 = vunpack.c.l.b16 %v3132
  %v3295 = vunpack.c.h.b16 %v3132
  %v3296 = vunpack.c.l.b16 %v3133
  %v3297 = vunpack.c.h.b16 %v3133
  %v3298 = vunpack.c.l.b16 %v3134
  %v3299 = vunpack.c.h.b16 %v3134
  %v3300 = vunpack.c.l.b16 %v3135
  %v3301 = vunpack.c.h.b16 %v3135
  %v3302 = vunpack.c.l.b16 %v3136
  %v3303 = vunpack.c.l.b16 %v3137
  %v3304 = vunpack.c.h.b16 %v3137
  %v3305 = vunpack.c.l.b16 %v3138
  %v3306 = vunpack.c.h.b16 %v3138
  %v3307 = vunpack.c.l.b16 %v3139
  %v3308 = vunpack.c.h.b16 %v3139
  %v3309 = vunpack.c.l.b16 %v3140
  %v3310 = vunpack.c.h.b16 %v3140
  %v3311 = vunpack.c.l.b16 %v3141
  %v3312 = vunpack.c.l.b16 %v3142
  %v3313 = vunpack.c.h.b16 %v3142
  %v3314 = vunpack.c.l.b16 %v3143
  %v3315 = vunpack.c.h.b16 %v3143
  %v3316 = vunpack.c.l.b16 %v3144
  %v3317 = vunpack.c.h.b16 %v3144
  %v3318 = vunpack.c.l.b16 %v3145
  %v3319 = vunpack.c.h.b16 %v3145
  %v3320 = vunpack.c.l.b16 %v3146
  %v3321 = vunpack.c.l.b16 %v3147
  %v3322 = vunpack.c.h.b16 %v3147
  %v3323 = vunpack.c.l.b16 %v3148
  %v3324 = vunpack.c.h.b16 %v3148
  %v3325 = vunpack.c.l.b16 %v3149
  %v3326 = vunpack.c.h.b16 %v3149
  %v3327 = vunpack.c.l.b16 %v3150
  %v3328 = vunpack.c.h.b16 %v3150
  %v3329 = vunpack.c.l.b16 %v3151
  %v3330 = vunpack.c.l.b16 %v3152
  %v3331 = vunpack.c.h.b16 %v3152
  %v3332 = vunpack.c.l.b16 %v3153
  %v3333 = vunpack.c.h.b16 %v3153
  %v3334 = vunpack.c.l.b16 %v3154
  %v3335 = vunpack.c.h.b16 %v3154
  %v3336 = vunpack.c.l.b16 %v3155
  %v3337 = vunpack.c.h.b16 %v3155
  %v3338 = vunpack.c.l.b16 %v3156
  %v3339 = vpack.c.b16 %v3231, %v3222
  %v3340 = vpack.c.b16 %v3232, %v3223
  %v3341 = vpack.c.b16 %v3233, %v3224
  %v3342 = vpack.c.b16 %v3234, %v3225
  %v3343 = vpack.c.b16 %v3235, %v3226
  %v3344 = vpack.c.b16 %v3236, %v3227
  %v3345 = vpack.c.b16 %v3237, %v3228
  %v3346 = vpack.c.b16 %v3238, %v3229
  %v3347 = vpack.c.b16 %v3239, %v3230
  %v3348 = vpack.c.b16 %v3249, %v3240
  %v3349 = vpack.c.b16 %v3250, %v3241
  %v3350 = vpack.c.b16 %v3251, %v3242
  %v3351 = vpack.c.b16 %v3252, %v3243
  %v3352 = vpack.c.b16 %v3253, %v3244
  %v3353 = vpack.c.b16 %v3254, %v3245
  %v3354 = vpack.c.b16 %v3255, %v3246
  %v3355 = vpack.c.b16 %v3256, %v3247
  %v3356 = vpack.c.b16 %v3257, %v3248
  %v3357 = vpack.c.b16 %v3267, %v3258
  %v3358 = vpack.c.b16 %v3268, %v3259
  %v3359 = vpack.c.b16 %v3269, %v3260
  %v3360 = vpack.c.b16 %v3270, %v3261
  %v3361 = vpack.c.b16 %v3271, %v3262
  %v3362 = vpack.c.b16 %v3272, %v3263
  %v3363 = vpack.c.b16 %v3273, %v3264
  %v3364 = vpack.c.b16 %v3274, %v3265
  %v3365 = vpack.c.b16 %v3275, %v3266
  %v3366 = vpack.c.b16 %v3285, %v3276
  %v3367 = vpack.c.b16 %v3286, %v3277
  %v3368 = vpack.c.b16 %v3287, %v3278
  %v3369 = vpack.c.b16 %v3288, %v3279
  %v3370 = vpack.c.b16 %v3289, %v3280
  %v3371 = vpack.c.b16 %v3290, %v3281
  %v3372 = vpack.c.b16 %v3291, %v3282
  %v3373 = vpack.c.b16 %v3292, %v3283
  %v3374 = vpack.c.b16 %v3293, %v3284
  %v3375 = vpack.c.b16 %v3303, %v3294
  %v3376 = vpack.c.b16 %v3304, %v3295
  %v3377 = vpack.c.b16 %v3305, %v3296
  %v3378 = vpack.c.b16 %v3306, %v3297
  %v3379 = vpack.c.b16 %v3307, %v3298
  %v3380 = vpack.c.b16 %v3308, %v3299
  %v3381 = vpack.c.b16 %v3309, %v3300
  %v3382 = vpack.c.b16 %v3310, %v3301
  %v3383 = vpack.c.b16 %v3311, %v3302
  %v3384 = vpack.c.b16 %v3321, %v3312
  %v3385 = vpack.c.b16 %v3322, %v3313
  %v3386 = vpack.c.b16 %v3323, %v3314
  %v3387 = vpack.c.b16 %v3324, %v3315
  %v3388 = vpack.c.b16 %v3325, %v3316
  %v3389 = vpack.c.b16 %v3326, %v3317
  %v3390 = vpack.c.b16 %v3327, %v3318
  %v3391 = vpack.c.b16 %v3328, %v3319
  %v3392 = vpack.c.b16 %v3329, %v3320
  %v3393 = vpack.c.b16 %v3330, %v3330
  %v3394 = vpack.c.b16 %v3331, %v3331
  %v3395 = vpack.c.b16 %v3332, %v3332
  %v3396 = vpack.c.b16 %v3333, %v3333
  %v3397 = vpack.c.b16 %v3334, %v3334
  %v3398 = vpack.c.b16 %v3335, %v3335
  %v3399 = vpack.c.b16 %v3336, %v3336
  %v3400 = vpack.c.b16 %v3337, %v3337
  %v3401 = vpack.c.b16 %v3338, %v3338
  %3465 = vmatprep.subr.bf16.mxu0 0
  %3466 = vmatpush1.bf16.msra.mxu0 %v834
  %3467 = vmatprep.subr.bf16.mxu0 0
  %3468 = vmatpush1.bf16.msra.mxu0 %v833
  %3469 = vmatprep.subr.bf16.mxu0 0
  %3470 = vmatpush1.bf16.msra.mxu0 %v832
  %3471 = vmatprep.subr.bf16.mxu0 0
  %3472 = vmatpush1.bf16.msra.mxu0 %v831
  %3473 = vmatprep.subr.bf16.mxu0 0
  %3474 = vmatpush1.bf16.msra.mxu0 %v830
  %3475 = vmatprep.subr.bf16.mxu0 0
  %3476 = vmatpush1.bf16.msra.mxu0 %v829
  %3477 = vmatprep.subr.bf16.mxu0 0
  %3478 = vmatpush1.bf16.msra.mxu0 %v828
  %3479 = vmatprep.subr.bf16.mxu0 0
  %3480 = vmatpush1.bf16.msra.mxu0 %v827
  %3481 = vmatprep.subr.bf16.mxu0 0
  %3482 = vmatpush2.bf16.msra.mxu0 %v842
  %3483 = vmatprep.subr.bf16.mxu0 0
  %3484 = vmatpush2.bf16.msra.mxu0 %v841
  %3485 = vmatprep.subr.bf16.mxu0 0
  %3486 = vmatpush2.bf16.msra.mxu0 %v840
  %3487 = vmatprep.subr.bf16.mxu0 0
  %3488 = vmatpush2.bf16.msra.mxu0 %v839
  %3489 = vmatprep.subr.bf16.mxu0 0
  %3490 = vmatpush2.bf16.msra.mxu0 %v838
  %3491 = vmatprep.subr.bf16.mxu0 0
  %3492 = vmatpush2.bf16.msra.mxu0 %v837
  %3493 = vmatprep.subr.bf16.mxu0 0
  %3494 = vmatpush2.bf16.msra.mxu0 %v836
  %3495 = vmatprep.subr.bf16.mxu0 0
  %3496 = vmatpush2.bf16.msra.mxu0 %v835
  %3497 = vmatprep.mubr.bf16.mxu0 %v3340
  %3498 = vmatmul.mubr.bf16.gmra.mxu0 %v3339
  %v3499 = vpop.f32.mrf.mxu0
  %v3500 = vadd.f32 %v229, %v3499
  %v3501 = vpop.f32.mrf.mxu0
  %v3502 = vpop.f32.mrf.mxu0
  %v3503 = vadd.f32 %v229, %v3502
  %v3504 = vpop.f32.mrf.mxu0
  %3505 = vmatprep.mubr.bf16.mxu0 %v3349
  %3506 = vmatmul.mubr.bf16.gmra.mxu0 %v3348
  %v3507 = vpop.f32.mrf.mxu0
  %v3508 = vadd.f32 %v229, %v3507
  %v3509 = vpop.f32.mrf.mxu0
  %v3510 = vpop.f32.mrf.mxu0
  %v3511 = vadd.f32 %v229, %v3510
  %v3512 = vpop.f32.mrf.mxu0
  %3513 = vmatprep.mubr.bf16.mxu0 %v3358
  %3514 = vmatmul.mubr.bf16.gmra.mxu0 %v3357
  %v3515 = vpop.f32.mrf.mxu0
  %v3516 = vadd.f32 %v229, %v3515
  %v3517 = vpop.f32.mrf.mxu0
  %v3518 = vpop.f32.mrf.mxu0
  %v3519 = vadd.f32 %v229, %v3518
  %v3520 = vpop.f32.mrf.mxu0
  %3521 = vmatprep.mubr.bf16.mxu0 %v3367
  %3522 = vmatmul.mubr.bf16.gmra.mxu0 %v3366
  %v3523 = vpop.f32.mrf.mxu0
  %v3524 = vadd.f32 %v229, %v3523
  %v3525 = vpop.f32.mrf.mxu0
  %v3526 = vpop.f32.mrf.mxu0
  %v3527 = vadd.f32 %v229, %v3526
  %v3528 = vpop.f32.mrf.mxu0
  %3529 = vmatprep.mubr.bf16.mxu0 %v3376
  %3530 = vmatmul.mubr.bf16.gmra.mxu0 %v3375
  %v3531 = vpop.f32.mrf.mxu0
  %v3532 = vadd.f32 %v229, %v3531
  %v3533 = vpop.f32.mrf.mxu0
  %v3534 = vpop.f32.mrf.mxu0
  %v3535 = vadd.f32 %v229, %v3534
  %v3536 = vpop.f32.mrf.mxu0
  %3537 = vmatprep.mubr.bf16.mxu0 %v3385
  %3538 = vmatmul.mubr.bf16.gmra.mxu0 %v3384
  %v3539 = vpop.f32.mrf.mxu0
  %v3540 = vadd.f32 %v229, %v3539
  %v3541 = vpop.f32.mrf.mxu0
  %v3542 = vpop.f32.mrf.mxu0
  %v3543 = vadd.f32 %v229, %v3542
  %v3544 = vpop.f32.mrf.mxu0
  %3545 = vmatprep.mubr.bf16.mxu0 %v3394
  %3546 = vmatmul.mubr.bf16.gmra.mxu0 %v3393
  %v3547 = vpop.f32.mrf.mxu0
  %v3548 = vadd.f32 %v229, %v3547
  %v3549 = vpop.f32.mrf.mxu0
  %v3550 = vpop.f32.mrf.mxu0
  %v3551 = vpop.f32.mrf.mxu0
  %3552 = vdwg.mxu0
  %3553 = vmatprep.subr.bf16.mxu0 0
  %3554 = vmatpush1.bf16.msra.mxu0 %v850
  %3555 = vmatprep.subr.bf16.mxu0 0
  %3556 = vmatpush1.bf16.msra.mxu0 %v849
  %3557 = vmatprep.subr.bf16.mxu0 0
  %3558 = vmatpush1.bf16.msra.mxu0 %v848
  %3559 = vmatprep.subr.bf16.mxu0 0
  %3560 = vmatpush1.bf16.msra.mxu0 %v847
  %3561 = vmatprep.subr.bf16.mxu0 0
  %3562 = vmatpush1.bf16.msra.mxu0 %v846
  %3563 = vmatprep.subr.bf16.mxu0 0
  %3564 = vmatpush1.bf16.msra.mxu0 %v845
  %3565 = vmatprep.subr.bf16.mxu0 0
  %3566 = vmatpush1.bf16.msra.mxu0 %v844
  %3567 = vmatprep.subr.bf16.mxu0 0
  %3568 = vmatpush1.bf16.msra.mxu0 %v843
  %3569 = vmatprep.subr.bf16.mxu0 0
  %3570 = vmatpush2.bf16.msra.mxu0 %v858
  %3571 = vmatprep.subr.bf16.mxu0 0
  %3572 = vmatpush2.bf16.msra.mxu0 %v857
  %3573 = vmatprep.subr.bf16.mxu0 0
  %3574 = vmatpush2.bf16.msra.mxu0 %v856
  %3575 = vmatprep.subr.bf16.mxu0 0
  %3576 = vmatpush2.bf16.msra.mxu0 %v855
  %3577 = vmatprep.subr.bf16.mxu0 0
  %3578 = vmatpush2.bf16.msra.mxu0 %v854
  %3579 = vmatprep.subr.bf16.mxu0 0
  %3580 = vmatpush2.bf16.msra.mxu0 %v853
  %3581 = vmatprep.subr.bf16.mxu0 0
  %3582 = vmatpush2.bf16.msra.mxu0 %v852
  %3583 = vmatprep.subr.bf16.mxu0 0
  %3584 = vmatpush2.bf16.msra.mxu0 %v851
  %3585 = vmatprep.mubr.bf16.mxu0 %v3342
  %3586 = vmatmul.mubr.bf16.gmra.mxu0 %v3341
  %v3587 = vpop.f32.mrf.mxu0
  %v3588 = vadd.f32 %v3500, %v3587
  %v3589 = vpop.f32.mrf.mxu0
  %v3590 = vpop.f32.mrf.mxu0
  %v3591 = vadd.f32 %v3503, %v3590
  %v3592 = vpop.f32.mrf.mxu0
  %3593 = vmatprep.mubr.bf16.mxu0 %v3351
  %3594 = vmatmul.mubr.bf16.gmra.mxu0 %v3350
  %v3595 = vpop.f32.mrf.mxu0
  %v3596 = vadd.f32 %v3508, %v3595
  %v3597 = vpop.f32.mrf.mxu0
  %v3598 = vpop.f32.mrf.mxu0
  %v3599 = vadd.f32 %v3511, %v3598
  %v3600 = vpop.f32.mrf.mxu0
  %3601 = vmatprep.mubr.bf16.mxu0 %v3360
  %3602 = vmatmul.mubr.bf16.gmra.mxu0 %v3359
  %v3603 = vpop.f32.mrf.mxu0
  %v3604 = vadd.f32 %v3516, %v3603
  %v3605 = vpop.f32.mrf.mxu0
  %v3606 = vpop.f32.mrf.mxu0
  %v3607 = vadd.f32 %v3519, %v3606
  %v3608 = vpop.f32.mrf.mxu0
  %3609 = vmatprep.mubr.bf16.mxu0 %v3369
  %3610 = vmatmul.mubr.bf16.gmra.mxu0 %v3368
  %v3611 = vpop.f32.mrf.mxu0
  %v3612 = vadd.f32 %v3524, %v3611
  %v3613 = vpop.f32.mrf.mxu0
  %v3614 = vpop.f32.mrf.mxu0
  %v3615 = vadd.f32 %v3527, %v3614
  %v3616 = vpop.f32.mrf.mxu0
  %3617 = vmatprep.mubr.bf16.mxu0 %v3378
  %3618 = vmatmul.mubr.bf16.gmra.mxu0 %v3377
  %v3619 = vpop.f32.mrf.mxu0
  %v3620 = vadd.f32 %v3532, %v3619
  %v3621 = vpop.f32.mrf.mxu0
  %v3622 = vpop.f32.mrf.mxu0
  %v3623 = vadd.f32 %v3535, %v3622
  %v3624 = vpop.f32.mrf.mxu0
  %3625 = vmatprep.mubr.bf16.mxu0 %v3387
  %3626 = vmatmul.mubr.bf16.gmra.mxu0 %v3386
  %v3627 = vpop.f32.mrf.mxu0
  %v3628 = vadd.f32 %v3540, %v3627
  %v3629 = vpop.f32.mrf.mxu0
  %v3630 = vpop.f32.mrf.mxu0
  %v3631 = vadd.f32 %v3543, %v3630
  %v3632 = vpop.f32.mrf.mxu0
  %3633 = vmatprep.mubr.bf16.mxu0 %v3396
  %3634 = vmatmul.mubr.bf16.gmra.mxu0 %v3395
  %v3635 = vpop.f32.mrf.mxu0
  %v3636 = vadd.f32 %v3548, %v3635
  %v3637 = vpop.f32.mrf.mxu0
  %v3638 = vpop.f32.mrf.mxu0
  %v3639 = vpop.f32.mrf.mxu0
  %3640 = vdwg.mxu0
  %3641 = vmatprep.subr.bf16.mxu0 0
  %3642 = vmatpush1.bf16.msra.mxu0 %v866
  %3643 = vmatprep.subr.bf16.mxu0 0
  %3644 = vmatpush1.bf16.msra.mxu0 %v865
  %3645 = vmatprep.subr.bf16.mxu0 0
  %3646 = vmatpush1.bf16.msra.mxu0 %v864
  %3647 = vmatprep.subr.bf16.mxu0 0
  %3648 = vmatpush1.bf16.msra.mxu0 %v863
  %3649 = vmatprep.subr.bf16.mxu0 0
  %3650 = vmatpush1.bf16.msra.mxu0 %v862
  %3651 = vmatprep.subr.bf16.mxu0 0
  %3652 = vmatpush1.bf16.msra.mxu0 %v861
  %3653 = vmatprep.subr.bf16.mxu0 0
  %3654 = vmatpush1.bf16.msra.mxu0 %v860
  %3655 = vmatprep.subr.bf16.mxu0 0
  %3656 = vmatpush1.bf16.msra.mxu0 %v859
  %3657 = vmatprep.subr.bf16.mxu0 0
  %3658 = vmatpush2.bf16.msra.mxu0 %v874
  %3659 = vmatprep.subr.bf16.mxu0 0
  %3660 = vmatpush2.bf16.msra.mxu0 %v873
  %3661 = vmatprep.subr.bf16.mxu0 0
  %3662 = vmatpush2.bf16.msra.mxu0 %v872
  %3663 = vmatprep.subr.bf16.mxu0 0
  %3664 = vmatpush2.bf16.msra.mxu0 %v871
  %3665 = vmatprep.subr.bf16.mxu0 0
  %3666 = vmatpush2.bf16.msra.mxu0 %v870
  %3667 = vmatprep.subr.bf16.mxu0 0
  %3668 = vmatpush2.bf16.msra.mxu0 %v869
  %3669 = vmatprep.subr.bf16.mxu0 0
  %3670 = vmatpush2.bf16.msra.mxu0 %v868
  %3671 = vmatprep.subr.bf16.mxu0 0
  %3672 = vmatpush2.bf16.msra.mxu0 %v867
  %3673 = vmatprep.mubr.bf16.mxu0 %v3344
  %3674 = vmatmul.mubr.bf16.gmra.mxu0 %v3343
  %v3675 = vpop.f32.mrf.mxu0
  %v3676 = vadd.f32 %v3588, %v3675
  %v3677 = vpop.f32.mrf.mxu0
  %v3678 = vpop.f32.mrf.mxu0
  %v3679 = vadd.f32 %v3591, %v3678
  %v3680 = vpop.f32.mrf.mxu0
  %3681 = vmatprep.mubr.bf16.mxu0 %v3353
  %3682 = vmatmul.mubr.bf16.gmra.mxu0 %v3352
  %v3683 = vpop.f32.mrf.mxu0
  %v3684 = vadd.f32 %v3596, %v3683
  %v3685 = vpop.f32.mrf.mxu0
  %v3686 = vpop.f32.mrf.mxu0
  %v3687 = vadd.f32 %v3599, %v3686
  %v3688 = vpop.f32.mrf.mxu0
  %3689 = vmatprep.mubr.bf16.mxu0 %v3362
  %3690 = vmatmul.mubr.bf16.gmra.mxu0 %v3361
  %v3691 = vpop.f32.mrf.mxu0
  %v3692 = vadd.f32 %v3604, %v3691
  %v3693 = vpop.f32.mrf.mxu0
  %v3694 = vpop.f32.mrf.mxu0
  %v3695 = vadd.f32 %v3607, %v3694
  %v3696 = vpop.f32.mrf.mxu0
  %3697 = vmatprep.mubr.bf16.mxu0 %v3371
  %3698 = vmatmul.mubr.bf16.gmra.mxu0 %v3370
  %v3699 = vpop.f32.mrf.mxu0
  %v3700 = vadd.f32 %v3612, %v3699
  %v3701 = vpop.f32.mrf.mxu0
  %v3702 = vpop.f32.mrf.mxu0
  %v3703 = vadd.f32 %v3615, %v3702
  %v3704 = vpop.f32.mrf.mxu0
  %3705 = vmatprep.mubr.bf16.mxu0 %v3380
  %3706 = vmatmul.mubr.bf16.gmra.mxu0 %v3379
  %v3707 = vpop.f32.mrf.mxu0
  %v3708 = vadd.f32 %v3620, %v3707
  %v3709 = vpop.f32.mrf.mxu0
  %v3710 = vpop.f32.mrf.mxu0
  %v3711 = vadd.f32 %v3623, %v3710
  %v3712 = vpop.f32.mrf.mxu0
  %3713 = vmatprep.mubr.bf16.mxu0 %v3389
  %3714 = vmatmul.mubr.bf16.gmra.mxu0 %v3388
  %v3715 = vpop.f32.mrf.mxu0
  %v3716 = vadd.f32 %v3628, %v3715
  %v3717 = vpop.f32.mrf.mxu0
  %v3718 = vpop.f32.mrf.mxu0
  %v3719 = vadd.f32 %v3631, %v3718
  %v3720 = vpop.f32.mrf.mxu0
  %3721 = vmatprep.mubr.bf16.mxu0 %v3398
  %3722 = vmatmul.mubr.bf16.gmra.mxu0 %v3397
  %v3723 = vpop.f32.mrf.mxu0
  %v3724 = vadd.f32 %v3636, %v3723
  %v3725 = vpop.f32.mrf.mxu0
  %v3726 = vpop.f32.mrf.mxu0
  %v3727 = vpop.f32.mrf.mxu0
  %3728 = vdwg.mxu0
  %3729 = vmatprep.subr.bf16.mxu0 0
  %3730 = vmatpush1.bf16.msra.mxu0 %v882
  %3731 = vmatprep.subr.bf16.mxu0 0
  %3732 = vmatpush1.bf16.msra.mxu0 %v881
  %3733 = vmatprep.subr.bf16.mxu0 0
  %3734 = vmatpush1.bf16.msra.mxu0 %v880
  %3735 = vmatprep.subr.bf16.mxu0 0
  %3736 = vmatpush1.bf16.msra.mxu0 %v879
  %3737 = vmatprep.subr.bf16.mxu0 0
  %3738 = vmatpush1.bf16.msra.mxu0 %v878
  %3739 = vmatprep.subr.bf16.mxu0 0
  %3740 = vmatpush1.bf16.msra.mxu0 %v877
  %3741 = vmatprep.subr.bf16.mxu0 0
  %3742 = vmatpush1.bf16.msra.mxu0 %v876
  %3743 = vmatprep.subr.bf16.mxu0 0
  %3744 = vmatpush1.bf16.msra.mxu0 %v875
  %3745 = vmatprep.subr.bf16.mxu0 0
  %3746 = vmatpush2.bf16.msra.mxu0 %v890
  %3747 = vmatprep.subr.bf16.mxu0 0
  %3748 = vmatpush2.bf16.msra.mxu0 %v889
  %3749 = vmatprep.subr.bf16.mxu0 0
  %3750 = vmatpush2.bf16.msra.mxu0 %v888
  %3751 = vmatprep.subr.bf16.mxu0 0
  %3752 = vmatpush2.bf16.msra.mxu0 %v887
  %3753 = vmatprep.subr.bf16.mxu0 0
  %3754 = vmatpush2.bf16.msra.mxu0 %v886
  %3755 = vmatprep.subr.bf16.mxu0 0
  %3756 = vmatpush2.bf16.msra.mxu0 %v885
  %3757 = vmatprep.subr.bf16.mxu0 0
  %3758 = vmatpush2.bf16.msra.mxu0 %v884
  %3759 = vmatprep.subr.bf16.mxu0 0
  %3760 = vmatpush2.bf16.msra.mxu0 %v883
  %3761 = vmatprep.mubr.bf16.mxu0 %v3346
  %3762 = vmatmul.mubr.bf16.gmra.mxu0 %v3345
  %v3763 = vpop.f32.mrf.mxu0
  %v3764 = vadd.f32 %v3676, %v3763
  %v3765 = vpop.f32.mrf.mxu0
  %v3766 = vpop.f32.mrf.mxu0
  %v3767 = vadd.f32 %v3679, %v3766
  %v3768 = vpop.f32.mrf.mxu0
  %3769 = vmatprep.mubr.bf16.mxu0 %v3355
  %3770 = vmatmul.mubr.bf16.gmra.mxu0 %v3354
  %v3771 = vpop.f32.mrf.mxu0
  %v3772 = vadd.f32 %v3684, %v3771
  %v3773 = vpop.f32.mrf.mxu0
  %v3774 = vpop.f32.mrf.mxu0
  %v3775 = vadd.f32 %v3687, %v3774
  %v3776 = vpop.f32.mrf.mxu0
  %3777 = vmatprep.mubr.bf16.mxu0 %v3364
  %3778 = vmatmul.mubr.bf16.gmra.mxu0 %v3363
  %v3779 = vpop.f32.mrf.mxu0
  %v3780 = vadd.f32 %v3692, %v3779
  %v3781 = vpop.f32.mrf.mxu0
  %v3782 = vpop.f32.mrf.mxu0
  %v3783 = vadd.f32 %v3695, %v3782
  %v3784 = vpop.f32.mrf.mxu0
  %3785 = vmatprep.mubr.bf16.mxu0 %v3373
  %3786 = vmatmul.mubr.bf16.gmra.mxu0 %v3372
  %v3787 = vpop.f32.mrf.mxu0
  %v3788 = vadd.f32 %v3700, %v3787
  %v3789 = vpop.f32.mrf.mxu0
  %v3790 = vpop.f32.mrf.mxu0
  %v3791 = vadd.f32 %v3703, %v3790
  %v3792 = vpop.f32.mrf.mxu0
  %3793 = vmatprep.mubr.bf16.mxu0 %v3382
  %3794 = vmatmul.mubr.bf16.gmra.mxu0 %v3381
  %v3795 = vpop.f32.mrf.mxu0
  %v3796 = vadd.f32 %v3708, %v3795
  %v3797 = vpop.f32.mrf.mxu0
  %v3798 = vpop.f32.mrf.mxu0
  %v3799 = vadd.f32 %v3711, %v3798
  %v3800 = vpop.f32.mrf.mxu0
  %3801 = vmatprep.mubr.bf16.mxu0 %v3391
  %3802 = vmatmul.mubr.bf16.gmra.mxu0 %v3390
  %v3803 = vpop.f32.mrf.mxu0
  %v3804 = vadd.f32 %v3716, %v3803
  %v3805 = vpop.f32.mrf.mxu0
  %v3806 = vpop.f32.mrf.mxu0
  %v3807 = vadd.f32 %v3719, %v3806
  %v3808 = vpop.f32.mrf.mxu0
  %3809 = vmatprep.mubr.bf16.mxu0 %v3400
  %3810 = vmatmul.mubr.bf16.gmra.mxu0 %v3399
  %v3811 = vpop.f32.mrf.mxu0
  %v3812 = vadd.f32 %v3724, %v3811
  %v3813 = vpop.f32.mrf.mxu0
  %v3814 = vpop.f32.mrf.mxu0
  %v3815 = vpop.f32.mrf.mxu0
  %3816 = vdwg.mxu0
  %3817 = vmatprep.subr.bf16.mxu0 0
  %3818 = vmatpush1.bf16.msra.mxu0 %v898
  %3819 = vmatprep.subr.bf16.mxu0 0
  %3820 = vmatpush1.bf16.msra.mxu0 %v897
  %3821 = vmatprep.subr.bf16.mxu0 0
  %3822 = vmatpush1.bf16.msra.mxu0 %v896
  %3823 = vmatprep.subr.bf16.mxu0 0
  %3824 = vmatpush1.bf16.msra.mxu0 %v895
  %3825 = vmatprep.subr.bf16.mxu0 0
  %3826 = vmatpush1.bf16.msra.mxu0 %v894
  %3827 = vmatprep.subr.bf16.mxu0 0
  %3828 = vmatpush1.bf16.msra.mxu0 %v893
  %3829 = vmatprep.subr.bf16.mxu0 0
  %3830 = vmatpush1.bf16.msra.mxu0 %v892
  %3831 = vmatprep.subr.bf16.mxu0 0
  %3832 = vmatpush1.bf16.msra.mxu0 %v891
  %3833 = vmatprep.subr.bf16.mxu0 0
  %3834 = vmatpush2.bf16.msra.mxu0 0
  %3835 = vmatprep.subr.bf16.mxu0 0
  %3836 = vmatpush2.bf16.msra.mxu0 0
  %3837 = vmatprep.subr.bf16.mxu0 0
  %3838 = vmatpush2.bf16.msra.mxu0 0
  %3839 = vmatprep.subr.bf16.mxu0 0
  %3840 = vmatpush2.bf16.msra.mxu0 0
  %3841 = vmatprep.subr.bf16.mxu0 0
  %3842 = vmatpush2.bf16.msra.mxu0 0
  %3843 = vmatprep.subr.bf16.mxu0 0
  %3844 = vmatpush2.bf16.msra.mxu0 0
  %3845 = vmatprep.subr.bf16.mxu0 0
  %3846 = vmatpush2.bf16.msra.mxu0 0
  %3847 = vmatprep.subr.bf16.mxu0 0
  %3848 = vmatpush2.bf16.msra.mxu0 0
  %3849 = vmatprep.mubr.bf16.mxu0 0
  %3850 = vmatmul.mubr.bf16.gmra.mxu0 %v3347
  %v3851 = vpop.f32.mrf.mxu0
  %v3852 = vadd.f32 %v3764, %v3851
  %v3853 = vpop.f32.mrf.mxu0
  %v3854 = vpop.f32.mrf.mxu0
  %v3855 = vadd.f32 %v3767, %v3854
  %v3856 = vpop.f32.mrf.mxu0
  %3857 = vmatprep.mubr.bf16.mxu0 0
  %3858 = vmatmul.mubr.bf16.gmra.mxu0 %v3356
  %v3859 = vpop.f32.mrf.mxu0
  %v3860 = vadd.f32 %v3772, %v3859
  %v3861 = vpop.f32.mrf.mxu0
  %v3862 = vpop.f32.mrf.mxu0
  %v3863 = vadd.f32 %v3775, %v3862
  %v3864 = vpop.f32.mrf.mxu0
  %3865 = vmatprep.mubr.bf16.mxu0 0
  %3866 = vmatmul.mubr.bf16.gmra.mxu0 %v3365
  %v3867 = vpop.f32.mrf.mxu0
  %v3868 = vadd.f32 %v3780, %v3867
  %v3869 = vpop.f32.mrf.mxu0
  %v3870 = vpop.f32.mrf.mxu0
  %v3871 = vadd.f32 %v3783, %v3870
  %v3872 = vpop.f32.mrf.mxu0
  %3873 = vmatprep.mubr.bf16.mxu0 0
  %3874 = vmatmul.mubr.bf16.gmra.mxu0 %v3374
  %v3875 = vpop.f32.mrf.mxu0
  %v3876 = vadd.f32 %v3788, %v3875
  %v3877 = vpop.f32.mrf.mxu0
  %v3878 = vpop.f32.mrf.mxu0
  %v3879 = vadd.f32 %v3791, %v3878
  %v3880 = vpop.f32.mrf.mxu0
  %3881 = vmatprep.mubr.bf16.mxu0 0
  %3882 = vmatmul.mubr.bf16.gmra.mxu0 %v3383
  %v3883 = vpop.f32.mrf.mxu0
  %v3884 = vadd.f32 %v3796, %v3883
  %v3885 = vpop.f32.mrf.mxu0
  %v3886 = vpop.f32.mrf.mxu0
  %v3887 = vadd.f32 %v3799, %v3886
  %v3888 = vpop.f32.mrf.mxu0
  %3889 = vmatprep.mubr.bf16.mxu0 0
  %3890 = vmatmul.mubr.bf16.gmra.mxu0 %v3392
  %v3891 = vpop.f32.mrf.mxu0
  %v3892 = vadd.f32 %v3804, %v3891
  %v3893 = vpop.f32.mrf.mxu0
  %v3894 = vpop.f32.mrf.mxu0
  %v3895 = vadd.f32 %v3807, %v3894
  %v3896 = vpop.f32.mrf.mxu0
  %3897 = vmatprep.mubr.bf16.mxu0 0
  %3898 = vmatmul.mubr.bf16.gmra.mxu0 %v3401
  %v3899 = vpop.f32.mrf.mxu0
  %v3900 = vadd.f32 %v3812, %v3899
  %v3901 = vpop.f32.mrf.mxu0
  %v3902 = vpop.f32.mrf.mxu0
  %v3903 = vpop.f32.mrf.mxu0
  %3904 = vdwg.mxu0
  %v3905 = vmax.f32 %v3852, 0.0
  %v3906 = vmax.f32 %v3855, 0.0
  %v3907 = vmax.f32 %v3860, 0.0
  %v3908 = vmax.f32 %v3863, 0.0
  %v3909 = vmax.f32 %v3868, 0.0
  %v3910 = vmax.f32 %v3871, 0.0
  %v3911 = vmax.f32 %v3876, 0.0
  %v3912 = vmax.f32 %v3879, 0.0
  %v3913 = vmax.f32 %v3884, 0.0
  %v3914 = vmax.f32 %v3887, 0.0
  %v3915 = vmax.f32 %v3892, 0.0
  %v3916 = vmax.f32 %v3895, 0.0
  %v3917 = vmax.f32 %v3900, 0.0
  %v3918 = vmax.f32 %v3078, %v3905
  %v3919 = vmax.f32 %v3079, %v3906
  %v3920 = vmax.f32 %v3080, %v3907
  %v3921 = vmax.f32 %v3081, %v3908
  %v3922 = vmax.f32 %v3082, %v3909
  %v3923 = vmax.f32 %v3083, %v3910
  %v3924 = vmax.f32 %v3084, %v3911
  %v3925 = vmax.f32 %v3085, %v3912
  %v3926 = vmax.f32 %v3086, %v3913
  %v3927 = vmax.f32 %v3087, %v3914
  %v3928 = vmax.f32 %v3088, %v3915
  %v3929 = vmax.f32 %v3089, %v3916
  %v3930 = vmax.f32 %v3090, %v3917
  %v3931 = vmax.f32 %v2251, %v3918
  %v3932 = vmax.f32 %v2252, %v3919
  %v3933 = vmax.f32 %v2253, %v3920
  %v3934 = vmax.f32 %v2254, %v3921
  %v3935 = vmax.f32 %v2255, %v3922
  %v3936 = vmax.f32 %v2256, %v3923
  %v3937 = vmax.f32 %v2257, %v3924
  %v3938 = vmax.f32 %v2258, %v3925
  %v3939 = vmax.f32 %v2259, %v3926
  %v3940 = vmax.f32 %v2260, %v3927
  %v3941 = vmax.f32 %v2261, %v3928
  %v3942 = vmax.f32 %v2262, %v3929
  %v3943 = vmax.f32 %v2263, %v3930
  %v3944 = vpack.c.bf16 %v3932, %v3931
  %v3945 = vpack.c.bf16 %v3934, %v3933
  %v3946 = vpack.c.bf16 %v3936, %v3935
  %v3947 = vpack.c.bf16 %v3938, %v3937
  %v3948 = vpack.c.bf16 %v3940, %v3939
  %v3949 = vpack.c.bf16 %v3942, %v3941
  %v3950 = vpack.c.bf16 %v3943, %v3943
  %v3958 = vunpack.c.l.b16 %v3944
  %v3959 = vunpack.c.h.b16 %v3944
  %v3960 = vunpack.c.l.b16 %v3945
  %v3961 = vunpack.c.h.b16 %v3945
  %v3962 = vunpack.c.l.b16 %v3946
  %v3963 = vunpack.c.h.b16 %v3946
  %v3964 = vunpack.c.l.b16 %v3947
  %v3965 = vunpack.c.h.b16 %v3947
  %v3966 = vunpack.c.l.b16 %v3948
  %v3967 = vunpack.c.h.b16 %v3948
  %v3968 = vunpack.c.l.b16 %v3949
  %v3969 = vunpack.c.h.b16 %v3949
  %v3970 = vunpack.c.l.b16 %v3950
  %v3971 = vpack.c.b16 %v3958, %v3958
  %v3972 = vpack.c.b16 %v3959, %v3959
  %v3973 = vpack.c.b16 %v3960, %v3960
  %v3974 = vpack.c.b16 %v3961, %v3961
  %v3975 = vpack.c.b16 %v3962, %v3962
  %v3976 = vpack.c.b16 %v3963, %v3963
  %v3977 = vpack.c.b16 %v3964, %v3964
  %v3978 = vpack.c.b16 %v3965, %v3965
  %v3979 = vpack.c.b16 %v3966, %v3966
  %v3980 = vpack.c.b16 %v3967, %v3967
  %v3981 = vpack.c.b16 %v3968, %v3968
  %v3982 = vpack.c.b16 %v3969, %v3969
  %v3983 = vpack.c.b16 %v3970, %v3970
  %3997 = vst [vmem:[%s3] sm:$0xf] %v3971
  %3998 = vst [vmem:[%s3 + $0x4] sm:$0xf] %v3972
  %3999 = vst [vmem:[%s3 + $0x8] sm:$0xf] %v3973
  %4000 = vst [vmem:[%s3 + $0xc] sm:$0xf] %v3974
  %4001 = vst [vmem:[%s3 + $0x10] sm:$0xf] %v3975
  %4002 = vst [vmem:[%s3 + $0x14] sm:$0xf] %v3976
  %4003 = vst [vmem:[%s3 + $0x18] sm:$0xf] %v3977
  %4004 = vst [vmem:[%s3 + $0x1c] sm:$0xf] %v3978
  %4005 = vst [vmem:[%s3 + $0x20] sm:$0xf] %v3979
  %4006 = vst [vmem:[%s3 + $0x24] sm:$0xf] %v3980
  %4007 = vst [vmem:[%s3 + $0x28] sm:$0xf] %v3981
  %4008 = vst [vmem:[%s3 + $0x2c] sm:$0xf] %v3982
  %4009 = vst [vmem:[%s3 + $0x30] sm:$0x1] %v3983
  // Predicated region
  $region14: #{simple_cnn_forward.4} parent=0 // pred_check
    _
  $region15: #{simple_cnn_forward.4} parent=0 // pred_check_branch
    %4011 = sbr.rel (0) target = $region17
  $region16: #{simple_cnn_forward.4} parent=0 // pred_region
    _
  $region17: #{simple_cnn_forward.4} parent=0 // pred_fallthru
    _
  // Predicated region
  $region18: #{simple_cnn_forward.4} parent=0 // pred_check
    _
  $region19: #{simple_cnn_forward.4} parent=0 // pred_check_branch
    %4013 = sbr.rel (0) target = $region21
  $region20: #{simple_cnn_forward.4} parent=0 // pred_region
    _
  $region21: #{simple_cnn_forward.4} parent=0 // pred_fallthru
    _

</llo_original>
